<compile_context>
chip_gen: v5e
topology: v5e:2x2
jax: 0.10.0
libtpu: 0.0.40
codegen_flags: <defaults>
</compile_context>

<pallas_src>
import functools

import numpy as np
import jax
import jax.numpy as jnp
from jax.experimental import pallas as pl
from jax.experimental.pallas import tpu as pltpu

BN_EPS = 1e-5
C = 32          # width of every internal feature map
C2 = C // 2     # SE bottleneck width


# ----------------------------------------------------------------------------
# Constant selection matrices (built with numpy at trace time)
# ----------------------------------------------------------------------------
def _pool_select(wg, hq, wq, length):
    """(length, hq*wq) matrix: 2x2 avg-pool + compaction of a conv output that is
    stored flat with row stride `wg` (the input-grid width)."""
    P = np.zeros((length, hq * wq), np.float32)
    for a in range(hq):
        for b in range(wq):
            base = 2 * a * wg + 2 * b
            for off in (0, 1, wg, wg + 1):
                P[base + off, a * wq + b] = 0.25
    return P


def _compact_select(wg, ho, wo, length):
    """(length, ho*wo) one-hot matrix: pick the valid conv-output columns."""
    S = np.zeros((length, ho * wo), np.float32)
    for a in range(ho):
        for b in range(wo):
            S[a * wg + b, a * wo + b] = 1.0
    return S


# ----------------------------------------------------------------------------
# Fused kernel: one grid step == one image, everything resident in VMEM
# ----------------------------------------------------------------------------
def _c3ae_kernel(*refs, g1w, l1, g2w, l2, g3w, l3):
    cols0 = refs[0]                 # (K0p, S0)  wrapper im2col, parity-grouped cols
    conv = refs[1:11]               # (w, b) x 5, BN already folded into convs 0..3
    se = refs[11:31]                # (w1, b1, w2, b2) x 5 SE modules
    p1m, p2m, s3m = refs[31], refs[32], refs[33]
    o_ref = refs[34]                # (C, 4)   final (2,2,32) feature map
    im1, im2, im3 = refs[35], refs[36], refs[37]   # im2col scratch buffers

    f32 = jnp.float32

    def hswish(v):
        return v * jnp.clip(v + 3.0, 0.0, 6.0) * (1.0 / 6.0)

    def se_scale(v, idx):
        w1, b1, w2, b2 = se[4 * idx:4 * idx + 4]
        m = jnp.mean(v, axis=1, keepdims=True)                               # (C, 1)
        h = hswish(jnp.dot(w1[...], m, preferred_element_type=f32) + b1[...])
        s = jax.nn.sigmoid(jnp.dot(w2[...], h, preferred_element_type=f32) + b2[...])
        return v * s

    def conv3x3(x, wg, length, w_ref, b_ref, im_ref):
        # x: (C, Hg*wg) row-major on an (Hg, wg) grid.  9 contiguous slice stores
        # build the im2col, then ONE matmul + ONE store produce the conv output
        # (indexed on the input grid; out-of-window columns are ignored later).
        for t in range(9):
            d = (t // 3) * wg + (t % 3)
            im_ref[C * t:C * (t + 1), :] = x[:, d:d + length]
        return jnp.dot(w_ref[...], im_ref[...],
                       preferred_element_type=f32) + b_ref[...]

    # ---- stage 0: conv0 (wrapper im2col) -> hswish -> avgpool2x2 -> SE --------
    z0 = jnp.dot(conv[0][...], cols0[...], preferred_element_type=f32) + conv[1][...]
    h0 = hswish(z0)                                       # (C, 4*Q) parity-grouped
    q = h0.shape[1] // 4
    p0 = 0.25 * (h0[:, 0:q] + h0[:, q:2 * q] + h0[:, 2 * q:3 * q] + h0[:, 3 * q:4 * q])
    p0 = se_scale(p0, 0)                                  # (C, g1h*g1w), row-major

    # ---- stage 1: conv1 -> hswish -> pool (one matmul) -> SE ------------------
    z1 = conv3x3(p0, g1w, l1, conv[2], conv[3], im1)
    p1 = jnp.dot(hswish(z1), p1m[...], preferred_element_type=f32)
    p1 = se_scale(p1, 1)

    # ---- stage 2: conv2 -> hswish -> pool (one matmul) -> SE ------------------
    z2 = conv3x3(p1, g2w, l2, conv[4], conv[5], im2)
    p2 = jnp.dot(hswish(z2), p2m[...], preferred_element_type=f32)
    p2 = se_scale(p2, 2)

    # ---- stage 3: conv3 -> (folded BN) -> hswish -> SE  (compact 4x4 -> 2x2) --
    z3 = conv3x3(p2, g3w, l3, conv[6], conv[7], im3)
    c3 = hswish(jnp.dot(z3, s3m[...], preferred_element_type=f32))
    c3 = se_scale(c3, 3)

    # ---- stage 4: conv4 (1x1) -> SE, straight into the output block -----------
    z4 = jnp.dot(conv[8][...], c3, preferred_element_type=f32) + conv[9][...]
    o_ref[...] = se_scale(z4, 4)


# ----------------------------------------------------------------------------
# Wrapper: BN folding, conv0 im2col, selection matrices, pallas_call
# ----------------------------------------------------------------------------
def c3ae_forward(x_nchw, params):
    x = x_nchw.astype(jnp.float32)
    N, Cin, H, W = x.shape
    assert H % 2 == 0 and W % 2 == 0 and H >= 38 and W >= 38, "unsupported size"

    # ---- per-stage geometry (valid 3x3 convs, floor-mode 2x2 avg pools) -------
    H0, W0 = H - 2, W - 2                    # conv0 output
    g1h, g1w = H0 // 2, W0 // 2              # stage-1 input grid
    l1 = g1h * g1w - 2 * g1w - 2
    c1h, c1w = g1h - 2, g1w - 2
    g2h, g2w = c1h // 2, c1w // 2
    l2 = g2h * g2w - 2 * g2w - 2
    c2h, c2w = g2h - 2, g2w - 2
    g3h, g3w = c2h // 2, c2w // 2
    l3 = g3h * g3w - 2 * g3w - 2
    c3h, c3w = g3h - 2, g3w - 2              # final spatial (2, 2) for 48x48
    out_cols = c3h * c3w

    # ---- conv0 im2col in the wrapper, columns ordered in 2x2-parity groups ----
    taps = [(kh, kw) for kh in range(3) for kw in range(3)]
    cols = jnp.stack([x[:, :, kh:kh + H0, kw:kw + W0] for kh, kw in taps], axis=1)
    cols = cols.reshape(N, 9 * Cin, g1h, 2, g1w, 2)
    cols = jnp.transpose(cols, (0, 1, 3, 5, 2, 4)).reshape(N, 9 * Cin, 4 * g1h * g1w)
    k0 = 9 * Cin
    k0p = max(32, ((k0 + 7) // 8) * 8)
    if k0p > k0:
        cols = jnp.concatenate(
            [cols, jnp.zeros((N, k0p - k0, cols.shape[2]), jnp.float32)], axis=1)
    s0 = cols.shape[2]

    # ---- fold inference-mode BN into convs, pack weights as matmul operands ---
    # Contract: bn{i}_* are gamma/beta/running_mean/running_var; the fold uses
    # s = gamma/sqrt(var+eps), shift = beta - mean*s (exact in infinite precision).
    def fold_conv(i, with_bn=True):
        w = params[f"conv{i}_w"].astype(jnp.float32)          # torch (Co,Ci,kh,kw)
        b = params[f"conv{i}_b"].astype(jnp.float32)
        co = w.shape[0]
        wt = jnp.transpose(w, (0, 2, 3, 1)).reshape(co, -1)   # (Co, kh*kw*Ci)
        if with_bn:
            s = params[f"bn{i}_gamma"] / jnp.sqrt(params[f"bn{i}_var"] + BN_EPS)
            wt = wt * s[:, None]
            b = b * s + (params[f"bn{i}_beta"] - params[f"bn{i}_mean"] * s)
        return wt, b[:, None]

    w0t, b0 = fold_conv(0)
    if k0p > k0:
        w0t = jnp.concatenate([w0t, jnp.zeros((C, k0p - k0), jnp.float32)], axis=1)
    w1t, b1 = fold_conv(1)
    w2t, b2 = fold_conv(2)
    w3t, b3 = fold_conv(3)
    w4t, b4 = fold_conv(4, with_bn=False)
    w4t = w4t.reshape(C, C)

    se_args = []
    for i in range(5):
        se_args += [params[f"se{i}_w1"].reshape(C2, C).astype(jnp.float32),
                    params[f"se{i}_b1"].astype(jnp.float32)[:, None],
                    params[f"se{i}_w2"].reshape(C, C2).astype(jnp.float32),
                    params[f"se{i}_b2"].astype(jnp.float32)[:, None]]

    # ---- constant pool / compaction selection matrices ------------------------
    P1 = jnp.asarray(_pool_select(g1w, g2h, g2w, l1))
    P2 = jnp.asarray(_pool_select(g2w, g3h, g3w, l2))
    S3 = jnp.asarray(_compact_select(g3w, c3h, c3w, l3))

    weights = [w0t, b0, w1t, b1, w2t, b2, w3t, b3, w4t, b4] + se_args + [P1, P2, S3]

    in_specs = [pl.BlockSpec((None, k0p, s0), lambda n: (n, 0, 0))]
    in_specs += [pl.BlockSpec(wa.shape, lambda n: (0, 0)) for wa in weights]

    grid_spec = pltpu.PrefetchScalarGridSpec(
        num_scalar_prefetch=0,
        grid=(N,),
        in_specs=in_specs,
        out_specs=pl.BlockSpec((None, C, out_cols), lambda n: (n, 0, 0)),
        scratch_shapes=[pltpu.VMEM((9 * C, l1), jnp.float32),
                        pltpu.VMEM((9 * C, l2), jnp.float32),
                        pltpu.VMEM((9 * C, l3), jnp.float32)],
    )

    flops = 2 * N * (s0 * k0p * C
                     + (l1 + l2 + l3) * (9 * C) * C
                     + l1 * g2h * g2w * C + l2 * g3h * g3w * C + l3 * out_cols * C
                     + out_cols * C * C
                     + 5 * 2 * C * C2)
    bytes_accessed = int(cols.size * 4 + sum(int(wa.size) for wa in weights) * 4
                         + N * C * out_cols * 4)
    cost = pl.CostEstimate(flops=int(flops), transcendentals=int(N * 5 * C),
                           bytes_accessed=bytes_accessed)

    kernel = functools.partial(_c3ae_kernel, g1w=g1w, l1=l1, g2w=g2w, l2=l2,
                               g3w=g3w, l3=l3)

    out = pl.pallas_call(
        kernel,
        out_shape=jax.ShapeDtypeStruct((N, C, out_cols), jnp.float32),
        grid_spec=grid_spec,
        compiler_params=pltpu.CompilerParams(
            dimension_semantics=("parallel",),
            vmem_limit_bytes=32 * 1024 * 1024),
        cost_estimate=cost,
    )(cols, *weights)

    return out.reshape(N, C, c3h, c3w)                    # NCHW, matches PyTorch


# ----------------------------------------------------------------------------
# Pure-JAX reference (PyTorch semantics) for validation
# ----------------------------------------------------------------------------
@jax.jit
def _reference_forward(x, p):
    x = x.astype(jnp.float32)

    def conv(h, w, b):
        y = jax.lax.conv_general_dilated(
            h, w.astype(jnp.float32), window_strides=(1, 1), padding="VALID",
            dimension_numbers=("NCHW", "OIHW", "NCHW"),
            precision=jax.lax.Precision.HIGHEST)
        return y + b.reshape(1, -1, 1, 1)

    def bn(h, i):
        s = p[f"bn{i}_gamma"] / jnp.sqrt(p[f"bn{i}_var"] + BN_EPS)
        t = p[f"bn{i}_beta"] - p[f"bn{i}_mean"] * s
        return h * s.reshape(1, -1, 1, 1) + t.reshape(1, -1, 1, 1)

    def hsw(h):
        return h * jnp.clip(h + 3.0, 0.0, 6.0) / 6.0

    def pool(h):
        n, c, hh, ww = h.shape
        hp, wp = hh // 2, ww // 2
        h = h[:, :, :2 * hp, :2 * wp].reshape(n, c, hp, 2, wp, 2)
        return h.mean(axis=(3, 5))

    def se(h, i):
        w1 = p[f"se{i}_w1"].reshape(C2, C)
        w2 = p[f"se{i}_w2"].reshape(C, C2)
        m = h.mean(axis=(2, 3))
        a = hsw(m @ w1.T + p[f"se{i}_b1"])
        s = jax.nn.sigmoid(a @ w2.T + p[f"se{i}_b2"])
        return h * s[:, :, None, None]

    h = x
    for i in range(3):
        h = se(pool(hsw(bn(conv(h, p[f"conv{i}_w"], p[f"conv{i}_b"]), i))), i)
    h = se(hsw(bn(conv(h, p["conv3_w"], p["conv3_b"]), 3)), 3)
    h = se(conv(h, p["conv4_w"], p["conv4_b"]), 4)
    return h


# ----------------------------------------------------------------------------
# Parameter init (PyTorch layouts; BN/bias values randomized to exercise paths)
# ----------------------------------------------------------------------------
def init_params(in_channels=3, seed=42):
    key = jax.random.PRNGKey(seed)
    ks = iter(jax.random.split(key, 64))
    p = {}
    conv_defs = [(C, in_channels, 3), (C, C, 3), (C, C, 3), (C, C, 3), (C, C, 1)]
    for i, (co, ci, k) in enumerate(conv_defs):
        std = (2.0 / (co * k * k)) ** 0.5
        p[f"conv{i}_w"] = std * jax.random.normal(next(ks), (co, ci, k, k), jnp.float32)
        p[f"conv{i}_b"] = 0.02 * jax.random.normal(next(ks), (co,), jnp.float32)
    for i in range(4):
        p[f"bn{i}_gamma"] = 1.0 + 0.1 * jax.random.normal(next(ks), (C,), jnp.float32)
        p[f"bn{i}_beta"] = 0.1 * jax.random.normal(next(ks), (C,), jnp.float32)
        p[f"bn{i}_mean"] = 0.1 * jax.random.normal(next(ks), (C,), jnp.float32)
        p[f"bn{i}_var"] = 1.0 + 0.1 * jnp.abs(jax.random.normal(next(ks), (C,), jnp.float32))
    for i in range(5):
        p[f"se{i}_w1"] = (2.0 / C2) ** 0.5 * jax.random.normal(next(ks), (C2, C, 1, 1), jnp.float32)
        p[f"se{i}_b1"] = 0.1 * jax.random.normal(next(ks), (C2,), jnp.float32)
        p[f"se{i}_w2"] = (2.0 / C) ** 0.5 * jax.random.normal(next(ks), (C, C2, 1, 1), jnp.float32)
        p[f"se{i}_b2"] = 0.1 * jax.random.normal(next(ks), (C,), jnp.float32)
    return p


if __name__ == "__main__":
    N, Cin, H, W = 2, 3, 48, 48
    x = jax.random.normal(jax.random.PRNGKey(0), (N, Cin, H, W), jnp.float32)
    params = init_params(in_channels=Cin)

    fwd = jax.jit(c3ae_forward)
    out = jax.block_until_ready(fwd(x, params))
    assert out.shape == (N, 32, 2, 2), out.shape
    assert bool(jnp.all(jnp.isfinite(out)))

    ref = jax.block_until_ready(_reference_forward(x, params))
    assert ref.shape == out.shape
    assert bool(jnp.allclose(out, ref, atol=5e-3, rtol=5e-2)), \
        float(jnp.max(jnp.abs(out - ref)))

    print("KERNEL_OK")
</pallas_src>

<mosaic_0001>
module attributes {stable_mosaic.version = 11 : i64} {
  func.func @_c3ae_kernel(%arg0: i32, %arg1: memref<1x32x2116xf32, #tpu.memory_space<vmem>>, %arg2: memref<32x32xf32, #tpu.memory_space<vmem>>, %arg3: memref<32x1xf32, #tpu.memory_space<vmem>>, %arg4: memref<32x288xf32, #tpu.memory_space<vmem>>, %arg5: memref<32x1xf32, #tpu.memory_space<vmem>>, %arg6: memref<32x288xf32, #tpu.memory_space<vmem>>, %arg7: memref<32x1xf32, #tpu.memory_space<vmem>>, %arg8: memref<32x288xf32, #tpu.memory_space<vmem>>, %arg9: memref<32x1xf32, #tpu.memory_space<vmem>>, %arg10: memref<32x32xf32, #tpu.memory_space<vmem>>, %arg11: memref<32x1xf32, #tpu.memory_space<vmem>>, %arg12: memref<16x32xf32, #tpu.memory_space<vmem>>, %arg13: memref<16x1xf32, #tpu.memory_space<vmem>>, %arg14: memref<32x16xf32, #tpu.memory_space<vmem>>, %arg15: memref<32x1xf32, #tpu.memory_space<vmem>>, %arg16: memref<16x32xf32, #tpu.memory_space<vmem>>, %arg17: memref<16x1xf32, #tpu.memory_space<vmem>>, %arg18: memref<32x16xf32, #tpu.memory_space<vmem>>, %arg19: memref<32x1xf32, #tpu.memory_space<vmem>>, %arg20: memref<16x32xf32, #tpu.memory_space<vmem>>, %arg21: memref<16x1xf32, #tpu.memory_space<vmem>>, %arg22: memref<32x16xf32, #tpu.memory_space<vmem>>, %arg23: memref<32x1xf32, #tpu.memory_space<vmem>>, %arg24: memref<16x32xf32, #tpu.memory_space<vmem>>, %arg25: memref<16x1xf32, #tpu.memory_space<vmem>>, %arg26: memref<32x16xf32, #tpu.memory_space<vmem>>, %arg27: memref<32x1xf32, #tpu.memory_space<vmem>>, %arg28: memref<16x32xf32, #tpu.memory_space<vmem>>, %arg29: memref<16x1xf32, #tpu.memory_space<vmem>>, %arg30: memref<32x16xf32, #tpu.memory_space<vmem>>, %arg31: memref<32x1xf32, #tpu.memory_space<vmem>>, %arg32: memref<481x100xf32, #tpu.memory_space<vmem>>, %arg33: memref<78x16xf32, #tpu.memory_space<vmem>>, %arg34: memref<6x4xf32, #tpu.memory_space<vmem>>, %arg35: memref<1x32x4xf32, #tpu.memory_space<vmem>>, %arg36: memref<288x481xf32, #tpu.memory_space<vmem>>, %arg37: memref<288x78xf32, #tpu.memory_space<vmem>>, %arg38: memref<288x6xf32, #tpu.memory_space<vmem>>) attributes {dimension_semantics = [#tpu.dimension_semantics<parallel>], iteration_bounds = array<i64: 2>, scalar_prefetch = 0 : i64, scratch_operands = 3 : i64, tpu.core_type = #tpu.core_type<tc>, window_params = [{transform_indices = @transform_0, window_bounds = array<i64: 1, 32, 2116>}, {pipeline_mode = #tpu.pipeline_mode<synchronous>, transform_indices = @transform_1, window_bounds = array<i64: 32, 32>}, {pipeline_mode = #tpu.pipeline_mode<synchronous>, transform_indices = @transform_2, window_bounds = array<i64: 32, 1>}, {pipeline_mode = #tpu.pipeline_mode<synchronous>, transform_indices = @transform_3, window_bounds = array<i64: 32, 288>}, {pipeline_mode = #tpu.pipeline_mode<synchronous>, transform_indices = @transform_4, window_bounds = array<i64: 32, 1>}, {pipeline_mode = #tpu.pipeline_mode<synchronous>, transform_indices = @transform_5, window_bounds = array<i64: 32, 288>}, {pipeline_mode = #tpu.pipeline_mode<synchronous>, transform_indices = @transform_6, window_bounds = array<i64: 32, 1>}, {pipeline_mode = #tpu.pipeline_mode<synchronous>, transform_indices = @transform_7, window_bounds = array<i64: 32, 288>}, {pipeline_mode = #tpu.pipeline_mode<synchronous>, transform_indices = @transform_8, window_bounds = array<i64: 32, 1>}, {pipeline_mode = #tpu.pipeline_mode<synchronous>, transform_indices = @transform_9, window_bounds = array<i64: 32, 32>}, {pipeline_mode = #tpu.pipeline_mode<synchronous>, transform_indices = @transform_10, window_bounds = array<i64: 32, 1>}, {pipeline_mode = #tpu.pipeline_mode<synchronous>, transform_indices = @transform_11, window_bounds = array<i64: 16, 32>}, {pipeline_mode = #tpu.pipeline_mode<synchronous>, transform_indices = @transform_12, window_bounds = array<i64: 16, 1>}, {pipeline_mode = #tpu.pipeline_mode<synchronous>, transform_indices = @transform_13, window_bounds = array<i64: 32, 16>}, {pipeline_mode = #tpu.pipeline_mode<synchronous>, transform_indices = @transform_14, window_bounds = array<i64: 32, 1>}, {pipeline_mode = #tpu.pipeline_mode<synchronous>, transform_indices = @transform_15, window_bounds = array<i64: 16, 32>}, {pipeline_mode = #tpu.pipeline_mode<synchronous>, transform_indices = @transform_16, window_bounds = array<i64: 16, 1>}, {pipeline_mode = #tpu.pipeline_mode<synchronous>, transform_indices = @transform_17, window_bounds = array<i64: 32, 16>}, {pipeline_mode = #tpu.pipeline_mode<synchronous>, transform_indices = @transform_18, window_bounds = array<i64: 32, 1>}, {pipeline_mode = #tpu.pipeline_mode<synchronous>, transform_indices = @transform_19, window_bounds = array<i64: 16, 32>}, {pipeline_mode = #tpu.pipeline_mode<synchronous>, transform_indices = @transform_20, window_bounds = array<i64: 16, 1>}, {pipeline_mode = #tpu.pipeline_mode<synchronous>, transform_indices = @transform_21, window_bounds = array<i64: 32, 16>}, {pipeline_mode = #tpu.pipeline_mode<synchronous>, transform_indices = @transform_22, window_bounds = array<i64: 32, 1>}, {pipeline_mode = #tpu.pipeline_mode<synchronous>, transform_indices = @transform_23, window_bounds = array<i64: 16, 32>}, {pipeline_mode = #tpu.pipeline_mode<synchronous>, transform_indices = @transform_24, window_bounds = array<i64: 16, 1>}, {pipeline_mode = #tpu.pipeline_mode<synchronous>, transform_indices = @transform_25, window_bounds = array<i64: 32, 16>}, {pipeline_mode = #tpu.pipeline_mode<synchronous>, transform_indices = @transform_26, window_bounds = array<i64: 32, 1>}, {pipeline_mode = #tpu.pipeline_mode<synchronous>, transform_indices = @transform_27, window_bounds = array<i64: 16, 32>}, {pipeline_mode = #tpu.pipeline_mode<synchronous>, transform_indices = @transform_28, window_bounds = array<i64: 16, 1>}, {pipeline_mode = #tpu.pipeline_mode<synchronous>, transform_indices = @transform_29, window_bounds = array<i64: 32, 16>}, {pipeline_mode = #tpu.pipeline_mode<synchronous>, transform_indices = @transform_30, window_bounds = array<i64: 32, 1>}, {pipeline_mode = #tpu.pipeline_mode<synchronous>, transform_indices = @transform_31, window_bounds = array<i64: 481, 100>}, {pipeline_mode = #tpu.pipeline_mode<synchronous>, transform_indices = @transform_32, window_bounds = array<i64: 78, 16>}, {pipeline_mode = #tpu.pipeline_mode<synchronous>, transform_indices = @transform_33, window_bounds = array<i64: 6, 4>}, {transform_indices = @transform_34, window_bounds = array<i64: 1, 32, 4>}]} {
    %c0 = arith.constant 0 : index
    %c0_0 = arith.constant 0 : index
    %0 = vector.load %arg2[%c0, %c0_0] : memref<32x32xf32, #tpu.memory_space<vmem>>, vector<32x32xf32>
    %c0_1 = arith.constant 0 : index
    %c0_2 = arith.constant 0 : index
    %c0_3 = arith.constant 0 : index
    %1 = vector.load %arg1[%c0_1, %c0_2, %c0_3] : memref<1x32x2116xf32, #tpu.memory_space<vmem>>, vector<1x32x2116xf32>
    %2 = vector.shape_cast %1 : vector<1x32x2116xf32> to vector<32x2116xf32>
    %cst = arith.constant dense<0.000000e+00> : vector<32x2116xf32>
    %3 = tpu.matmul %0, %2, %cst {dimension_numbers = #tpu.dot_dimension_numbers<[1], [0], [0], [1], [0, 0, 1, 1], [], []>} : vector<32x32xf32>, vector<32x2116xf32>, vector<32x2116xf32> -> vector<32x2116xf32>
    %c0_4 = arith.constant 0 : index
    %c0_5 = arith.constant 0 : index
    %4 = vector.load %arg3[%c0_4, %c0_5] : memref<32x1xf32, #tpu.memory_space<vmem>>, vector<32x1xf32>
    %5 = vector.broadcast %4 : vector<32x1xf32> to vector<32x2116xf32>
    %6 = arith.addf %3, %5 : vector<32x2116xf32>
    %cst_6 = arith.constant 3.000000e+00 : f32
    %7 = vector.broadcast %cst_6 : f32 to vector<32x2116xf32>
    %8 = arith.addf %6, %7 : vector<32x2116xf32>
    %cst_7 = arith.constant 0.000000e+00 : f32
    %cst_8 = arith.constant 6.000000e+00 : f32
    %9 = vector.broadcast %cst_7 : f32 to vector<32x2116xf32>
    %10 = arith.maximumf %9, %8 : vector<32x2116xf32>
    %11 = vector.broadcast %cst_8 : f32 to vector<32x2116xf32>
    %12 = arith.minimumf %11, %10 : vector<32x2116xf32>
    %13 = arith.mulf %6, %12 : vector<32x2116xf32>
    %cst_9 = arith.constant 0.166666672 : f32
    %14 = vector.broadcast %cst_9 : f32 to vector<32x2116xf32>
    %15 = arith.mulf %13, %14 : vector<32x2116xf32>
    %16 = vector.extract_strided_slice %15 {offsets = [0, 0], sizes = [32, 529], strides = [1, 1]} : vector<32x2116xf32> to vector<32x529xf32>
    %17 = vector.extract_strided_slice %15 {offsets = [0, 529], sizes = [32, 529], strides = [1, 1]} : vector<32x2116xf32> to vector<32x529xf32>
    %18 = arith.addf %16, %17 : vector<32x529xf32>
    %19 = vector.extract_strided_slice %15 {offsets = [0, 1058], sizes = [32, 529], strides = [1, 1]} : vector<32x2116xf32> to vector<32x529xf32>
    %20 = arith.addf %18, %19 : vector<32x529xf32>
    %21 = vector.extract_strided_slice %15 {offsets = [0, 1587], sizes = [32, 529], strides = [1, 1]} : vector<32x2116xf32> to vector<32x529xf32>
    %22 = arith.addf %20, %21 : vector<32x529xf32>
    %cst_10 = arith.constant 2.500000e-01 : f32
    %23 = vector.broadcast %cst_10 : f32 to vector<32x529xf32>
    %24 = arith.mulf %23, %22 : vector<32x529xf32>
    %cst_11 = arith.constant dense<0.000000e+00> : vector<32xf32>
    %25 = vector.multi_reduction <add>, %24, %cst_11 [1] : vector<32x529xf32> to vector<32xf32>
    %26 = vector.shape_cast %25 : vector<32xf32> to vector<32x1xf32>
    %cst_12 = arith.constant 5.290000e+02 : f32
    %27 = vector.broadcast %cst_12 : f32 to vector<32x1xf32>
    %28 = arith.divf %26, %27 : vector<32x1xf32>
    %c0_13 = arith.constant 0 : index
    %c0_14 = arith.constant 0 : index
    %29 = vector.load %arg12[%c0_13, %c0_14] : memref<16x32xf32, #tpu.memory_space<vmem>>, vector<16x32xf32>
    %cst_15 = arith.constant dense<0.000000e+00> : vector<16x1xf32>
    %30 = tpu.matmul %29, %28, %cst_15 {dimension_numbers = #tpu.dot_dimension_numbers<[1], [0], [0], [1], [0, 0, 1, 1], [], []>} : vector<16x32xf32>, vector<32x1xf32>, vector<16x1xf32> -> vector<16x1xf32>
    %c0_16 = arith.constant 0 : index
    %c0_17 = arith.constant 0 : index
    %31 = vector.load %arg13[%c0_16, %c0_17] : memref<16x1xf32, #tpu.memory_space<vmem>>, vector<16x1xf32>
    %32 = arith.addf %30, %31 : vector<16x1xf32>
    %cst_18 = arith.constant 3.000000e+00 : f32
    %33 = vector.broadcast %cst_18 : f32 to vector<16x1xf32>
    %34 = arith.addf %32, %33 : vector<16x1xf32>
    %cst_19 = arith.constant 0.000000e+00 : f32
    %cst_20 = arith.constant 6.000000e+00 : f32
    %35 = vector.broadcast %cst_19 : f32 to vector<16x1xf32>
    %36 = arith.maximumf %35, %34 : vector<16x1xf32>
    %37 = vector.broadcast %cst_20 : f32 to vector<16x1xf32>
    %38 = arith.minimumf %37, %36 : vector<16x1xf32>
    %39 = arith.mulf %32, %38 : vector<16x1xf32>
    %cst_21 = arith.constant 0.166666672 : f32
    %40 = vector.broadcast %cst_21 : f32 to vector<16x1xf32>
    %41 = arith.mulf %39, %40 : vector<16x1xf32>
    %c0_22 = arith.constant 0 : index
    %c0_23 = arith.constant 0 : index
    %42 = vector.load %arg14[%c0_22, %c0_23] : memref<32x16xf32, #tpu.memory_space<vmem>>, vector<32x16xf32>
    %cst_24 = arith.constant dense<0.000000e+00> : vector<32x1xf32>
    %43 = tpu.matmul %42, %41, %cst_24 {dimension_numbers = #tpu.dot_dimension_numbers<[1], [0], [0], [1], [0, 0, 1, 1], [], []>} : vector<32x16xf32>, vector<16x1xf32>, vector<32x1xf32> -> vector<32x1xf32>
    %c0_25 = arith.constant 0 : index
    %c0_26 = arith.constant 0 : index
    %44 = vector.load %arg15[%c0_25, %c0_26] : memref<32x1xf32, #tpu.memory_space<vmem>>, vector<32x1xf32>
    %45 = arith.addf %43, %44 : vector<32x1xf32>
    %46 = arith.negf %45 : vector<32x1xf32>
    %47 = math.exp %46 : vector<32x1xf32>
    %cst_27 = arith.constant 1.000000e+00 : f32
    %48 = vector.broadcast %cst_27 : f32 to vector<32x1xf32>
    %49 = arith.addf %48, %47 : vector<32x1xf32>
    %50 = arith.divf %48, %49 : vector<32x1xf32>
    %51 = vector.broadcast %50 : vector<32x1xf32> to vector<32x529xf32>
    %52 = arith.mulf %24, %51 : vector<32x529xf32>
    %53 = vector.extract_strided_slice %52 {offsets = [0, 0], sizes = [32, 481], strides = [1, 1]} : vector<32x529xf32> to vector<32x481xf32>
    %c0_28 = arith.constant 0 : index
    %c0_29 = arith.constant 0 : index
    %54 = vector.load %arg36[%c0_28, %c0_29] : memref<288x481xf32, #tpu.memory_space<vmem>>, vector<32x481xf32>
    tpu.vector_store %arg36[%c0_28, %c0_29], %53 {strides = array<i32>} : memref<288x481xf32, #tpu.memory_space<vmem>>, vector<32x481xf32>,
    %55 = vector.extract_strided_slice %52 {offsets = [0, 1], sizes = [32, 481], strides = [1, 1]} : vector<32x529xf32> to vector<32x481xf32>
    %c32 = arith.constant 32 : index
    %c0_30 = arith.constant 0 : index
    %56 = vector.load %arg36[%c32, %c0_30] : memref<288x481xf32, #tpu.memory_space<vmem>>, vector<32x481xf32>
    tpu.vector_store %arg36[%c32, %c0_30], %55 {strides = array<i32>} : memref<288x481xf32, #tpu.memory_space<vmem>>, vector<32x481xf32>,
    %57 = vector.extract_strided_slice %52 {offsets = [0, 2], sizes = [32, 481], strides = [1, 1]} : vector<32x529xf32> to vector<32x481xf32>
    %c64 = arith.constant 64 : index
    %c0_31 = arith.constant 0 : index
    %58 = vector.load %arg36[%c64, %c0_31] : memref<288x481xf32, #tpu.memory_space<vmem>>, vector<32x481xf32>
    tpu.vector_store %arg36[%c64, %c0_31], %57 {strides = array<i32>} : memref<288x481xf32, #tpu.memory_space<vmem>>, vector<32x481xf32>,
    %59 = vector.extract_strided_slice %52 {offsets = [0, 23], sizes = [32, 481], strides = [1, 1]} : vector<32x529xf32> to vector<32x481xf32>
    %c96 = arith.constant 96 : index
    %c0_32 = arith.constant 0 : index
    %60 = vector.load %arg36[%c96, %c0_32] : memref<288x481xf32, #tpu.memory_space<vmem>>, vector<32x481xf32>
    tpu.vector_store %arg36[%c96, %c0_32], %59 {strides = array<i32>} : memref<288x481xf32, #tpu.memory_space<vmem>>, vector<32x481xf32>,
    %61 = vector.extract_strided_slice %52 {offsets = [0, 24], sizes = [32, 481], strides = [1, 1]} : vector<32x529xf32> to vector<32x481xf32>
    %c128 = arith.constant 128 : index
    %c0_33 = arith.constant 0 : index
    %62 = vector.load %arg36[%c128, %c0_33] : memref<288x481xf32, #tpu.memory_space<vmem>>, vector<32x481xf32>
    tpu.vector_store %arg36[%c128, %c0_33], %61 {strides = array<i32>} : memref<288x481xf32, #tpu.memory_space<vmem>>, vector<32x481xf32>,
    %63 = vector.extract_strided_slice %52 {offsets = [0, 25], sizes = [32, 481], strides = [1, 1]} : vector<32x529xf32> to vector<32x481xf32>
    %c160 = arith.constant 160 : index
    %c0_34 = arith.constant 0 : index
    %64 = vector.load %arg36[%c160, %c0_34] : memref<288x481xf32, #tpu.memory_space<vmem>>, vector<32x481xf32>
    tpu.vector_store %arg36[%c160, %c0_34], %63 {strides = array<i32>} : memref<288x481xf32, #tpu.memory_space<vmem>>, vector<32x481xf32>,
    %65 = vector.extract_strided_slice %52 {offsets = [0, 46], sizes = [32, 481], strides = [1, 1]} : vector<32x529xf32> to vector<32x481xf32>
    %c192 = arith.constant 192 : index
    %c0_35 = arith.constant 0 : index
    %66 = vector.load %arg36[%c192, %c0_35] : memref<288x481xf32, #tpu.memory_space<vmem>>, vector<32x481xf32>
    tpu.vector_store %arg36[%c192, %c0_35], %65 {strides = array<i32>} : memref<288x481xf32, #tpu.memory_space<vmem>>, vector<32x481xf32>,
    %67 = vector.extract_strided_slice %52 {offsets = [0, 47], sizes = [32, 481], strides = [1, 1]} : vector<32x529xf32> to vector<32x481xf32>
    %c224 = arith.constant 224 : index
    %c0_36 = arith.constant 0 : index
    %68 = vector.load %arg36[%c224, %c0_36] : memref<288x481xf32, #tpu.memory_space<vmem>>, vector<32x481xf32>
    tpu.vector_store %arg36[%c224, %c0_36], %67 {strides = array<i32>} : memref<288x481xf32, #tpu.memory_space<vmem>>, vector<32x481xf32>,
    %69 = vector.extract_strided_slice %52 {offsets = [0, 48], sizes = [32, 481], strides = [1, 1]} : vector<32x529xf32> to vector<32x481xf32>
    %c256 = arith.constant 256 : index
    %c0_37 = arith.constant 0 : index
    %70 = vector.load %arg36[%c256, %c0_37] : memref<288x481xf32, #tpu.memory_space<vmem>>, vector<32x481xf32>
    tpu.vector_store %arg36[%c256, %c0_37], %69 {strides = array<i32>} : memref<288x481xf32, #tpu.memory_space<vmem>>, vector<32x481xf32>,
    %c0_38 = arith.constant 0 : index
    %c0_39 = arith.constant 0 : index
    %71 = vector.load %arg4[%c0_38, %c0_39] : memref<32x288xf32, #tpu.memory_space<vmem>>, vector<32x288xf32>
    %c0_40 = arith.constant 0 : index
    %c0_41 = arith.constant 0 : index
    %72 = vector.load %arg36[%c0_40, %c0_41] : memref<288x481xf32, #tpu.memory_space<vmem>>, vector<288x481xf32>
    %cst_42 = arith.constant dense<0.000000e+00> : vector<32x481xf32>
    %73 = tpu.matmul %71, %72, %cst_42 {dimension_numbers = #tpu.dot_dimension_numbers<[1], [0], [0], [1], [0, 0, 1, 1], [], []>} : vector<32x288xf32>, vector<288x481xf32>, vector<32x481xf32> -> vector<32x481xf32>
    %c0_43 = arith.constant 0 : index
    %c0_44 = arith.constant 0 : index
    %74 = vector.load %arg5[%c0_43, %c0_44] : memref<32x1xf32, #tpu.memory_space<vmem>>, vector<32x1xf32>
    %75 = vector.broadcast %74 : vector<32x1xf32> to vector<32x481xf32>
    %76 = arith.addf %73, %75 : vector<32x481xf32>
    %cst_45 = arith.constant 3.000000e+00 : f32
    %77 = vector.broadcast %cst_45 : f32 to vector<32x481xf32>
    %78 = arith.addf %76, %77 : vector<32x481xf32>
    %cst_46 = arith.constant 0.000000e+00 : f32
    %cst_47 = arith.constant 6.000000e+00 : f32
    %79 = vector.broadcast %cst_46 : f32 to vector<32x481xf32>
    %80 = arith.maximumf %79, %78 : vector<32x481xf32>
    %81 = vector.broadcast %cst_47 : f32 to vector<32x481xf32>
    %82 = arith.minimumf %81, %80 : vector<32x481xf32>
    %83 = arith.mulf %76, %82 : vector<32x481xf32>
    %cst_48 = arith.constant 0.166666672 : f32
    %84 = vector.broadcast %cst_48 : f32 to vector<32x481xf32>
    %85 = arith.mulf %83, %84 : vector<32x481xf32>
    %c0_49 = arith.constant 0 : index
    %c0_50 = arith.constant 0 : index
    %86 = vector.load %arg32[%c0_49, %c0_50] : memref<481x100xf32, #tpu.memory_space<vmem>>, vector<481x100xf32>
    %cst_51 = arith.constant dense<0.000000e+00> : vector<32x100xf32>
    %87 = tpu.matmul %85, %86, %cst_51 {dimension_numbers = #tpu.dot_dimension_numbers<[1], [0], [0], [1], [0, 0, 1, 1], [], []>} : vector<32x481xf32>, vector<481x100xf32>, vector<32x100xf32> -> vector<32x100xf32>
    %cst_52 = arith.constant dense<0.000000e+00> : vector<32xf32>
    %88 = vector.multi_reduction <add>, %87, %cst_52 [1] : vector<32x100xf32> to vector<32xf32>
    %89 = vector.shape_cast %88 : vector<32xf32> to vector<32x1xf32>
    %cst_53 = arith.constant 1.000000e+02 : f32
    %90 = vector.broadcast %cst_53 : f32 to vector<32x1xf32>
    %91 = arith.divf %89, %90 : vector<32x1xf32>
    %c0_54 = arith.constant 0 : index
    %c0_55 = arith.constant 0 : index
    %92 = vector.load %arg16[%c0_54, %c0_55] : memref<16x32xf32, #tpu.memory_space<vmem>>, vector<16x32xf32>
    %cst_56 = arith.constant dense<0.000000e+00> : vector<16x1xf32>
    %93 = tpu.matmul %92, %91, %cst_56 {dimension_numbers = #tpu.dot_dimension_numbers<[1], [0], [0], [1], [0, 0, 1, 1], [], []>} : vector<16x32xf32>, vector<32x1xf32>, vector<16x1xf32> -> vector<16x1xf32>
    %c0_57 = arith.constant 0 : index
    %c0_58 = arith.constant 0 : index
    %94 = vector.load %arg17[%c0_57, %c0_58] : memref<16x1xf32, #tpu.memory_space<vmem>>, vector<16x1xf32>
    %95 = arith.addf %93, %94 : vector<16x1xf32>
    %cst_59 = arith.constant 3.000000e+00 : f32
    %96 = vector.broadcast %cst_59 : f32 to vector<16x1xf32>
    %97 = arith.addf %95, %96 : vector<16x1xf32>
    %cst_60 = arith.constant 0.000000e+00 : f32
    %cst_61 = arith.constant 6.000000e+00 : f32
    %98 = vector.broadcast %cst_60 : f32 to vector<16x1xf32>
    %99 = arith.maximumf %98, %97 : vector<16x1xf32>
    %100 = vector.broadcast %cst_61 : f32 to vector<16x1xf32>
    %101 = arith.minimumf %100, %99 : vector<16x1xf32>
    %102 = arith.mulf %95, %101 : vector<16x1xf32>
    %cst_62 = arith.constant 0.166666672 : f32
    %103 = vector.broadcast %cst_62 : f32 to vector<16x1xf32>
    %104 = arith.mulf %102, %103 : vector<16x1xf32>
    %c0_63 = arith.constant 0 : index
    %c0_64 = arith.constant 0 : index
    %105 = vector.load %arg18[%c0_63, %c0_64] : memref<32x16xf32, #tpu.memory_space<vmem>>, vector<32x16xf32>
    %cst_65 = arith.constant dense<0.000000e+00> : vector<32x1xf32>
    %106 = tpu.matmul %105, %104, %cst_65 {dimension_numbers = #tpu.dot_dimension_numbers<[1], [0], [0], [1], [0, 0, 1, 1], [], []>} : vector<32x16xf32>, vector<16x1xf32>, vector<32x1xf32> -> vector<32x1xf32>
    %c0_66 = arith.constant 0 : index
    %c0_67 = arith.constant 0 : index
    %107 = vector.load %arg19[%c0_66, %c0_67] : memref<32x1xf32, #tpu.memory_space<vmem>>, vector<32x1xf32>
    %108 = arith.addf %106, %107 : vector<32x1xf32>
    %109 = arith.negf %108 : vector<32x1xf32>
    %110 = math.exp %109 : vector<32x1xf32>
    %cst_68 = arith.constant 1.000000e+00 : f32
    %111 = vector.broadcast %cst_68 : f32 to vector<32x1xf32>
    %112 = arith.addf %111, %110 : vector<32x1xf32>
    %113 = arith.divf %111, %112 : vector<32x1xf32>
    %114 = vector.broadcast %113 : vector<32x1xf32> to vector<32x100xf32>
    %115 = arith.mulf %87, %114 : vector<32x100xf32>
    %116 = vector.extract_strided_slice %115 {offsets = [0, 0], sizes = [32, 78], strides = [1, 1]} : vector<32x100xf32> to vector<32x78xf32>
    %c0_69 = arith.constant 0 : index
    %c0_70 = arith.constant 0 : index
    %117 = vector.load %arg37[%c0_69, %c0_70] : memref<288x78xf32, #tpu.memory_space<vmem>>, vector<32x78xf32>
    tpu.vector_store %arg37[%c0_69, %c0_70], %116 {strides = array<i32>} : memref<288x78xf32, #tpu.memory_space<vmem>>, vector<32x78xf32>,
    %118 = vector.extract_strided_slice %115 {offsets = [0, 1], sizes = [32, 78], strides = [1, 1]} : vector<32x100xf32> to vector<32x78xf32>
    %c32_71 = arith.constant 32 : index
    %c0_72 = arith.constant 0 : index
    %119 = vector.load %arg37[%c32_71, %c0_72] : memref<288x78xf32, #tpu.memory_space<vmem>>, vector<32x78xf32>
    tpu.vector_store %arg37[%c32_71, %c0_72], %118 {strides = array<i32>} : memref<288x78xf32, #tpu.memory_space<vmem>>, vector<32x78xf32>,
    %120 = vector.extract_strided_slice %115 {offsets = [0, 2], sizes = [32, 78], strides = [1, 1]} : vector<32x100xf32> to vector<32x78xf32>
    %c64_73 = arith.constant 64 : index
    %c0_74 = arith.constant 0 : index
    %121 = vector.load %arg37[%c64_73, %c0_74] : memref<288x78xf32, #tpu.memory_space<vmem>>, vector<32x78xf32>
    tpu.vector_store %arg37[%c64_73, %c0_74], %120 {strides = array<i32>} : memref<288x78xf32, #tpu.memory_space<vmem>>, vector<32x78xf32>,
    %122 = vector.extract_strided_slice %115 {offsets = [0, 10], sizes = [32, 78], strides = [1, 1]} : vector<32x100xf32> to vector<32x78xf32>
    %c96_75 = arith.constant 96 : index
    %c0_76 = arith.constant 0 : index
    %123 = vector.load %arg37[%c96_75, %c0_76] : memref<288x78xf32, #tpu.memory_space<vmem>>, vector<32x78xf32>
    tpu.vector_store %arg37[%c96_75, %c0_76], %122 {strides = array<i32>} : memref<288x78xf32, #tpu.memory_space<vmem>>, vector<32x78xf32>,
    %124 = vector.extract_strided_slice %115 {offsets = [0, 11], sizes = [32, 78], strides = [1, 1]} : vector<32x100xf32> to vector<32x78xf32>
    %c128_77 = arith.constant 128 : index
    %c0_78 = arith.constant 0 : index
    %125 = vector.load %arg37[%c128_77, %c0_78] : memref<288x78xf32, #tpu.memory_space<vmem>>, vector<32x78xf32>
    tpu.vector_store %arg37[%c128_77, %c0_78], %124 {strides = array<i32>} : memref<288x78xf32, #tpu.memory_space<vmem>>, vector<32x78xf32>,
    %126 = vector.extract_strided_slice %115 {offsets = [0, 12], sizes = [32, 78], strides = [1, 1]} : vector<32x100xf32> to vector<32x78xf32>
    %c160_79 = arith.constant 160 : index
    %c0_80 = arith.constant 0 : index
    %127 = vector.load %arg37[%c160_79, %c0_80] : memref<288x78xf32, #tpu.memory_space<vmem>>, vector<32x78xf32>
    tpu.vector_store %arg37[%c160_79, %c0_80], %126 {strides = array<i32>} : memref<288x78xf32, #tpu.memory_space<vmem>>, vector<32x78xf32>,
    %128 = vector.extract_strided_slice %115 {offsets = [0, 20], sizes = [32, 78], strides = [1, 1]} : vector<32x100xf32> to vector<32x78xf32>
    %c192_81 = arith.constant 192 : index
    %c0_82 = arith.constant 0 : index
    %129 = vector.load %arg37[%c192_81, %c0_82] : memref<288x78xf32, #tpu.memory_space<vmem>>, vector<32x78xf32>
    tpu.vector_store %arg37[%c192_81, %c0_82], %128 {strides = array<i32>} : memref<288x78xf32, #tpu.memory_space<vmem>>, vector<32x78xf32>,
    %130 = vector.extract_strided_slice %115 {offsets = [0, 21], sizes = [32, 78], strides = [1, 1]} : vector<32x100xf32> to vector<32x78xf32>
    %c224_83 = arith.constant 224 : index
    %c0_84 = arith.constant 0 : index
    %131 = vector.load %arg37[%c224_83, %c0_84] : memref<288x78xf32, #tpu.memory_space<vmem>>, vector<32x78xf32>
    tpu.vector_store %arg37[%c224_83, %c0_84], %130 {strides = array<i32>} : memref<288x78xf32, #tpu.memory_space<vmem>>, vector<32x78xf32>,
    %132 = vector.extract_strided_slice %115 {offsets = [0, 22], sizes = [32, 78], strides = [1, 1]} : vector<32x100xf32> to vector<32x78xf32>
    %c256_85 = arith.constant 256 : index
    %c0_86 = arith.constant 0 : index
    %133 = vector.load %arg37[%c256_85, %c0_86] : memref<288x78xf32, #tpu.memory_space<vmem>>, vector<32x78xf32>
    tpu.vector_store %arg37[%c256_85, %c0_86], %132 {strides = array<i32>} : memref<288x78xf32, #tpu.memory_space<vmem>>, vector<32x78xf32>,
    %c0_87 = arith.constant 0 : index
    %c0_88 = arith.constant 0 : index
    %134 = vector.load %arg6[%c0_87, %c0_88] : memref<32x288xf32, #tpu.memory_space<vmem>>, vector<32x288xf32>
    %c0_89 = arith.constant 0 : index
    %c0_90 = arith.constant 0 : index
    %135 = vector.load %arg37[%c0_89, %c0_90] : memref<288x78xf32, #tpu.memory_space<vmem>>, vector<288x78xf32>
    %cst_91 = arith.constant dense<0.000000e+00> : vector<32x78xf32>
    %136 = tpu.matmul %134, %135, %cst_91 {dimension_numbers = #tpu.dot_dimension_numbers<[1], [0], [0], [1], [0, 0, 1, 1], [], []>} : vector<32x288xf32>, vector<288x78xf32>, vector<32x78xf32> -> vector<32x78xf32>
    %c0_92 = arith.constant 0 : index
    %c0_93 = arith.constant 0 : index
    %137 = vector.load %arg7[%c0_92, %c0_93] : memref<32x1xf32, #tpu.memory_space<vmem>>, vector<32x1xf32>
    %138 = vector.broadcast %137 : vector<32x1xf32> to vector<32x78xf32>
    %139 = arith.addf %136, %138 : vector<32x78xf32>
    %cst_94 = arith.constant 3.000000e+00 : f32
    %140 = vector.broadcast %cst_94 : f32 to vector<32x78xf32>
    %141 = arith.addf %139, %140 : vector<32x78xf32>
    %cst_95 = arith.constant 0.000000e+00 : f32
    %cst_96 = arith.constant 6.000000e+00 : f32
    %142 = vector.broadcast %cst_95 : f32 to vector<32x78xf32>
    %143 = arith.maximumf %142, %141 : vector<32x78xf32>
    %144 = vector.broadcast %cst_96 : f32 to vector<32x78xf32>
    %145 = arith.minimumf %144, %143 : vector<32x78xf32>
    %146 = arith.mulf %139, %145 : vector<32x78xf32>
    %cst_97 = arith.constant 0.166666672 : f32
    %147 = vector.broadcast %cst_97 : f32 to vector<32x78xf32>
    %148 = arith.mulf %146, %147 : vector<32x78xf32>
    %c0_98 = arith.constant 0 : index
    %c0_99 = arith.constant 0 : index
    %149 = vector.load %arg33[%c0_98, %c0_99] : memref<78x16xf32, #tpu.memory_space<vmem>>, vector<78x16xf32>
    %cst_100 = arith.constant dense<0.000000e+00> : vector<32x16xf32>
    %150 = tpu.matmul %148, %149, %cst_100 {dimension_numbers = #tpu.dot_dimension_numbers<[1], [0], [0], [1], [0, 0, 1, 1], [], []>} : vector<32x78xf32>, vector<78x16xf32>, vector<32x16xf32> -> vector<32x16xf32>
    %cst_101 = arith.constant dense<0.000000e+00> : vector<32xf32>
    %151 = vector.multi_reduction <add>, %150, %cst_101 [1] : vector<32x16xf32> to vector<32xf32>
    %152 = vector.shape_cast %151 : vector<32xf32> to vector<32x1xf32>
    %cst_102 = arith.constant 1.600000e+01 : f32
    %153 = vector.broadcast %cst_102 : f32 to vector<32x1xf32>
    %154 = arith.divf %152, %153 : vector<32x1xf32>
    %c0_103 = arith.constant 0 : index
    %c0_104 = arith.constant 0 : index
    %155 = vector.load %arg20[%c0_103, %c0_104] : memref<16x32xf32, #tpu.memory_space<vmem>>, vector<16x32xf32>
    %cst_105 = arith.constant dense<0.000000e+00> : vector<16x1xf32>
    %156 = tpu.matmul %155, %154, %cst_105 {dimension_numbers = #tpu.dot_dimension_numbers<[1], [0], [0], [1], [0, 0, 1, 1], [], []>} : vector<16x32xf32>, vector<32x1xf32>, vector<16x1xf32> -> vector<16x1xf32>
    %c0_106 = arith.constant 0 : index
    %c0_107 = arith.constant 0 : index
    %157 = vector.load %arg21[%c0_106, %c0_107] : memref<16x1xf32, #tpu.memory_space<vmem>>, vector<16x1xf32>
    %158 = arith.addf %156, %157 : vector<16x1xf32>
    %cst_108 = arith.constant 3.000000e+00 : f32
    %159 = vector.broadcast %cst_108 : f32 to vector<16x1xf32>
    %160 = arith.addf %158, %159 : vector<16x1xf32>
    %cst_109 = arith.constant 0.000000e+00 : f32
    %cst_110 = arith.constant 6.000000e+00 : f32
    %161 = vector.broadcast %cst_109 : f32 to vector<16x1xf32>
    %162 = arith.maximumf %161, %160 : vector<16x1xf32>
    %163 = vector.broadcast %cst_110 : f32 to vector<16x1xf32>
    %164 = arith.minimumf %163, %162 : vector<16x1xf32>
    %165 = arith.mulf %158, %164 : vector<16x1xf32>
    %cst_111 = arith.constant 0.166666672 : f32
    %166 = vector.broadcast %cst_111 : f32 to vector<16x1xf32>
    %167 = arith.mulf %165, %166 : vector<16x1xf32>
    %c0_112 = arith.constant 0 : index
    %c0_113 = arith.constant 0 : index
    %168 = vector.load %arg22[%c0_112, %c0_113] : memref<32x16xf32, #tpu.memory_space<vmem>>, vector<32x16xf32>
    %cst_114 = arith.constant dense<0.000000e+00> : vector<32x1xf32>
    %169 = tpu.matmul %168, %167, %cst_114 {dimension_numbers = #tpu.dot_dimension_numbers<[1], [0], [0], [1], [0, 0, 1, 1], [], []>} : vector<32x16xf32>, vector<16x1xf32>, vector<32x1xf32> -> vector<32x1xf32>
    %c0_115 = arith.constant 0 : index
    %c0_116 = arith.constant 0 : index
    %170 = vector.load %arg23[%c0_115, %c0_116] : memref<32x1xf32, #tpu.memory_space<vmem>>, vector<32x1xf32>
    %171 = arith.addf %169, %170 : vector<32x1xf32>
    %172 = arith.negf %171 : vector<32x1xf32>
    %173 = math.exp %172 : vector<32x1xf32>
    %cst_117 = arith.constant 1.000000e+00 : f32
    %174 = vector.broadcast %cst_117 : f32 to vector<32x1xf32>
    %175 = arith.addf %174, %173 : vector<32x1xf32>
    %176 = arith.divf %174, %175 : vector<32x1xf32>
    %177 = vector.broadcast %176 : vector<32x1xf32> to vector<32x16xf32>
    %178 = arith.mulf %150, %177 : vector<32x16xf32>
    %179 = vector.extract_strided_slice %178 {offsets = [0, 0], sizes = [32, 6], strides = [1, 1]} : vector<32x16xf32> to vector<32x6xf32>
    %c0_118 = arith.constant 0 : index
    %c0_119 = arith.constant 0 : index
    %180 = vector.load %arg38[%c0_118, %c0_119] : memref<288x6xf32, #tpu.memory_space<vmem>>, vector<32x6xf32>
    tpu.vector_store %arg38[%c0_118, %c0_119], %179 {strides = array<i32>} : memref<288x6xf32, #tpu.memory_space<vmem>>, vector<32x6xf32>,
    %181 = vector.extract_strided_slice %178 {offsets = [0, 1], sizes = [32, 6], strides = [1, 1]} : vector<32x16xf32> to vector<32x6xf32>
    %c32_120 = arith.constant 32 : index
    %c0_121 = arith.constant 0 : index
    %182 = vector.load %arg38[%c32_120, %c0_121] : memref<288x6xf32, #tpu.memory_space<vmem>>, vector<32x6xf32>
    tpu.vector_store %arg38[%c32_120, %c0_121], %181 {strides = array<i32>} : memref<288x6xf32, #tpu.memory_space<vmem>>, vector<32x6xf32>,
    %183 = vector.extract_strided_slice %178 {offsets = [0, 2], sizes = [32, 6], strides = [1, 1]} : vector<32x16xf32> to vector<32x6xf32>
    %c64_122 = arith.constant 64 : index
    %c0_123 = arith.constant 0 : index
    %184 = vector.load %arg38[%c64_122, %c0_123] : memref<288x6xf32, #tpu.memory_space<vmem>>, vector<32x6xf32>
    tpu.vector_store %arg38[%c64_122, %c0_123], %183 {strides = array<i32>} : memref<288x6xf32, #tpu.memory_space<vmem>>, vector<32x6xf32>,
    %185 = vector.extract_strided_slice %178 {offsets = [0, 4], sizes = [32, 6], strides = [1, 1]} : vector<32x16xf32> to vector<32x6xf32>
    %c96_124 = arith.constant 96 : index
    %c0_125 = arith.constant 0 : index
    %186 = vector.load %arg38[%c96_124, %c0_125] : memref<288x6xf32, #tpu.memory_space<vmem>>, vector<32x6xf32>
    tpu.vector_store %arg38[%c96_124, %c0_125], %185 {strides = array<i32>} : memref<288x6xf32, #tpu.memory_space<vmem>>, vector<32x6xf32>,
    %187 = vector.extract_strided_slice %178 {offsets = [0, 5], sizes = [32, 6], strides = [1, 1]} : vector<32x16xf32> to vector<32x6xf32>
    %c128_126 = arith.constant 128 : index
    %c0_127 = arith.constant 0 : index
    %188 = vector.load %arg38[%c128_126, %c0_127] : memref<288x6xf32, #tpu.memory_space<vmem>>, vector<32x6xf32>
    tpu.vector_store %arg38[%c128_126, %c0_127], %187 {strides = array<i32>} : memref<288x6xf32, #tpu.memory_space<vmem>>, vector<32x6xf32>,
    %189 = vector.extract_strided_slice %178 {offsets = [0, 6], sizes = [32, 6], strides = [1, 1]} : vector<32x16xf32> to vector<32x6xf32>
    %c160_128 = arith.constant 160 : index
    %c0_129 = arith.constant 0 : index
    %190 = vector.load %arg38[%c160_128, %c0_129] : memref<288x6xf32, #tpu.memory_space<vmem>>, vector<32x6xf32>
    tpu.vector_store %arg38[%c160_128, %c0_129], %189 {strides = array<i32>} : memref<288x6xf32, #tpu.memory_space<vmem>>, vector<32x6xf32>,
    %191 = vector.extract_strided_slice %178 {offsets = [0, 8], sizes = [32, 6], strides = [1, 1]} : vector<32x16xf32> to vector<32x6xf32>
    %c192_130 = arith.constant 192 : index
    %c0_131 = arith.constant 0 : index
    %192 = vector.load %arg38[%c192_130, %c0_131] : memref<288x6xf32, #tpu.memory_space<vmem>>, vector<32x6xf32>
    tpu.vector_store %arg38[%c192_130, %c0_131], %191 {strides = array<i32>} : memref<288x6xf32, #tpu.memory_space<vmem>>, vector<32x6xf32>,
    %193 = vector.extract_strided_slice %178 {offsets = [0, 9], sizes = [32, 6], strides = [1, 1]} : vector<32x16xf32> to vector<32x6xf32>
    %c224_132 = arith.constant 224 : index
    %c0_133 = arith.constant 0 : index
    %194 = vector.load %arg38[%c224_132, %c0_133] : memref<288x6xf32, #tpu.memory_space<vmem>>, vector<32x6xf32>
    tpu.vector_store %arg38[%c224_132, %c0_133], %193 {strides = array<i32>} : memref<288x6xf32, #tpu.memory_space<vmem>>, vector<32x6xf32>,
    %195 = vector.extract_strided_slice %178 {offsets = [0, 10], sizes = [32, 6], strides = [1, 1]} : vector<32x16xf32> to vector<32x6xf32>
    %c256_134 = arith.constant 256 : index
    %c0_135 = arith.constant 0 : index
    %196 = vector.load %arg38[%c256_134, %c0_135] : memref<288x6xf32, #tpu.memory_space<vmem>>, vector<32x6xf32>
    tpu.vector_store %arg38[%c256_134, %c0_135], %195 {strides = array<i32>} : memref<288x6xf32, #tpu.memory_space<vmem>>, vector<32x6xf32>,
    %c0_136 = arith.constant 0 : index
    %c0_137 = arith.constant 0 : index
    %197 = vector.load %arg8[%c0_136, %c0_137] : memref<32x288xf32, #tpu.memory_space<vmem>>, vector<32x288xf32>
    %c0_138 = arith.constant 0 : index
    %c0_139 = arith.constant 0 : index
    %198 = vector.load %arg38[%c0_138, %c0_139] : memref<288x6xf32, #tpu.memory_space<vmem>>, vector<288x6xf32>
    %cst_140 = arith.constant dense<0.000000e+00> : vector<32x6xf32>
    %199 = tpu.matmul %197, %198, %cst_140 {dimension_numbers = #tpu.dot_dimension_numbers<[1], [0], [0], [1], [0, 0, 1, 1], [], []>} : vector<32x288xf32>, vector<288x6xf32>, vector<32x6xf32> -> vector<32x6xf32>
    %c0_141 = arith.constant 0 : index
    %c0_142 = arith.constant 0 : index
    %200 = vector.load %arg9[%c0_141, %c0_142] : memref<32x1xf32, #tpu.memory_space<vmem>>, vector<32x1xf32>
    %201 = vector.broadcast %200 : vector<32x1xf32> to vector<32x6xf32>
    %202 = arith.addf %199, %201 : vector<32x6xf32>
    %c0_143 = arith.constant 0 : index
    %c0_144 = arith.constant 0 : index
    %203 = vector.load %arg34[%c0_143, %c0_144] : memref<6x4xf32, #tpu.memory_space<vmem>>, vector<6x4xf32>
    %cst_145 = arith.constant dense<0.000000e+00> : vector<32x4xf32>
    %204 = tpu.matmul %202, %203, %cst_145 {dimension_numbers = #tpu.dot_dimension_numbers<[1], [0], [0], [1], [0, 0, 1, 1], [], []>} : vector<32x6xf32>, vector<6x4xf32>, vector<32x4xf32> -> vector<32x4xf32>
    %cst_146 = arith.constant 3.000000e+00 : f32
    %205 = vector.broadcast %cst_146 : f32 to vector<32x4xf32>
    %206 = arith.addf %204, %205 : vector<32x4xf32>
    %cst_147 = arith.constant 0.000000e+00 : f32
    %cst_148 = arith.constant 6.000000e+00 : f32
    %207 = vector.broadcast %cst_147 : f32 to vector<32x4xf32>
    %208 = arith.maximumf %207, %206 : vector<32x4xf32>
    %209 = vector.broadcast %cst_148 : f32 to vector<32x4xf32>
    %210 = arith.minimumf %209, %208 : vector<32x4xf32>
    %211 = arith.mulf %204, %210 : vector<32x4xf32>
    %cst_149 = arith.constant 0.166666672 : f32
    %212 = vector.broadcast %cst_149 : f32 to vector<32x4xf32>
    %213 = arith.mulf %211, %212 : vector<32x4xf32>
    %cst_150 = arith.constant dense<0.000000e+00> : vector<32xf32>
    %214 = vector.multi_reduction <add>, %213, %cst_150 [1] : vector<32x4xf32> to vector<32xf32>
    %215 = vector.shape_cast %214 : vector<32xf32> to vector<32x1xf32>
    %cst_151 = arith.constant 4.000000e+00 : f32
    %216 = vector.broadcast %cst_151 : f32 to vector<32x1xf32>
    %217 = arith.divf %215, %216 : vector<32x1xf32>
    %c0_152 = arith.constant 0 : index
    %c0_153 = arith.constant 0 : index
    %218 = vector.load %arg24[%c0_152, %c0_153] : memref<16x32xf32, #tpu.memory_space<vmem>>, vector<16x32xf32>
    %cst_154 = arith.constant dense<0.000000e+00> : vector<16x1xf32>
    %219 = tpu.matmul %218, %217, %cst_154 {dimension_numbers = #tpu.dot_dimension_numbers<[1], [0], [0], [1], [0, 0, 1, 1], [], []>} : vector<16x32xf32>, vector<32x1xf32>, vector<16x1xf32> -> vector<16x1xf32>
    %c0_155 = arith.constant 0 : index
    %c0_156 = arith.constant 0 : index
    %220 = vector.load %arg25[%c0_155, %c0_156] : memref<16x1xf32, #tpu.memory_space<vmem>>, vector<16x1xf32>
    %221 = arith.addf %219, %220 : vector<16x1xf32>
    %cst_157 = arith.constant 3.000000e+00 : f32
    %222 = vector.broadcast %cst_157 : f32 to vector<16x1xf32>
    %223 = arith.addf %221, %222 : vector<16x1xf32>
    %cst_158 = arith.constant 0.000000e+00 : f32
    %cst_159 = arith.constant 6.000000e+00 : f32
    %224 = vector.broadcast %cst_158 : f32 to vector<16x1xf32>
    %225 = arith.maximumf %224, %223 : vector<16x1xf32>
    %226 = vector.broadcast %cst_159 : f32 to vector<16x1xf32>
    %227 = arith.minimumf %226, %225 : vector<16x1xf32>
    %228 = arith.mulf %221, %227 : vector<16x1xf32>
    %cst_160 = arith.constant 0.166666672 : f32
    %229 = vector.broadcast %cst_160 : f32 to vector<16x1xf32>
    %230 = arith.mulf %228, %229 : vector<16x1xf32>
    %c0_161 = arith.constant 0 : index
    %c0_162 = arith.constant 0 : index
    %231 = vector.load %arg26[%c0_161, %c0_162] : memref<32x16xf32, #tpu.memory_space<vmem>>, vector<32x16xf32>
    %cst_163 = arith.constant dense<0.000000e+00> : vector<32x1xf32>
    %232 = tpu.matmul %231, %230, %cst_163 {dimension_numbers = #tpu.dot_dimension_numbers<[1], [0], [0], [1], [0, 0, 1, 1], [], []>} : vector<32x16xf32>, vector<16x1xf32>, vector<32x1xf32> -> vector<32x1xf32>
    %c0_164 = arith.constant 0 : index
    %c0_165 = arith.constant 0 : index
    %233 = vector.load %arg27[%c0_164, %c0_165] : memref<32x1xf32, #tpu.memory_space<vmem>>, vector<32x1xf32>
    %234 = arith.addf %232, %233 : vector<32x1xf32>
    %235 = arith.negf %234 : vector<32x1xf32>
    %236 = math.exp %235 : vector<32x1xf32>
    %cst_166 = arith.constant 1.000000e+00 : f32
    %237 = vector.broadcast %cst_166 : f32 to vector<32x1xf32>
    %238 = arith.addf %237, %236 : vector<32x1xf32>
    %239 = arith.divf %237, %238 : vector<32x1xf32>
    %240 = vector.broadcast %239 : vector<32x1xf32> to vector<32x4xf32>
    %241 = arith.mulf %213, %240 : vector<32x4xf32>
    %c0_167 = arith.constant 0 : index
    %c0_168 = arith.constant 0 : index
    %242 = vector.load %arg10[%c0_167, %c0_168] : memref<32x32xf32, #tpu.memory_space<vmem>>, vector<32x32xf32>
    %cst_169 = arith.constant dense<0.000000e+00> : vector<32x4xf32>
    %243 = tpu.matmul %242, %241, %cst_169 {dimension_numbers = #tpu.dot_dimension_numbers<[1], [0], [0], [1], [0, 0, 1, 1], [], []>} : vector<32x32xf32>, vector<32x4xf32>, vector<32x4xf32> -> vector<32x4xf32>
    %c0_170 = arith.constant 0 : index
    %c0_171 = arith.constant 0 : index
    %244 = vector.load %arg11[%c0_170, %c0_171] : memref<32x1xf32, #tpu.memory_space<vmem>>, vector<32x1xf32>
    %245 = vector.broadcast %244 : vector<32x1xf32> to vector<32x4xf32>
    %246 = arith.addf %243, %245 : vector<32x4xf32>
    %cst_172 = arith.constant dense<0.000000e+00> : vector<32xf32>
    %247 = vector.multi_reduction <add>, %246, %cst_172 [1] : vector<32x4xf32> to vector<32xf32>
    %248 = vector.shape_cast %247 : vector<32xf32> to vector<32x1xf32>
    %cst_173 = arith.constant 4.000000e+00 : f32
    %249 = vector.broadcast %cst_173 : f32 to vector<32x1xf32>
    %250 = arith.divf %248, %249 : vector<32x1xf32>
    %c0_174 = arith.constant 0 : index
    %c0_175 = arith.constant 0 : index
    %251 = vector.load %arg28[%c0_174, %c0_175] : memref<16x32xf32, #tpu.memory_space<vmem>>, vector<16x32xf32>
    %cst_176 = arith.constant dense<0.000000e+00> : vector<16x1xf32>
    %252 = tpu.matmul %251, %250, %cst_176 {dimension_numbers = #tpu.dot_dimension_numbers<[1], [0], [0], [1], [0, 0, 1, 1], [], []>} : vector<16x32xf32>, vector<32x1xf32>, vector<16x1xf32> -> vector<16x1xf32>
    %c0_177 = arith.constant 0 : index
    %c0_178 = arith.constant 0 : index
    %253 = vector.load %arg29[%c0_177, %c0_178] : memref<16x1xf32, #tpu.memory_space<vmem>>, vector<16x1xf32>
    %254 = arith.addf %252, %253 : vector<16x1xf32>
    %cst_179 = arith.constant 3.000000e+00 : f32
    %255 = vector.broadcast %cst_179 : f32 to vector<16x1xf32>
    %256 = arith.addf %254, %255 : vector<16x1xf32>
    %cst_180 = arith.constant 0.000000e+00 : f32
    %cst_181 = arith.constant 6.000000e+00 : f32
    %257 = vector.broadcast %cst_180 : f32 to vector<16x1xf32>
    %258 = arith.maximumf %257, %256 : vector<16x1xf32>
    %259 = vector.broadcast %cst_181 : f32 to vector<16x1xf32>
    %260 = arith.minimumf %259, %258 : vector<16x1xf32>
    %261 = arith.mulf %254, %260 : vector<16x1xf32>
    %cst_182 = arith.constant 0.166666672 : f32
    %262 = vector.broadcast %cst_182 : f32 to vector<16x1xf32>
    %263 = arith.mulf %261, %262 : vector<16x1xf32>
    %c0_183 = arith.constant 0 : index
    %c0_184 = arith.constant 0 : index
    %264 = vector.load %arg30[%c0_183, %c0_184] : memref<32x16xf32, #tpu.memory_space<vmem>>, vector<32x16xf32>
    %cst_185 = arith.constant dense<0.000000e+00> : vector<32x1xf32>
    %265 = tpu.matmul %264, %263, %cst_185 {dimension_numbers = #tpu.dot_dimension_numbers<[1], [0], [0], [1], [0, 0, 1, 1], [], []>} : vector<32x16xf32>, vector<16x1xf32>, vector<32x1xf32> -> vector<32x1xf32>
    %c0_186 = arith.constant 0 : index
    %c0_187 = arith.constant 0 : index
    %266 = vector.load %arg31[%c0_186, %c0_187] : memref<32x1xf32, #tpu.memory_space<vmem>>, vector<32x1xf32>
    %267 = arith.addf %265, %266 : vector<32x1xf32>
    %268 = arith.negf %267 : vector<32x1xf32>
    %269 = math.exp %268 : vector<32x1xf32>
    %cst_188 = arith.constant 1.000000e+00 : f32
    %270 = vector.broadcast %cst_188 : f32 to vector<32x1xf32>
    %271 = arith.addf %270, %269 : vector<32x1xf32>
    %272 = arith.divf %270, %271 : vector<32x1xf32>
    %273 = vector.broadcast %272 : vector<32x1xf32> to vector<32x4xf32>
    %274 = arith.mulf %246, %273 : vector<32x4xf32>
    %c0_189 = arith.constant 0 : index
    %c0_190 = arith.constant 0 : index
    %c0_191 = arith.constant 0 : index
    %275 = vector.load %arg35[%c0_189, %c0_190, %c0_191] : memref<1x32x4xf32, #tpu.memory_space<vmem>>, vector<1x32x4xf32>
    %276 = vector.shape_cast %275 : vector<1x32x4xf32> to vector<32x4xf32>
    %277 = vector.shape_cast %274 : vector<32x4xf32> to vector<1x32x4xf32>
    tpu.vector_store %arg35[%c0_189, %c0_190, %c0_191], %277 {strides = array<i32>} : memref<1x32x4xf32, #tpu.memory_space<vmem>>, vector<1x32x4xf32>,
    return
  }
  func.func @transform_0(%arg0: i32) -> (i32, i32, i32) {
    %c0_i32 = arith.constant 0 : i32
    %c0_i32_0 = arith.constant 0 : i32
    %c0_i32_1 = arith.constant 0 : i32
    return %arg0, %c0_i32, %c0_i32_0 : i32, i32, i32
  }
  func.func @transform_1(%arg0: i32) -> (i32, i32) {
    %c0_i32 = arith.constant 0 : i32
    %c0_i32_0 = arith.constant 0 : i32
    %c0_i32_1 = arith.constant 0 : i32
    return %c0_i32, %c0_i32_0 : i32, i32
  }
  func.func @transform_2(%arg0: i32) -> (i32, i32) {
    %c0_i32 = arith.constant 0 : i32
    %c0_i32_0 = arith.constant 0 : i32
    %c0_i32_1 = arith.constant 0 : i32
    return %c0_i32, %c0_i32_0 : i32, i32
  }
  func.func @transform_3(%arg0: i32) -> (i32, i32) {
    %c0_i32 = arith.constant 0 : i32
    %c0_i32_0 = arith.constant 0 : i32
    %c0_i32_1 = arith.constant 0 : i32
    return %c0_i32, %c0_i32_0 : i32, i32
  }
  func.func @transform_4(%arg0: i32) -> (i32, i32) {
    %c0_i32 = arith.constant 0 : i32
    %c0_i32_0 = arith.constant 0 : i32
    %c0_i32_1 = arith.constant 0 : i32
    return %c0_i32, %c0_i32_0 : i32, i32
  }
  func.func @transform_5(%arg0: i32) -> (i32, i32) {
    %c0_i32 = arith.constant 0 : i32
    %c0_i32_0 = arith.constant 0 : i32
    %c0_i32_1 = arith.constant 0 : i32
    return %c0_i32, %c0_i32_0 : i32, i32
  }
  func.func @transform_6(%arg0: i32) -> (i32, i32) {
    %c0_i32 = arith.constant 0 : i32
    %c0_i32_0 = arith.constant 0 : i32
    %c0_i32_1 = arith.constant 0 : i32
    return %c0_i32, %c0_i32_0 : i32, i32
  }
  func.func @transform_7(%arg0: i32) -> (i32, i32) {
    %c0_i32 = arith.constant 0 : i32
    %c0_i32_0 = arith.constant 0 : i32
    %c0_i32_1 = arith.constant 0 : i32
    return %c0_i32, %c0_i32_0 : i32, i32
  }
  func.func @transform_8(%arg0: i32) -> (i32, i32) {
    %c0_i32 = arith.constant 0 : i32
    %c0_i32_0 = arith.constant 0 : i32
    %c0_i32_1 = arith.constant 0 : i32
    return %c0_i32, %c0_i32_0 : i32, i32
  }
  func.func @transform_9(%arg0: i32) -> (i32, i32) {
    %c0_i32 = arith.constant 0 : i32
    %c0_i32_0 = arith.constant 0 : i32
    %c0_i32_1 = arith.constant 0 : i32
    return %c0_i32, %c0_i32_0 : i32, i32
  }
  func.func @transform_10(%arg0: i32) -> (i32, i32) {
    %c0_i32 = arith.constant 0 : i32
    %c0_i32_0 = arith.constant 0 : i32
    %c0_i32_1 = arith.constant 0 : i32
    return %c0_i32, %c0_i32_0 : i32, i32
  }
  func.func @transform_11(%arg0: i32) -> (i32, i32) {
    %c0_i32 = arith.constant 0 : i32
    %c0_i32_0 = arith.constant 0 : i32
    %c0_i32_1 = arith.constant 0 : i32
    return %c0_i32, %c0_i32_0 : i32, i32
  }
  func.func @transform_12(%arg0: i32) -> (i32, i32) {
    %c0_i32 = arith.constant 0 : i32
    %c0_i32_0 = arith.constant 0 : i32
    %c0_i32_1 = arith.constant 0 : i32
    return %c0_i32, %c0_i32_0 : i32, i32
  }
  func.func @transform_13(%arg0: i32) -> (i32, i32) {
    %c0_i32 = arith.constant 0 : i32
    %c0_i32_0 = arith.constant 0 : i32
    %c0_i32_1 = arith.constant 0 : i32
    return %c0_i32, %c0_i32_0 : i32, i32
  }
  func.func @transform_14(%arg0: i32) -> (i32, i32) {
    %c0_i32 = arith.constant 0 : i32
    %c0_i32_0 = arith.constant 0 : i32
    %c0_i32_1 = arith.constant 0 : i32
    return %c0_i32, %c0_i32_0 : i32, i32
  }
  func.func @transform_15(%arg0: i32) -> (i32, i32) {
    %c0_i32 = arith.constant 0 : i32
    %c0_i32_0 = arith.constant 0 : i32
    %c0_i32_1 = arith.constant 0 : i32
    return %c0_i32, %c0_i32_0 : i32, i32
  }
  func.func @transform_16(%arg0: i32) -> (i32, i32) {
    %c0_i32 = arith.constant 0 : i32
    %c0_i32_0 = arith.constant 0 : i32
    %c0_i32_1 = arith.constant 0 : i32
    return %c0_i32, %c0_i32_0 : i32, i32
  }
  func.func @transform_17(%arg0: i32) -> (i32, i32) {
    %c0_i32 = arith.constant 0 : i32
    %c0_i32_0 = arith.constant 0 : i32
    %c0_i32_1 = arith.constant 0 : i32
    return %c0_i32, %c0_i32_0 : i32, i32
  }
  func.func @transform_18(%arg0: i32) -> (i32, i32) {
    %c0_i32 = arith.constant 0 : i32
    %c0_i32_0 = arith.constant 0 : i32
    %c0_i32_1 = arith.constant 0 : i32
    return %c0_i32, %c0_i32_0 : i32, i32
  }
  func.func @transform_19(%arg0: i32) -> (i32, i32) {
    %c0_i32 = arith.constant 0 : i32
    %c0_i32_0 = arith.constant 0 : i32
    %c0_i32_1 = arith.constant 0 : i32
    return %c0_i32, %c0_i32_0 : i32, i32
  }
  func.func @transform_20(%arg0: i32) -> (i32, i32) {
    %c0_i32 = arith.constant 0 : i32
    %c0_i32_0 = arith.constant 0 : i32
    %c0_i32_1 = arith.constant 0 : i32
    return %c0_i32, %c0_i32_0 : i32, i32
  }
  func.func @transform_21(%arg0: i32) -> (i32, i32) {
    %c0_i32 = arith.constant 0 : i32
    %c0_i32_0 = arith.constant 0 : i32
    %c0_i32_1 = arith.constant 0 : i32
    return %c0_i32, %c0_i32_0 : i32, i32
  }
  func.func @transform_22(%arg0: i32) -> (i32, i32) {
    %c0_i32 = arith.constant 0 : i32
    %c0_i32_0 = arith.constant 0 : i32
    %c0_i32_1 = arith.constant 0 : i32
    return %c0_i32, %c0_i32_0 : i32, i32
  }
  func.func @transform_23(%arg0: i32) -> (i32, i32) {
    %c0_i32 = arith.constant 0 : i32
    %c0_i32_0 = arith.constant 0 : i32
    %c0_i32_1 = arith.constant 0 : i32
    return %c0_i32, %c0_i32_0 : i32, i32
  }
  func.func @transform_24(%arg0: i32) -> (i32, i32) {
    %c0_i32 = arith.constant 0 : i32
    %c0_i32_0 = arith.constant 0 : i32
    %c0_i32_1 = arith.constant 0 : i32
    return %c0_i32, %c0_i32_0 : i32, i32
  }
  func.func @transform_25(%arg0: i32) -> (i32, i32) {
    %c0_i32 = arith.constant 0 : i32
    %c0_i32_0 = arith.constant 0 : i32
    %c0_i32_1 = arith.constant 0 : i32
    return %c0_i32, %c0_i32_0 : i32, i32
  }
  func.func @transform_26(%arg0: i32) -> (i32, i32) {
    %c0_i32 = arith.constant 0 : i32
    %c0_i32_0 = arith.constant 0 : i32
    %c0_i32_1 = arith.constant 0 : i32
    return %c0_i32, %c0_i32_0 : i32, i32
  }
  func.func @transform_27(%arg0: i32) -> (i32, i32) {
    %c0_i32 = arith.constant 0 : i32
    %c0_i32_0 = arith.constant 0 : i32
    %c0_i32_1 = arith.constant 0 : i32
    return %c0_i32, %c0_i32_0 : i32, i32
  }
  func.func @transform_28(%arg0: i32) -> (i32, i32) {
    %c0_i32 = arith.constant 0 : i32
    %c0_i32_0 = arith.constant 0 : i32
    %c0_i32_1 = arith.constant 0 : i32
    return %c0_i32, %c0_i32_0 : i32, i32
  }
  func.func @transform_29(%arg0: i32) -> (i32, i32) {
    %c0_i32 = arith.constant 0 : i32
    %c0_i32_0 = arith.constant 0 : i32
    %c0_i32_1 = arith.constant 0 : i32
    return %c0_i32, %c0_i32_0 : i32, i32
  }
  func.func @transform_30(%arg0: i32) -> (i32, i32) {
    %c0_i32 = arith.constant 0 : i32
    %c0_i32_0 = arith.constant 0 : i32
    %c0_i32_1 = arith.constant 0 : i32
    return %c0_i32, %c0_i32_0 : i32, i32
  }
  func.func @transform_31(%arg0: i32) -> (i32, i32) {
    %c0_i32 = arith.constant 0 : i32
    %c0_i32_0 = arith.constant 0 : i32
    %c0_i32_1 = arith.constant 0 : i32
    return %c0_i32, %c0_i32_0 : i32, i32
  }
  func.func @transform_32(%arg0: i32) -> (i32, i32) {
    %c0_i32 = arith.constant 0 : i32
    %c0_i32_0 = arith.constant 0 : i32
    %c0_i32_1 = arith.constant 0 : i32
    return %c0_i32, %c0_i32_0 : i32, i32
  }
  func.func @transform_33(%arg0: i32) -> (i32, i32) {
    %c0_i32 = arith.constant 0 : i32
    %c0_i32_0 = arith.constant 0 : i32
    %c0_i32_1 = arith.constant 0 : i32
    return %c0_i32, %c0_i32_0 : i32, i32
  }
  func.func @transform_34(%arg0: i32) -> (i32, i32, i32) {
    %c0_i32 = arith.constant 0 : i32
    %c0_i32_0 = arith.constant 0 : i32
    %c0_i32_1 = arith.constant 0 : i32
    return %arg0, %c0_i32, %c0_i32_0 : i32, i32, i32
  }
}

</mosaic_0001>

<llo_original>
// kernel: c3ae_forward.1
$region0: #{c3ae_forward.1}
  #allocation0 [shape = 'u32[]', space=smem, size = 0x4, offset = 0x4, fixed_abs, tag = 'smem constant byte address 0x4 - core index']
  #allocation1 [shape = 'u32[72,128]{1,0:T(1,128)}', space=vmem, size = 0x9000, scoped, tag = 'internal scratch']
  #allocation2 [shape = 'f32[288,481]{1,0:T(8,128)}', space=vmem, size = 0x90000, scoped, tag = 'scratch operand']
  #allocation3 [shape = 'f32[288,78]{1,0:T(8,128)}', space=vmem, size = 0x24000, scoped, tag = 'scratch operand']
  #allocation4 [shape = 'f32[288,6]{1,0:T(8,128)}', space=vmem, size = 0x24000, scoped, tag = 'scratch operand']
  %s0 = inlined_call_operand.smem [shape: u32[35], index: -1, kind: input, shape index: {}]
  %s1 = sld [smem:[%s0]]
  %s2 = scalar_lea.smem %s0, 1
  %s3 = sld [smem:[%s2]]
  %s4 = scalar_lea.smem %s0, 2
  %s5 = sld [smem:[%s4]]
  %s6 = scalar_lea.smem %s0, 3
  %s7 = sld [smem:[%s6]]
  %s8 = scalar_lea.smem %s0, 4
  %s9 = sld [smem:[%s8]]
  %s10 = scalar_lea.smem %s0, 5
  %s11 = sld [smem:[%s10]]
  %s12 = scalar_lea.smem %s0, 6
  %s13 = sld [smem:[%s12]]
  %s14 = scalar_lea.smem %s0, 7
  %s15 = sld [smem:[%s14]]
  %s16 = scalar_lea.smem %s0, 8
  %s17 = sld [smem:[%s16]]
  %s18 = scalar_lea.smem %s0, 9
  %s19 = sld [smem:[%s18]]
  %s20 = scalar_lea.smem %s0, 10
  %s21 = sld [smem:[%s20]]
  %s22 = scalar_lea.smem %s0, 11
  %s23 = sld [smem:[%s22]]
  %s24 = scalar_lea.smem %s0, 12
  %s25 = sld [smem:[%s24]]
  %s26 = scalar_lea.smem %s0, 13
  %s27 = sld [smem:[%s26]]
  %s28 = scalar_lea.smem %s0, 14
  %s29 = sld [smem:[%s28]]
  %s30 = scalar_lea.smem %s0, 15
  %s31 = sld [smem:[%s30]]
  %s32 = scalar_lea.smem %s0, 16
  %s33 = sld [smem:[%s32]]
  %s34 = scalar_lea.smem %s0, 17
  %s35 = sld [smem:[%s34]]
  %s36 = scalar_lea.smem %s0, 18
  %s37 = sld [smem:[%s36]]
  %s38 = scalar_lea.smem %s0, 19
  %s39 = sld [smem:[%s38]]
  %s40 = scalar_lea.smem %s0, 20
  %s41 = sld [smem:[%s40]]
  %s42 = scalar_lea.smem %s0, 21
  %s43 = sld [smem:[%s42]]
  %s44 = scalar_lea.smem %s0, 22
  %s45 = sld [smem:[%s44]]
  %s46 = scalar_lea.smem %s0, 23
  %s47 = sld [smem:[%s46]]
  %s48 = scalar_lea.smem %s0, 24
  %s49 = sld [smem:[%s48]]
  %s50 = scalar_lea.smem %s0, 25
  %s51 = sld [smem:[%s50]]
  %s52 = scalar_lea.smem %s0, 26
  %s53 = sld [smem:[%s52]]
  %s54 = scalar_lea.smem %s0, 27
  %s55 = sld [smem:[%s54]]
  %s56 = scalar_lea.smem %s0, 28
  %s57 = sld [smem:[%s56]]
  %s58 = scalar_lea.smem %s0, 29
  %s59 = sld [smem:[%s58]]
  %s60 = scalar_lea.smem %s0, 30
  %s61 = sld [smem:[%s60]]
  %s62 = scalar_lea.smem %s0, 31
  %s63 = sld [smem:[%s62]]
  %s64 = scalar_lea.smem %s0, 32
  %s65 = sld [smem:[%s64]]
  %s66 = scalar_lea.smem %s0, 33
  %s67 = sld [smem:[%s66]]
  %s68 = scalar_lea.smem %s0, 34
  %s69 = sld [smem:[%s68]]
  %s70 = sld [smem:[#allocation0]]
  $region169: #{c3ae_forward.1} parent=0
    _
  %s72 = ssub.s32 1, %s70
  %s73 = scalar_select 0, %s72, %s70
  loop: start=0, step=1, limit=4
  $region2: #{c3ae_forward.1} parent=0 // loop_pre_header
    _
  $region3: #{c3ae_forward.1} parent=0 // loop_header
    %s75 = sphi 0, %s79
    %p76 = scmp.ge.s32.totalorder %s75, 4
    %s85 = sphi 0, %s87
    %s88 = sphi 0, %s85
    %s89 = sphi 0, %s88
    %s105 = sphi 0, %s89
    %s109 = sphi 0, %s109
    %s111 = sphi 0, %s109
    %s112 = sphi 0, %s111
    %s126 = sphi 0, %s112
    %s130 = sphi 0, %s130
    %s132 = sphi 0, %s130
    %s133 = sphi 0, %s132
    %s147 = sphi 0, %s133
    %s151 = sphi 0, %s151
    %s153 = sphi 0, %s151
    %s154 = sphi 0, %s153
    %s168 = sphi 0, %s154
    %s172 = sphi 0, %s172
    %s174 = sphi 0, %s172
    %s175 = sphi 0, %s174
    %s189 = sphi 0, %s175
    %s193 = sphi 0, %s193
    %s195 = sphi 0, %s193
    %s196 = sphi 0, %s195
    %s210 = sphi 0, %s196
    %s214 = sphi 0, %s214
    %s216 = sphi 0, %s214
    %s217 = sphi 0, %s216
    %s231 = sphi 0, %s217
    %s235 = sphi 0, %s235
    %s237 = sphi 0, %s235
    %s238 = sphi 0, %s237
    %s252 = sphi 0, %s238
    %s256 = sphi 0, %s256
    %s258 = sphi 0, %s256
    %s259 = sphi 0, %s258
    %s273 = sphi 0, %s259
    %s277 = sphi 0, %s277
    %s279 = sphi 0, %s277
    %s280 = sphi 0, %s279
    %s294 = sphi 0, %s280
    %s298 = sphi 0, %s298
    %s300 = sphi 0, %s298
    %s301 = sphi 0, %s300
    %s315 = sphi 0, %s301
    %s319 = sphi 0, %s319
    %s321 = sphi 0, %s319
    %s322 = sphi 0, %s321
    %s336 = sphi 0, %s322
    %s340 = sphi 0, %s340
    %s342 = sphi 0, %s340
    %s343 = sphi 0, %s342
    %s357 = sphi 0, %s343
    %s361 = sphi 0, %s361
    %s363 = sphi 0, %s361
    %s364 = sphi 0, %s363
    %s378 = sphi 0, %s364
    %s382 = sphi 0, %s382
    %s384 = sphi 0, %s382
    %s385 = sphi 0, %s384
    %s399 = sphi 0, %s385
    %s403 = sphi 0, %s403
    %s405 = sphi 0, %s403
    %s406 = sphi 0, %s405
    %s420 = sphi 0, %s406
    %s424 = sphi 0, %s424
    %s426 = sphi 0, %s424
    %s427 = sphi 0, %s426
    %s441 = sphi 0, %s427
    %s445 = sphi 0, %s445
    %s447 = sphi 0, %s445
    %s448 = sphi 0, %s447
    %s462 = sphi 0, %s448
    %s466 = sphi 0, %s466
    %s468 = sphi 0, %s466
    %s469 = sphi 0, %s468
    %s483 = sphi 0, %s469
    %s487 = sphi 0, %s487
    %s489 = sphi 0, %s487
    %s490 = sphi 0, %s489
    %s504 = sphi 0, %s490
    %s508 = sphi 0, %s508
    %s510 = sphi 0, %s508
    %s511 = sphi 0, %s510
    %s525 = sphi 0, %s511
    %s529 = sphi 0, %s529
    %s531 = sphi 0, %s529
    %s532 = sphi 0, %s531
    %s546 = sphi 0, %s532
    %s550 = sphi 0, %s550
    %s552 = sphi 0, %s550
    %s553 = sphi 0, %s552
    %s567 = sphi 0, %s553
    %s571 = sphi 0, %s571
    %s573 = sphi 0, %s571
    %s574 = sphi 0, %s573
    %s588 = sphi 0, %s574
    %s592 = sphi 0, %s592
    %s594 = sphi 0, %s592
    %s595 = sphi 0, %s594
    %s609 = sphi 0, %s595
    %s613 = sphi 0, %s613
    %s615 = sphi 0, %s613
    %s616 = sphi 0, %s615
    %s630 = sphi 0, %s616
    %s634 = sphi 0, %s634
    %s636 = sphi 0, %s634
    %s637 = sphi 0, %s636
    %s651 = sphi 0, %s637
    %s655 = sphi 0, %s655
    %s657 = sphi 0, %s655
    %s658 = sphi 0, %s657
    %s672 = sphi 0, %s658
    %s676 = sphi 0, %s676
    %s678 = sphi 0, %s676
    %s679 = sphi 0, %s678
    %s693 = sphi 0, %s679
    %s697 = sphi 0, %s697
    %s699 = sphi 0, %s697
    %s700 = sphi 0, %s699
    %s714 = sphi 0, %s700
    %s718 = sphi 0, %s718
    %s720 = sphi 0, %s718
    %s721 = sphi 0, %s720
    %s735 = sphi 0, %s721
    %s739 = sphi 0, %s739
    %s741 = sphi 0, %s739
    %s742 = sphi 0, %s741
    %s756 = sphi 0, %s742
    %s760 = sphi 0, %s760
    %s762 = sphi 0, %s760
    %s763 = sphi 0, %s762
    %s777 = sphi 0, %s763
    %s781 = sphi 0, %s781
    %s783 = sphi 0, %s781
    %s784 = sphi 0, %s783
    %s798 = sphi 0, %s784
    %s804 = sphi 0, %s806
    %s807 = sphi 0, %s804
    %s808 = sphi 0, %s807
    %s824 = sphi 0, %s808
  $region4: #{c3ae_forward.1} parent=0 // loop_header_branch
    %78 = sbr.rel (%p76) target = $region8
  $region5: #{c3ae_forward.1} parent=0 // loop_body
    %s80 = ssub.s32 %s75, 1
    %s81 = ssub.s32 %s75, 2
    %s82 = sadd.s32 %s75, 1
    %s83 = ssub.s32 %s75, %s82
    %p84 = scmp.eq.s32.totalorder %s83, 0
    %s86 = sadd.s32 %s85, 1
    %s87 = scalar_select %p84, %s85, %s86
    %p90 = pneg %p84
    %p91 = scmp.eq.s32.totalorder %s75, 1
    %p92 = por %p90, %p91
    %p93 = scmp.ne.s32.totalorder %s85, %s88
    %p94 = scmp.eq.s32.totalorder %s75, 0
    %p95 = por %p93, %p94
    %p96 = scmp.ne.s32.totalorder %s85, %s88
    %p97 = scmp.eq.s32.totalorder %s80, 1
    %p98 = por %p96, %p97
    %p99 = scmp.ne.s32.totalorder %s88, %s89
    %p100 = scmp.eq.s32.totalorder %s80, 0
    %p101 = por %p99, %p100
    %p102 = scmp.ne.s32.totalorder %s88, %s89
    %p103 = scmp.eq.s32.totalorder %s81, 1
    %p104 = por %p102, %p103
    %p106 = scmp.ne.s32.totalorder %s89, %s105
    %p107 = scmp.eq.s32.totalorder %s81, 0
    %p108 = por %p106, %p107
    %s110 = sadd.s32 %s109, 1
    %p113 = scmp.eq.s32.totalorder %s75, 1
    %p114 = scmp.ne.s32.totalorder %s109, %s111
    %p115 = scmp.eq.s32.totalorder %s75, 0
    %p116 = por %p114, %p115
    %p117 = scmp.ne.s32.totalorder %s109, %s111
    %p118 = scmp.eq.s32.totalorder %s80, 1
    %p119 = por %p117, %p118
    %p120 = scmp.ne.s32.totalorder %s111, %s112
    %p121 = scmp.eq.s32.totalorder %s80, 0
    %p122 = por %p120, %p121
    %p123 = scmp.ne.s32.totalorder %s111, %s112
    %p124 = scmp.eq.s32.totalorder %s81, 1
    %p125 = por %p123, %p124
    %p127 = scmp.ne.s32.totalorder %s112, %s126
    %p128 = scmp.eq.s32.totalorder %s81, 0
    %p129 = por %p127, %p128
    %s131 = sadd.s32 %s130, 1
    %p134 = scmp.eq.s32.totalorder %s75, 1
    %p135 = scmp.ne.s32.totalorder %s130, %s132
    %p136 = scmp.eq.s32.totalorder %s75, 0
    %p137 = por %p135, %p136
    %p138 = scmp.ne.s32.totalorder %s130, %s132
    %p139 = scmp.eq.s32.totalorder %s80, 1
    %p140 = por %p138, %p139
    %p141 = scmp.ne.s32.totalorder %s132, %s133
    %p142 = scmp.eq.s32.totalorder %s80, 0
    %p143 = por %p141, %p142
    %p144 = scmp.ne.s32.totalorder %s132, %s133
    %p145 = scmp.eq.s32.totalorder %s81, 1
    %p146 = por %p144, %p145
    %p148 = scmp.ne.s32.totalorder %s133, %s147
    %p149 = scmp.eq.s32.totalorder %s81, 0
    %p150 = por %p148, %p149
    %s152 = sadd.s32 %s151, 1
    %p155 = scmp.eq.s32.totalorder %s75, 1
    %p156 = scmp.ne.s32.totalorder %s151, %s153
    %p157 = scmp.eq.s32.totalorder %s75, 0
    %p158 = por %p156, %p157
    %p159 = scmp.ne.s32.totalorder %s151, %s153
    %p160 = scmp.eq.s32.totalorder %s80, 1
    %p161 = por %p159, %p160
    %p162 = scmp.ne.s32.totalorder %s153, %s154
    %p163 = scmp.eq.s32.totalorder %s80, 0
    %p164 = por %p162, %p163
    %p165 = scmp.ne.s32.totalorder %s153, %s154
    %p166 = scmp.eq.s32.totalorder %s81, 1
    %p167 = por %p165, %p166
    %p169 = scmp.ne.s32.totalorder %s154, %s168
    %p170 = scmp.eq.s32.totalorder %s81, 0
    %p171 = por %p169, %p170
    %s173 = sadd.s32 %s172, 1
    %p176 = scmp.eq.s32.totalorder %s75, 1
    %p177 = scmp.ne.s32.totalorder %s172, %s174
    %p178 = scmp.eq.s32.totalorder %s75, 0
    %p179 = por %p177, %p178
    %p180 = scmp.ne.s32.totalorder %s172, %s174
    %p181 = scmp.eq.s32.totalorder %s80, 1
    %p182 = por %p180, %p181
    %p183 = scmp.ne.s32.totalorder %s174, %s175
    %p184 = scmp.eq.s32.totalorder %s80, 0
    %p185 = por %p183, %p184
    %p186 = scmp.ne.s32.totalorder %s174, %s175
    %p187 = scmp.eq.s32.totalorder %s81, 1
    %p188 = por %p186, %p187
    %p190 = scmp.ne.s32.totalorder %s175, %s189
    %p191 = scmp.eq.s32.totalorder %s81, 0
    %p192 = por %p190, %p191
    %s194 = sadd.s32 %s193, 1
    %p197 = scmp.eq.s32.totalorder %s75, 1
    %p198 = scmp.ne.s32.totalorder %s193, %s195
    %p199 = scmp.eq.s32.totalorder %s75, 0
    %p200 = por %p198, %p199
    %p201 = scmp.ne.s32.totalorder %s193, %s195
    %p202 = scmp.eq.s32.totalorder %s80, 1
    %p203 = por %p201, %p202
    %p204 = scmp.ne.s32.totalorder %s195, %s196
    %p205 = scmp.eq.s32.totalorder %s80, 0
    %p206 = por %p204, %p205
    %p207 = scmp.ne.s32.totalorder %s195, %s196
    %p208 = scmp.eq.s32.totalorder %s81, 1
    %p209 = por %p207, %p208
    %p211 = scmp.ne.s32.totalorder %s196, %s210
    %p212 = scmp.eq.s32.totalorder %s81, 0
    %p213 = por %p211, %p212
    %s215 = sadd.s32 %s214, 1
    %p218 = scmp.eq.s32.totalorder %s75, 1
    %p219 = scmp.ne.s32.totalorder %s214, %s216
    %p220 = scmp.eq.s32.totalorder %s75, 0
    %p221 = por %p219, %p220
    %p222 = scmp.ne.s32.totalorder %s214, %s216
    %p223 = scmp.eq.s32.totalorder %s80, 1
    %p224 = por %p222, %p223
    %p225 = scmp.ne.s32.totalorder %s216, %s217
    %p226 = scmp.eq.s32.totalorder %s80, 0
    %p227 = por %p225, %p226
    %p228 = scmp.ne.s32.totalorder %s216, %s217
    %p229 = scmp.eq.s32.totalorder %s81, 1
    %p230 = por %p228, %p229
    %p232 = scmp.ne.s32.totalorder %s217, %s231
    %p233 = scmp.eq.s32.totalorder %s81, 0
    %p234 = por %p232, %p233
    %s236 = sadd.s32 %s235, 1
    %p239 = scmp.eq.s32.totalorder %s75, 1
    %p240 = scmp.ne.s32.totalorder %s235, %s237
    %p241 = scmp.eq.s32.totalorder %s75, 0
    %p242 = por %p240, %p241
    %p243 = scmp.ne.s32.totalorder %s235, %s237
    %p244 = scmp.eq.s32.totalorder %s80, 1
    %p245 = por %p243, %p244
    %p246 = scmp.ne.s32.totalorder %s237, %s238
    %p247 = scmp.eq.s32.totalorder %s80, 0
    %p248 = por %p246, %p247
    %p249 = scmp.ne.s32.totalorder %s237, %s238
    %p250 = scmp.eq.s32.totalorder %s81, 1
    %p251 = por %p249, %p250
    %p253 = scmp.ne.s32.totalorder %s238, %s252
    %p254 = scmp.eq.s32.totalorder %s81, 0
    %p255 = por %p253, %p254
    %s257 = sadd.s32 %s256, 1
    %p260 = scmp.eq.s32.totalorder %s75, 1
    %p261 = scmp.ne.s32.totalorder %s256, %s258
    %p262 = scmp.eq.s32.totalorder %s75, 0
    %p263 = por %p261, %p262
    %p264 = scmp.ne.s32.totalorder %s256, %s258
    %p265 = scmp.eq.s32.totalorder %s80, 1
    %p266 = por %p264, %p265
    %p267 = scmp.ne.s32.totalorder %s258, %s259
    %p268 = scmp.eq.s32.totalorder %s80, 0
    %p269 = por %p267, %p268
    %p270 = scmp.ne.s32.totalorder %s258, %s259
    %p271 = scmp.eq.s32.totalorder %s81, 1
    %p272 = por %p270, %p271
    %p274 = scmp.ne.s32.totalorder %s259, %s273
    %p275 = scmp.eq.s32.totalorder %s81, 0
    %p276 = por %p274, %p275
    %s278 = sadd.s32 %s277, 1
    %p281 = scmp.eq.s32.totalorder %s75, 1
    %p282 = scmp.ne.s32.totalorder %s277, %s279
    %p283 = scmp.eq.s32.totalorder %s75, 0
    %p284 = por %p282, %p283
    %p285 = scmp.ne.s32.totalorder %s277, %s279
    %p286 = scmp.eq.s32.totalorder %s80, 1
    %p287 = por %p285, %p286
    %p288 = scmp.ne.s32.totalorder %s279, %s280
    %p289 = scmp.eq.s32.totalorder %s80, 0
    %p290 = por %p288, %p289
    %p291 = scmp.ne.s32.totalorder %s279, %s280
    %p292 = scmp.eq.s32.totalorder %s81, 1
    %p293 = por %p291, %p292
    %p295 = scmp.ne.s32.totalorder %s280, %s294
    %p296 = scmp.eq.s32.totalorder %s81, 0
    %p297 = por %p295, %p296
    %s299 = sadd.s32 %s298, 1
    %p302 = scmp.eq.s32.totalorder %s75, 1
    %p303 = scmp.ne.s32.totalorder %s298, %s300
    %p304 = scmp.eq.s32.totalorder %s75, 0
    %p305 = por %p303, %p304
    %p306 = scmp.ne.s32.totalorder %s298, %s300
    %p307 = scmp.eq.s32.totalorder %s80, 1
    %p308 = por %p306, %p307
    %p309 = scmp.ne.s32.totalorder %s300, %s301
    %p310 = scmp.eq.s32.totalorder %s80, 0
    %p311 = por %p309, %p310
    %p312 = scmp.ne.s32.totalorder %s300, %s301
    %p313 = scmp.eq.s32.totalorder %s81, 1
    %p314 = por %p312, %p313
    %p316 = scmp.ne.s32.totalorder %s301, %s315
    %p317 = scmp.eq.s32.totalorder %s81, 0
    %p318 = por %p316, %p317
    %s320 = sadd.s32 %s319, 1
    %p323 = scmp.eq.s32.totalorder %s75, 1
    %p324 = scmp.ne.s32.totalorder %s319, %s321
    %p325 = scmp.eq.s32.totalorder %s75, 0
    %p326 = por %p324, %p325
    %p327 = scmp.ne.s32.totalorder %s319, %s321
    %p328 = scmp.eq.s32.totalorder %s80, 1
    %p329 = por %p327, %p328
    %p330 = scmp.ne.s32.totalorder %s321, %s322
    %p331 = scmp.eq.s32.totalorder %s80, 0
    %p332 = por %p330, %p331
    %p333 = scmp.ne.s32.totalorder %s321, %s322
    %p334 = scmp.eq.s32.totalorder %s81, 1
    %p335 = por %p333, %p334
    %p337 = scmp.ne.s32.totalorder %s322, %s336
    %p338 = scmp.eq.s32.totalorder %s81, 0
    %p339 = por %p337, %p338
    %s341 = sadd.s32 %s340, 1
    %p344 = scmp.eq.s32.totalorder %s75, 1
    %p345 = scmp.ne.s32.totalorder %s340, %s342
    %p346 = scmp.eq.s32.totalorder %s75, 0
    %p347 = por %p345, %p346
    %p348 = scmp.ne.s32.totalorder %s340, %s342
    %p349 = scmp.eq.s32.totalorder %s80, 1
    %p350 = por %p348, %p349
    %p351 = scmp.ne.s32.totalorder %s342, %s343
    %p352 = scmp.eq.s32.totalorder %s80, 0
    %p353 = por %p351, %p352
    %p354 = scmp.ne.s32.totalorder %s342, %s343
    %p355 = scmp.eq.s32.totalorder %s81, 1
    %p356 = por %p354, %p355
    %p358 = scmp.ne.s32.totalorder %s343, %s357
    %p359 = scmp.eq.s32.totalorder %s81, 0
    %p360 = por %p358, %p359
    %s362 = sadd.s32 %s361, 1
    %p365 = scmp.eq.s32.totalorder %s75, 1
    %p366 = scmp.ne.s32.totalorder %s361, %s363
    %p367 = scmp.eq.s32.totalorder %s75, 0
    %p368 = por %p366, %p367
    %p369 = scmp.ne.s32.totalorder %s361, %s363
    %p370 = scmp.eq.s32.totalorder %s80, 1
    %p371 = por %p369, %p370
    %p372 = scmp.ne.s32.totalorder %s363, %s364
    %p373 = scmp.eq.s32.totalorder %s80, 0
    %p374 = por %p372, %p373
    %p375 = scmp.ne.s32.totalorder %s363, %s364
    %p376 = scmp.eq.s32.totalorder %s81, 1
    %p377 = por %p375, %p376
    %p379 = scmp.ne.s32.totalorder %s364, %s378
    %p380 = scmp.eq.s32.totalorder %s81, 0
    %p381 = por %p379, %p380
    %s383 = sadd.s32 %s382, 1
    %p386 = scmp.eq.s32.totalorder %s75, 1
    %p387 = scmp.ne.s32.totalorder %s382, %s384
    %p388 = scmp.eq.s32.totalorder %s75, 0
    %p389 = por %p387, %p388
    %p390 = scmp.ne.s32.totalorder %s382, %s384
    %p391 = scmp.eq.s32.totalorder %s80, 1
    %p392 = por %p390, %p391
    %p393 = scmp.ne.s32.totalorder %s384, %s385
    %p394 = scmp.eq.s32.totalorder %s80, 0
    %p395 = por %p393, %p394
    %p396 = scmp.ne.s32.totalorder %s384, %s385
    %p397 = scmp.eq.s32.totalorder %s81, 1
    %p398 = por %p396, %p397
    %p400 = scmp.ne.s32.totalorder %s385, %s399
    %p401 = scmp.eq.s32.totalorder %s81, 0
    %p402 = por %p400, %p401
    %s404 = sadd.s32 %s403, 1
    %p407 = scmp.eq.s32.totalorder %s75, 1
    %p408 = scmp.ne.s32.totalorder %s403, %s405
    %p409 = scmp.eq.s32.totalorder %s75, 0
    %p410 = por %p408, %p409
    %p411 = scmp.ne.s32.totalorder %s403, %s405
    %p412 = scmp.eq.s32.totalorder %s80, 1
    %p413 = por %p411, %p412
    %p414 = scmp.ne.s32.totalorder %s405, %s406
    %p415 = scmp.eq.s32.totalorder %s80, 0
    %p416 = por %p414, %p415
    %p417 = scmp.ne.s32.totalorder %s405, %s406
    %p418 = scmp.eq.s32.totalorder %s81, 1
    %p419 = por %p417, %p418
    %p421 = scmp.ne.s32.totalorder %s406, %s420
    %p422 = scmp.eq.s32.totalorder %s81, 0
    %p423 = por %p421, %p422
    %s425 = sadd.s32 %s424, 1
    %p428 = scmp.eq.s32.totalorder %s75, 1
    %p429 = scmp.ne.s32.totalorder %s424, %s426
    %p430 = scmp.eq.s32.totalorder %s75, 0
    %p431 = por %p429, %p430
    %p432 = scmp.ne.s32.totalorder %s424, %s426
    %p433 = scmp.eq.s32.totalorder %s80, 1
    %p434 = por %p432, %p433
    %p435 = scmp.ne.s32.totalorder %s426, %s427
    %p436 = scmp.eq.s32.totalorder %s80, 0
    %p437 = por %p435, %p436
    %p438 = scmp.ne.s32.totalorder %s426, %s427
    %p439 = scmp.eq.s32.totalorder %s81, 1
    %p440 = por %p438, %p439
    %p442 = scmp.ne.s32.totalorder %s427, %s441
    %p443 = scmp.eq.s32.totalorder %s81, 0
    %p444 = por %p442, %p443
    %s446 = sadd.s32 %s445, 1
    %p449 = scmp.eq.s32.totalorder %s75, 1
    %p450 = scmp.ne.s32.totalorder %s445, %s447
    %p451 = scmp.eq.s32.totalorder %s75, 0
    %p452 = por %p450, %p451
    %p453 = scmp.ne.s32.totalorder %s445, %s447
    %p454 = scmp.eq.s32.totalorder %s80, 1
    %p455 = por %p453, %p454
    %p456 = scmp.ne.s32.totalorder %s447, %s448
    %p457 = scmp.eq.s32.totalorder %s80, 0
    %p458 = por %p456, %p457
    %p459 = scmp.ne.s32.totalorder %s447, %s448
    %p460 = scmp.eq.s32.totalorder %s81, 1
    %p461 = por %p459, %p460
    %p463 = scmp.ne.s32.totalorder %s448, %s462
    %p464 = scmp.eq.s32.totalorder %s81, 0
    %p465 = por %p463, %p464
    %s467 = sadd.s32 %s466, 1
    %p470 = scmp.eq.s32.totalorder %s75, 1
    %p471 = scmp.ne.s32.totalorder %s466, %s468
    %p472 = scmp.eq.s32.totalorder %s75, 0
    %p473 = por %p471, %p472
    %p474 = scmp.ne.s32.totalorder %s466, %s468
    %p475 = scmp.eq.s32.totalorder %s80, 1
    %p476 = por %p474, %p475
    %p477 = scmp.ne.s32.totalorder %s468, %s469
    %p478 = scmp.eq.s32.totalorder %s80, 0
    %p479 = por %p477, %p478
    %p480 = scmp.ne.s32.totalorder %s468, %s469
    %p481 = scmp.eq.s32.totalorder %s81, 1
    %p482 = por %p480, %p481
    %p484 = scmp.ne.s32.totalorder %s469, %s483
    %p485 = scmp.eq.s32.totalorder %s81, 0
    %p486 = por %p484, %p485
    %s488 = sadd.s32 %s487, 1
    %p491 = scmp.eq.s32.totalorder %s75, 1
    %p492 = scmp.ne.s32.totalorder %s487, %s489
    %p493 = scmp.eq.s32.totalorder %s75, 0
    %p494 = por %p492, %p493
    %p495 = scmp.ne.s32.totalorder %s487, %s489
    %p496 = scmp.eq.s32.totalorder %s80, 1
    %p497 = por %p495, %p496
    %p498 = scmp.ne.s32.totalorder %s489, %s490
    %p499 = scmp.eq.s32.totalorder %s80, 0
    %p500 = por %p498, %p499
    %p501 = scmp.ne.s32.totalorder %s489, %s490
    %p502 = scmp.eq.s32.totalorder %s81, 1
    %p503 = por %p501, %p502
    %p505 = scmp.ne.s32.totalorder %s490, %s504
    %p506 = scmp.eq.s32.totalorder %s81, 0
    %p507 = por %p505, %p506
    %s509 = sadd.s32 %s508, 1
    %p512 = scmp.eq.s32.totalorder %s75, 1
    %p513 = scmp.ne.s32.totalorder %s508, %s510
    %p514 = scmp.eq.s32.totalorder %s75, 0
    %p515 = por %p513, %p514
    %p516 = scmp.ne.s32.totalorder %s508, %s510
    %p517 = scmp.eq.s32.totalorder %s80, 1
    %p518 = por %p516, %p517
    %p519 = scmp.ne.s32.totalorder %s510, %s511
    %p520 = scmp.eq.s32.totalorder %s80, 0
    %p521 = por %p519, %p520
    %p522 = scmp.ne.s32.totalorder %s510, %s511
    %p523 = scmp.eq.s32.totalorder %s81, 1
    %p524 = por %p522, %p523
    %p526 = scmp.ne.s32.totalorder %s511, %s525
    %p527 = scmp.eq.s32.totalorder %s81, 0
    %p528 = por %p526, %p527
    %s530 = sadd.s32 %s529, 1
    %p533 = scmp.eq.s32.totalorder %s75, 1
    %p534 = scmp.ne.s32.totalorder %s529, %s531
    %p535 = scmp.eq.s32.totalorder %s75, 0
    %p536 = por %p534, %p535
    %p537 = scmp.ne.s32.totalorder %s529, %s531
    %p538 = scmp.eq.s32.totalorder %s80, 1
    %p539 = por %p537, %p538
    %p540 = scmp.ne.s32.totalorder %s531, %s532
    %p541 = scmp.eq.s32.totalorder %s80, 0
    %p542 = por %p540, %p541
    %p543 = scmp.ne.s32.totalorder %s531, %s532
    %p544 = scmp.eq.s32.totalorder %s81, 1
    %p545 = por %p543, %p544
    %p547 = scmp.ne.s32.totalorder %s532, %s546
    %p548 = scmp.eq.s32.totalorder %s81, 0
    %p549 = por %p547, %p548
    %s551 = sadd.s32 %s550, 1
    %p554 = scmp.eq.s32.totalorder %s75, 1
    %p555 = scmp.ne.s32.totalorder %s550, %s552
    %p556 = scmp.eq.s32.totalorder %s75, 0
    %p557 = por %p555, %p556
    %p558 = scmp.ne.s32.totalorder %s550, %s552
    %p559 = scmp.eq.s32.totalorder %s80, 1
    %p560 = por %p558, %p559
    %p561 = scmp.ne.s32.totalorder %s552, %s553
    %p562 = scmp.eq.s32.totalorder %s80, 0
    %p563 = por %p561, %p562
    %p564 = scmp.ne.s32.totalorder %s552, %s553
    %p565 = scmp.eq.s32.totalorder %s81, 1
    %p566 = por %p564, %p565
    %p568 = scmp.ne.s32.totalorder %s553, %s567
    %p569 = scmp.eq.s32.totalorder %s81, 0
    %p570 = por %p568, %p569
    %s572 = sadd.s32 %s571, 1
    %p575 = scmp.eq.s32.totalorder %s75, 1
    %p576 = scmp.ne.s32.totalorder %s571, %s573
    %p577 = scmp.eq.s32.totalorder %s75, 0
    %p578 = por %p576, %p577
    %p579 = scmp.ne.s32.totalorder %s571, %s573
    %p580 = scmp.eq.s32.totalorder %s80, 1
    %p581 = por %p579, %p580
    %p582 = scmp.ne.s32.totalorder %s573, %s574
    %p583 = scmp.eq.s32.totalorder %s80, 0
    %p584 = por %p582, %p583
    %p585 = scmp.ne.s32.totalorder %s573, %s574
    %p586 = scmp.eq.s32.totalorder %s81, 1
    %p587 = por %p585, %p586
    %p589 = scmp.ne.s32.totalorder %s574, %s588
    %p590 = scmp.eq.s32.totalorder %s81, 0
    %p591 = por %p589, %p590
    %s593 = sadd.s32 %s592, 1
    %p596 = scmp.eq.s32.totalorder %s75, 1
    %p597 = scmp.ne.s32.totalorder %s592, %s594
    %p598 = scmp.eq.s32.totalorder %s75, 0
    %p599 = por %p597, %p598
    %p600 = scmp.ne.s32.totalorder %s592, %s594
    %p601 = scmp.eq.s32.totalorder %s80, 1
    %p602 = por %p600, %p601
    %p603 = scmp.ne.s32.totalorder %s594, %s595
    %p604 = scmp.eq.s32.totalorder %s80, 0
    %p605 = por %p603, %p604
    %p606 = scmp.ne.s32.totalorder %s594, %s595
    %p607 = scmp.eq.s32.totalorder %s81, 1
    %p608 = por %p606, %p607
    %p610 = scmp.ne.s32.totalorder %s595, %s609
    %p611 = scmp.eq.s32.totalorder %s81, 0
    %p612 = por %p610, %p611
    %s614 = sadd.s32 %s613, 1
    %p617 = scmp.eq.s32.totalorder %s75, 1
    %p618 = scmp.ne.s32.totalorder %s613, %s615
    %p619 = scmp.eq.s32.totalorder %s75, 0
    %p620 = por %p618, %p619
    %p621 = scmp.ne.s32.totalorder %s613, %s615
    %p622 = scmp.eq.s32.totalorder %s80, 1
    %p623 = por %p621, %p622
    %p624 = scmp.ne.s32.totalorder %s615, %s616
    %p625 = scmp.eq.s32.totalorder %s80, 0
    %p626 = por %p624, %p625
    %p627 = scmp.ne.s32.totalorder %s615, %s616
    %p628 = scmp.eq.s32.totalorder %s81, 1
    %p629 = por %p627, %p628
    %p631 = scmp.ne.s32.totalorder %s616, %s630
    %p632 = scmp.eq.s32.totalorder %s81, 0
    %p633 = por %p631, %p632
    %s635 = sadd.s32 %s634, 1
    %p638 = scmp.eq.s32.totalorder %s75, 1
    %p639 = scmp.ne.s32.totalorder %s634, %s636
    %p640 = scmp.eq.s32.totalorder %s75, 0
    %p641 = por %p639, %p640
    %p642 = scmp.ne.s32.totalorder %s634, %s636
    %p643 = scmp.eq.s32.totalorder %s80, 1
    %p644 = por %p642, %p643
    %p645 = scmp.ne.s32.totalorder %s636, %s637
    %p646 = scmp.eq.s32.totalorder %s80, 0
    %p647 = por %p645, %p646
    %p648 = scmp.ne.s32.totalorder %s636, %s637
    %p649 = scmp.eq.s32.totalorder %s81, 1
    %p650 = por %p648, %p649
    %p652 = scmp.ne.s32.totalorder %s637, %s651
    %p653 = scmp.eq.s32.totalorder %s81, 0
    %p654 = por %p652, %p653
    %s656 = sadd.s32 %s655, 1
    %p659 = scmp.eq.s32.totalorder %s75, 1
    %p660 = scmp.ne.s32.totalorder %s655, %s657
    %p661 = scmp.eq.s32.totalorder %s75, 0
    %p662 = por %p660, %p661
    %p663 = scmp.ne.s32.totalorder %s655, %s657
    %p664 = scmp.eq.s32.totalorder %s80, 1
    %p665 = por %p663, %p664
    %p666 = scmp.ne.s32.totalorder %s657, %s658
    %p667 = scmp.eq.s32.totalorder %s80, 0
    %p668 = por %p666, %p667
    %p669 = scmp.ne.s32.totalorder %s657, %s658
    %p670 = scmp.eq.s32.totalorder %s81, 1
    %p671 = por %p669, %p670
    %p673 = scmp.ne.s32.totalorder %s658, %s672
    %p674 = scmp.eq.s32.totalorder %s81, 0
    %p675 = por %p673, %p674
    %s677 = sadd.s32 %s676, 1
    %p680 = scmp.eq.s32.totalorder %s75, 1
    %p681 = scmp.ne.s32.totalorder %s676, %s678
    %p682 = scmp.eq.s32.totalorder %s75, 0
    %p683 = por %p681, %p682
    %p684 = scmp.ne.s32.totalorder %s676, %s678
    %p685 = scmp.eq.s32.totalorder %s80, 1
    %p686 = por %p684, %p685
    %p687 = scmp.ne.s32.totalorder %s678, %s679
    %p688 = scmp.eq.s32.totalorder %s80, 0
    %p689 = por %p687, %p688
    %p690 = scmp.ne.s32.totalorder %s678, %s679
    %p691 = scmp.eq.s32.totalorder %s81, 1
    %p692 = por %p690, %p691
    %p694 = scmp.ne.s32.totalorder %s679, %s693
    %p695 = scmp.eq.s32.totalorder %s81, 0
    %p696 = por %p694, %p695
    %s698 = sadd.s32 %s697, 1
    %p701 = scmp.eq.s32.totalorder %s75, 1
    %p702 = scmp.ne.s32.totalorder %s697, %s699
    %p703 = scmp.eq.s32.totalorder %s75, 0
    %p704 = por %p702, %p703
    %p705 = scmp.ne.s32.totalorder %s697, %s699
    %p706 = scmp.eq.s32.totalorder %s80, 1
    %p707 = por %p705, %p706
    %p708 = scmp.ne.s32.totalorder %s699, %s700
    %p709 = scmp.eq.s32.totalorder %s80, 0
    %p710 = por %p708, %p709
    %p711 = scmp.ne.s32.totalorder %s699, %s700
    %p712 = scmp.eq.s32.totalorder %s81, 1
    %p713 = por %p711, %p712
    %p715 = scmp.ne.s32.totalorder %s700, %s714
    %p716 = scmp.eq.s32.totalorder %s81, 0
    %p717 = por %p715, %p716
    %s719 = sadd.s32 %s718, 1
    %p722 = scmp.eq.s32.totalorder %s75, 1
    %p723 = scmp.ne.s32.totalorder %s718, %s720
    %p724 = scmp.eq.s32.totalorder %s75, 0
    %p725 = por %p723, %p724
    %p726 = scmp.ne.s32.totalorder %s718, %s720
    %p727 = scmp.eq.s32.totalorder %s80, 1
    %p728 = por %p726, %p727
    %p729 = scmp.ne.s32.totalorder %s720, %s721
    %p730 = scmp.eq.s32.totalorder %s80, 0
    %p731 = por %p729, %p730
    %p732 = scmp.ne.s32.totalorder %s720, %s721
    %p733 = scmp.eq.s32.totalorder %s81, 1
    %p734 = por %p732, %p733
    %p736 = scmp.ne.s32.totalorder %s721, %s735
    %p737 = scmp.eq.s32.totalorder %s81, 0
    %p738 = por %p736, %p737
    %s740 = sadd.s32 %s739, 1
    %p743 = scmp.eq.s32.totalorder %s75, 1
    %p744 = scmp.ne.s32.totalorder %s739, %s741
    %p745 = scmp.eq.s32.totalorder %s75, 0
    %p746 = por %p744, %p745
    %p747 = scmp.ne.s32.totalorder %s739, %s741
    %p748 = scmp.eq.s32.totalorder %s80, 1
    %p749 = por %p747, %p748
    %p750 = scmp.ne.s32.totalorder %s741, %s742
    %p751 = scmp.eq.s32.totalorder %s80, 0
    %p752 = por %p750, %p751
    %p753 = scmp.ne.s32.totalorder %s741, %s742
    %p754 = scmp.eq.s32.totalorder %s81, 1
    %p755 = por %p753, %p754
    %p757 = scmp.ne.s32.totalorder %s742, %s756
    %p758 = scmp.eq.s32.totalorder %s81, 0
    %p759 = por %p757, %p758
    %s761 = sadd.s32 %s760, 1
    %p764 = scmp.eq.s32.totalorder %s75, 1
    %p765 = scmp.ne.s32.totalorder %s760, %s762
    %p766 = scmp.eq.s32.totalorder %s75, 0
    %p767 = por %p765, %p766
    %p768 = scmp.ne.s32.totalorder %s760, %s762
    %p769 = scmp.eq.s32.totalorder %s80, 1
    %p770 = por %p768, %p769
    %p771 = scmp.ne.s32.totalorder %s762, %s763
    %p772 = scmp.eq.s32.totalorder %s80, 0
    %p773 = por %p771, %p772
    %p774 = scmp.ne.s32.totalorder %s762, %s763
    %p775 = scmp.eq.s32.totalorder %s81, 1
    %p776 = por %p774, %p775
    %p778 = scmp.ne.s32.totalorder %s763, %s777
    %p779 = scmp.eq.s32.totalorder %s81, 0
    %p780 = por %p778, %p779
    %s782 = sadd.s32 %s781, 1
    %p785 = scmp.eq.s32.totalorder %s75, 1
    %p786 = scmp.ne.s32.totalorder %s781, %s783
    %p787 = scmp.eq.s32.totalorder %s75, 0
    %p788 = por %p786, %p787
    %p789 = scmp.ne.s32.totalorder %s781, %s783
    %p790 = scmp.eq.s32.totalorder %s80, 1
    %p791 = por %p789, %p790
    %p792 = scmp.ne.s32.totalorder %s783, %s784
    %p793 = scmp.eq.s32.totalorder %s80, 0
    %p794 = por %p792, %p793
    %p795 = scmp.ne.s32.totalorder %s783, %s784
    %p796 = scmp.eq.s32.totalorder %s81, 1
    %p797 = por %p795, %p796
    %p799 = scmp.ne.s32.totalorder %s784, %s798
    %p800 = scmp.eq.s32.totalorder %s81, 0
    %p801 = por %p799, %p800
    %s802 = ssub.s32 %s75, %s82
    %p803 = scmp.eq.s32.totalorder %s802, 0
    %s805 = sadd.s32 %s804, 1
    %s806 = scalar_select %p803, %s804, %s805
    %p809 = pneg %p803
    %p810 = scmp.eq.s32.totalorder %s75, 1
    %p811 = por %p809, %p810
    %p812 = scmp.ne.s32.totalorder %s804, %s807
    %p813 = scmp.eq.s32.totalorder %s75, 0
    %p814 = por %p812, %p813
    %p815 = scmp.ne.s32.totalorder %s804, %s807
    %p816 = scmp.eq.s32.totalorder %s80, 1
    %p817 = por %p815, %p816
    %p818 = scmp.ne.s32.totalorder %s807, %s808
    %p819 = scmp.eq.s32.totalorder %s80, 0
    %p820 = por %p818, %p819
    %p821 = scmp.ne.s32.totalorder %s807, %s808
    %p822 = scmp.eq.s32.totalorder %s81, 1
    %p823 = por %p821, %p822
    %p825 = scmp.ne.s32.totalorder %s808, %s824
    %p826 = scmp.eq.s32.totalorder %s81, 0
    %p827 = por %p825, %p826
    %p828 = scmp.le.s32.totalorder 1, %s75
    %p829 = scmp.lt.s32.totalorder %s75, 3
    %p830 = pnand %p828, %p829
    %p831 = pneg %p830
    // Predicated region
    $region9: #{c3ae_forward.1} parent=5 // pred_check
      _
    $region10: #{c3ae_forward.1} parent=5 // pred_check_branch
      %833 = sbr.rel (%p830) target = $region12
    $region11: #{c3ae_forward.1} parent=5 // pred_region
      %s834 = ssub.s32 %s75, 1
      // Predicated region
      $region13: #{c3ae_forward.1} parent=11 // pred_check
        %p835 = pneg %p122
      $region14: #{c3ae_forward.1} parent=11 // pred_check_branch
        %837 = sbr.rel (%p835) target = $region16
      $region15: #{c3ae_forward.1} parent=11 // pred_region
        _
      $region16: #{c3ae_forward.1} parent=11 // pred_fallthru
        _
      // Predicated region
      $region17: #{c3ae_forward.1} parent=11 // pred_check
        %p838 = pneg %p143
      $region18: #{c3ae_forward.1} parent=11 // pred_check_branch
        %840 = sbr.rel (%p838) target = $region20
      $region19: #{c3ae_forward.1} parent=11 // pred_region
        _
      $region20: #{c3ae_forward.1} parent=11 // pred_fallthru
        _
      // Predicated region
      $region21: #{c3ae_forward.1} parent=11 // pred_check
        %p841 = pneg %p164
      $region22: #{c3ae_forward.1} parent=11 // pred_check_branch
        %843 = sbr.rel (%p841) target = $region24
      $region23: #{c3ae_forward.1} parent=11 // pred_region
        _
      $region24: #{c3ae_forward.1} parent=11 // pred_fallthru
        _
      // Predicated region
      $region25: #{c3ae_forward.1} parent=11 // pred_check
        %p844 = pneg %p185
      $region26: #{c3ae_forward.1} parent=11 // pred_check_branch
        %846 = sbr.rel (%p844) target = $region28
      $region27: #{c3ae_forward.1} parent=11 // pred_region
        _
      $region28: #{c3ae_forward.1} parent=11 // pred_fallthru
        _
      // Predicated region
      $region29: #{c3ae_forward.1} parent=11 // pred_check
        %p847 = pneg %p206
      $region30: #{c3ae_forward.1} parent=11 // pred_check_branch
        %849 = sbr.rel (%p847) target = $region32
      $region31: #{c3ae_forward.1} parent=11 // pred_region
        _
      $region32: #{c3ae_forward.1} parent=11 // pred_fallthru
        _
      // Predicated region
      $region33: #{c3ae_forward.1} parent=11 // pred_check
        %p850 = pneg %p227
      $region34: #{c3ae_forward.1} parent=11 // pred_check_branch
        %852 = sbr.rel (%p850) target = $region36
      $region35: #{c3ae_forward.1} parent=11 // pred_region
        _
      $region36: #{c3ae_forward.1} parent=11 // pred_fallthru
        _
      // Predicated region
      $region37: #{c3ae_forward.1} parent=11 // pred_check
        %p853 = pneg %p248
      $region38: #{c3ae_forward.1} parent=11 // pred_check_branch
        %855 = sbr.rel (%p853) target = $region40
      $region39: #{c3ae_forward.1} parent=11 // pred_region
        _
      $region40: #{c3ae_forward.1} parent=11 // pred_fallthru
        _
      // Predicated region
      $region41: #{c3ae_forward.1} parent=11 // pred_check
        %p856 = pneg %p269
      $region42: #{c3ae_forward.1} parent=11 // pred_check_branch
        %858 = sbr.rel (%p856) target = $region44
      $region43: #{c3ae_forward.1} parent=11 // pred_region
        _
      $region44: #{c3ae_forward.1} parent=11 // pred_fallthru
        _
      // Predicated region
      $region45: #{c3ae_forward.1} parent=11 // pred_check
        %p859 = pneg %p290
      $region46: #{c3ae_forward.1} parent=11 // pred_check_branch
        %861 = sbr.rel (%p859) target = $region48
      $region47: #{c3ae_forward.1} parent=11 // pred_region
        _
      $region48: #{c3ae_forward.1} parent=11 // pred_fallthru
        _
      // Predicated region
      $region49: #{c3ae_forward.1} parent=11 // pred_check
        %p862 = pneg %p311
      $region50: #{c3ae_forward.1} parent=11 // pred_check_branch
        %864 = sbr.rel (%p862) target = $region52
      $region51: #{c3ae_forward.1} parent=11 // pred_region
        _
      $region52: #{c3ae_forward.1} parent=11 // pred_fallthru
        _
      // Predicated region
      $region53: #{c3ae_forward.1} parent=11 // pred_check
        %p865 = pneg %p332
      $region54: #{c3ae_forward.1} parent=11 // pred_check_branch
        %867 = sbr.rel (%p865) target = $region56
      $region55: #{c3ae_forward.1} parent=11 // pred_region
        _
      $region56: #{c3ae_forward.1} parent=11 // pred_fallthru
        _
      // Predicated region
      $region57: #{c3ae_forward.1} parent=11 // pred_check
        %p868 = pneg %p353
      $region58: #{c3ae_forward.1} parent=11 // pred_check_branch
        %870 = sbr.rel (%p868) target = $region60
      $region59: #{c3ae_forward.1} parent=11 // pred_region
        _
      $region60: #{c3ae_forward.1} parent=11 // pred_fallthru
        _
      // Predicated region
      $region61: #{c3ae_forward.1} parent=11 // pred_check
        %p871 = pneg %p374
      $region62: #{c3ae_forward.1} parent=11 // pred_check_branch
        %873 = sbr.rel (%p871) target = $region64
      $region63: #{c3ae_forward.1} parent=11 // pred_region
        _
      $region64: #{c3ae_forward.1} parent=11 // pred_fallthru
        _
      // Predicated region
      $region65: #{c3ae_forward.1} parent=11 // pred_check
        %p874 = pneg %p395
      $region66: #{c3ae_forward.1} parent=11 // pred_check_branch
        %876 = sbr.rel (%p874) target = $region68
      $region67: #{c3ae_forward.1} parent=11 // pred_region
        _
      $region68: #{c3ae_forward.1} parent=11 // pred_fallthru
        _
      // Predicated region
      $region69: #{c3ae_forward.1} parent=11 // pred_check
        %p877 = pneg %p416
      $region70: #{c3ae_forward.1} parent=11 // pred_check_branch
        %879 = sbr.rel (%p877) target = $region72
      $region71: #{c3ae_forward.1} parent=11 // pred_region
        _
      $region72: #{c3ae_forward.1} parent=11 // pred_fallthru
        _
      // Predicated region
      $region73: #{c3ae_forward.1} parent=11 // pred_check
        %p880 = pneg %p437
      $region74: #{c3ae_forward.1} parent=11 // pred_check_branch
        %882 = sbr.rel (%p880) target = $region76
      $region75: #{c3ae_forward.1} parent=11 // pred_region
        _
      $region76: #{c3ae_forward.1} parent=11 // pred_fallthru
        _
      // Predicated region
      $region77: #{c3ae_forward.1} parent=11 // pred_check
        %p883 = pneg %p458
      $region78: #{c3ae_forward.1} parent=11 // pred_check_branch
        %885 = sbr.rel (%p883) target = $region80
      $region79: #{c3ae_forward.1} parent=11 // pred_region
        _
      $region80: #{c3ae_forward.1} parent=11 // pred_fallthru
        _
      // Predicated region
      $region81: #{c3ae_forward.1} parent=11 // pred_check
        %p886 = pneg %p479
      $region82: #{c3ae_forward.1} parent=11 // pred_check_branch
        %888 = sbr.rel (%p886) target = $region84
      $region83: #{c3ae_forward.1} parent=11 // pred_region
        _
      $region84: #{c3ae_forward.1} parent=11 // pred_fallthru
        _
      // Predicated region
      $region85: #{c3ae_forward.1} parent=11 // pred_check
        %p889 = pneg %p500
      $region86: #{c3ae_forward.1} parent=11 // pred_check_branch
        %891 = sbr.rel (%p889) target = $region88
      $region87: #{c3ae_forward.1} parent=11 // pred_region
        _
      $region88: #{c3ae_forward.1} parent=11 // pred_fallthru
        _
      // Predicated region
      $region89: #{c3ae_forward.1} parent=11 // pred_check
        %p892 = pneg %p521
      $region90: #{c3ae_forward.1} parent=11 // pred_check_branch
        %894 = sbr.rel (%p892) target = $region92
      $region91: #{c3ae_forward.1} parent=11 // pred_region
        _
      $region92: #{c3ae_forward.1} parent=11 // pred_fallthru
        _
      // Predicated region
      $region93: #{c3ae_forward.1} parent=11 // pred_check
        %p895 = pneg %p542
      $region94: #{c3ae_forward.1} parent=11 // pred_check_branch
        %897 = sbr.rel (%p895) target = $region96
      $region95: #{c3ae_forward.1} parent=11 // pred_region
        _
      $region96: #{c3ae_forward.1} parent=11 // pred_fallthru
        _
      // Predicated region
      $region97: #{c3ae_forward.1} parent=11 // pred_check
        %p898 = pneg %p563
      $region98: #{c3ae_forward.1} parent=11 // pred_check_branch
        %900 = sbr.rel (%p898) target = $region100
      $region99: #{c3ae_forward.1} parent=11 // pred_region
        _
      $region100: #{c3ae_forward.1} parent=11 // pred_fallthru
        _
      // Predicated region
      $region101: #{c3ae_forward.1} parent=11 // pred_check
        %p901 = pneg %p584
      $region102: #{c3ae_forward.1} parent=11 // pred_check_branch
        %903 = sbr.rel (%p901) target = $region104
      $region103: #{c3ae_forward.1} parent=11 // pred_region
        _
      $region104: #{c3ae_forward.1} parent=11 // pred_fallthru
        _
      // Predicated region
      $region105: #{c3ae_forward.1} parent=11 // pred_check
        %p904 = pneg %p605
      $region106: #{c3ae_forward.1} parent=11 // pred_check_branch
        %906 = sbr.rel (%p904) target = $region108
      $region107: #{c3ae_forward.1} parent=11 // pred_region
        _
      $region108: #{c3ae_forward.1} parent=11 // pred_fallthru
        _
      // Predicated region
      $region109: #{c3ae_forward.1} parent=11 // pred_check
        %p907 = pneg %p626
      $region110: #{c3ae_forward.1} parent=11 // pred_check_branch
        %909 = sbr.rel (%p907) target = $region112
      $region111: #{c3ae_forward.1} parent=11 // pred_region
        _
      $region112: #{c3ae_forward.1} parent=11 // pred_fallthru
        _
      // Predicated region
      $region113: #{c3ae_forward.1} parent=11 // pred_check
        %p910 = pneg %p647
      $region114: #{c3ae_forward.1} parent=11 // pred_check_branch
        %912 = sbr.rel (%p910) target = $region116
      $region115: #{c3ae_forward.1} parent=11 // pred_region
        _
      $region116: #{c3ae_forward.1} parent=11 // pred_fallthru
        _
      // Predicated region
      $region117: #{c3ae_forward.1} parent=11 // pred_check
        %p913 = pneg %p668
      $region118: #{c3ae_forward.1} parent=11 // pred_check_branch
        %915 = sbr.rel (%p913) target = $region120
      $region119: #{c3ae_forward.1} parent=11 // pred_region
        _
      $region120: #{c3ae_forward.1} parent=11 // pred_fallthru
        _
      // Predicated region
      $region121: #{c3ae_forward.1} parent=11 // pred_check
        %p916 = pneg %p689
      $region122: #{c3ae_forward.1} parent=11 // pred_check_branch
        %918 = sbr.rel (%p916) target = $region124
      $region123: #{c3ae_forward.1} parent=11 // pred_region
        _
      $region124: #{c3ae_forward.1} parent=11 // pred_fallthru
        _
      // Predicated region
      $region125: #{c3ae_forward.1} parent=11 // pred_check
        %p919 = pneg %p710
      $region126: #{c3ae_forward.1} parent=11 // pred_check_branch
        %921 = sbr.rel (%p919) target = $region128
      $region127: #{c3ae_forward.1} parent=11 // pred_region
        _
      $region128: #{c3ae_forward.1} parent=11 // pred_fallthru
        _
      // Predicated region
      $region129: #{c3ae_forward.1} parent=11 // pred_check
        %p922 = pneg %p731
      $region130: #{c3ae_forward.1} parent=11 // pred_check_branch
        %924 = sbr.rel (%p922) target = $region132
      $region131: #{c3ae_forward.1} parent=11 // pred_region
        _
      $region132: #{c3ae_forward.1} parent=11 // pred_fallthru
        _
      // Predicated region
      $region133: #{c3ae_forward.1} parent=11 // pred_check
        %p925 = pneg %p752
      $region134: #{c3ae_forward.1} parent=11 // pred_check_branch
        %927 = sbr.rel (%p925) target = $region136
      $region135: #{c3ae_forward.1} parent=11 // pred_region
        _
      $region136: #{c3ae_forward.1} parent=11 // pred_fallthru
        _
      // Predicated region
      $region137: #{c3ae_forward.1} parent=11 // pred_check
        %p928 = pneg %p773
      $region138: #{c3ae_forward.1} parent=11 // pred_check_branch
        %930 = sbr.rel (%p928) target = $region140
      $region139: #{c3ae_forward.1} parent=11 // pred_region
        _
      $region140: #{c3ae_forward.1} parent=11 // pred_fallthru
        _
      // Predicated region
      $region141: #{c3ae_forward.1} parent=11 // pred_check
        %p931 = pneg %p794
      $region142: #{c3ae_forward.1} parent=11 // pred_check_branch
        %933 = sbr.rel (%p931) target = $region144
      $region143: #{c3ae_forward.1} parent=11 // pred_region
        _
      $region144: #{c3ae_forward.1} parent=11 // pred_fallthru
        _
    $region12: #{c3ae_forward.1} parent=5 // pred_fallthru
      _
    %p934 = scmp.lt.s32.totalorder %s75, 2
    // Predicated region
    $region145: #{c3ae_forward.1} parent=5 // pred_check
      %p935 = pneg %p934
    $region146: #{c3ae_forward.1} parent=5 // pred_check_branch
      %937 = sbr.rel (%p935) target = $region148
    $region147: #{c3ae_forward.1} parent=5 // pred_region
      // Predicated region
      $region149: #{c3ae_forward.1} parent=147 // pred_check
        %p938 = pneg %p95
      $region150: #{c3ae_forward.1} parent=147 // pred_check_branch
        %940 = sbr.rel (%p938) target = $region152
      $region151: #{c3ae_forward.1} parent=147 // pred_region
        %p941 = scmp.lt.s32.totalorder %s75, 1
        %s942 = scalar_select %p941, %s75, 1
        %s943 = smul.addr %s942, 68
        %s944 = smul.addr %s943, 8
        %s945 = scalar_lea.vmem %s1, %s944
      $region152: #{c3ae_forward.1} parent=147 // pred_fallthru
        _
    $region148: #{c3ae_forward.1} parent=5 // pred_fallthru
      _
    %p946 = scmp.le.s32.totalorder 1, %s75
    %p947 = scmp.lt.s32.totalorder %s75, 3
    %p948 = pnand %p946, %p947
    %p949 = pneg %p948
    // Predicated region
    $region153: #{c3ae_forward.1} parent=5 // pred_check
      _
    $region154: #{c3ae_forward.1} parent=5 // pred_check_branch
      %951 = sbr.rel (%p948) target = $region156
    $region155: #{c3ae_forward.1} parent=5 // pred_region
      %s952 = ssub.s32 %s75, 1
      %p953 = scmp.lt.s32.totalorder %s80, 1
      %s954 = scalar_select %p953, %s80, 1
      %s955 = smul.addr %s954, 68
      %s956 = smul.addr %s955, 8
      %s957 = scalar_lea.vmem %s1, %s956
      %p958 = pneg %p101
      %p959 = pneg %p98
      %p960 = pneg %p122
      %p961 = pneg %p119
      %p962 = pneg %p143
      %p963 = pneg %p140
      %p964 = pneg %p164
      %p965 = pneg %p161
      %p966 = pneg %p185
      %p967 = pneg %p182
      %p968 = pneg %p206
      %p969 = pneg %p203
      %p970 = pneg %p227
      %p971 = pneg %p224
      %p972 = pneg %p248
      %p973 = pneg %p245
      %p974 = pneg %p269
      %p975 = pneg %p266
      %p976 = pneg %p290
      %p977 = pneg %p287
      %p978 = pneg %p311
      %p979 = pneg %p308
      %p980 = pneg %p332
      %p981 = pneg %p329
      %p982 = pneg %p353
      %p983 = pneg %p350
      %p984 = pneg %p374
      %p985 = pneg %p371
      %p986 = pneg %p395
      %p987 = pneg %p392
      %p988 = pneg %p416
      %p989 = pneg %p413
      %p990 = pneg %p437
      %p991 = pneg %p434
      %p992 = pneg %p458
      %p993 = pneg %p455
      %p994 = pneg %p479
      %p995 = pneg %p476
      %p996 = pneg %p500
      %p997 = pneg %p497
      %p998 = pneg %p521
      %p999 = pneg %p518
      %p1000 = pneg %p542
      %p1001 = pneg %p539
      %p1002 = pneg %p563
      %p1003 = pneg %p560
      %p1004 = pneg %p584
      %p1005 = pneg %p581
      %p1006 = pneg %p605
      %p1007 = pneg %p602
      %p1008 = pneg %p626
      %p1009 = pneg %p623
      %p1010 = pneg %p647
      %p1011 = pneg %p644
      %p1012 = pneg %p668
      %p1013 = pneg %p665
      %p1014 = pneg %p689
      %p1015 = pneg %p686
      %p1016 = pneg %p710
      %p1017 = pneg %p707
      %p1018 = pneg %p731
      %p1019 = pneg %p728
      %p1020 = pneg %p752
      %p1021 = pneg %p749
      %p1022 = pneg %p773
      %p1023 = pneg %p770
      %p1024 = pneg %p794
      %p1025 = pneg %p791
      %p1026 = pneg %p820
      %p1027 = pneg %p817
      %p1028 = scmp.lt.s32.totalorder %s80, 1
      %s1029 = scalar_select %p1028, %s80, 1
      %s1030 = smul.addr %s1029, 4
      %s1031 = smul.addr %s1030, 8
      %s1032 = scalar_lea.vmem %s69, %s1031
      %p1033 = scmp.lt.s32.totalorder %s80, 1
      %s1034 = scalar_select %p1033, %s80, 1
      %s1035 = smul.addr %s1034, 68
      %s1036 = smul.addr %s1035, 8
      %s1037 = scalar_lea.vmem %s1, %s1036
      %p1038 = scmp.lt.s32.totalorder %s80, 1
      %s1039 = scalar_select %p1038, %s80, 1
      %s1040 = smul.addr %s1039, 4
      %s1041 = smul.addr %s1040, 8
      %s1042 = scalar_lea.vmem %s69, %s1041
      %v1043 = vld [vmem:[%s3] sm:$0xff]
      %v1044 = vld [vmem:[%s3 + $0x8] sm:$0xff]
      %v1045 = vld [vmem:[%s3 + $0x10] sm:$0xff]
      %v1046 = vld [vmem:[%s3 + $0x18] sm:$0xff]
      %v1047 = vld [vmem:[%s1037] sm:$0xff]
      %v1048 = vld [vmem:[%s1037 + $0x8] sm:$0xff]
      %v1049 = vld [vmem:[%s1037 + $0x10] sm:$0xff]
      %v1050 = vld [vmem:[%s1037 + $0x18] sm:$0xff]
      %v1051 = vld [vmem:[%s1037 + $0x20] sm:$0xff]
      %v1052 = vld [vmem:[%s1037 + $0x28] sm:$0xff]
      %v1053 = vld [vmem:[%s1037 + $0x30] sm:$0xff]
      %v1054 = vld [vmem:[%s1037 + $0x38] sm:$0xff]
      %v1055 = vld [vmem:[%s1037 + $0x40] sm:$0xff]
      %v1056 = vld [vmem:[%s1037 + $0x48] sm:$0xff]
      %v1057 = vld [vmem:[%s1037 + $0x50] sm:$0xff]
      %v1058 = vld [vmem:[%s1037 + $0x58] sm:$0xff]
      %v1059 = vld [vmem:[%s1037 + $0x60] sm:$0xff]
      %v1060 = vld [vmem:[%s1037 + $0x68] sm:$0xff]
      %v1061 = vld [vmem:[%s1037 + $0x70] sm:$0xff]
      %v1062 = vld [vmem:[%s1037 + $0x78] sm:$0xff]
      %v1063 = vld [vmem:[%s1037 + $0x80] sm:$0xff]
      %v1064 = vld [vmem:[%s1037 + $0x88] sm:$0xff]
      %v1065 = vld [vmem:[%s1037 + $0x90] sm:$0xff]
      %v1066 = vld [vmem:[%s1037 + $0x98] sm:$0xff]
      %v1067 = vld [vmem:[%s1037 + $0xa0] sm:$0xff]
      %v1068 = vld [vmem:[%s1037 + $0xa8] sm:$0xff]
      %v1069 = vld [vmem:[%s1037 + $0xb0] sm:$0xff]
      %v1070 = vld [vmem:[%s1037 + $0xb8] sm:$0xff]
      %v1071 = vld [vmem:[%s1037 + $0xc0] sm:$0xff]
      %v1072 = vld [vmem:[%s1037 + $0xc8] sm:$0xff]
      %v1073 = vld [vmem:[%s1037 + $0xd0] sm:$0xff]
      %v1074 = vld [vmem:[%s1037 + $0xd8] sm:$0xff]
      %v1075 = vld [vmem:[%s1037 + $0xe0] sm:$0xff]
      %v1076 = vld [vmem:[%s1037 + $0xe8] sm:$0xff]
      %v1077 = vld [vmem:[%s1037 + $0xf0] sm:$0xff]
      %v1078 = vld [vmem:[%s1037 + $0xf8] sm:$0xff]
      %v1079 = vld [vmem:[%s1037 + $0x100] sm:$0xff]
      %v1080 = vld [vmem:[%s1037 + $0x108] sm:$0xff]
      %v1081 = vld [vmem:[%s1037 + $0x110] sm:$0xff]
      %v1082 = vld [vmem:[%s1037 + $0x118] sm:$0xff]
      %v1083 = vld [vmem:[%s1037 + $0x120] sm:$0xff]
      %v1084 = vld [vmem:[%s1037 + $0x128] sm:$0xff]
      %v1085 = vld [vmem:[%s1037 + $0x130] sm:$0xff]
      %v1086 = vld [vmem:[%s1037 + $0x138] sm:$0xff]
      %v1087 = vld [vmem:[%s1037 + $0x140] sm:$0xff]
      %v1088 = vld [vmem:[%s1037 + $0x148] sm:$0xff]
      %v1089 = vld [vmem:[%s1037 + $0x150] sm:$0xff]
      %v1090 = vld [vmem:[%s1037 + $0x158] sm:$0xff]
      %v1091 = vld [vmem:[%s1037 + $0x160] sm:$0xff]
      %v1092 = vld [vmem:[%s1037 + $0x168] sm:$0xff]
      %v1093 = vld [vmem:[%s1037 + $0x170] sm:$0xff]
      %v1094 = vld [vmem:[%s1037 + $0x178] sm:$0xff]
      %v1095 = vld [vmem:[%s1037 + $0x180] sm:$0xff]
      %v1096 = vld [vmem:[%s1037 + $0x188] sm:$0xff]
      %v1097 = vld [vmem:[%s1037 + $0x190] sm:$0xff]
      %v1098 = vld [vmem:[%s1037 + $0x198] sm:$0xff]
      %v1099 = vld [vmem:[%s1037 + $0x1a0] sm:$0xff]
      %v1100 = vld [vmem:[%s1037 + $0x1a8] sm:$0xff]
      %v1101 = vld [vmem:[%s1037 + $0x1b0] sm:$0xff]
      %v1102 = vld [vmem:[%s1037 + $0x1b8] sm:$0xff]
      %v1103 = vld [vmem:[%s1037 + $0x1c0] sm:$0xff]
      %v1104 = vld [vmem:[%s1037 + $0x1c8] sm:$0xff]
      %v1105 = vld [vmem:[%s1037 + $0x1d0] sm:$0xff]
      %v1106 = vld [vmem:[%s1037 + $0x1d8] sm:$0xff]
      %v1107 = vld [vmem:[%s1037 + $0x1e0] sm:$0xff]
      %v1108 = vld [vmem:[%s1037 + $0x1e8] sm:$0xff]
      %v1109 = vld [vmem:[%s1037 + $0x1f0] sm:$0xff]
      %v1110 = vld [vmem:[%s1037 + $0x1f8] sm:$0xff]
      %v1111 = vld [vmem:[%s1037 + $0x200] sm:$0xff]
      %v1112 = vld [vmem:[%s1037 + $0x208] sm:$0xff]
      %v1113 = vld [vmem:[%s1037 + $0x210] sm:$0xff]
      %v1114 = vld [vmem:[%s1037 + $0x218] sm:$0xff]
      %v1115 = vld [vmem:[%s5] sm:$0xff]
      %v1116 = vld [vmem:[%s5 + $0x8] sm:$0xff]
      %v1117 = vld [vmem:[%s5 + $0x10] sm:$0xff]
      %v1118 = vld [vmem:[%s5 + $0x18] sm:$0xff]
      %1120 = vset.pattern.permute.xlu0 0
      %1121 = vperm.xlu0 %1120, %v1115
      %v1122 = vpop.permute.xlu0 %1121
      %1125 = vset.pattern.permute.xlu0 0
      %1126 = vperm.xlu0 %1125, %v1116
      %v1127 = vpop.permute.xlu0 %1126
      %1130 = vset.pattern.permute.xlu0 0
      %1131 = vperm.xlu0 %1130, %v1117
      %v1132 = vpop.permute.xlu0 %1131
      %1135 = vset.pattern.permute.xlu0 0
      %1136 = vperm.xlu0 %1135, %v1118
      %v1137 = vpop.permute.xlu0 %1136
      %vm1139 = vcmask 261120
      %v1141 = vsel %vm1139, %v1043, 0
      %v1144 = vsel %vm1139, %v1044, 0
      %v1147 = vsel %vm1139, %v1045, 0
      %v1150 = vsel %vm1139, %v1046, 0
      %1152 = vmatpush.msra.mxu0 0.0
      %1153 = vmatpush.msra.mxu0 0.0
      %1154 = vmatpush.msra.mxu0 0.0
      %1155 = vmatpush.msra.mxu0 0.0
      %1156 = vmatpush.msra.mxu0 0.0
      %1157 = vmatpush.msra.mxu0 0.0
      %1158 = vmatpush.msra.mxu0 0.0
      %1159 = vmatpush.msra.mxu0 0.0
      %1160 = vmatpush.msra.mxu0 0.0
      %1161 = vmatpush.msra.mxu0 0.0
      %1162 = vmatpush.msra.mxu0 0.0
      %1163 = vmatpush.msra.mxu0 0.0
      %1164 = vmatpush.msra.mxu0 %v1098
      %1165 = vmatpush.msra.mxu0 %v1081
      %1166 = vmatpush.msra.mxu0 %v1064
      %1167 = vmatpush.msra.mxu0 %v1047
      %1168 = vmatmul.f32.gmra.mxu0 %v1141
      %v1169 = vpop.f32.mrf.mxu0
      %v1170 = vadd.f32 %v1122, %v1169
      %1171 = vmatmul.f32.gmra.mxu0 %v1144
      %v1172 = vpop.f32.mrf.mxu0
      %v1173 = vadd.f32 %v1127, %v1172
      %1174 = vmatmul.f32.gmra.mxu0 %v1147
      %v1175 = vpop.f32.mrf.mxu0
      %v1176 = vadd.f32 %v1132, %v1175
      %1177 = vmatmul.f32.gmra.mxu0 %v1150
      %v1178 = vpop.f32.mrf.mxu0
      %v1179 = vadd.f32 %v1137, %v1178
      %1180 = vdwg.mxu0
      %1181 = vmatpush.msra.mxu0 0.0
      %1182 = vmatpush.msra.mxu0 0.0
      %1183 = vmatpush.msra.mxu0 0.0
      %1184 = vmatpush.msra.mxu0 0.0
      %1185 = vmatpush.msra.mxu0 0.0
      %1186 = vmatpush.msra.mxu0 0.0
      %1187 = vmatpush.msra.mxu0 0.0
      %1188 = vmatpush.msra.mxu0 0.0
      %1189 = vmatpush.msra.mxu0 0.0
      %1190 = vmatpush.msra.mxu0 0.0
      %1191 = vmatpush.msra.mxu0 0.0
      %1192 = vmatpush.msra.mxu0 0.0
      %1193 = vmatpush.msra.mxu0 %v1099
      %1194 = vmatpush.msra.mxu0 %v1082
      %1195 = vmatpush.msra.mxu0 %v1065
      %1196 = vmatpush.msra.mxu0 %v1048
      %1197 = vmatmul.f32.gmra.mxu0 %v1141
      %v1198 = vpop.f32.mrf.mxu0
      %v1199 = vadd.f32 %v1122, %v1198
      %1200 = vmatmul.f32.gmra.mxu0 %v1144
      %v1201 = vpop.f32.mrf.mxu0
      %v1202 = vadd.f32 %v1127, %v1201
      %1203 = vmatmul.f32.gmra.mxu0 %v1147
      %v1204 = vpop.f32.mrf.mxu0
      %v1205 = vadd.f32 %v1132, %v1204
      %1206 = vmatmul.f32.gmra.mxu0 %v1150
      %v1207 = vpop.f32.mrf.mxu0
      %v1208 = vadd.f32 %v1137, %v1207
      %1209 = vdwg.mxu0
      %1210 = vmatpush.msra.mxu0 0.0
      %1211 = vmatpush.msra.mxu0 0.0
      %1212 = vmatpush.msra.mxu0 0.0
      %1213 = vmatpush.msra.mxu0 0.0
      %1214 = vmatpush.msra.mxu0 0.0
      %1215 = vmatpush.msra.mxu0 0.0
      %1216 = vmatpush.msra.mxu0 0.0
      %1217 = vmatpush.msra.mxu0 0.0
      %1218 = vmatpush.msra.mxu0 0.0
      %1219 = vmatpush.msra.mxu0 0.0
      %1220 = vmatpush.msra.mxu0 0.0
      %1221 = vmatpush.msra.mxu0 0.0
      %1222 = vmatpush.msra.mxu0 %v1100
      %1223 = vmatpush.msra.mxu0 %v1083
      %1224 = vmatpush.msra.mxu0 %v1066
      %1225 = vmatpush.msra.mxu0 %v1049
      %1226 = vmatmul.f32.gmra.mxu0 %v1141
      %v1227 = vpop.f32.mrf.mxu0
      %v1228 = vadd.f32 %v1122, %v1227
      %1229 = vmatmul.f32.gmra.mxu0 %v1144
      %v1230 = vpop.f32.mrf.mxu0
      %v1231 = vadd.f32 %v1127, %v1230
      %1232 = vmatmul.f32.gmra.mxu0 %v1147
      %v1233 = vpop.f32.mrf.mxu0
      %v1234 = vadd.f32 %v1132, %v1233
      %1235 = vmatmul.f32.gmra.mxu0 %v1150
      %v1236 = vpop.f32.mrf.mxu0
      %v1237 = vadd.f32 %v1137, %v1236
      %1238 = vdwg.mxu0
      %1239 = vmatpush.msra.mxu0 0.0
      %1240 = vmatpush.msra.mxu0 0.0
      %1241 = vmatpush.msra.mxu0 0.0
      %1242 = vmatpush.msra.mxu0 0.0
      %1243 = vmatpush.msra.mxu0 0.0
      %1244 = vmatpush.msra.mxu0 0.0
      %1245 = vmatpush.msra.mxu0 0.0
      %1246 = vmatpush.msra.mxu0 0.0
      %1247 = vmatpush.msra.mxu0 0.0
      %1248 = vmatpush.msra.mxu0 0.0
      %1249 = vmatpush.msra.mxu0 0.0
      %1250 = vmatpush.msra.mxu0 0.0
      %1251 = vmatpush.msra.mxu0 %v1101
      %1252 = vmatpush.msra.mxu0 %v1084
      %1253 = vmatpush.msra.mxu0 %v1067
      %1254 = vmatpush.msra.mxu0 %v1050
      %1255 = vmatmul.f32.gmra.mxu0 %v1141
      %v1256 = vpop.f32.mrf.mxu0
      %v1257 = vadd.f32 %v1122, %v1256
      %1258 = vmatmul.f32.gmra.mxu0 %v1144
      %v1259 = vpop.f32.mrf.mxu0
      %v1260 = vadd.f32 %v1127, %v1259
      %1261 = vmatmul.f32.gmra.mxu0 %v1147
      %v1262 = vpop.f32.mrf.mxu0
      %v1263 = vadd.f32 %v1132, %v1262
      %1264 = vmatmul.f32.gmra.mxu0 %v1150
      %v1265 = vpop.f32.mrf.mxu0
      %v1266 = vadd.f32 %v1137, %v1265
      %1267 = vdwg.mxu0
      %1268 = vmatpush.msra.mxu0 0.0
      %1269 = vmatpush.msra.mxu0 0.0
      %1270 = vmatpush.msra.mxu0 0.0
      %1271 = vmatpush.msra.mxu0 0.0
      %1272 = vmatpush.msra.mxu0 0.0
      %1273 = vmatpush.msra.mxu0 0.0
      %1274 = vmatpush.msra.mxu0 0.0
      %1275 = vmatpush.msra.mxu0 0.0
      %1276 = vmatpush.msra.mxu0 0.0
      %1277 = vmatpush.msra.mxu0 0.0
      %1278 = vmatpush.msra.mxu0 0.0
      %1279 = vmatpush.msra.mxu0 0.0
      %1280 = vmatpush.msra.mxu0 %v1102
      %1281 = vmatpush.msra.mxu0 %v1085
      %1282 = vmatpush.msra.mxu0 %v1068
      %1283 = vmatpush.msra.mxu0 %v1051
      %1284 = vmatmul.f32.gmra.mxu0 %v1141
      %v1285 = vpop.f32.mrf.mxu0
      %v1286 = vadd.f32 %v1122, %v1285
      %1287 = vmatmul.f32.gmra.mxu0 %v1144
      %v1288 = vpop.f32.mrf.mxu0
      %v1289 = vadd.f32 %v1127, %v1288
      %1290 = vmatmul.f32.gmra.mxu0 %v1147
      %v1291 = vpop.f32.mrf.mxu0
      %v1292 = vadd.f32 %v1132, %v1291
      %1293 = vmatmul.f32.gmra.mxu0 %v1150
      %v1294 = vpop.f32.mrf.mxu0
      %v1295 = vadd.f32 %v1137, %v1294
      %1296 = vdwg.mxu0
      %1297 = vmatpush.msra.mxu0 0.0
      %1298 = vmatpush.msra.mxu0 0.0
      %1299 = vmatpush.msra.mxu0 0.0
      %1300 = vmatpush.msra.mxu0 0.0
      %1301 = vmatpush.msra.mxu0 0.0
      %1302 = vmatpush.msra.mxu0 0.0
      %1303 = vmatpush.msra.mxu0 0.0
      %1304 = vmatpush.msra.mxu0 0.0
      %1305 = vmatpush.msra.mxu0 0.0
      %1306 = vmatpush.msra.mxu0 0.0
      %1307 = vmatpush.msra.mxu0 0.0
      %1308 = vmatpush.msra.mxu0 0.0
      %1309 = vmatpush.msra.mxu0 %v1103
      %1310 = vmatpush.msra.mxu0 %v1086
      %1311 = vmatpush.msra.mxu0 %v1069
      %1312 = vmatpush.msra.mxu0 %v1052
      %1313 = vmatmul.f32.gmra.mxu0 %v1141
      %v1314 = vpop.f32.mrf.mxu0
      %v1315 = vadd.f32 %v1122, %v1314
      %1316 = vmatmul.f32.gmra.mxu0 %v1144
      %v1317 = vpop.f32.mrf.mxu0
      %v1318 = vadd.f32 %v1127, %v1317
      %1319 = vmatmul.f32.gmra.mxu0 %v1147
      %v1320 = vpop.f32.mrf.mxu0
      %v1321 = vadd.f32 %v1132, %v1320
      %1322 = vmatmul.f32.gmra.mxu0 %v1150
      %v1323 = vpop.f32.mrf.mxu0
      %v1324 = vadd.f32 %v1137, %v1323
      %1325 = vdwg.mxu0
      %1326 = vmatpush.msra.mxu0 0.0
      %1327 = vmatpush.msra.mxu0 0.0
      %1328 = vmatpush.msra.mxu0 0.0
      %1329 = vmatpush.msra.mxu0 0.0
      %1330 = vmatpush.msra.mxu0 0.0
      %1331 = vmatpush.msra.mxu0 0.0
      %1332 = vmatpush.msra.mxu0 0.0
      %1333 = vmatpush.msra.mxu0 0.0
      %1334 = vmatpush.msra.mxu0 0.0
      %1335 = vmatpush.msra.mxu0 0.0
      %1336 = vmatpush.msra.mxu0 0.0
      %1337 = vmatpush.msra.mxu0 0.0
      %1338 = vmatpush.msra.mxu0 %v1104
      %1339 = vmatpush.msra.mxu0 %v1087
      %1340 = vmatpush.msra.mxu0 %v1070
      %1341 = vmatpush.msra.mxu0 %v1053
      %1342 = vmatmul.f32.gmra.mxu0 %v1141
      %v1343 = vpop.f32.mrf.mxu0
      %v1344 = vadd.f32 %v1122, %v1343
      %1345 = vmatmul.f32.gmra.mxu0 %v1144
      %v1346 = vpop.f32.mrf.mxu0
      %v1347 = vadd.f32 %v1127, %v1346
      %1348 = vmatmul.f32.gmra.mxu0 %v1147
      %v1349 = vpop.f32.mrf.mxu0
      %v1350 = vadd.f32 %v1132, %v1349
      %1351 = vmatmul.f32.gmra.mxu0 %v1150
      %v1352 = vpop.f32.mrf.mxu0
      %v1353 = vadd.f32 %v1137, %v1352
      %1354 = vdwg.mxu0
      %1355 = vmatpush.msra.mxu0 0.0
      %1356 = vmatpush.msra.mxu0 0.0
      %1357 = vmatpush.msra.mxu0 0.0
      %1358 = vmatpush.msra.mxu0 0.0
      %1359 = vmatpush.msra.mxu0 0.0
      %1360 = vmatpush.msra.mxu0 0.0
      %1361 = vmatpush.msra.mxu0 0.0
      %1362 = vmatpush.msra.mxu0 0.0
      %1363 = vmatpush.msra.mxu0 0.0
      %1364 = vmatpush.msra.mxu0 0.0
      %1365 = vmatpush.msra.mxu0 0.0
      %1366 = vmatpush.msra.mxu0 0.0
      %1367 = vmatpush.msra.mxu0 %v1105
      %1368 = vmatpush.msra.mxu0 %v1088
      %1369 = vmatpush.msra.mxu0 %v1071
      %1370 = vmatpush.msra.mxu0 %v1054
      %1371 = vmatmul.f32.gmra.mxu0 %v1141
      %v1372 = vpop.f32.mrf.mxu0
      %v1373 = vadd.f32 %v1122, %v1372
      %1374 = vmatmul.f32.gmra.mxu0 %v1144
      %v1375 = vpop.f32.mrf.mxu0
      %v1376 = vadd.f32 %v1127, %v1375
      %1377 = vmatmul.f32.gmra.mxu0 %v1147
      %v1378 = vpop.f32.mrf.mxu0
      %v1379 = vadd.f32 %v1132, %v1378
      %1380 = vmatmul.f32.gmra.mxu0 %v1150
      %v1381 = vpop.f32.mrf.mxu0
      %v1382 = vadd.f32 %v1137, %v1381
      %1383 = vdwg.mxu0
      %1384 = vmatpush.msra.mxu0 0.0
      %1385 = vmatpush.msra.mxu0 0.0
      %1386 = vmatpush.msra.mxu0 0.0
      %1387 = vmatpush.msra.mxu0 0.0
      %1388 = vmatpush.msra.mxu0 0.0
      %1389 = vmatpush.msra.mxu0 0.0
      %1390 = vmatpush.msra.mxu0 0.0
      %1391 = vmatpush.msra.mxu0 0.0
      %1392 = vmatpush.msra.mxu0 0.0
      %1393 = vmatpush.msra.mxu0 0.0
      %1394 = vmatpush.msra.mxu0 0.0
      %1395 = vmatpush.msra.mxu0 0.0
      %1396 = vmatpush.msra.mxu0 %v1106
      %1397 = vmatpush.msra.mxu0 %v1089
      %1398 = vmatpush.msra.mxu0 %v1072
      %1399 = vmatpush.msra.mxu0 %v1055
      %1400 = vmatmul.f32.gmra.mxu0 %v1141
      %v1401 = vpop.f32.mrf.mxu0
      %v1402 = vadd.f32 %v1122, %v1401
      %1403 = vmatmul.f32.gmra.mxu0 %v1144
      %v1404 = vpop.f32.mrf.mxu0
      %v1405 = vadd.f32 %v1127, %v1404
      %1406 = vmatmul.f32.gmra.mxu0 %v1147
      %v1407 = vpop.f32.mrf.mxu0
      %v1408 = vadd.f32 %v1132, %v1407
      %1409 = vmatmul.f32.gmra.mxu0 %v1150
      %v1410 = vpop.f32.mrf.mxu0
      %v1411 = vadd.f32 %v1137, %v1410
      %1412 = vdwg.mxu0
      %1413 = vmatpush.msra.mxu0 0.0
      %1414 = vmatpush.msra.mxu0 0.0
      %1415 = vmatpush.msra.mxu0 0.0
      %1416 = vmatpush.msra.mxu0 0.0
      %1417 = vmatpush.msra.mxu0 0.0
      %1418 = vmatpush.msra.mxu0 0.0
      %1419 = vmatpush.msra.mxu0 0.0
      %1420 = vmatpush.msra.mxu0 0.0
      %1421 = vmatpush.msra.mxu0 0.0
      %1422 = vmatpush.msra.mxu0 0.0
      %1423 = vmatpush.msra.mxu0 0.0
      %1424 = vmatpush.msra.mxu0 0.0
      %1425 = vmatpush.msra.mxu0 %v1107
      %1426 = vmatpush.msra.mxu0 %v1090
      %1427 = vmatpush.msra.mxu0 %v1073
      %1428 = vmatpush.msra.mxu0 %v1056
      %1429 = vmatmul.f32.gmra.mxu0 %v1141
      %v1430 = vpop.f32.mrf.mxu0
      %v1431 = vadd.f32 %v1122, %v1430
      %1432 = vmatmul.f32.gmra.mxu0 %v1144
      %v1433 = vpop.f32.mrf.mxu0
      %v1434 = vadd.f32 %v1127, %v1433
      %1435 = vmatmul.f32.gmra.mxu0 %v1147
      %v1436 = vpop.f32.mrf.mxu0
      %v1437 = vadd.f32 %v1132, %v1436
      %1438 = vmatmul.f32.gmra.mxu0 %v1150
      %v1439 = vpop.f32.mrf.mxu0
      %v1440 = vadd.f32 %v1137, %v1439
      %1441 = vdwg.mxu0
      %1442 = vmatpush.msra.mxu0 0.0
      %1443 = vmatpush.msra.mxu0 0.0
      %1444 = vmatpush.msra.mxu0 0.0
      %1445 = vmatpush.msra.mxu0 0.0
      %1446 = vmatpush.msra.mxu0 0.0
      %1447 = vmatpush.msra.mxu0 0.0
      %1448 = vmatpush.msra.mxu0 0.0
      %1449 = vmatpush.msra.mxu0 0.0
      %1450 = vmatpush.msra.mxu0 0.0
      %1451 = vmatpush.msra.mxu0 0.0
      %1452 = vmatpush.msra.mxu0 0.0
      %1453 = vmatpush.msra.mxu0 0.0
      %1454 = vmatpush.msra.mxu0 %v1108
      %1455 = vmatpush.msra.mxu0 %v1091
      %1456 = vmatpush.msra.mxu0 %v1074
      %1457 = vmatpush.msra.mxu0 %v1057
      %1458 = vmatmul.f32.gmra.mxu0 %v1141
      %v1459 = vpop.f32.mrf.mxu0
      %v1460 = vadd.f32 %v1122, %v1459
      %1461 = vmatmul.f32.gmra.mxu0 %v1144
      %v1462 = vpop.f32.mrf.mxu0
      %v1463 = vadd.f32 %v1127, %v1462
      %1464 = vmatmul.f32.gmra.mxu0 %v1147
      %v1465 = vpop.f32.mrf.mxu0
      %v1466 = vadd.f32 %v1132, %v1465
      %1467 = vmatmul.f32.gmra.mxu0 %v1150
      %v1468 = vpop.f32.mrf.mxu0
      %v1469 = vadd.f32 %v1137, %v1468
      %1470 = vdwg.mxu0
      %1471 = vmatpush.msra.mxu0 0.0
      %1472 = vmatpush.msra.mxu0 0.0
      %1473 = vmatpush.msra.mxu0 0.0
      %1474 = vmatpush.msra.mxu0 0.0
      %1475 = vmatpush.msra.mxu0 0.0
      %1476 = vmatpush.msra.mxu0 0.0
      %1477 = vmatpush.msra.mxu0 0.0
      %1478 = vmatpush.msra.mxu0 0.0
      %1479 = vmatpush.msra.mxu0 0.0
      %1480 = vmatpush.msra.mxu0 0.0
      %1481 = vmatpush.msra.mxu0 0.0
      %1482 = vmatpush.msra.mxu0 0.0
      %1483 = vmatpush.msra.mxu0 %v1109
      %1484 = vmatpush.msra.mxu0 %v1092
      %1485 = vmatpush.msra.mxu0 %v1075
      %1486 = vmatpush.msra.mxu0 %v1058
      %1487 = vmatmul.f32.gmra.mxu0 %v1141
      %v1488 = vpop.f32.mrf.mxu0
      %v1489 = vadd.f32 %v1122, %v1488
      %1490 = vmatmul.f32.gmra.mxu0 %v1144
      %v1491 = vpop.f32.mrf.mxu0
      %v1492 = vadd.f32 %v1127, %v1491
      %1493 = vmatmul.f32.gmra.mxu0 %v1147
      %v1494 = vpop.f32.mrf.mxu0
      %v1495 = vadd.f32 %v1132, %v1494
      %1496 = vmatmul.f32.gmra.mxu0 %v1150
      %v1497 = vpop.f32.mrf.mxu0
      %v1498 = vadd.f32 %v1137, %v1497
      %1499 = vdwg.mxu0
      %1500 = vmatpush.msra.mxu0 0.0
      %1501 = vmatpush.msra.mxu0 0.0
      %1502 = vmatpush.msra.mxu0 0.0
      %1503 = vmatpush.msra.mxu0 0.0
      %1504 = vmatpush.msra.mxu0 0.0
      %1505 = vmatpush.msra.mxu0 0.0
      %1506 = vmatpush.msra.mxu0 0.0
      %1507 = vmatpush.msra.mxu0 0.0
      %1508 = vmatpush.msra.mxu0 0.0
      %1509 = vmatpush.msra.mxu0 0.0
      %1510 = vmatpush.msra.mxu0 0.0
      %1511 = vmatpush.msra.mxu0 0.0
      %1512 = vmatpush.msra.mxu0 %v1110
      %1513 = vmatpush.msra.mxu0 %v1093
      %1514 = vmatpush.msra.mxu0 %v1076
      %1515 = vmatpush.msra.mxu0 %v1059
      %1516 = vmatmul.f32.gmra.mxu0 %v1141
      %v1517 = vpop.f32.mrf.mxu0
      %v1518 = vadd.f32 %v1122, %v1517
      %1519 = vmatmul.f32.gmra.mxu0 %v1144
      %v1520 = vpop.f32.mrf.mxu0
      %v1521 = vadd.f32 %v1127, %v1520
      %1522 = vmatmul.f32.gmra.mxu0 %v1147
      %v1523 = vpop.f32.mrf.mxu0
      %v1524 = vadd.f32 %v1132, %v1523
      %1525 = vmatmul.f32.gmra.mxu0 %v1150
      %v1526 = vpop.f32.mrf.mxu0
      %v1527 = vadd.f32 %v1137, %v1526
      %1528 = vdwg.mxu0
      %1529 = vmatpush.msra.mxu0 0.0
      %1530 = vmatpush.msra.mxu0 0.0
      %1531 = vmatpush.msra.mxu0 0.0
      %1532 = vmatpush.msra.mxu0 0.0
      %1533 = vmatpush.msra.mxu0 0.0
      %1534 = vmatpush.msra.mxu0 0.0
      %1535 = vmatpush.msra.mxu0 0.0
      %1536 = vmatpush.msra.mxu0 0.0
      %1537 = vmatpush.msra.mxu0 0.0
      %1538 = vmatpush.msra.mxu0 0.0
      %1539 = vmatpush.msra.mxu0 0.0
      %1540 = vmatpush.msra.mxu0 0.0
      %1541 = vmatpush.msra.mxu0 %v1111
      %1542 = vmatpush.msra.mxu0 %v1094
      %1543 = vmatpush.msra.mxu0 %v1077
      %1544 = vmatpush.msra.mxu0 %v1060
      %1545 = vmatmul.f32.gmra.mxu0 %v1141
      %v1546 = vpop.f32.mrf.mxu0
      %v1547 = vadd.f32 %v1122, %v1546
      %1548 = vmatmul.f32.gmra.mxu0 %v1144
      %v1549 = vpop.f32.mrf.mxu0
      %v1550 = vadd.f32 %v1127, %v1549
      %1551 = vmatmul.f32.gmra.mxu0 %v1147
      %v1552 = vpop.f32.mrf.mxu0
      %v1553 = vadd.f32 %v1132, %v1552
      %1554 = vmatmul.f32.gmra.mxu0 %v1150
      %v1555 = vpop.f32.mrf.mxu0
      %v1556 = vadd.f32 %v1137, %v1555
      %1557 = vdwg.mxu0
      %1558 = vmatpush.msra.mxu0 0.0
      %1559 = vmatpush.msra.mxu0 0.0
      %1560 = vmatpush.msra.mxu0 0.0
      %1561 = vmatpush.msra.mxu0 0.0
      %1562 = vmatpush.msra.mxu0 0.0
      %1563 = vmatpush.msra.mxu0 0.0
      %1564 = vmatpush.msra.mxu0 0.0
      %1565 = vmatpush.msra.mxu0 0.0
      %1566 = vmatpush.msra.mxu0 0.0
      %1567 = vmatpush.msra.mxu0 0.0
      %1568 = vmatpush.msra.mxu0 0.0
      %1569 = vmatpush.msra.mxu0 0.0
      %1570 = vmatpush.msra.mxu0 %v1112
      %1571 = vmatpush.msra.mxu0 %v1095
      %1572 = vmatpush.msra.mxu0 %v1078
      %1573 = vmatpush.msra.mxu0 %v1061
      %1574 = vmatmul.f32.gmra.mxu0 %v1141
      %v1575 = vpop.f32.mrf.mxu0
      %v1576 = vadd.f32 %v1122, %v1575
      %1577 = vmatmul.f32.gmra.mxu0 %v1144
      %v1578 = vpop.f32.mrf.mxu0
      %v1579 = vadd.f32 %v1127, %v1578
      %1580 = vmatmul.f32.gmra.mxu0 %v1147
      %v1581 = vpop.f32.mrf.mxu0
      %v1582 = vadd.f32 %v1132, %v1581
      %1583 = vmatmul.f32.gmra.mxu0 %v1150
      %v1584 = vpop.f32.mrf.mxu0
      %v1585 = vadd.f32 %v1137, %v1584
      %1586 = vdwg.mxu0
      %1587 = vmatpush.msra.mxu0 0.0
      %1588 = vmatpush.msra.mxu0 0.0
      %1589 = vmatpush.msra.mxu0 0.0
      %1590 = vmatpush.msra.mxu0 0.0
      %1591 = vmatpush.msra.mxu0 0.0
      %1592 = vmatpush.msra.mxu0 0.0
      %1593 = vmatpush.msra.mxu0 0.0
      %1594 = vmatpush.msra.mxu0 0.0
      %1595 = vmatpush.msra.mxu0 0.0
      %1596 = vmatpush.msra.mxu0 0.0
      %1597 = vmatpush.msra.mxu0 0.0
      %1598 = vmatpush.msra.mxu0 0.0
      %1599 = vmatpush.msra.mxu0 %v1113
      %1600 = vmatpush.msra.mxu0 %v1096
      %1601 = vmatpush.msra.mxu0 %v1079
      %1602 = vmatpush.msra.mxu0 %v1062
      %1603 = vmatmul.f32.gmra.mxu0 %v1141
      %v1604 = vpop.f32.mrf.mxu0
      %v1605 = vadd.f32 %v1122, %v1604
      %1606 = vmatmul.f32.gmra.mxu0 %v1144
      %v1607 = vpop.f32.mrf.mxu0
      %v1608 = vadd.f32 %v1127, %v1607
      %1609 = vmatmul.f32.gmra.mxu0 %v1147
      %v1610 = vpop.f32.mrf.mxu0
      %v1611 = vadd.f32 %v1132, %v1610
      %1612 = vmatmul.f32.gmra.mxu0 %v1150
      %v1613 = vpop.f32.mrf.mxu0
      %v1614 = vadd.f32 %v1137, %v1613
      %1615 = vdwg.mxu0
      %1616 = vmatpush.msra.mxu0 0.0
      %1617 = vmatpush.msra.mxu0 0.0
      %1618 = vmatpush.msra.mxu0 0.0
      %1619 = vmatpush.msra.mxu0 0.0
      %1620 = vmatpush.msra.mxu0 0.0
      %1621 = vmatpush.msra.mxu0 0.0
      %1622 = vmatpush.msra.mxu0 0.0
      %1623 = vmatpush.msra.mxu0 0.0
      %1624 = vmatpush.msra.mxu0 0.0
      %1625 = vmatpush.msra.mxu0 0.0
      %1626 = vmatpush.msra.mxu0 0.0
      %1627 = vmatpush.msra.mxu0 0.0
      %1628 = vmatpush.msra.mxu0 %v1114
      %1629 = vmatpush.msra.mxu0 %v1097
      %1630 = vmatpush.msra.mxu0 %v1080
      %1631 = vmatpush.msra.mxu0 %v1063
      %1632 = vmatmul.f32.gmra.mxu0 %v1141
      %v1633 = vpop.f32.mrf.mxu0
      %v1634 = vadd.f32 %v1122, %v1633
      %1635 = vmatmul.f32.gmra.mxu0 %v1144
      %v1636 = vpop.f32.mrf.mxu0
      %v1637 = vadd.f32 %v1127, %v1636
      %1638 = vmatmul.f32.gmra.mxu0 %v1147
      %v1639 = vpop.f32.mrf.mxu0
      %v1640 = vadd.f32 %v1132, %v1639
      %1641 = vmatmul.f32.gmra.mxu0 %v1150
      %v1642 = vpop.f32.mrf.mxu0
      %v1643 = vadd.f32 %v1137, %v1642
      %1644 = vdwg.mxu0
      %v1645 = vadd.f32 %v1170, 3.0
      %v1646 = vadd.f32 %v1199, 3.0
      %v1647 = vadd.f32 %v1228, 3.0
      %v1648 = vadd.f32 %v1257, 3.0
      %v1649 = vadd.f32 %v1286, 3.0
      %v1650 = vadd.f32 %v1315, 3.0
      %v1651 = vadd.f32 %v1344, 3.0
      %v1652 = vadd.f32 %v1373, 3.0
      %v1653 = vadd.f32 %v1402, 3.0
      %v1654 = vadd.f32 %v1431, 3.0
      %v1655 = vadd.f32 %v1460, 3.0
      %v1656 = vadd.f32 %v1489, 3.0
      %v1657 = vadd.f32 %v1518, 3.0
      %v1658 = vadd.f32 %v1547, 3.0
      %v1659 = vadd.f32 %v1576, 3.0
      %v1660 = vadd.f32 %v1605, 3.0
      %v1661 = vadd.f32 %v1634, 3.0
      %v1662 = vadd.f32 %v1173, 3.0
      %v1663 = vadd.f32 %v1202, 3.0
      %v1664 = vadd.f32 %v1231, 3.0
      %v1665 = vadd.f32 %v1260, 3.0
      %v1666 = vadd.f32 %v1289, 3.0
      %v1667 = vadd.f32 %v1318, 3.0
      %v1668 = vadd.f32 %v1347, 3.0
      %v1669 = vadd.f32 %v1376, 3.0
      %v1670 = vadd.f32 %v1405, 3.0
      %v1671 = vadd.f32 %v1434, 3.0
      %v1672 = vadd.f32 %v1463, 3.0
      %v1673 = vadd.f32 %v1492, 3.0
      %v1674 = vadd.f32 %v1521, 3.0
      %v1675 = vadd.f32 %v1550, 3.0
      %v1676 = vadd.f32 %v1579, 3.0
      %v1677 = vadd.f32 %v1608, 3.0
      %v1678 = vadd.f32 %v1637, 3.0
      %v1679 = vadd.f32 %v1176, 3.0
      %v1680 = vadd.f32 %v1205, 3.0
      %v1681 = vadd.f32 %v1234, 3.0
      %v1682 = vadd.f32 %v1263, 3.0
      %v1683 = vadd.f32 %v1292, 3.0
      %v1684 = vadd.f32 %v1321, 3.0
      %v1685 = vadd.f32 %v1350, 3.0
      %v1686 = vadd.f32 %v1379, 3.0
      %v1687 = vadd.f32 %v1408, 3.0
      %v1688 = vadd.f32 %v1437, 3.0
      %v1689 = vadd.f32 %v1466, 3.0
      %v1690 = vadd.f32 %v1495, 3.0
      %v1691 = vadd.f32 %v1524, 3.0
      %v1692 = vadd.f32 %v1553, 3.0
      %v1693 = vadd.f32 %v1582, 3.0
      %v1694 = vadd.f32 %v1611, 3.0
      %v1695 = vadd.f32 %v1640, 3.0
      %v1696 = vadd.f32 %v1179, 3.0
      %v1697 = vadd.f32 %v1208, 3.0
      %v1698 = vadd.f32 %v1237, 3.0
      %v1699 = vadd.f32 %v1266, 3.0
      %v1700 = vadd.f32 %v1295, 3.0
      %v1701 = vadd.f32 %v1324, 3.0
      %v1702 = vadd.f32 %v1353, 3.0
      %v1703 = vadd.f32 %v1382, 3.0
      %v1704 = vadd.f32 %v1411, 3.0
      %v1705 = vadd.f32 %v1440, 3.0
      %v1706 = vadd.f32 %v1469, 3.0
      %v1707 = vadd.f32 %v1498, 3.0
      %v1708 = vadd.f32 %v1527, 3.0
      %v1709 = vadd.f32 %v1556, 3.0
      %v1710 = vadd.f32 %v1585, 3.0
      %v1711 = vadd.f32 %v1614, 3.0
      %v1712 = vadd.f32 %v1643, 3.0
      %v1713 = vmax.f32 %v1645, 0.0
      %v1714 = vmax.f32 %v1646, 0.0
      %v1715 = vmax.f32 %v1647, 0.0
      %v1716 = vmax.f32 %v1648, 0.0
      %v1717 = vmax.f32 %v1649, 0.0
      %v1718 = vmax.f32 %v1650, 0.0
      %v1719 = vmax.f32 %v1651, 0.0
      %v1720 = vmax.f32 %v1652, 0.0
      %v1721 = vmax.f32 %v1653, 0.0
      %v1722 = vmax.f32 %v1654, 0.0
      %v1723 = vmax.f32 %v1655, 0.0
      %v1724 = vmax.f32 %v1656, 0.0
      %v1725 = vmax.f32 %v1657, 0.0
      %v1726 = vmax.f32 %v1658, 0.0
      %v1727 = vmax.f32 %v1659, 0.0
      %v1728 = vmax.f32 %v1660, 0.0
      %v1729 = vmax.f32 %v1661, 0.0
      %v1730 = vmax.f32 %v1662, 0.0
      %v1731 = vmax.f32 %v1663, 0.0
      %v1732 = vmax.f32 %v1664, 0.0
      %v1733 = vmax.f32 %v1665, 0.0
      %v1734 = vmax.f32 %v1666, 0.0
      %v1735 = vmax.f32 %v1667, 0.0
      %v1736 = vmax.f32 %v1668, 0.0
      %v1737 = vmax.f32 %v1669, 0.0
      %v1738 = vmax.f32 %v1670, 0.0
      %v1739 = vmax.f32 %v1671, 0.0
      %v1740 = vmax.f32 %v1672, 0.0
      %v1741 = vmax.f32 %v1673, 0.0
      %v1742 = vmax.f32 %v1674, 0.0
      %v1743 = vmax.f32 %v1675, 0.0
      %v1744 = vmax.f32 %v1676, 0.0
      %v1745 = vmax.f32 %v1677, 0.0
      %v1746 = vmax.f32 %v1678, 0.0
      %v1747 = vmax.f32 %v1679, 0.0
      %v1748 = vmax.f32 %v1680, 0.0
      %v1749 = vmax.f32 %v1681, 0.0
      %v1750 = vmax.f32 %v1682, 0.0
      %v1751 = vmax.f32 %v1683, 0.0
      %v1752 = vmax.f32 %v1684, 0.0
      %v1753 = vmax.f32 %v1685, 0.0
      %v1754 = vmax.f32 %v1686, 0.0
      %v1755 = vmax.f32 %v1687, 0.0
      %v1756 = vmax.f32 %v1688, 0.0
      %v1757 = vmax.f32 %v1689, 0.0
      %v1758 = vmax.f32 %v1690, 0.0
      %v1759 = vmax.f32 %v1691, 0.0
      %v1760 = vmax.f32 %v1692, 0.0
      %v1761 = vmax.f32 %v1693, 0.0
      %v1762 = vmax.f32 %v1694, 0.0
      %v1763 = vmax.f32 %v1695, 0.0
      %v1764 = vmax.f32 %v1696, 0.0
      %v1765 = vmax.f32 %v1697, 0.0
      %v1766 = vmax.f32 %v1698, 0.0
      %v1767 = vmax.f32 %v1699, 0.0
      %v1768 = vmax.f32 %v1700, 0.0
      %v1769 = vmax.f32 %v1701, 0.0
      %v1770 = vmax.f32 %v1702, 0.0
      %v1771 = vmax.f32 %v1703, 0.0
      %v1772 = vmax.f32 %v1704, 0.0
      %v1773 = vmax.f32 %v1705, 0.0
      %v1774 = vmax.f32 %v1706, 0.0
      %v1775 = vmax.f32 %v1707, 0.0
      %v1776 = vmax.f32 %v1708, 0.0
      %v1777 = vmax.f32 %v1709, 0.0
      %v1778 = vmax.f32 %v1710, 0.0
      %v1779 = vmax.f32 %v1711, 0.0
      %v1780 = vmax.f32 %v1712, 0.0
      %v1781 = vmin.f32 %v1713, 6.0
      %v1782 = vmin.f32 %v1714, 6.0
      %v1783 = vmin.f32 %v1715, 6.0
      %v1784 = vmin.f32 %v1716, 6.0
      %v1785 = vmin.f32 %v1717, 6.0
      %v1786 = vmin.f32 %v1718, 6.0
      %v1787 = vmin.f32 %v1719, 6.0
      %v1788 = vmin.f32 %v1720, 6.0
      %v1789 = vmin.f32 %v1721, 6.0
      %v1790 = vmin.f32 %v1722, 6.0
      %v1791 = vmin.f32 %v1723, 6.0
      %v1792 = vmin.f32 %v1724, 6.0
      %v1793 = vmin.f32 %v1725, 6.0
      %v1794 = vmin.f32 %v1726, 6.0
      %v1795 = vmin.f32 %v1727, 6.0
      %v1796 = vmin.f32 %v1728, 6.0
      %v1797 = vmin.f32 %v1729, 6.0
      %v1798 = vmin.f32 %v1730, 6.0
      %v1799 = vmin.f32 %v1731, 6.0
      %v1800 = vmin.f32 %v1732, 6.0
      %v1801 = vmin.f32 %v1733, 6.0
      %v1802 = vmin.f32 %v1734, 6.0
      %v1803 = vmin.f32 %v1735, 6.0
      %v1804 = vmin.f32 %v1736, 6.0
      %v1805 = vmin.f32 %v1737, 6.0
      %v1806 = vmin.f32 %v1738, 6.0
      %v1807 = vmin.f32 %v1739, 6.0
      %v1808 = vmin.f32 %v1740, 6.0
      %v1809 = vmin.f32 %v1741, 6.0
      %v1810 = vmin.f32 %v1742, 6.0
      %v1811 = vmin.f32 %v1743, 6.0
      %v1812 = vmin.f32 %v1744, 6.0
      %v1813 = vmin.f32 %v1745, 6.0
      %v1814 = vmin.f32 %v1746, 6.0
      %v1815 = vmin.f32 %v1747, 6.0
      %v1816 = vmin.f32 %v1748, 6.0
      %v1817 = vmin.f32 %v1749, 6.0
      %v1818 = vmin.f32 %v1750, 6.0
      %v1819 = vmin.f32 %v1751, 6.0
      %v1820 = vmin.f32 %v1752, 6.0
      %v1821 = vmin.f32 %v1753, 6.0
      %v1822 = vmin.f32 %v1754, 6.0
      %v1823 = vmin.f32 %v1755, 6.0
      %v1824 = vmin.f32 %v1756, 6.0
      %v1825 = vmin.f32 %v1757, 6.0
      %v1826 = vmin.f32 %v1758, 6.0
      %v1827 = vmin.f32 %v1759, 6.0
      %v1828 = vmin.f32 %v1760, 6.0
      %v1829 = vmin.f32 %v1761, 6.0
      %v1830 = vmin.f32 %v1762, 6.0
      %v1831 = vmin.f32 %v1763, 6.0
      %v1832 = vmin.f32 %v1764, 6.0
      %v1833 = vmin.f32 %v1765, 6.0
      %v1834 = vmin.f32 %v1766, 6.0
      %v1835 = vmin.f32 %v1767, 6.0
      %v1836 = vmin.f32 %v1768, 6.0
      %v1837 = vmin.f32 %v1769, 6.0
      %v1838 = vmin.f32 %v1770, 6.0
      %v1839 = vmin.f32 %v1771, 6.0
      %v1840 = vmin.f32 %v1772, 6.0
      %v1841 = vmin.f32 %v1773, 6.0
      %v1842 = vmin.f32 %v1774, 6.0
      %v1843 = vmin.f32 %v1775, 6.0
      %v1844 = vmin.f32 %v1776, 6.0
      %v1845 = vmin.f32 %v1777, 6.0
      %v1846 = vmin.f32 %v1778, 6.0
      %v1847 = vmin.f32 %v1779, 6.0
      %v1848 = vmin.f32 %v1780, 6.0
      %v1849 = vmul.f32 %v1170, %v1781
      %v1850 = vmul.f32 %v1199, %v1782
      %v1851 = vmul.f32 %v1228, %v1783
      %v1852 = vmul.f32 %v1257, %v1784
      %v1853 = vmul.f32 %v1286, %v1785
      %v1854 = vmul.f32 %v1315, %v1786
      %v1855 = vmul.f32 %v1344, %v1787
      %v1856 = vmul.f32 %v1373, %v1788
      %v1857 = vmul.f32 %v1402, %v1789
      %v1858 = vmul.f32 %v1431, %v1790
      %v1859 = vmul.f32 %v1460, %v1791
      %v1860 = vmul.f32 %v1489, %v1792
      %v1861 = vmul.f32 %v1518, %v1793
      %v1862 = vmul.f32 %v1547, %v1794
      %v1863 = vmul.f32 %v1576, %v1795
      %v1864 = vmul.f32 %v1605, %v1796
      %v1865 = vmul.f32 %v1634, %v1797
      %v1866 = vmul.f32 %v1173, %v1798
      %v1867 = vmul.f32 %v1202, %v1799
      %v1868 = vmul.f32 %v1231, %v1800
      %v1869 = vmul.f32 %v1260, %v1801
      %v1870 = vmul.f32 %v1289, %v1802
      %v1871 = vmul.f32 %v1318, %v1803
      %v1872 = vmul.f32 %v1347, %v1804
      %v1873 = vmul.f32 %v1376, %v1805
      %v1874 = vmul.f32 %v1405, %v1806
      %v1875 = vmul.f32 %v1434, %v1807
      %v1876 = vmul.f32 %v1463, %v1808
      %v1877 = vmul.f32 %v1492, %v1809
      %v1878 = vmul.f32 %v1521, %v1810
      %v1879 = vmul.f32 %v1550, %v1811
      %v1880 = vmul.f32 %v1579, %v1812
      %v1881 = vmul.f32 %v1608, %v1813
      %v1882 = vmul.f32 %v1637, %v1814
      %v1883 = vmul.f32 %v1176, %v1815
      %v1884 = vmul.f32 %v1205, %v1816
      %v1885 = vmul.f32 %v1234, %v1817
      %v1886 = vmul.f32 %v1263, %v1818
      %v1887 = vmul.f32 %v1292, %v1819
      %v1888 = vmul.f32 %v1321, %v1820
      %v1889 = vmul.f32 %v1350, %v1821
      %v1890 = vmul.f32 %v1379, %v1822
      %v1891 = vmul.f32 %v1408, %v1823
      %v1892 = vmul.f32 %v1437, %v1824
      %v1893 = vmul.f32 %v1466, %v1825
      %v1894 = vmul.f32 %v1495, %v1826
      %v1895 = vmul.f32 %v1524, %v1827
      %v1896 = vmul.f32 %v1553, %v1828
      %v1897 = vmul.f32 %v1582, %v1829
      %v1898 = vmul.f32 %v1611, %v1830
      %v1899 = vmul.f32 %v1640, %v1831
      %v1900 = vmul.f32 %v1179, %v1832
      %v1901 = vmul.f32 %v1208, %v1833
      %v1902 = vmul.f32 %v1237, %v1834
      %v1903 = vmul.f32 %v1266, %v1835
      %v1904 = vmul.f32 %v1295, %v1836
      %v1905 = vmul.f32 %v1324, %v1837
      %v1906 = vmul.f32 %v1353, %v1838
      %v1907 = vmul.f32 %v1382, %v1839
      %v1908 = vmul.f32 %v1411, %v1840
      %v1909 = vmul.f32 %v1440, %v1841
      %v1910 = vmul.f32 %v1469, %v1842
      %v1911 = vmul.f32 %v1498, %v1843
      %v1912 = vmul.f32 %v1527, %v1844
      %v1913 = vmul.f32 %v1556, %v1845
      %v1914 = vmul.f32 %v1585, %v1846
      %v1915 = vmul.f32 %v1614, %v1847
      %v1916 = vmul.f32 %v1643, %v1848
      %v1917 = vmul.f32 %v1849, 0.16666667
      %v1918 = vmul.f32 %v1850, 0.16666667
      %v1919 = vmul.f32 %v1851, 0.16666667
      %v1920 = vmul.f32 %v1852, 0.16666667
      %v1921 = vmul.f32 %v1853, 0.16666667
      %v1922 = vmul.f32 %v1854, 0.16666667
      %v1923 = vmul.f32 %v1855, 0.16666667
      %v1924 = vmul.f32 %v1856, 0.16666667
      %v1925 = vmul.f32 %v1857, 0.16666667
      %v1926 = vmul.f32 %v1858, 0.16666667
      %v1927 = vmul.f32 %v1859, 0.16666667
      %v1928 = vmul.f32 %v1860, 0.16666667
      %v1929 = vmul.f32 %v1861, 0.16666667
      %v1930 = vmul.f32 %v1862, 0.16666667
      %v1931 = vmul.f32 %v1863, 0.16666667
      %v1932 = vmul.f32 %v1864, 0.16666667
      %v1933 = vmul.f32 %v1865, 0.16666667
      %v1934 = vmul.f32 %v1866, 0.16666667
      %v1935 = vmul.f32 %v1867, 0.16666667
      %v1936 = vmul.f32 %v1868, 0.16666667
      %v1937 = vmul.f32 %v1869, 0.16666667
      %v1938 = vmul.f32 %v1870, 0.16666667
      %v1939 = vmul.f32 %v1871, 0.16666667
      %v1940 = vmul.f32 %v1872, 0.16666667
      %v1941 = vmul.f32 %v1873, 0.16666667
      %v1942 = vmul.f32 %v1874, 0.16666667
      %v1943 = vmul.f32 %v1875, 0.16666667
      %v1944 = vmul.f32 %v1876, 0.16666667
      %v1945 = vmul.f32 %v1877, 0.16666667
      %v1946 = vmul.f32 %v1878, 0.16666667
      %v1947 = vmul.f32 %v1879, 0.16666667
      %v1948 = vmul.f32 %v1880, 0.16666667
      %v1949 = vmul.f32 %v1881, 0.16666667
      %v1950 = vmul.f32 %v1882, 0.16666667
      %v1951 = vmul.f32 %v1883, 0.16666667
      %v1952 = vmul.f32 %v1884, 0.16666667
      %v1953 = vmul.f32 %v1885, 0.16666667
      %v1954 = vmul.f32 %v1886, 0.16666667
      %v1955 = vmul.f32 %v1887, 0.16666667
      %v1956 = vmul.f32 %v1888, 0.16666667
      %v1957 = vmul.f32 %v1889, 0.16666667
      %v1958 = vmul.f32 %v1890, 0.16666667
      %v1959 = vmul.f32 %v1891, 0.16666667
      %v1960 = vmul.f32 %v1892, 0.16666667
      %v1961 = vmul.f32 %v1893, 0.16666667
      %v1962 = vmul.f32 %v1894, 0.16666667
      %v1963 = vmul.f32 %v1895, 0.16666667
      %v1964 = vmul.f32 %v1896, 0.16666667
      %v1965 = vmul.f32 %v1897, 0.16666667
      %v1966 = vmul.f32 %v1898, 0.16666667
      %v1967 = vmul.f32 %v1899, 0.16666667
      %v1968 = vmul.f32 %v1900, 0.16666667
      %v1969 = vmul.f32 %v1901, 0.16666667
      %v1970 = vmul.f32 %v1902, 0.16666667
      %v1971 = vmul.f32 %v1903, 0.16666667
      %v1972 = vmul.f32 %v1904, 0.16666667
      %v1973 = vmul.f32 %v1905, 0.16666667
      %v1974 = vmul.f32 %v1906, 0.16666667
      %v1975 = vmul.f32 %v1907, 0.16666667
      %v1976 = vmul.f32 %v1908, 0.16666667
      %v1977 = vmul.f32 %v1909, 0.16666667
      %v1978 = vmul.f32 %v1910, 0.16666667
      %v1979 = vmul.f32 %v1911, 0.16666667
      %v1980 = vmul.f32 %v1912, 0.16666667
      %v1981 = vmul.f32 %v1913, 0.16666667
      %v1982 = vmul.f32 %v1914, 0.16666667
      %v1983 = vmul.f32 %v1915, 0.16666667
      %v1984 = vmul.f32 %v1916, 0.16666667
      %2005 = vrot.lane.b32.xlu0 %v1921, 111
      %v2006 = vpop.permute.xlu0 %2005
      %2007 = vrot.lane.b32.xlu0 %v1922, 111
      %v2008 = vpop.permute.xlu0 %2007
      %2009 = vrot.lane.b32.xlu0 %v1923, 111
      %v2010 = vpop.permute.xlu0 %2009
      %2011 = vrot.lane.b32.xlu0 %v1924, 111
      %v2012 = vpop.permute.xlu0 %2011
      %2013 = vrot.lane.b32.xlu0 %v1925, 111
      %v2014 = vpop.permute.xlu0 %2013
      %2015 = vrot.lane.b32.xlu0 %v1938, 111
      %v2016 = vpop.permute.xlu0 %2015
      %2017 = vrot.lane.b32.xlu0 %v1939, 111
      %v2018 = vpop.permute.xlu0 %2017
      %2019 = vrot.lane.b32.xlu0 %v1940, 111
      %v2020 = vpop.permute.xlu0 %2019
      %2021 = vrot.lane.b32.xlu0 %v1941, 111
      %v2022 = vpop.permute.xlu0 %2021
      %2023 = vrot.lane.b32.xlu0 %v1942, 111
      %v2024 = vpop.permute.xlu0 %2023
      %2025 = vrot.lane.b32.xlu0 %v1955, 111
      %v2026 = vpop.permute.xlu0 %2025
      %2027 = vrot.lane.b32.xlu0 %v1956, 111
      %v2028 = vpop.permute.xlu0 %2027
      %2029 = vrot.lane.b32.xlu0 %v1957, 111
      %v2030 = vpop.permute.xlu0 %2029
      %2031 = vrot.lane.b32.xlu0 %v1958, 111
      %v2032 = vpop.permute.xlu0 %2031
      %2033 = vrot.lane.b32.xlu0 %v1959, 111
      %v2034 = vpop.permute.xlu0 %2033
      %2035 = vrot.lane.b32.xlu0 %v1972, 111
      %v2036 = vpop.permute.xlu0 %2035
      %2037 = vrot.lane.b32.xlu0 %v1973, 111
      %v2038 = vpop.permute.xlu0 %2037
      %2039 = vrot.lane.b32.xlu0 %v1974, 111
      %v2040 = vpop.permute.xlu0 %2039
      %2041 = vrot.lane.b32.xlu0 %v1975, 111
      %v2042 = vpop.permute.xlu0 %2041
      %2043 = vrot.lane.b32.xlu0 %v1976, 111
      %v2044 = vpop.permute.xlu0 %2043
      %vm2045 = vcmask 908288
      %v2046 = vsel %vm2045, %v2006, %v2008
      %v2047 = vsel %vm2045, %v2008, %v2010
      %v2048 = vsel %vm2045, %v2010, %v2012
      %v2049 = vsel %vm2045, %v2012, %v2014
      %v2050 = vsel %vm2045, %v2016, %v2018
      %v2051 = vsel %vm2045, %v2018, %v2020
      %v2052 = vsel %vm2045, %v2020, %v2022
      %v2053 = vsel %vm2045, %v2022, %v2024
      %v2054 = vsel %vm2045, %v2026, %v2028
      %v2055 = vsel %vm2045, %v2028, %v2030
      %v2056 = vsel %vm2045, %v2030, %v2032
      %v2057 = vsel %vm2045, %v2032, %v2034
      %v2058 = vsel %vm2045, %v2036, %v2038
      %v2059 = vsel %vm2045, %v2038, %v2040
      %v2060 = vsel %vm2045, %v2040, %v2042
      %v2061 = vsel %vm2045, %v2042, %v2044
      %v2082 = vadd.f32 %v1917, %v2046
      %v2083 = vadd.f32 %v1918, %v2047
      %v2084 = vadd.f32 %v1919, %v2048
      %v2085 = vadd.f32 %v1920, %v2049
      %v2086 = vadd.f32 %v1921, %v2014
      %v2087 = vadd.f32 %v1934, %v2050
      %v2088 = vadd.f32 %v1935, %v2051
      %v2089 = vadd.f32 %v1936, %v2052
      %v2090 = vadd.f32 %v1937, %v2053
      %v2091 = vadd.f32 %v1938, %v2024
      %v2092 = vadd.f32 %v1951, %v2054
      %v2093 = vadd.f32 %v1952, %v2055
      %v2094 = vadd.f32 %v1953, %v2056
      %v2095 = vadd.f32 %v1954, %v2057
      %v2096 = vadd.f32 %v1955, %v2034
      %v2097 = vadd.f32 %v1968, %v2058
      %v2098 = vadd.f32 %v1969, %v2059
      %v2099 = vadd.f32 %v1970, %v2060
      %v2100 = vadd.f32 %v1971, %v2061
      %v2101 = vadd.f32 %v1972, %v2044
      %2118 = vrot.lane.b32.xlu0 %v1925, 94
      %v2119 = vpop.permute.xlu0 %2118
      %2120 = vrot.lane.b32.xlu0 %v1926, 94
      %v2121 = vpop.permute.xlu0 %2120
      %2122 = vrot.lane.b32.xlu0 %v1927, 94
      %v2123 = vpop.permute.xlu0 %2122
      %2124 = vrot.lane.b32.xlu0 %v1928, 94
      %v2125 = vpop.permute.xlu0 %2124
      %2126 = vrot.lane.b32.xlu0 %v1929, 94
      %v2127 = vpop.permute.xlu0 %2126
      %2128 = vrot.lane.b32.xlu0 %v1942, 94
      %v2129 = vpop.permute.xlu0 %2128
      %2130 = vrot.lane.b32.xlu0 %v1943, 94
      %v2131 = vpop.permute.xlu0 %2130
      %2132 = vrot.lane.b32.xlu0 %v1944, 94
      %v2133 = vpop.permute.xlu0 %2132
      %2134 = vrot.lane.b32.xlu0 %v1945, 94
      %v2135 = vpop.permute.xlu0 %2134
      %2136 = vrot.lane.b32.xlu0 %v1946, 94
      %v2137 = vpop.permute.xlu0 %2136
      %2138 = vrot.lane.b32.xlu0 %v1959, 94
      %v2139 = vpop.permute.xlu0 %2138
      %2140 = vrot.lane.b32.xlu0 %v1960, 94
      %v2141 = vpop.permute.xlu0 %2140
      %2142 = vrot.lane.b32.xlu0 %v1961, 94
      %v2143 = vpop.permute.xlu0 %2142
      %2144 = vrot.lane.b32.xlu0 %v1962, 94
      %v2145 = vpop.permute.xlu0 %2144
      %2146 = vrot.lane.b32.xlu0 %v1963, 94
      %v2147 = vpop.permute.xlu0 %2146
      %2148 = vrot.lane.b32.xlu0 %v1976, 94
      %v2149 = vpop.permute.xlu0 %2148
      %2150 = vrot.lane.b32.xlu0 %v1977, 94
      %v2151 = vpop.permute.xlu0 %2150
      %2152 = vrot.lane.b32.xlu0 %v1978, 94
      %v2153 = vpop.permute.xlu0 %2152
      %2154 = vrot.lane.b32.xlu0 %v1979, 94
      %v2155 = vpop.permute.xlu0 %2154
      %2156 = vrot.lane.b32.xlu0 %v1980, 94
      %v2157 = vpop.permute.xlu0 %2156
      %vm2158 = vcmask 769024
      %v2159 = vsel %vm2158, %v2119, %v2121
      %v2160 = vsel %vm2158, %v2121, %v2123
      %v2161 = vsel %vm2158, %v2123, %v2125
      %v2162 = vsel %vm2158, %v2125, %v2127
      %v2163 = vsel %vm2158, %v2129, %v2131
      %v2164 = vsel %vm2158, %v2131, %v2133
      %v2165 = vsel %vm2158, %v2133, %v2135
      %v2166 = vsel %vm2158, %v2135, %v2137
      %v2167 = vsel %vm2158, %v2139, %v2141
      %v2168 = vsel %vm2158, %v2141, %v2143
      %v2169 = vsel %vm2158, %v2143, %v2145
      %v2170 = vsel %vm2158, %v2145, %v2147
      %v2171 = vsel %vm2158, %v2149, %v2151
      %v2172 = vsel %vm2158, %v2151, %v2153
      %v2173 = vsel %vm2158, %v2153, %v2155
      %v2174 = vsel %vm2158, %v2155, %v2157
      %v2195 = vadd.f32 %v2082, %v2159
      %v2196 = vadd.f32 %v2083, %v2160
      %v2197 = vadd.f32 %v2084, %v2161
      %v2198 = vadd.f32 %v2085, %v2162
      %v2199 = vadd.f32 %v2086, %v2127
      %v2200 = vadd.f32 %v2087, %v2163
      %v2201 = vadd.f32 %v2088, %v2164
      %v2202 = vadd.f32 %v2089, %v2165
      %v2203 = vadd.f32 %v2090, %v2166
      %v2204 = vadd.f32 %v2091, %v2137
      %v2205 = vadd.f32 %v2092, %v2167
      %v2206 = vadd.f32 %v2093, %v2168
      %v2207 = vadd.f32 %v2094, %v2169
      %v2208 = vadd.f32 %v2095, %v2170
      %v2209 = vadd.f32 %v2096, %v2147
      %v2210 = vadd.f32 %v2097, %v2171
      %v2211 = vadd.f32 %v2098, %v2172
      %v2212 = vadd.f32 %v2099, %v2173
      %v2213 = vadd.f32 %v2100, %v2174
      %v2214 = vadd.f32 %v2101, %v2157
      %2231 = vrot.lane.b32.xlu0 %v1929, 77
      %v2232 = vpop.permute.xlu0 %2231
      %2233 = vrot.lane.b32.xlu0 %v1930, 77
      %v2234 = vpop.permute.xlu0 %2233
      %2235 = vrot.lane.b32.xlu0 %v1931, 77
      %v2236 = vpop.permute.xlu0 %2235
      %2237 = vrot.lane.b32.xlu0 %v1932, 77
      %v2238 = vpop.permute.xlu0 %2237
      %2239 = vrot.lane.b32.xlu0 %v1933, 77
      %v2240 = vpop.permute.xlu0 %2239
      %2241 = vrot.lane.b32.xlu0 %v1946, 77
      %v2242 = vpop.permute.xlu0 %2241
      %2243 = vrot.lane.b32.xlu0 %v1947, 77
      %v2244 = vpop.permute.xlu0 %2243
      %2245 = vrot.lane.b32.xlu0 %v1948, 77
      %v2246 = vpop.permute.xlu0 %2245
      %2247 = vrot.lane.b32.xlu0 %v1949, 77
      %v2248 = vpop.permute.xlu0 %2247
      %2249 = vrot.lane.b32.xlu0 %v1950, 77
      %v2250 = vpop.permute.xlu0 %2249
      %2251 = vrot.lane.b32.xlu0 %v1963, 77
      %v2252 = vpop.permute.xlu0 %2251
      %2253 = vrot.lane.b32.xlu0 %v1964, 77
      %v2254 = vpop.permute.xlu0 %2253
      %2255 = vrot.lane.b32.xlu0 %v1965, 77
      %v2256 = vpop.permute.xlu0 %2255
      %2257 = vrot.lane.b32.xlu0 %v1966, 77
      %v2258 = vpop.permute.xlu0 %2257
      %2259 = vrot.lane.b32.xlu0 %v1967, 77
      %v2260 = vpop.permute.xlu0 %2259
      %2261 = vrot.lane.b32.xlu0 %v1980, 77
      %v2262 = vpop.permute.xlu0 %2261
      %2263 = vrot.lane.b32.xlu0 %v1981, 77
      %v2264 = vpop.permute.xlu0 %2263
      %2265 = vrot.lane.b32.xlu0 %v1982, 77
      %v2266 = vpop.permute.xlu0 %2265
      %2267 = vrot.lane.b32.xlu0 %v1983, 77
      %v2268 = vpop.permute.xlu0 %2267
      %2269 = vrot.lane.b32.xlu0 %v1984, 77
      %v2270 = vpop.permute.xlu0 %2269
      %vm2271 = vcmask 629760
      %v2272 = vsel %vm2271, %v2232, %v2234
      %v2273 = vsel %vm2271, %v2234, %v2236
      %v2274 = vsel %vm2271, %v2236, %v2238
      %v2275 = vsel %vm2271, %v2238, %v2240
      %v2276 = vsel %vm2271, %v2242, %v2244
      %v2277 = vsel %vm2271, %v2244, %v2246
      %v2278 = vsel %vm2271, %v2246, %v2248
      %v2279 = vsel %vm2271, %v2248, %v2250
      %v2280 = vsel %vm2271, %v2252, %v2254
      %v2281 = vsel %vm2271, %v2254, %v2256
      %v2282 = vsel %vm2271, %v2256, %v2258
      %v2283 = vsel %vm2271, %v2258, %v2260
      %v2284 = vsel %vm2271, %v2262, %v2264
      %v2285 = vsel %vm2271, %v2264, %v2266
      %v2286 = vsel %vm2271, %v2266, %v2268
      %v2287 = vsel %vm2271, %v2268, %v2270
      %v2308 = vadd.f32 %v2195, %v2272
      %v2309 = vadd.f32 %v2196, %v2273
      %v2310 = vadd.f32 %v2197, %v2274
      %v2311 = vadd.f32 %v2198, %v2275
      %v2312 = vadd.f32 %v2199, %v2240
      %v2313 = vadd.f32 %v2200, %v2276
      %v2314 = vadd.f32 %v2201, %v2277
      %v2315 = vadd.f32 %v2202, %v2278
      %v2316 = vadd.f32 %v2203, %v2279
      %v2317 = vadd.f32 %v2204, %v2250
      %v2318 = vadd.f32 %v2205, %v2280
      %v2319 = vadd.f32 %v2206, %v2281
      %v2320 = vadd.f32 %v2207, %v2282
      %v2321 = vadd.f32 %v2208, %v2283
      %v2322 = vadd.f32 %v2209, %v2260
      %v2323 = vadd.f32 %v2210, %v2284
      %v2324 = vadd.f32 %v2211, %v2285
      %v2325 = vadd.f32 %v2212, %v2286
      %v2326 = vadd.f32 %v2213, %v2287
      %v2327 = vadd.f32 %v2214, %v2270
      %v2328 = vmul.f32 %v2308, 0.25
      %v2329 = vmul.f32 %v2309, 0.25
      %v2330 = vmul.f32 %v2310, 0.25
      %v2331 = vmul.f32 %v2311, 0.25
      %v2332 = vmul.f32 %v2312, 0.25
      %v2333 = vmul.f32 %v2313, 0.25
      %v2334 = vmul.f32 %v2314, 0.25
      %v2335 = vmul.f32 %v2315, 0.25
      %v2336 = vmul.f32 %v2316, 0.25
      %v2337 = vmul.f32 %v2317, 0.25
      %v2338 = vmul.f32 %v2318, 0.25
      %v2339 = vmul.f32 %v2319, 0.25
      %v2340 = vmul.f32 %v2320, 0.25
      %v2341 = vmul.f32 %v2321, 0.25
      %v2342 = vmul.f32 %v2322, 0.25
      %v2343 = vmul.f32 %v2323, 0.25
      %v2344 = vmul.f32 %v2324, 0.25
      %v2345 = vmul.f32 %v2325, 0.25
      %v2346 = vmul.f32 %v2326, 0.25
      %v2347 = vmul.f32 %v2327, 0.25
      %v2348 = vadd.f32 %v2328, %v2329
      %v2349 = vadd.f32 %v2348, %v2330
      %v2350 = vadd.f32 %v2349, %v2331
      %vm2351 = vcmask 138240
      %v2352 = vsel %vm2351, %v2332, 0.0
      %v2353 = vadd.f32 %v2350, %v2352
      %2354 = vadd.xlane.f32.xlu0 %v2353
      %v2355 = vpop.xlane.xlu0 %2354
      %v2356 = vadd.f32 %v2333, %v2334
      %v2357 = vadd.f32 %v2356, %v2335
      %v2358 = vadd.f32 %v2357, %v2336
      %v2359 = vsel %vm2351, %v2337, 0.0
      %v2360 = vadd.f32 %v2358, %v2359
      %2361 = vadd.xlane.f32.xlu0 %v2360
      %v2362 = vpop.xlane.xlu0 %2361
      %v2363 = vadd.f32 %v2338, %v2339
      %v2364 = vadd.f32 %v2363, %v2340
      %v2365 = vadd.f32 %v2364, %v2341
      %v2366 = vsel %vm2351, %v2342, 0.0
      %v2367 = vadd.f32 %v2365, %v2366
      %2368 = vadd.xlane.f32.xlu0 %v2367
      %v2369 = vpop.xlane.xlu0 %2368
      %v2370 = vadd.f32 %v2343, %v2344
      %v2371 = vadd.f32 %v2370, %v2345
      %v2372 = vadd.f32 %v2371, %v2346
      %v2373 = vsel %vm2351, %v2347, 0.0
      %v2374 = vadd.f32 %v2372, %v2373
      %2375 = vadd.xlane.f32.xlu0 %v2374
      %v2376 = vpop.xlane.xlu0 %2375
      %v2377 = vrcp.pop 529.0
      %v2378 = vmul.f32 529.0, %v2377
      %v2379 = vsub.f32 1.0, %v2378
      %v2380 = vmul.f32 %v2377, %v2379
      %v2381 = vadd.f32 %v2377, %v2380
      %vm2382 = vweird.f32 %v2377
      %v2383 = vsel %vm2382, %v2377, %v2381
      %v2384 = vmul.f32 %v2355, %v2383
      %v2385 = vmul.f32 %v2362, %v2383
      %v2386 = vmul.f32 %v2369, %v2383
      %v2387 = vmul.f32 %v2376, %v2383
      %v2388 = vld [vmem:[%s23] sm:$0xff]
      %v2389 = vld [vmem:[%s23 + $0x8] sm:$0xff]
      %v2390 = vld [vmem:[%s25] sm:$0xff]
      %v2391 = vld [vmem:[%s25 + $0x8] sm:$0xff]
      %v2393 = vsel %vm1139, %v2388, 0
      %v2396 = vsel %vm1139, %v2389, 0
      %2398 = vmatpush.msra.mxu0 0.0
      %2399 = vmatpush.msra.mxu0 0.0
      %2400 = vmatpush.msra.mxu0 0.0
      %2401 = vmatpush.msra.mxu0 0.0
      %2402 = vmatpush.msra.mxu0 0.0
      %2403 = vmatpush.msra.mxu0 0.0
      %2404 = vmatpush.msra.mxu0 0.0
      %2405 = vmatpush.msra.mxu0 0.0
      %2406 = vmatpush.msra.mxu0 0.0
      %2407 = vmatpush.msra.mxu0 0.0
      %2408 = vmatpush.msra.mxu0 0.0
      %2409 = vmatpush.msra.mxu0 0.0
      %2410 = vmatpush.msra.mxu0 %v2387
      %2411 = vmatpush.msra.mxu0 %v2386
      %2412 = vmatpush.msra.mxu0 %v2385
      %2413 = vmatpush.msra.mxu0 %v2384
      %2414 = vmatmul.f32.gmra.mxu0 %v2393
      %v2415 = vpop.f32.mrf.mxu0
      %v2416 = vadd.f32 %v2390, %v2415
      %2417 = vmatmul.f32.gmra.mxu0 %v2396
      %v2418 = vpop.f32.mrf.mxu0
      %v2419 = vadd.f32 %v2391, %v2418
      %2420 = vdwg.mxu0
      %v2421 = vadd.f32 %v2416, 3.0
      %v2422 = vadd.f32 %v2419, 3.0
      %v2423 = vmax.f32 %v2421, 0.0
      %v2424 = vmax.f32 %v2422, 0.0
      %v2425 = vmin.f32 %v2423, 6.0
      %v2426 = vmin.f32 %v2424, 6.0
      %v2427 = vmul.f32 %v2416, %v2425
      %v2428 = vmul.f32 %v2419, %v2426
      %v2429 = vmul.f32 %v2427, 0.16666667
      %v2430 = vmul.f32 %v2428, 0.16666667
      %v2431 = vld [vmem:[%s27] sm:$0xff]
      %v2432 = vld [vmem:[%s27 + $0x8] sm:$0xff]
      %v2433 = vld [vmem:[%s27 + $0x10] sm:$0xff]
      %v2434 = vld [vmem:[%s27 + $0x18] sm:$0xff]
      %v2435 = vld [vmem:[%s29] sm:$0xff]
      %v2436 = vld [vmem:[%s29 + $0x8] sm:$0xff]
      %v2437 = vld [vmem:[%s29 + $0x10] sm:$0xff]
      %v2438 = vld [vmem:[%s29 + $0x18] sm:$0xff]
      %vm2439 = vcmask 130048
      %v2441 = vsel %vm2439, %v2431, 0
      %v2444 = vsel %vm2439, %v2432, 0
      %v2447 = vsel %vm2439, %v2433, 0
      %v2450 = vsel %vm2439, %v2434, 0
      %2452 = vmatpush.msra.mxu0 0.0
      %2453 = vmatpush.msra.mxu0 0.0
      %2454 = vmatpush.msra.mxu0 0.0
      %2455 = vmatpush.msra.mxu0 0.0
      %2456 = vmatpush.msra.mxu0 0.0
      %2457 = vmatpush.msra.mxu0 0.0
      %2458 = vmatpush.msra.mxu0 0.0
      %2459 = vmatpush.msra.mxu0 0.0
      %2460 = vmatpush.msra.mxu0 0.0
      %2461 = vmatpush.msra.mxu0 0.0
      %2462 = vmatpush.msra.mxu0 0.0
      %2463 = vmatpush.msra.mxu0 0.0
      %2464 = vmatpush.msra.mxu0 0.0
      %2465 = vmatpush.msra.mxu0 0.0
      %2466 = vmatpush.msra.mxu0 %v2430
      %2467 = vmatpush.msra.mxu0 %v2429
      %2468 = vmatmul.f32.gmra.mxu0 %v2441
      %v2469 = vpop.f32.mrf.mxu0
      %v2470 = vadd.f32 %v2435, %v2469
      %2471 = vmatmul.f32.gmra.mxu0 %v2444
      %v2472 = vpop.f32.mrf.mxu0
      %v2473 = vadd.f32 %v2436, %v2472
      %2474 = vmatmul.f32.gmra.mxu0 %v2447
      %v2475 = vpop.f32.mrf.mxu0
      %v2476 = vadd.f32 %v2437, %v2475
      %2477 = vmatmul.f32.gmra.mxu0 %v2450
      %v2478 = vpop.f32.mrf.mxu0
      %v2479 = vadd.f32 %v2438, %v2478
      %2480 = vdwg.mxu0
      %v2481 = vxor.u32 %v2470, 2147483648
      %v2482 = vxor.u32 %v2473, 2147483648
      %v2483 = vxor.u32 %v2476, 2147483648
      %v2484 = vxor.u32 %v2479, 2147483648
      %v2485 = vmul.f32 %v2481, 1.442695
      %v2486 = vpow.pop %v2485
      %v2487 = vmul.f32 %v2482, 1.442695
      %v2488 = vpow.pop %v2487
      %v2489 = vmul.f32 %v2483, 1.442695
      %v2490 = vpow.pop %v2489
      %v2491 = vmul.f32 %v2484, 1.442695
      %v2492 = vpow.pop %v2491
      %v2493 = vadd.f32 %v2486, 1.0
      %v2494 = vadd.f32 %v2488, 1.0
      %v2495 = vadd.f32 %v2490, 1.0
      %v2496 = vadd.f32 %v2492, 1.0
      %v2497 = vrcp.pop %v2493
      %v2498 = vmul.f32 %v2493, %v2497
      %v2499 = vsub.f32 1.0, %v2498
      %v2500 = vmul.f32 %v2497, %v2499
      %v2501 = vadd.f32 %v2497, %v2500
      %vm2502 = vweird.f32 %v2493
      %vm2503 = vweird.f32 %v2497
      %vm2504 = vmor %vm2502, %vm2503
      %v2505 = vsel %vm2504, %v2497, %v2501
      %v2506 = vand.u32 2147483647, %v2493
      %vm2507 = vcmp.eq.f32.partialorder %v2506, 8.507059e+37
      %v2508 = vand.u32 %v2493, 2147483648
      %v2509 = vor.u32 1.1754944e-38, %v2508
      %v2510 = vsel %vm2507, %v2509, %v2505
      %v2511 = vmul.f32 1.0, %v2510
      %v2512 = vrcp.pop %v2494
      %v2513 = vmul.f32 %v2494, %v2512
      %v2514 = vsub.f32 1.0, %v2513
      %v2515 = vmul.f32 %v2512, %v2514
      %v2516 = vadd.f32 %v2512, %v2515
      %vm2517 = vweird.f32 %v2494
      %vm2518 = vweird.f32 %v2512
      %vm2519 = vmor %vm2517, %vm2518
      %v2520 = vsel %vm2519, %v2512, %v2516
      %v2521 = vand.u32 2147483647, %v2494
      %vm2522 = vcmp.eq.f32.partialorder %v2521, 8.507059e+37
      %v2523 = vand.u32 %v2494, 2147483648
      %v2524 = vor.u32 1.1754944e-38, %v2523
      %v2525 = vsel %vm2522, %v2524, %v2520
      %v2526 = vmul.f32 1.0, %v2525
      %v2527 = vrcp.pop %v2495
      %v2528 = vmul.f32 %v2495, %v2527
      %v2529 = vsub.f32 1.0, %v2528
      %v2530 = vmul.f32 %v2527, %v2529
      %v2531 = vadd.f32 %v2527, %v2530
      %vm2532 = vweird.f32 %v2495
      %vm2533 = vweird.f32 %v2527
      %vm2534 = vmor %vm2532, %vm2533
      %v2535 = vsel %vm2534, %v2527, %v2531
      %v2536 = vand.u32 2147483647, %v2495
      %vm2537 = vcmp.eq.f32.partialorder %v2536, 8.507059e+37
      %v2538 = vand.u32 %v2495, 2147483648
      %v2539 = vor.u32 1.1754944e-38, %v2538
      %v2540 = vsel %vm2537, %v2539, %v2535
      %v2541 = vmul.f32 1.0, %v2540
      %v2542 = vrcp.pop %v2496
      %v2543 = vmul.f32 %v2496, %v2542
      %v2544 = vsub.f32 1.0, %v2543
      %v2545 = vmul.f32 %v2542, %v2544
      %v2546 = vadd.f32 %v2542, %v2545
      %vm2547 = vweird.f32 %v2496
      %vm2548 = vweird.f32 %v2542
      %vm2549 = vmor %vm2547, %vm2548
      %v2550 = vsel %vm2549, %v2542, %v2546
      %v2551 = vand.u32 2147483647, %v2496
      %vm2552 = vcmp.eq.f32.partialorder %v2551, 8.507059e+37
      %v2553 = vand.u32 %v2496, 2147483648
      %v2554 = vor.u32 1.1754944e-38, %v2553
      %v2555 = vsel %vm2552, %v2554, %v2550
      %v2556 = vmul.f32 1.0, %v2555
      %2558 = vset.pattern.permute.xlu0 0
      %2559 = vperm.xlu0 %2558, %v2511
      %v2560 = vpop.permute.xlu0 %2559
      %2563 = vset.pattern.permute.xlu0 0
      %2564 = vperm.xlu0 %2563, %v2526
      %v2565 = vpop.permute.xlu0 %2564
      %2568 = vset.pattern.permute.xlu0 0
      %2569 = vperm.xlu0 %2568, %v2541
      %v2570 = vpop.permute.xlu0 %2569
      %2573 = vset.pattern.permute.xlu0 0
      %2574 = vperm.xlu0 %2573, %v2556
      %v2575 = vpop.permute.xlu0 %2574
      %v2577 = vmul.f32 %v2328, %v2560
      %v2578 = vmul.f32 %v2329, %v2560
      %v2579 = vmul.f32 %v2330, %v2560
      %v2580 = vmul.f32 %v2331, %v2560
      %v2581 = vmul.f32 %v2332, %v2560
      %v2582 = vmul.f32 %v2333, %v2565
      %v2583 = vmul.f32 %v2334, %v2565
      %v2584 = vmul.f32 %v2335, %v2565
      %v2585 = vmul.f32 %v2336, %v2565
      %v2586 = vmul.f32 %v2337, %v2565
      %v2587 = vmul.f32 %v2338, %v2570
      %v2588 = vmul.f32 %v2339, %v2570
      %v2589 = vmul.f32 %v2340, %v2570
      %v2590 = vmul.f32 %v2341, %v2570
      %v2591 = vmul.f32 %v2342, %v2570
      %v2592 = vmul.f32 %v2343, %v2575
      %v2593 = vmul.f32 %v2344, %v2575
      %v2594 = vmul.f32 %v2345, %v2575
      %v2595 = vmul.f32 %v2346, %v2575
      %v2596 = vmul.f32 %v2347, %v2575
      %2597 = vst [vmem:[#allocation2] sm:$0xff] %v2577
      %2598 = vst [vmem:[#allocation2 + $0x8] sm:$0xff] %v2578
      %2599 = vst [vmem:[#allocation2 + $0x10] sm:$0xff] %v2579
      %vm2600 = vcmask 793600
      %2601 = vst.msk [vmem:[#allocation2 + $0x18] sm:$0xff] %vm2600, %v2580
      %2602 = vst [vmem:[#allocation2 + $0x20] sm:$0xff] %v2582
      %2603 = vst [vmem:[#allocation2 + $0x28] sm:$0xff] %v2583
      %2604 = vst [vmem:[#allocation2 + $0x30] sm:$0xff] %v2584
      %2605 = vst.msk [vmem:[#allocation2 + $0x38] sm:$0xff] %vm2600, %v2585
      %2606 = vst [vmem:[#allocation2 + $0x40] sm:$0xff] %v2587
      %2607 = vst [vmem:[#allocation2 + $0x48] sm:$0xff] %v2588
      %2608 = vst [vmem:[#allocation2 + $0x50] sm:$0xff] %v2589
      %2609 = vst.msk [vmem:[#allocation2 + $0x58] sm:$0xff] %vm2600, %v2590
      %2610 = vst [vmem:[#allocation2 + $0x60] sm:$0xff] %v2592
      %2611 = vst [vmem:[#allocation2 + $0x68] sm:$0xff] %v2593
      %2612 = vst [vmem:[#allocation2 + $0x70] sm:$0xff] %v2594
      %2613 = vst.msk [vmem:[#allocation2 + $0x78] sm:$0xff] %vm2600, %v2595
      %2630 = vrot.lane.b32.xlu0 %v2577, 127
      %v2631 = vpop.permute.xlu0 %2630
      %2632 = vrot.lane.b32.xlu0 %v2578, 127
      %v2633 = vpop.permute.xlu0 %2632
      %2634 = vrot.lane.b32.xlu0 %v2579, 127
      %v2635 = vpop.permute.xlu0 %2634
      %2636 = vrot.lane.b32.xlu0 %v2580, 127
      %v2637 = vpop.permute.xlu0 %2636
      %2638 = vrot.lane.b32.xlu0 %v2582, 127
      %v2639 = vpop.permute.xlu0 %2638
      %2640 = vrot.lane.b32.xlu0 %v2583, 127
      %v2641 = vpop.permute.xlu0 %2640
      %2642 = vrot.lane.b32.xlu0 %v2584, 127
      %v2643 = vpop.permute.xlu0 %2642
      %2644 = vrot.lane.b32.xlu0 %v2585, 127
      %v2645 = vpop.permute.xlu0 %2644
      %2646 = vrot.lane.b32.xlu0 %v2587, 127
      %v2647 = vpop.permute.xlu0 %2646
      %2648 = vrot.lane.b32.xlu0 %v2588, 127
      %v2649 = vpop.permute.xlu0 %2648
      %2650 = vrot.lane.b32.xlu0 %v2589, 127
      %v2651 = vpop.permute.xlu0 %2650
      %2652 = vrot.lane.b32.xlu0 %v2590, 127
      %v2653 = vpop.permute.xlu0 %2652
      %2654 = vrot.lane.b32.xlu0 %v2592, 127
      %v2655 = vpop.permute.xlu0 %2654
      %2656 = vrot.lane.b32.xlu0 %v2593, 127
      %v2657 = vpop.permute.xlu0 %2656
      %2658 = vrot.lane.b32.xlu0 %v2594, 127
      %v2659 = vpop.permute.xlu0 %2658
      %2660 = vrot.lane.b32.xlu0 %v2595, 127
      %v2661 = vpop.permute.xlu0 %2660
      %vm2662 = vcmask 1039360
      %v2663 = vsel %vm2662, %v2631, %v2633
      %v2664 = vsel %vm2662, %v2633, %v2635
      %v2665 = vsel %vm2662, %v2635, %v2637
      %v2666 = vsel %vm2662, %v2639, %v2641
      %v2667 = vsel %vm2662, %v2641, %v2643
      %v2668 = vsel %vm2662, %v2643, %v2645
      %v2669 = vsel %vm2662, %v2647, %v2649
      %v2670 = vsel %vm2662, %v2649, %v2651
      %v2671 = vsel %vm2662, %v2651, %v2653
      %v2672 = vsel %vm2662, %v2655, %v2657
      %v2673 = vsel %vm2662, %v2657, %v2659
      %v2674 = vsel %vm2662, %v2659, %v2661
      %2691 = vst [vmem:[#allocation2 + $0x80] sm:$0xff] %v2663
      %2692 = vst [vmem:[#allocation2 + $0x88] sm:$0xff] %v2664
      %2693 = vst [vmem:[#allocation2 + $0x90] sm:$0xff] %v2665
      %2694 = vst.msk [vmem:[#allocation2 + $0x98] sm:$0xff] %vm2600, %v2637
      %2695 = vst [vmem:[#allocation2 + $0xa0] sm:$0xff] %v2666
      %2696 = vst [vmem:[#allocation2 + $0xa8] sm:$0xff] %v2667
      %2697 = vst [vmem:[#allocation2 + $0xb0] sm:$0xff] %v2668
      %2698 = vst.msk [vmem:[#allocation2 + $0xb8] sm:$0xff] %vm2600, %v2645
      %2699 = vst [vmem:[#allocation2 + $0xc0] sm:$0xff] %v2669
      %2700 = vst [vmem:[#allocation2 + $0xc8] sm:$0xff] %v2670
      %2701 = vst [vmem:[#allocation2 + $0xd0] sm:$0xff] %v2671
      %2702 = vst.msk [vmem:[#allocation2 + $0xd8] sm:$0xff] %vm2600, %v2653
      %2703 = vst [vmem:[#allocation2 + $0xe0] sm:$0xff] %v2672
      %2704 = vst [vmem:[#allocation2 + $0xe8] sm:$0xff] %v2673
      %2705 = vst [vmem:[#allocation2 + $0xf0] sm:$0xff] %v2674
      %2706 = vst.msk [vmem:[#allocation2 + $0xf8] sm:$0xff] %vm2600, %v2661
      %2707 = vrot.lane.b32.xlu0 %v2577, 126
      %v2708 = vpop.permute.xlu0 %2707
      %2709 = vrot.lane.b32.xlu0 %v2578, 126
      %v2710 = vpop.permute.xlu0 %2709
      %2711 = vrot.lane.b32.xlu0 %v2579, 126
      %v2712 = vpop.permute.xlu0 %2711
      %2713 = vrot.lane.b32.xlu0 %v2580, 126
      %v2714 = vpop.permute.xlu0 %2713
      %2715 = vrot.lane.b32.xlu0 %v2582, 126
      %v2716 = vpop.permute.xlu0 %2715
      %2717 = vrot.lane.b32.xlu0 %v2583, 126
      %v2718 = vpop.permute.xlu0 %2717
      %2719 = vrot.lane.b32.xlu0 %v2584, 126
      %v2720 = vpop.permute.xlu0 %2719
      %2721 = vrot.lane.b32.xlu0 %v2585, 126
      %v2722 = vpop.permute.xlu0 %2721
      %2723 = vrot.lane.b32.xlu0 %v2587, 126
      %v2724 = vpop.permute.xlu0 %2723
      %2725 = vrot.lane.b32.xlu0 %v2588, 126
      %v2726 = vpop.permute.xlu0 %2725
      %2727 = vrot.lane.b32.xlu0 %v2589, 126
      %v2728 = vpop.permute.xlu0 %2727
      %2729 = vrot.lane.b32.xlu0 %v2590, 126
      %v2730 = vpop.permute.xlu0 %2729
      %2731 = vrot.lane.b32.xlu0 %v2592, 126
      %v2732 = vpop.permute.xlu0 %2731
      %2733 = vrot.lane.b32.xlu0 %v2593, 126
      %v2734 = vpop.permute.xlu0 %2733
      %2735 = vrot.lane.b32.xlu0 %v2594, 126
      %v2736 = vpop.permute.xlu0 %2735
      %2737 = vrot.lane.b32.xlu0 %v2595, 126
      %v2738 = vpop.permute.xlu0 %2737
      %vm2739 = vcmask 1031168
      %v2740 = vsel %vm2739, %v2708, %v2710
      %v2741 = vsel %vm2739, %v2710, %v2712
      %v2742 = vsel %vm2739, %v2712, %v2714
      %v2743 = vsel %vm2739, %v2716, %v2718
      %v2744 = vsel %vm2739, %v2718, %v2720
      %v2745 = vsel %vm2739, %v2720, %v2722
      %v2746 = vsel %vm2739, %v2724, %v2726
      %v2747 = vsel %vm2739, %v2726, %v2728
      %v2748 = vsel %vm2739, %v2728, %v2730
      %v2749 = vsel %vm2739, %v2732, %v2734
      %v2750 = vsel %vm2739, %v2734, %v2736
      %v2751 = vsel %vm2739, %v2736, %v2738
      %2768 = vst [vmem:[#allocation2 + $0x100] sm:$0xff] %v2740
      %2769 = vst [vmem:[#allocation2 + $0x108] sm:$0xff] %v2741
      %2770 = vst [vmem:[#allocation2 + $0x110] sm:$0xff] %v2742
      %2771 = vst.msk [vmem:[#allocation2 + $0x118] sm:$0xff] %vm2600, %v2714
      %2772 = vst [vmem:[#allocation2 + $0x120] sm:$0xff] %v2743
      %2773 = vst [vmem:[#allocation2 + $0x128] sm:$0xff] %v2744
      %2774 = vst [vmem:[#allocation2 + $0x130] sm:$0xff] %v2745
      %2775 = vst.msk [vmem:[#allocation2 + $0x138] sm:$0xff] %vm2600, %v2722
      %2776 = vst [vmem:[#allocation2 + $0x140] sm:$0xff] %v2746
      %2777 = vst [vmem:[#allocation2 + $0x148] sm:$0xff] %v2747
      %2778 = vst [vmem:[#allocation2 + $0x150] sm:$0xff] %v2748
      %2779 = vst.msk [vmem:[#allocation2 + $0x158] sm:$0xff] %vm2600, %v2730
      %2780 = vst [vmem:[#allocation2 + $0x160] sm:$0xff] %v2749
      %2781 = vst [vmem:[#allocation2 + $0x168] sm:$0xff] %v2750
      %2782 = vst [vmem:[#allocation2 + $0x170] sm:$0xff] %v2751
      %2783 = vst.msk [vmem:[#allocation2 + $0x178] sm:$0xff] %vm2600, %v2738
      %2784 = vrot.lane.b32.xlu0 %v2577, 105
      %v2785 = vpop.permute.xlu0 %2784
      %2786 = vrot.lane.b32.xlu0 %v2578, 105
      %v2787 = vpop.permute.xlu0 %2786
      %2788 = vrot.lane.b32.xlu0 %v2579, 105
      %v2789 = vpop.permute.xlu0 %2788
      %2790 = vrot.lane.b32.xlu0 %v2580, 105
      %v2791 = vpop.permute.xlu0 %2790
      %2792 = vrot.lane.b32.xlu0 %v2582, 105
      %v2793 = vpop.permute.xlu0 %2792
      %2794 = vrot.lane.b32.xlu0 %v2583, 105
      %v2795 = vpop.permute.xlu0 %2794
      %2796 = vrot.lane.b32.xlu0 %v2584, 105
      %v2797 = vpop.permute.xlu0 %2796
      %2798 = vrot.lane.b32.xlu0 %v2585, 105
      %v2799 = vpop.permute.xlu0 %2798
      %2800 = vrot.lane.b32.xlu0 %v2587, 105
      %v2801 = vpop.permute.xlu0 %2800
      %2802 = vrot.lane.b32.xlu0 %v2588, 105
      %v2803 = vpop.permute.xlu0 %2802
      %2804 = vrot.lane.b32.xlu0 %v2589, 105
      %v2805 = vpop.permute.xlu0 %2804
      %2806 = vrot.lane.b32.xlu0 %v2590, 105
      %v2807 = vpop.permute.xlu0 %2806
      %2808 = vrot.lane.b32.xlu0 %v2592, 105
      %v2809 = vpop.permute.xlu0 %2808
      %2810 = vrot.lane.b32.xlu0 %v2593, 105
      %v2811 = vpop.permute.xlu0 %2810
      %2812 = vrot.lane.b32.xlu0 %v2594, 105
      %v2813 = vpop.permute.xlu0 %2812
      %2814 = vrot.lane.b32.xlu0 %v2595, 105
      %v2815 = vpop.permute.xlu0 %2814
      %vm2816 = vcmask 859136
      %v2817 = vsel %vm2816, %v2785, %v2787
      %v2818 = vsel %vm2816, %v2787, %v2789
      %v2819 = vsel %vm2816, %v2789, %v2791
      %v2820 = vsel %vm2816, %v2793, %v2795
      %v2821 = vsel %vm2816, %v2795, %v2797
      %v2822 = vsel %vm2816, %v2797, %v2799
      %v2823 = vsel %vm2816, %v2801, %v2803
      %v2824 = vsel %vm2816, %v2803, %v2805
      %v2825 = vsel %vm2816, %v2805, %v2807
      %v2826 = vsel %vm2816, %v2809, %v2811
      %v2827 = vsel %vm2816, %v2811, %v2813
      %v2828 = vsel %vm2816, %v2813, %v2815
      %2845 = vst [vmem:[#allocation2 + $0x180] sm:$0xff] %v2817
      %2846 = vst [vmem:[#allocation2 + $0x188] sm:$0xff] %v2818
      %2847 = vst [vmem:[#allocation2 + $0x190] sm:$0xff] %v2819
      %2848 = vst.msk [vmem:[#allocation2 + $0x198] sm:$0xff] %vm2600, %v2791
      %2849 = vst [vmem:[#allocation2 + $0x1a0] sm:$0xff] %v2820
      %2850 = vst [vmem:[#allocation2 + $0x1a8] sm:$0xff] %v2821
      %2851 = vst [vmem:[#allocation2 + $0x1b0] sm:$0xff] %v2822
      %2852 = vst.msk [vmem:[#allocation2 + $0x1b8] sm:$0xff] %vm2600, %v2799
      %2853 = vst [vmem:[#allocation2 + $0x1c0] sm:$0xff] %v2823
      %2854 = vst [vmem:[#allocation2 + $0x1c8] sm:$0xff] %v2824
      %2855 = vst [vmem:[#allocation2 + $0x1d0] sm:$0xff] %v2825
      %2856 = vst.msk [vmem:[#allocation2 + $0x1d8] sm:$0xff] %vm2600, %v2807
      %2857 = vst [vmem:[#allocation2 + $0x1e0] sm:$0xff] %v2826
      %2858 = vst [vmem:[#allocation2 + $0x1e8] sm:$0xff] %v2827
      %2859 = vst [vmem:[#allocation2 + $0x1f0] sm:$0xff] %v2828
      %2860 = vst.msk [vmem:[#allocation2 + $0x1f8] sm:$0xff] %vm2600, %v2815
      %2861 = vrot.lane.b32.xlu0 %v2577, 104
      %v2862 = vpop.permute.xlu0 %2861
      %2863 = vrot.lane.b32.xlu0 %v2578, 104
      %v2864 = vpop.permute.xlu0 %2863
      %2865 = vrot.lane.b32.xlu0 %v2579, 104
      %v2866 = vpop.permute.xlu0 %2865
      %2867 = vrot.lane.b32.xlu0 %v2580, 104
      %v2868 = vpop.permute.xlu0 %2867
      %2869 = vrot.lane.b32.xlu0 %v2582, 104
      %v2870 = vpop.permute.xlu0 %2869
      %2871 = vrot.lane.b32.xlu0 %v2583, 104
      %v2872 = vpop.permute.xlu0 %2871
      %2873 = vrot.lane.b32.xlu0 %v2584, 104
      %v2874 = vpop.permute.xlu0 %2873
      %2875 = vrot.lane.b32.xlu0 %v2585, 104
      %v2876 = vpop.permute.xlu0 %2875
      %2877 = vrot.lane.b32.xlu0 %v2587, 104
      %v2878 = vpop.permute.xlu0 %2877
      %2879 = vrot.lane.b32.xlu0 %v2588, 104
      %v2880 = vpop.permute.xlu0 %2879
      %2881 = vrot.lane.b32.xlu0 %v2589, 104
      %v2882 = vpop.permute.xlu0 %2881
      %2883 = vrot.lane.b32.xlu0 %v2590, 104
      %v2884 = vpop.permute.xlu0 %2883
      %2885 = vrot.lane.b32.xlu0 %v2592, 104
      %v2886 = vpop.permute.xlu0 %2885
      %2887 = vrot.lane.b32.xlu0 %v2593, 104
      %v2888 = vpop.permute.xlu0 %2887
      %2889 = vrot.lane.b32.xlu0 %v2594, 104
      %v2890 = vpop.permute.xlu0 %2889
      %2891 = vrot.lane.b32.xlu0 %v2595, 104
      %v2892 = vpop.permute.xlu0 %2891
      %vm2893 = vcmask 850944
      %v2894 = vsel %vm2893, %v2862, %v2864
      %v2895 = vsel %vm2893, %v2864, %v2866
      %v2896 = vsel %vm2893, %v2866, %v2868
      %v2897 = vsel %vm2893, %v2870, %v2872
      %v2898 = vsel %vm2893, %v2872, %v2874
      %v2899 = vsel %vm2893, %v2874, %v2876
      %v2900 = vsel %vm2893, %v2878, %v2880
      %v2901 = vsel %vm2893, %v2880, %v2882
      %v2902 = vsel %vm2893, %v2882, %v2884
      %v2903 = vsel %vm2893, %v2886, %v2888
      %v2904 = vsel %vm2893, %v2888, %v2890
      %v2905 = vsel %vm2893, %v2890, %v2892
      %2922 = vst [vmem:[#allocation2 + $0x200] sm:$0xff] %v2894
      %2923 = vst [vmem:[#allocation2 + $0x208] sm:$0xff] %v2895
      %2924 = vst [vmem:[#allocation2 + $0x210] sm:$0xff] %v2896
      %2925 = vst.msk [vmem:[#allocation2 + $0x218] sm:$0xff] %vm2600, %v2868
      %2926 = vst [vmem:[#allocation2 + $0x220] sm:$0xff] %v2897
      %2927 = vst [vmem:[#allocation2 + $0x228] sm:$0xff] %v2898
      %2928 = vst [vmem:[#allocation2 + $0x230] sm:$0xff] %v2899
      %2929 = vst.msk [vmem:[#allocation2 + $0x238] sm:$0xff] %vm2600, %v2876
      %2930 = vst [vmem:[#allocation2 + $0x240] sm:$0xff] %v2900
      %2931 = vst [vmem:[#allocation2 + $0x248] sm:$0xff] %v2901
      %2932 = vst [vmem:[#allocation2 + $0x250] sm:$0xff] %v2902
      %2933 = vst.msk [vmem:[#allocation2 + $0x258] sm:$0xff] %vm2600, %v2884
      %2934 = vst [vmem:[#allocation2 + $0x260] sm:$0xff] %v2903
      %2935 = vst [vmem:[#allocation2 + $0x268] sm:$0xff] %v2904
      %2936 = vst [vmem:[#allocation2 + $0x270] sm:$0xff] %v2905
      %2937 = vst.msk [vmem:[#allocation2 + $0x278] sm:$0xff] %vm2600, %v2892
      %2938 = vrot.lane.b32.xlu0 %v2577, 103
      %v2939 = vpop.permute.xlu0 %2938
      %2940 = vrot.lane.b32.xlu0 %v2578, 103
      %v2941 = vpop.permute.xlu0 %2940
      %2942 = vrot.lane.b32.xlu0 %v2579, 103
      %v2943 = vpop.permute.xlu0 %2942
      %2944 = vrot.lane.b32.xlu0 %v2580, 103
      %v2945 = vpop.permute.xlu0 %2944
      %2946 = vrot.lane.b32.xlu0 %v2582, 103
      %v2947 = vpop.permute.xlu0 %2946
      %2948 = vrot.lane.b32.xlu0 %v2583, 103
      %v2949 = vpop.permute.xlu0 %2948
      %2950 = vrot.lane.b32.xlu0 %v2584, 103
      %v2951 = vpop.permute.xlu0 %2950
      %2952 = vrot.lane.b32.xlu0 %v2585, 103
      %v2953 = vpop.permute.xlu0 %2952
      %2954 = vrot.lane.b32.xlu0 %v2587, 103
      %v2955 = vpop.permute.xlu0 %2954
      %2956 = vrot.lane.b32.xlu0 %v2588, 103
      %v2957 = vpop.permute.xlu0 %2956
      %2958 = vrot.lane.b32.xlu0 %v2589, 103
      %v2959 = vpop.permute.xlu0 %2958
      %2960 = vrot.lane.b32.xlu0 %v2590, 103
      %v2961 = vpop.permute.xlu0 %2960
      %2962 = vrot.lane.b32.xlu0 %v2592, 103
      %v2963 = vpop.permute.xlu0 %2962
      %2964 = vrot.lane.b32.xlu0 %v2593, 103
      %v2965 = vpop.permute.xlu0 %2964
      %2966 = vrot.lane.b32.xlu0 %v2594, 103
      %v2967 = vpop.permute.xlu0 %2966
      %2968 = vrot.lane.b32.xlu0 %v2595, 103
      %v2969 = vpop.permute.xlu0 %2968
      %vm2970 = vcmask 842752
      %v2971 = vsel %vm2970, %v2939, %v2941
      %v2972 = vsel %vm2970, %v2941, %v2943
      %v2973 = vsel %vm2970, %v2943, %v2945
      %v2974 = vsel %vm2970, %v2947, %v2949
      %v2975 = vsel %vm2970, %v2949, %v2951
      %v2976 = vsel %vm2970, %v2951, %v2953
      %v2977 = vsel %vm2970, %v2955, %v2957
      %v2978 = vsel %vm2970, %v2957, %v2959
      %v2979 = vsel %vm2970, %v2959, %v2961
      %v2980 = vsel %vm2970, %v2963, %v2965
      %v2981 = vsel %vm2970, %v2965, %v2967
      %v2982 = vsel %vm2970, %v2967, %v2969
      %2999 = vst [vmem:[#allocation2 + $0x280] sm:$0xff] %v2971
      %3000 = vst [vmem:[#allocation2 + $0x288] sm:$0xff] %v2972
      %3001 = vst [vmem:[#allocation2 + $0x290] sm:$0xff] %v2973
      %3002 = vst.msk [vmem:[#allocation2 + $0x298] sm:$0xff] %vm2600, %v2945
      %3003 = vst [vmem:[#allocation2 + $0x2a0] sm:$0xff] %v2974
      %3004 = vst [vmem:[#allocation2 + $0x2a8] sm:$0xff] %v2975
      %3005 = vst [vmem:[#allocation2 + $0x2b0] sm:$0xff] %v2976
      %3006 = vst.msk [vmem:[#allocation2 + $0x2b8] sm:$0xff] %vm2600, %v2953
      %3007 = vst [vmem:[#allocation2 + $0x2c0] sm:$0xff] %v2977
      %3008 = vst [vmem:[#allocation2 + $0x2c8] sm:$0xff] %v2978
      %3009 = vst [vmem:[#allocation2 + $0x2d0] sm:$0xff] %v2979
      %3010 = vst.msk [vmem:[#allocation2 + $0x2d8] sm:$0xff] %vm2600, %v2961
      %3011 = vst [vmem:[#allocation2 + $0x2e0] sm:$0xff] %v2980
      %3012 = vst [vmem:[#allocation2 + $0x2e8] sm:$0xff] %v2981
      %3013 = vst [vmem:[#allocation2 + $0x2f0] sm:$0xff] %v2982
      %3014 = vst.msk [vmem:[#allocation2 + $0x2f8] sm:$0xff] %vm2600, %v2969
      %3019 = vrot.lane.b32.xlu0 %v2577, 82
      %v3020 = vpop.permute.xlu0 %3019
      %3021 = vrot.lane.b32.xlu0 %v2578, 82
      %v3022 = vpop.permute.xlu0 %3021
      %3023 = vrot.lane.b32.xlu0 %v2579, 82
      %v3024 = vpop.permute.xlu0 %3023
      %3025 = vrot.lane.b32.xlu0 %v2580, 82
      %v3026 = vpop.permute.xlu0 %3025
      %3027 = vrot.lane.b32.xlu0 %v2581, 82
      %v3028 = vpop.permute.xlu0 %3027
      %3029 = vrot.lane.b32.xlu0 %v2582, 82
      %v3030 = vpop.permute.xlu0 %3029
      %3031 = vrot.lane.b32.xlu0 %v2583, 82
      %v3032 = vpop.permute.xlu0 %3031
      %3033 = vrot.lane.b32.xlu0 %v2584, 82
      %v3034 = vpop.permute.xlu0 %3033
      %3035 = vrot.lane.b32.xlu0 %v2585, 82
      %v3036 = vpop.permute.xlu0 %3035
      %3037 = vrot.lane.b32.xlu0 %v2586, 82
      %v3038 = vpop.permute.xlu0 %3037
      %3039 = vrot.lane.b32.xlu0 %v2587, 82
      %v3040 = vpop.permute.xlu0 %3039
      %3041 = vrot.lane.b32.xlu0 %v2588, 82
      %v3042 = vpop.permute.xlu0 %3041
      %3043 = vrot.lane.b32.xlu0 %v2589, 82
      %v3044 = vpop.permute.xlu0 %3043
      %3045 = vrot.lane.b32.xlu0 %v2590, 82
      %v3046 = vpop.permute.xlu0 %3045
      %3047 = vrot.lane.b32.xlu0 %v2591, 82
      %v3048 = vpop.permute.xlu0 %3047
      %3049 = vrot.lane.b32.xlu0 %v2592, 82
      %v3050 = vpop.permute.xlu0 %3049
      %3051 = vrot.lane.b32.xlu0 %v2593, 82
      %v3052 = vpop.permute.xlu0 %3051
      %3053 = vrot.lane.b32.xlu0 %v2594, 82
      %v3054 = vpop.permute.xlu0 %3053
      %3055 = vrot.lane.b32.xlu0 %v2595, 82
      %v3056 = vpop.permute.xlu0 %3055
      %3057 = vrot.lane.b32.xlu0 %v2596, 82
      %v3058 = vpop.permute.xlu0 %3057
      %vm3059 = vcmask 670720
      %v3060 = vsel %vm3059, %v3020, %v3022
      %v3061 = vsel %vm3059, %v3022, %v3024
      %v3062 = vsel %vm3059, %v3024, %v3026
      %v3063 = vsel %vm3059, %v3026, %v3028
      %v3064 = vsel %vm3059, %v3030, %v3032
      %v3065 = vsel %vm3059, %v3032, %v3034
      %v3066 = vsel %vm3059, %v3034, %v3036
      %v3067 = vsel %vm3059, %v3036, %v3038
      %v3068 = vsel %vm3059, %v3040, %v3042
      %v3069 = vsel %vm3059, %v3042, %v3044
      %v3070 = vsel %vm3059, %v3044, %v3046
      %v3071 = vsel %vm3059, %v3046, %v3048
      %v3072 = vsel %vm3059, %v3050, %v3052
      %v3073 = vsel %vm3059, %v3052, %v3054
      %v3074 = vsel %vm3059, %v3054, %v3056
      %v3075 = vsel %vm3059, %v3056, %v3058
      %3092 = vst [vmem:[#allocation2 + $0x300] sm:$0xff] %v3060
      %3093 = vst [vmem:[#allocation2 + $0x308] sm:$0xff] %v3061
      %3094 = vst [vmem:[#allocation2 + $0x310] sm:$0xff] %v3062
      %3095 = vst.msk [vmem:[#allocation2 + $0x318] sm:$0xff] %vm2600, %v3063
      %3096 = vst [vmem:[#allocation2 + $0x320] sm:$0xff] %v3064
      %3097 = vst [vmem:[#allocation2 + $0x328] sm:$0xff] %v3065
      %3098 = vst [vmem:[#allocation2 + $0x330] sm:$0xff] %v3066
      %3099 = vst.msk [vmem:[#allocation2 + $0x338] sm:$0xff] %vm2600, %v3067
      %3100 = vst [vmem:[#allocation2 + $0x340] sm:$0xff] %v3068
      %3101 = vst [vmem:[#allocation2 + $0x348] sm:$0xff] %v3069
      %3102 = vst [vmem:[#allocation2 + $0x350] sm:$0xff] %v3070
      %3103 = vst.msk [vmem:[#allocation2 + $0x358] sm:$0xff] %vm2600, %v3071
      %3104 = vst [vmem:[#allocation2 + $0x360] sm:$0xff] %v3072
      %3105 = vst [vmem:[#allocation2 + $0x368] sm:$0xff] %v3073
      %3106 = vst [vmem:[#allocation2 + $0x370] sm:$0xff] %v3074
      %3107 = vst.msk [vmem:[#allocation2 + $0x378] sm:$0xff] %vm2600, %v3075
      %3108 = vrot.lane.b32.xlu0 %v2577, 81
      %v3109 = vpop.permute.xlu0 %3108
      %3110 = vrot.lane.b32.xlu0 %v2578, 81
      %v3111 = vpop.permute.xlu0 %3110
      %3112 = vrot.lane.b32.xlu0 %v2579, 81
      %v3113 = vpop.permute.xlu0 %3112
      %3114 = vrot.lane.b32.xlu0 %v2580, 81
      %v3115 = vpop.permute.xlu0 %3114
      %3116 = vrot.lane.b32.xlu0 %v2581, 81
      %v3117 = vpop.permute.xlu0 %3116
      %3118 = vrot.lane.b32.xlu0 %v2582, 81
      %v3119 = vpop.permute.xlu0 %3118
      %3120 = vrot.lane.b32.xlu0 %v2583, 81
      %v3121 = vpop.permute.xlu0 %3120
      %3122 = vrot.lane.b32.xlu0 %v2584, 81
      %v3123 = vpop.permute.xlu0 %3122
      %3124 = vrot.lane.b32.xlu0 %v2585, 81
      %v3125 = vpop.permute.xlu0 %3124
      %3126 = vrot.lane.b32.xlu0 %v2586, 81
      %v3127 = vpop.permute.xlu0 %3126
      %3128 = vrot.lane.b32.xlu0 %v2587, 81
      %v3129 = vpop.permute.xlu0 %3128
      %3130 = vrot.lane.b32.xlu0 %v2588, 81
      %v3131 = vpop.permute.xlu0 %3130
      %3132 = vrot.lane.b32.xlu0 %v2589, 81
      %v3133 = vpop.permute.xlu0 %3132
      %3134 = vrot.lane.b32.xlu0 %v2590, 81
      %v3135 = vpop.permute.xlu0 %3134
      %3136 = vrot.lane.b32.xlu0 %v2591, 81
      %v3137 = vpop.permute.xlu0 %3136
      %3138 = vrot.lane.b32.xlu0 %v2592, 81
      %v3139 = vpop.permute.xlu0 %3138
      %3140 = vrot.lane.b32.xlu0 %v2593, 81
      %v3141 = vpop.permute.xlu0 %3140
      %3142 = vrot.lane.b32.xlu0 %v2594, 81
      %v3143 = vpop.permute.xlu0 %3142
      %3144 = vrot.lane.b32.xlu0 %v2595, 81
      %v3145 = vpop.permute.xlu0 %3144
      %3146 = vrot.lane.b32.xlu0 %v2596, 81
      %v3147 = vpop.permute.xlu0 %3146
      %vm3148 = vcmask 662528
      %v3149 = vsel %vm3148, %v3109, %v3111
      %v3150 = vsel %vm3148, %v3111, %v3113
      %v3151 = vsel %vm3148, %v3113, %v3115
      %v3152 = vsel %vm3148, %v3115, %v3117
      %v3153 = vsel %vm3148, %v3119, %v3121
      %v3154 = vsel %vm3148, %v3121, %v3123
      %v3155 = vsel %vm3148, %v3123, %v3125
      %v3156 = vsel %vm3148, %v3125, %v3127
      %v3157 = vsel %vm3148, %v3129, %v3131
      %v3158 = vsel %vm3148, %v3131, %v3133
      %v3159 = vsel %vm3148, %v3133, %v3135
      %v3160 = vsel %vm3148, %v3135, %v3137
      %v3161 = vsel %vm3148, %v3139, %v3141
      %v3162 = vsel %vm3148, %v3141, %v3143
      %v3163 = vsel %vm3148, %v3143, %v3145
      %v3164 = vsel %vm3148, %v3145, %v3147
      %3181 = vst [vmem:[#allocation2 + $0x380] sm:$0xff] %v3149
      %3182 = vst [vmem:[#allocation2 + $0x388] sm:$0xff] %v3150
      %3183 = vst [vmem:[#allocation2 + $0x390] sm:$0xff] %v3151
      %3184 = vst.msk [vmem:[#allocation2 + $0x398] sm:$0xff] %vm2600, %v3152
      %3185 = vst [vmem:[#allocation2 + $0x3a0] sm:$0xff] %v3153
      %3186 = vst [vmem:[#allocation2 + $0x3a8] sm:$0xff] %v3154
      %3187 = vst [vmem:[#allocation2 + $0x3b0] sm:$0xff] %v3155
      %3188 = vst.msk [vmem:[#allocation2 + $0x3b8] sm:$0xff] %vm2600, %v3156
      %3189 = vst [vmem:[#allocation2 + $0x3c0] sm:$0xff] %v3157
      %3190 = vst [vmem:[#allocation2 + $0x3c8] sm:$0xff] %v3158
      %3191 = vst [vmem:[#allocation2 + $0x3d0] sm:$0xff] %v3159
      %3192 = vst.msk [vmem:[#allocation2 + $0x3d8] sm:$0xff] %vm2600, %v3160
      %3193 = vst [vmem:[#allocation2 + $0x3e0] sm:$0xff] %v3161
      %3194 = vst [vmem:[#allocation2 + $0x3e8] sm:$0xff] %v3162
      %3195 = vst [vmem:[#allocation2 + $0x3f0] sm:$0xff] %v3163
      %3196 = vst.msk [vmem:[#allocation2 + $0x3f8] sm:$0xff] %vm2600, %v3164
      %3197 = vrot.lane.b32.xlu0 %v2577, 80
      %v3198 = vpop.permute.xlu0 %3197
      %3199 = vrot.lane.b32.xlu0 %v2578, 80
      %v3200 = vpop.permute.xlu0 %3199
      %3201 = vrot.lane.b32.xlu0 %v2579, 80
      %v3202 = vpop.permute.xlu0 %3201
      %3203 = vrot.lane.b32.xlu0 %v2580, 80
      %v3204 = vpop.permute.xlu0 %3203
      %3205 = vrot.lane.b32.xlu0 %v2581, 80
      %v3206 = vpop.permute.xlu0 %3205
      %3207 = vrot.lane.b32.xlu0 %v2582, 80
      %v3208 = vpop.permute.xlu0 %3207
      %3209 = vrot.lane.b32.xlu0 %v2583, 80
      %v3210 = vpop.permute.xlu0 %3209
      %3211 = vrot.lane.b32.xlu0 %v2584, 80
      %v3212 = vpop.permute.xlu0 %3211
      %3213 = vrot.lane.b32.xlu0 %v2585, 80
      %v3214 = vpop.permute.xlu0 %3213
      %3215 = vrot.lane.b32.xlu0 %v2586, 80
      %v3216 = vpop.permute.xlu0 %3215
      %3217 = vrot.lane.b32.xlu0 %v2587, 80
      %v3218 = vpop.permute.xlu0 %3217
      %3219 = vrot.lane.b32.xlu0 %v2588, 80
      %v3220 = vpop.permute.xlu0 %3219
      %3221 = vrot.lane.b32.xlu0 %v2589, 80
      %v3222 = vpop.permute.xlu0 %3221
      %3223 = vrot.lane.b32.xlu0 %v2590, 80
      %v3224 = vpop.permute.xlu0 %3223
      %3225 = vrot.lane.b32.xlu0 %v2591, 80
      %v3226 = vpop.permute.xlu0 %3225
      %3227 = vrot.lane.b32.xlu0 %v2592, 80
      %v3228 = vpop.permute.xlu0 %3227
      %3229 = vrot.lane.b32.xlu0 %v2593, 80
      %v3230 = vpop.permute.xlu0 %3229
      %3231 = vrot.lane.b32.xlu0 %v2594, 80
      %v3232 = vpop.permute.xlu0 %3231
      %3233 = vrot.lane.b32.xlu0 %v2595, 80
      %v3234 = vpop.permute.xlu0 %3233
      %3235 = vrot.lane.b32.xlu0 %v2596, 80
      %v3236 = vpop.permute.xlu0 %3235
      %vm3237 = vcmask 654336
      %v3238 = vsel %vm3237, %v3198, %v3200
      %v3239 = vsel %vm3237, %v3200, %v3202
      %v3240 = vsel %vm3237, %v3202, %v3204
      %v3241 = vsel %vm3237, %v3204, %v3206
      %v3242 = vsel %vm3237, %v3208, %v3210
      %v3243 = vsel %vm3237, %v3210, %v3212
      %v3244 = vsel %vm3237, %v3212, %v3214
      %v3245 = vsel %vm3237, %v3214, %v3216
      %v3246 = vsel %vm3237, %v3218, %v3220
      %v3247 = vsel %vm3237, %v3220, %v3222
      %v3248 = vsel %vm3237, %v3222, %v3224
      %v3249 = vsel %vm3237, %v3224, %v3226
      %v3250 = vsel %vm3237, %v3228, %v3230
      %v3251 = vsel %vm3237, %v3230, %v3232
      %v3252 = vsel %vm3237, %v3232, %v3234
      %v3253 = vsel %vm3237, %v3234, %v3236
      %3270 = vst [vmem:[#allocation2 + $0x400] sm:$0xff] %v3238
      %3271 = vst [vmem:[#allocation2 + $0x408] sm:$0xff] %v3239
      %3272 = vst [vmem:[#allocation2 + $0x410] sm:$0xff] %v3240
      %3273 = vst.msk [vmem:[#allocation2 + $0x418] sm:$0xff] %vm2600, %v3241
      %3274 = vst [vmem:[#allocation2 + $0x420] sm:$0xff] %v3242
      %3275 = vst [vmem:[#allocation2 + $0x428] sm:$0xff] %v3243
      %3276 = vst [vmem:[#allocation2 + $0x430] sm:$0xff] %v3244
      %3277 = vst.msk [vmem:[#allocation2 + $0x438] sm:$0xff] %vm2600, %v3245
      %3278 = vst [vmem:[#allocation2 + $0x440] sm:$0xff] %v3246
      %3279 = vst [vmem:[#allocation2 + $0x448] sm:$0xff] %v3247
      %3280 = vst [vmem:[#allocation2 + $0x450] sm:$0xff] %v3248
      %3281 = vst.msk [vmem:[#allocation2 + $0x458] sm:$0xff] %vm2600, %v3249
      %3282 = vst [vmem:[#allocation2 + $0x460] sm:$0xff] %v3250
      %3283 = vst [vmem:[#allocation2 + $0x468] sm:$0xff] %v3251
      %3284 = vst [vmem:[#allocation2 + $0x470] sm:$0xff] %v3252
      %3285 = vst.msk [vmem:[#allocation2 + $0x478] sm:$0xff] %vm2600, %v3253
      %v3286 = vld [vmem:[%s7] sm:$0xff]
      %v3287 = vld [vmem:[%s7 + $0x8] sm:$0xff]
      %v3288 = vld [vmem:[%s7 + $0x10] sm:$0xff]
      %v3289 = vld [vmem:[%s7 + $0x18] sm:$0xff]
      %v3290 = vld [vmem:[%s7 + $0x20] sm:$0xff]
      %v3291 = vld [vmem:[%s7 + $0x28] sm:$0xff]
      %v3292 = vld [vmem:[%s7 + $0x30] sm:$0xff]
      %v3293 = vld [vmem:[%s7 + $0x38] sm:$0xff]
      %v3294 = vld [vmem:[%s7 + $0x40] sm:$0xff]
      %v3295 = vld [vmem:[%s7 + $0x48] sm:$0xff]
      %v3296 = vld [vmem:[%s7 + $0x50] sm:$0xff]
      %v3297 = vld [vmem:[%s7 + $0x58] sm:$0xff]
      %v3298 = vld [vmem:[#allocation2] sm:$0xff]
      %v3299 = vld [vmem:[#allocation2 + $0x8] sm:$0xff]
      %v3300 = vld [vmem:[#allocation2 + $0x10] sm:$0xff]
      %v3301 = vld [vmem:[#allocation2 + $0x18] sm:$0xff]
      %v3302 = vld [vmem:[#allocation2 + $0x20] sm:$0xff]
      %v3303 = vld [vmem:[#allocation2 + $0x28] sm:$0xff]
      %v3304 = vld [vmem:[#allocation2 + $0x30] sm:$0xff]
      %v3305 = vld [vmem:[#allocation2 + $0x38] sm:$0xff]
      %v3306 = vld [vmem:[#allocation2 + $0x40] sm:$0xff]
      %v3307 = vld [vmem:[#allocation2 + $0x48] sm:$0xff]
      %v3308 = vld [vmem:[#allocation2 + $0x50] sm:$0xff]
      %v3309 = vld [vmem:[#allocation2 + $0x58] sm:$0xff]
      %v3310 = vld [vmem:[#allocation2 + $0x60] sm:$0xff]
      %v3311 = vld [vmem:[#allocation2 + $0x68] sm:$0xff]
      %v3312 = vld [vmem:[#allocation2 + $0x70] sm:$0xff]
      %v3313 = vld [vmem:[#allocation2 + $0x78] sm:$0xff]
      %v3314 = vld [vmem:[#allocation2 + $0x80] sm:$0xff]
      %v3315 = vld [vmem:[#allocation2 + $0x88] sm:$0xff]
      %v3316 = vld [vmem:[#allocation2 + $0x90] sm:$0xff]
      %v3317 = vld [vmem:[#allocation2 + $0x98] sm:$0xff]
      %v3318 = vld [vmem:[#allocation2 + $0xa0] sm:$0xff]
      %v3319 = vld [vmem:[#allocation2 + $0xa8] sm:$0xff]
      %v3320 = vld [vmem:[#allocation2 + $0xb0] sm:$0xff]
      %v3321 = vld [vmem:[#allocation2 + $0xb8] sm:$0xff]
      %v3322 = vld [vmem:[#allocation2 + $0xc0] sm:$0xff]
      %v3323 = vld [vmem:[#allocation2 + $0xc8] sm:$0xff]
      %v3324 = vld [vmem:[#allocation2 + $0xd0] sm:$0xff]
      %v3325 = vld [vmem:[#allocation2 + $0xd8] sm:$0xff]
      %v3326 = vld [vmem:[#allocation2 + $0xe0] sm:$0xff]
      %v3327 = vld [vmem:[#allocation2 + $0xe8] sm:$0xff]
      %v3328 = vld [vmem:[#allocation2 + $0xf0] sm:$0xff]
      %v3329 = vld [vmem:[#allocation2 + $0xf8] sm:$0xff]
      %v3330 = vld [vmem:[#allocation2 + $0x100] sm:$0xff]
      %v3331 = vld [vmem:[#allocation2 + $0x108] sm:$0xff]
      %v3332 = vld [vmem:[#allocation2 + $0x110] sm:$0xff]
      %v3333 = vld [vmem:[#allocation2 + $0x118] sm:$0xff]
      %v3334 = vld [vmem:[#allocation2 + $0x120] sm:$0xff]
      %v3335 = vld [vmem:[#allocation2 + $0x128] sm:$0xff]
      %v3336 = vld [vmem:[#allocation2 + $0x130] sm:$0xff]
      %v3337 = vld [vmem:[#allocation2 + $0x138] sm:$0xff]
      %v3338 = vld [vmem:[#allocation2 + $0x140] sm:$0xff]
      %v3339 = vld [vmem:[#allocation2 + $0x148] sm:$0xff]
      %v3340 = vld [vmem:[#allocation2 + $0x150] sm:$0xff]
      %v3341 = vld [vmem:[#allocation2 + $0x158] sm:$0xff]
      %v3342 = vld [vmem:[#allocation2 + $0x160] sm:$0xff]
      %v3343 = vld [vmem:[#allocation2 + $0x168] sm:$0xff]
      %v3344 = vld [vmem:[#allocation2 + $0x170] sm:$0xff]
      %v3345 = vld [vmem:[#allocation2 + $0x178] sm:$0xff]
      %v3346 = vld [vmem:[#allocation2 + $0x180] sm:$0xff]
      %v3347 = vld [vmem:[#allocation2 + $0x188] sm:$0xff]
      %v3348 = vld [vmem:[#allocation2 + $0x190] sm:$0xff]
      %v3349 = vld [vmem:[#allocation2 + $0x198] sm:$0xff]
      %v3350 = vld [vmem:[#allocation2 + $0x1a0] sm:$0xff]
      %v3351 = vld [vmem:[#allocation2 + $0x1a8] sm:$0xff]
      %v3352 = vld [vmem:[#allocation2 + $0x1b0] sm:$0xff]
      %v3353 = vld [vmem:[#allocation2 + $0x1b8] sm:$0xff]
      %v3354 = vld [vmem:[#allocation2 + $0x1c0] sm:$0xff]
      %v3355 = vld [vmem:[#allocation2 + $0x1c8] sm:$0xff]
      %v3356 = vld [vmem:[#allocation2 + $0x1d0] sm:$0xff]
      %v3357 = vld [vmem:[#allocation2 + $0x1d8] sm:$0xff]
      %v3358 = vld [vmem:[#allocation2 + $0x1e0] sm:$0xff]
      %v3359 = vld [vmem:[#allocation2 + $0x1e8] sm:$0xff]
      %v3360 = vld [vmem:[#allocation2 + $0x1f0] sm:$0xff]
      %v3361 = vld [vmem:[#allocation2 + $0x1f8] sm:$0xff]
      %v3362 = vld [vmem:[#allocation2 + $0x200] sm:$0xff]
      %v3363 = vld [vmem:[#allocation2 + $0x208] sm:$0xff]
      %v3364 = vld [vmem:[#allocation2 + $0x210] sm:$0xff]
      %v3365 = vld [vmem:[#allocation2 + $0x218] sm:$0xff]
      %v3366 = vld [vmem:[#allocation2 + $0x220] sm:$0xff]
      %v3367 = vld [vmem:[#allocation2 + $0x228] sm:$0xff]
      %v3368 = vld [vmem:[#allocation2 + $0x230] sm:$0xff]
      %v3369 = vld [vmem:[#allocation2 + $0x238] sm:$0xff]
      %v3370 = vld [vmem:[#allocation2 + $0x240] sm:$0xff]
      %v3371 = vld [vmem:[#allocation2 + $0x248] sm:$0xff]
      %v3372 = vld [vmem:[#allocation2 + $0x250] sm:$0xff]
      %v3373 = vld [vmem:[#allocation2 + $0x258] sm:$0xff]
      %v3374 = vld [vmem:[#allocation2 + $0x260] sm:$0xff]
      %v3375 = vld [vmem:[#allocation2 + $0x268] sm:$0xff]
      %v3376 = vld [vmem:[#allocation2 + $0x270] sm:$0xff]
      %v3377 = vld [vmem:[#allocation2 + $0x278] sm:$0xff]
      %v3378 = vld [vmem:[#allocation2 + $0x280] sm:$0xff]
      %v3379 = vld [vmem:[#allocation2 + $0x288] sm:$0xff]
      %v3380 = vld [vmem:[#allocation2 + $0x290] sm:$0xff]
      %v3381 = vld [vmem:[#allocation2 + $0x298] sm:$0xff]
      %v3382 = vld [vmem:[#allocation2 + $0x2a0] sm:$0xff]
      %v3383 = vld [vmem:[#allocation2 + $0x2a8] sm:$0xff]
      %v3384 = vld [vmem:[#allocation2 + $0x2b0] sm:$0xff]
      %v3385 = vld [vmem:[#allocation2 + $0x2b8] sm:$0xff]
      %v3386 = vld [vmem:[#allocation2 + $0x2c0] sm:$0xff]
      %v3387 = vld [vmem:[#allocation2 + $0x2c8] sm:$0xff]
      %v3388 = vld [vmem:[#allocation2 + $0x2d0] sm:$0xff]
      %v3389 = vld [vmem:[#allocation2 + $0x2d8] sm:$0xff]
      %v3390 = vld [vmem:[#allocation2 + $0x2e0] sm:$0xff]
      %v3391 = vld [vmem:[#allocation2 + $0x2e8] sm:$0xff]
      %v3392 = vld [vmem:[#allocation2 + $0x2f0] sm:$0xff]
      %v3393 = vld [vmem:[#allocation2 + $0x2f8] sm:$0xff]
      %v3394 = vld [vmem:[#allocation2 + $0x300] sm:$0xff]
      %v3395 = vld [vmem:[#allocation2 + $0x308] sm:$0xff]
      %v3396 = vld [vmem:[#allocation2 + $0x310] sm:$0xff]
      %v3397 = vld [vmem:[#allocation2 + $0x318] sm:$0xff]
      %v3398 = vld [vmem:[#allocation2 + $0x320] sm:$0xff]
      %v3399 = vld [vmem:[#allocation2 + $0x328] sm:$0xff]
      %v3400 = vld [vmem:[#allocation2 + $0x330] sm:$0xff]
      %v3401 = vld [vmem:[#allocation2 + $0x338] sm:$0xff]
      %v3402 = vld [vmem:[#allocation2 + $0x340] sm:$0xff]
      %v3403 = vld [vmem:[#allocation2 + $0x348] sm:$0xff]
      %v3404 = vld [vmem:[#allocation2 + $0x350] sm:$0xff]
      %v3405 = vld [vmem:[#allocation2 + $0x358] sm:$0xff]
      %v3406 = vld [vmem:[#allocation2 + $0x360] sm:$0xff]
      %v3407 = vld [vmem:[#allocation2 + $0x368] sm:$0xff]
      %v3408 = vld [vmem:[#allocation2 + $0x370] sm:$0xff]
      %v3409 = vld [vmem:[#allocation2 + $0x378] sm:$0xff]
      %v3410 = vld [vmem:[#allocation2 + $0x380] sm:$0xff]
      %v3411 = vld [vmem:[#allocation2 + $0x388] sm:$0xff]
      %v3412 = vld [vmem:[#allocation2 + $0x390] sm:$0xff]
      %v3413 = vld [vmem:[#allocation2 + $0x398] sm:$0xff]
      %v3414 = vld [vmem:[#allocation2 + $0x3a0] sm:$0xff]
      %v3415 = vld [vmem:[#allocation2 + $0x3a8] sm:$0xff]
      %v3416 = vld [vmem:[#allocation2 + $0x3b0] sm:$0xff]
      %v3417 = vld [vmem:[#allocation2 + $0x3b8] sm:$0xff]
      %v3418 = vld [vmem:[#allocation2 + $0x3c0] sm:$0xff]
      %v3419 = vld [vmem:[#allocation2 + $0x3c8] sm:$0xff]
      %v3420 = vld [vmem:[#allocation2 + $0x3d0] sm:$0xff]
      %v3421 = vld [vmem:[#allocation2 + $0x3d8] sm:$0xff]
      %v3422 = vld [vmem:[#allocation2 + $0x3e0] sm:$0xff]
      %v3423 = vld [vmem:[#allocation2 + $0x3e8] sm:$0xff]
      %v3424 = vld [vmem:[#allocation2 + $0x3f0] sm:$0xff]
      %v3425 = vld [vmem:[#allocation2 + $0x3f8] sm:$0xff]
      %v3426 = vld [vmem:[#allocation2 + $0x400] sm:$0xff]
      %v3427 = vld [vmem:[#allocation2 + $0x408] sm:$0xff]
      %v3428 = vld [vmem:[#allocation2 + $0x410] sm:$0xff]
      %v3429 = vld [vmem:[#allocation2 + $0x418] sm:$0xff]
      %v3430 = vld [vmem:[#allocation2 + $0x420] sm:$0xff]
      %v3431 = vld [vmem:[#allocation2 + $0x428] sm:$0xff]
      %v3432 = vld [vmem:[#allocation2 + $0x430] sm:$0xff]
      %v3433 = vld [vmem:[#allocation2 + $0x438] sm:$0xff]
      %v3434 = vld [vmem:[#allocation2 + $0x440] sm:$0xff]
      %v3435 = vld [vmem:[#allocation2 + $0x448] sm:$0xff]
      %v3436 = vld [vmem:[#allocation2 + $0x450] sm:$0xff]
      %v3437 = vld [vmem:[#allocation2 + $0x458] sm:$0xff]
      %v3438 = vld [vmem:[#allocation2 + $0x460] sm:$0xff]
      %v3439 = vld [vmem:[#allocation2 + $0x468] sm:$0xff]
      %v3440 = vld [vmem:[#allocation2 + $0x470] sm:$0xff]
      %v3441 = vld [vmem:[#allocation2 + $0x478] sm:$0xff]
      %v3442 = vld [vmem:[%s9] sm:$0xff]
      %v3443 = vld [vmem:[%s9 + $0x8] sm:$0xff]
      %v3444 = vld [vmem:[%s9 + $0x10] sm:$0xff]
      %v3445 = vld [vmem:[%s9 + $0x18] sm:$0xff]
      %3447 = vset.pattern.permute.xlu0 0
      %3448 = vperm.xlu0 %3447, %v3442
      %v3449 = vpop.permute.xlu0 %3448
      %3452 = vset.pattern.permute.xlu0 0
      %3453 = vperm.xlu0 %3452, %v3443
      %v3454 = vpop.permute.xlu0 %3453
      %3457 = vset.pattern.permute.xlu0 0
      %3458 = vperm.xlu0 %3457, %v3444
      %v3459 = vpop.permute.xlu0 %3458
      %3462 = vset.pattern.permute.xlu0 0
      %3463 = vperm.xlu0 %3462, %v3445
      %v3464 = vpop.permute.xlu0 %3463
      %v3467 = vsel %vm1139, %v3288, 0
      %v3470 = vsel %vm1139, %v3291, 0
      %v3473 = vsel %vm1139, %v3294, 0
      %v3476 = vsel %vm1139, %v3297, 0
      %3478 = vmatpush.msra.mxu0 %v3358
      %3479 = vmatpush.msra.mxu0 %v3354
      %3480 = vmatpush.msra.mxu0 %v3350
      %3481 = vmatpush.msra.mxu0 %v3346
      %3482 = vmatpush.msra.mxu0 %v3342
      %3483 = vmatpush.msra.mxu0 %v3338
      %3484 = vmatpush.msra.mxu0 %v3334
      %3485 = vmatpush.msra.mxu0 %v3330
      %3486 = vmatpush.msra.mxu0 %v3326
      %3487 = vmatpush.msra.mxu0 %v3322
      %3488 = vmatpush.msra.mxu0 %v3318
      %3489 = vmatpush.msra.mxu0 %v3314
      %3490 = vmatpush.msra.mxu0 %v3310
      %3491 = vmatpush.msra.mxu0 %v3306
      %3492 = vmatpush.msra.mxu0 %v3302
      %3493 = vmatpush.msra.mxu0 %v3298
      %3494 = vmatmul.f32.gmra.mxu0 %v3286
      %v3495 = vpop.f32.mrf.mxu0
      %v3496 = vadd.f32 %v3449, %v3495
      %3497 = vmatmul.f32.gmra.mxu0 %v3289
      %v3498 = vpop.f32.mrf.mxu0
      %v3499 = vadd.f32 %v3454, %v3498
      %3500 = vmatmul.f32.gmra.mxu0 %v3292
      %v3501 = vpop.f32.mrf.mxu0
      %v3502 = vadd.f32 %v3459, %v3501
      %3503 = vmatmul.f32.gmra.mxu0 %v3295
      %v3504 = vpop.f32.mrf.mxu0
      %v3505 = vadd.f32 %v3464, %v3504
      %3506 = vdwg.mxu0
      %3507 = vmatpush.msra.mxu0 %v3422
      %3508 = vmatpush.msra.mxu0 %v3418
      %3509 = vmatpush.msra.mxu0 %v3414
      %3510 = vmatpush.msra.mxu0 %v3410
      %3511 = vmatpush.msra.mxu0 %v3406
      %3512 = vmatpush.msra.mxu0 %v3402
      %3513 = vmatpush.msra.mxu0 %v3398
      %3514 = vmatpush.msra.mxu0 %v3394
      %3515 = vmatpush.msra.mxu0 %v3390
      %3516 = vmatpush.msra.mxu0 %v3386
      %3517 = vmatpush.msra.mxu0 %v3382
      %3518 = vmatpush.msra.mxu0 %v3378
      %3519 = vmatpush.msra.mxu0 %v3374
      %3520 = vmatpush.msra.mxu0 %v3370
      %3521 = vmatpush.msra.mxu0 %v3366
      %3522 = vmatpush.msra.mxu0 %v3362
      %3523 = vmatmul.f32.gmra.mxu0 %v3287
      %v3524 = vpop.f32.mrf.mxu0
      %v3525 = vadd.f32 %v3496, %v3524
      %3526 = vmatmul.f32.gmra.mxu0 %v3290
      %v3527 = vpop.f32.mrf.mxu0
      %v3528 = vadd.f32 %v3499, %v3527
      %3529 = vmatmul.f32.gmra.mxu0 %v3293
      %v3530 = vpop.f32.mrf.mxu0
      %v3531 = vadd.f32 %v3502, %v3530
      %3532 = vmatmul.f32.gmra.mxu0 %v3296
      %v3533 = vpop.f32.mrf.mxu0
      %v3534 = vadd.f32 %v3505, %v3533
      %3535 = vdwg.mxu0
      %3536 = vmatpush.msra.mxu0 0.0
      %3537 = vmatpush.msra.mxu0 0.0
      %3538 = vmatpush.msra.mxu0 0.0
      %3539 = vmatpush.msra.mxu0 0.0
      %3540 = vmatpush.msra.mxu0 0.0
      %3541 = vmatpush.msra.mxu0 0.0
      %3542 = vmatpush.msra.mxu0 0.0
      %3543 = vmatpush.msra.mxu0 0.0
      %3544 = vmatpush.msra.mxu0 0.0
      %3545 = vmatpush.msra.mxu0 0.0
      %3546 = vmatpush.msra.mxu0 0.0
      %3547 = vmatpush.msra.mxu0 0.0
      %3548 = vmatpush.msra.mxu0 %v3438
      %3549 = vmatpush.msra.mxu0 %v3434
      %3550 = vmatpush.msra.mxu0 %v3430
      %3551 = vmatpush.msra.mxu0 %v3426
      %3552 = vmatmul.f32.gmra.mxu0 %v3467
      %v3553 = vpop.f32.mrf.mxu0
      %v3554 = vadd.f32 %v3525, %v3553
      %3555 = vmatmul.f32.gmra.mxu0 %v3470
      %v3556 = vpop.f32.mrf.mxu0
      %v3557 = vadd.f32 %v3528, %v3556
      %3558 = vmatmul.f32.gmra.mxu0 %v3473
      %v3559 = vpop.f32.mrf.mxu0
      %v3560 = vadd.f32 %v3531, %v3559
      %3561 = vmatmul.f32.gmra.mxu0 %v3476
      %v3562 = vpop.f32.mrf.mxu0
      %v3563 = vadd.f32 %v3534, %v3562
      %3564 = vdwg.mxu0
      %3565 = vmatpush.msra.mxu0 %v3359
      %3566 = vmatpush.msra.mxu0 %v3355
      %3567 = vmatpush.msra.mxu0 %v3351
      %3568 = vmatpush.msra.mxu0 %v3347
      %3569 = vmatpush.msra.mxu0 %v3343
      %3570 = vmatpush.msra.mxu0 %v3339
      %3571 = vmatpush.msra.mxu0 %v3335
      %3572 = vmatpush.msra.mxu0 %v3331
      %3573 = vmatpush.msra.mxu0 %v3327
      %3574 = vmatpush.msra.mxu0 %v3323
      %3575 = vmatpush.msra.mxu0 %v3319
      %3576 = vmatpush.msra.mxu0 %v3315
      %3577 = vmatpush.msra.mxu0 %v3311
      %3578 = vmatpush.msra.mxu0 %v3307
      %3579 = vmatpush.msra.mxu0 %v3303
      %3580 = vmatpush.msra.mxu0 %v3299
      %3581 = vmatmul.f32.gmra.mxu0 %v3286
      %v3582 = vpop.f32.mrf.mxu0
      %v3583 = vadd.f32 %v3449, %v3582
      %3584 = vmatmul.f32.gmra.mxu0 %v3289
      %v3585 = vpop.f32.mrf.mxu0
      %v3586 = vadd.f32 %v3454, %v3585
      %3587 = vmatmul.f32.gmra.mxu0 %v3292
      %v3588 = vpop.f32.mrf.mxu0
      %v3589 = vadd.f32 %v3459, %v3588
      %3590 = vmatmul.f32.gmra.mxu0 %v3295
      %v3591 = vpop.f32.mrf.mxu0
      %v3592 = vadd.f32 %v3464, %v3591
      %3593 = vdwg.mxu0
      %3594 = vmatpush.msra.mxu0 %v3423
      %3595 = vmatpush.msra.mxu0 %v3419
      %3596 = vmatpush.msra.mxu0 %v3415
      %3597 = vmatpush.msra.mxu0 %v3411
      %3598 = vmatpush.msra.mxu0 %v3407
      %3599 = vmatpush.msra.mxu0 %v3403
      %3600 = vmatpush.msra.mxu0 %v3399
      %3601 = vmatpush.msra.mxu0 %v3395
      %3602 = vmatpush.msra.mxu0 %v3391
      %3603 = vmatpush.msra.mxu0 %v3387
      %3604 = vmatpush.msra.mxu0 %v3383
      %3605 = vmatpush.msra.mxu0 %v3379
      %3606 = vmatpush.msra.mxu0 %v3375
      %3607 = vmatpush.msra.mxu0 %v3371
      %3608 = vmatpush.msra.mxu0 %v3367
      %3609 = vmatpush.msra.mxu0 %v3363
      %3610 = vmatmul.f32.gmra.mxu0 %v3287
      %v3611 = vpop.f32.mrf.mxu0
      %v3612 = vadd.f32 %v3583, %v3611
      %3613 = vmatmul.f32.gmra.mxu0 %v3290
      %v3614 = vpop.f32.mrf.mxu0
      %v3615 = vadd.f32 %v3586, %v3614
      %3616 = vmatmul.f32.gmra.mxu0 %v3293
      %v3617 = vpop.f32.mrf.mxu0
      %v3618 = vadd.f32 %v3589, %v3617
      %3619 = vmatmul.f32.gmra.mxu0 %v3296
      %v3620 = vpop.f32.mrf.mxu0
      %v3621 = vadd.f32 %v3592, %v3620
      %3622 = vdwg.mxu0
      %3623 = vmatpush.msra.mxu0 0.0
      %3624 = vmatpush.msra.mxu0 0.0
      %3625 = vmatpush.msra.mxu0 0.0
      %3626 = vmatpush.msra.mxu0 0.0
      %3627 = vmatpush.msra.mxu0 0.0
      %3628 = vmatpush.msra.mxu0 0.0
      %3629 = vmatpush.msra.mxu0 0.0
      %3630 = vmatpush.msra.mxu0 0.0
      %3631 = vmatpush.msra.mxu0 0.0
      %3632 = vmatpush.msra.mxu0 0.0
      %3633 = vmatpush.msra.mxu0 0.0
      %3634 = vmatpush.msra.mxu0 0.0
      %3635 = vmatpush.msra.mxu0 %v3439
      %3636 = vmatpush.msra.mxu0 %v3435
      %3637 = vmatpush.msra.mxu0 %v3431
      %3638 = vmatpush.msra.mxu0 %v3427
      %3639 = vmatmul.f32.gmra.mxu0 %v3467
      %v3640 = vpop.f32.mrf.mxu0
      %v3641 = vadd.f32 %v3612, %v3640
      %3642 = vmatmul.f32.gmra.mxu0 %v3470
      %v3643 = vpop.f32.mrf.mxu0
      %v3644 = vadd.f32 %v3615, %v3643
      %3645 = vmatmul.f32.gmra.mxu0 %v3473
      %v3646 = vpop.f32.mrf.mxu0
      %v3647 = vadd.f32 %v3618, %v3646
      %3648 = vmatmul.f32.gmra.mxu0 %v3476
      %v3649 = vpop.f32.mrf.mxu0
      %v3650 = vadd.f32 %v3621, %v3649
      %3651 = vdwg.mxu0
      %3652 = vmatpush.msra.mxu0 %v3360
      %3653 = vmatpush.msra.mxu0 %v3356
      %3654 = vmatpush.msra.mxu0 %v3352
      %3655 = vmatpush.msra.mxu0 %v3348
      %3656 = vmatpush.msra.mxu0 %v3344
      %3657 = vmatpush.msra.mxu0 %v3340
      %3658 = vmatpush.msra.mxu0 %v3336
      %3659 = vmatpush.msra.mxu0 %v3332
      %3660 = vmatpush.msra.mxu0 %v3328
      %3661 = vmatpush.msra.mxu0 %v3324
      %3662 = vmatpush.msra.mxu0 %v3320
      %3663 = vmatpush.msra.mxu0 %v3316
      %3664 = vmatpush.msra.mxu0 %v3312
      %3665 = vmatpush.msra.mxu0 %v3308
      %3666 = vmatpush.msra.mxu0 %v3304
      %3667 = vmatpush.msra.mxu0 %v3300
      %3668 = vmatmul.f32.gmra.mxu0 %v3286
      %v3669 = vpop.f32.mrf.mxu0
      %v3670 = vadd.f32 %v3449, %v3669
      %3671 = vmatmul.f32.gmra.mxu0 %v3289
      %v3672 = vpop.f32.mrf.mxu0
      %v3673 = vadd.f32 %v3454, %v3672
      %3674 = vmatmul.f32.gmra.mxu0 %v3292
      %v3675 = vpop.f32.mrf.mxu0
      %v3676 = vadd.f32 %v3459, %v3675
      %3677 = vmatmul.f32.gmra.mxu0 %v3295
      %v3678 = vpop.f32.mrf.mxu0
      %v3679 = vadd.f32 %v3464, %v3678
      %3680 = vdwg.mxu0
      %3681 = vmatpush.msra.mxu0 %v3424
      %3682 = vmatpush.msra.mxu0 %v3420
      %3683 = vmatpush.msra.mxu0 %v3416
      %3684 = vmatpush.msra.mxu0 %v3412
      %3685 = vmatpush.msra.mxu0 %v3408
      %3686 = vmatpush.msra.mxu0 %v3404
      %3687 = vmatpush.msra.mxu0 %v3400
      %3688 = vmatpush.msra.mxu0 %v3396
      %3689 = vmatpush.msra.mxu0 %v3392
      %3690 = vmatpush.msra.mxu0 %v3388
      %3691 = vmatpush.msra.mxu0 %v3384
      %3692 = vmatpush.msra.mxu0 %v3380
      %3693 = vmatpush.msra.mxu0 %v3376
      %3694 = vmatpush.msra.mxu0 %v3372
      %3695 = vmatpush.msra.mxu0 %v3368
      %3696 = vmatpush.msra.mxu0 %v3364
      %3697 = vmatmul.f32.gmra.mxu0 %v3287
      %v3698 = vpop.f32.mrf.mxu0
      %v3699 = vadd.f32 %v3670, %v3698
      %3700 = vmatmul.f32.gmra.mxu0 %v3290
      %v3701 = vpop.f32.mrf.mxu0
      %v3702 = vadd.f32 %v3673, %v3701
      %3703 = vmatmul.f32.gmra.mxu0 %v3293
      %v3704 = vpop.f32.mrf.mxu0
      %v3705 = vadd.f32 %v3676, %v3704
      %3706 = vmatmul.f32.gmra.mxu0 %v3296
      %v3707 = vpop.f32.mrf.mxu0
      %v3708 = vadd.f32 %v3679, %v3707
      %3709 = vdwg.mxu0
      %3710 = vmatpush.msra.mxu0 0.0
      %3711 = vmatpush.msra.mxu0 0.0
      %3712 = vmatpush.msra.mxu0 0.0
      %3713 = vmatpush.msra.mxu0 0.0
      %3714 = vmatpush.msra.mxu0 0.0
      %3715 = vmatpush.msra.mxu0 0.0
      %3716 = vmatpush.msra.mxu0 0.0
      %3717 = vmatpush.msra.mxu0 0.0
      %3718 = vmatpush.msra.mxu0 0.0
      %3719 = vmatpush.msra.mxu0 0.0
      %3720 = vmatpush.msra.mxu0 0.0
      %3721 = vmatpush.msra.mxu0 0.0
      %3722 = vmatpush.msra.mxu0 %v3440
      %3723 = vmatpush.msra.mxu0 %v3436
      %3724 = vmatpush.msra.mxu0 %v3432
      %3725 = vmatpush.msra.mxu0 %v3428
      %3726 = vmatmul.f32.gmra.mxu0 %v3467
      %v3727 = vpop.f32.mrf.mxu0
      %v3728 = vadd.f32 %v3699, %v3727
      %3729 = vmatmul.f32.gmra.mxu0 %v3470
      %v3730 = vpop.f32.mrf.mxu0
      %v3731 = vadd.f32 %v3702, %v3730
      %3732 = vmatmul.f32.gmra.mxu0 %v3473
      %v3733 = vpop.f32.mrf.mxu0
      %v3734 = vadd.f32 %v3705, %v3733
      %3735 = vmatmul.f32.gmra.mxu0 %v3476
      %v3736 = vpop.f32.mrf.mxu0
      %v3737 = vadd.f32 %v3708, %v3736
      %3738 = vdwg.mxu0
      %3739 = vmatpush.msra.mxu0 %v3361
      %3740 = vmatpush.msra.mxu0 %v3357
      %3741 = vmatpush.msra.mxu0 %v3353
      %3742 = vmatpush.msra.mxu0 %v3349
      %3743 = vmatpush.msra.mxu0 %v3345
      %3744 = vmatpush.msra.mxu0 %v3341
      %3745 = vmatpush.msra.mxu0 %v3337
      %3746 = vmatpush.msra.mxu0 %v3333
      %3747 = vmatpush.msra.mxu0 %v3329
      %3748 = vmatpush.msra.mxu0 %v3325
      %3749 = vmatpush.msra.mxu0 %v3321
      %3750 = vmatpush.msra.mxu0 %v3317
      %3751 = vmatpush.msra.mxu0 %v3313
      %3752 = vmatpush.msra.mxu0 %v3309
      %3753 = vmatpush.msra.mxu0 %v3305
      %3754 = vmatpush.msra.mxu0 %v3301
      %3755 = vmatmul.f32.gmra.mxu0 %v3286
      %v3756 = vpop.f32.mrf.mxu0
      %v3757 = vadd.f32 %v3449, %v3756
      %3758 = vmatmul.f32.gmra.mxu0 %v3289
      %v3759 = vpop.f32.mrf.mxu0
      %v3760 = vadd.f32 %v3454, %v3759
      %3761 = vmatmul.f32.gmra.mxu0 %v3292
      %v3762 = vpop.f32.mrf.mxu0
      %v3763 = vadd.f32 %v3459, %v3762
      %3764 = vmatmul.f32.gmra.mxu0 %v3295
      %v3765 = vpop.f32.mrf.mxu0
      %v3766 = vadd.f32 %v3464, %v3765
      %3767 = vdwg.mxu0
      %3768 = vmatpush.msra.mxu0 %v3425
      %3769 = vmatpush.msra.mxu0 %v3421
      %3770 = vmatpush.msra.mxu0 %v3417
      %3771 = vmatpush.msra.mxu0 %v3413
      %3772 = vmatpush.msra.mxu0 %v3409
      %3773 = vmatpush.msra.mxu0 %v3405
      %3774 = vmatpush.msra.mxu0 %v3401
      %3775 = vmatpush.msra.mxu0 %v3397
      %3776 = vmatpush.msra.mxu0 %v3393
      %3777 = vmatpush.msra.mxu0 %v3389
      %3778 = vmatpush.msra.mxu0 %v3385
      %3779 = vmatpush.msra.mxu0 %v3381
      %3780 = vmatpush.msra.mxu0 %v3377
      %3781 = vmatpush.msra.mxu0 %v3373
      %3782 = vmatpush.msra.mxu0 %v3369
      %3783 = vmatpush.msra.mxu0 %v3365
      %3784 = vmatmul.f32.gmra.mxu0 %v3287
      %v3785 = vpop.f32.mrf.mxu0
      %v3786 = vadd.f32 %v3757, %v3785
      %3787 = vmatmul.f32.gmra.mxu0 %v3290
      %v3788 = vpop.f32.mrf.mxu0
      %v3789 = vadd.f32 %v3760, %v3788
      %3790 = vmatmul.f32.gmra.mxu0 %v3293
      %v3791 = vpop.f32.mrf.mxu0
      %v3792 = vadd.f32 %v3763, %v3791
      %3793 = vmatmul.f32.gmra.mxu0 %v3296
      %v3794 = vpop.f32.mrf.mxu0
      %v3795 = vadd.f32 %v3766, %v3794
      %3796 = vdwg.mxu0
      %3797 = vmatpush.msra.mxu0 0.0
      %3798 = vmatpush.msra.mxu0 0.0
      %3799 = vmatpush.msra.mxu0 0.0
      %3800 = vmatpush.msra.mxu0 0.0
      %3801 = vmatpush.msra.mxu0 0.0
      %3802 = vmatpush.msra.mxu0 0.0
      %3803 = vmatpush.msra.mxu0 0.0
      %3804 = vmatpush.msra.mxu0 0.0
      %3805 = vmatpush.msra.mxu0 0.0
      %3806 = vmatpush.msra.mxu0 0.0
      %3807 = vmatpush.msra.mxu0 0.0
      %3808 = vmatpush.msra.mxu0 0.0
      %3809 = vmatpush.msra.mxu0 %v3441
      %3810 = vmatpush.msra.mxu0 %v3437
      %3811 = vmatpush.msra.mxu0 %v3433
      %3812 = vmatpush.msra.mxu0 %v3429
      %3813 = vmatmul.f32.gmra.mxu0 %v3467
      %v3814 = vpop.f32.mrf.mxu0
      %v3815 = vadd.f32 %v3786, %v3814
      %3816 = vmatmul.f32.gmra.mxu0 %v3470
      %v3817 = vpop.f32.mrf.mxu0
      %v3818 = vadd.f32 %v3789, %v3817
      %3819 = vmatmul.f32.gmra.mxu0 %v3473
      %v3820 = vpop.f32.mrf.mxu0
      %v3821 = vadd.f32 %v3792, %v3820
      %3822 = vmatmul.f32.gmra.mxu0 %v3476
      %v3823 = vpop.f32.mrf.mxu0
      %v3824 = vadd.f32 %v3795, %v3823
      %3825 = vdwg.mxu0
      %v3826 = vadd.f32 %v3554, 3.0
      %v3827 = vadd.f32 %v3641, 3.0
      %v3828 = vadd.f32 %v3728, 3.0
      %v3829 = vadd.f32 %v3815, 3.0
      %v3830 = vadd.f32 %v3557, 3.0
      %v3831 = vadd.f32 %v3644, 3.0
      %v3832 = vadd.f32 %v3731, 3.0
      %v3833 = vadd.f32 %v3818, 3.0
      %v3834 = vadd.f32 %v3560, 3.0
      %v3835 = vadd.f32 %v3647, 3.0
      %v3836 = vadd.f32 %v3734, 3.0
      %v3837 = vadd.f32 %v3821, 3.0
      %v3838 = vadd.f32 %v3563, 3.0
      %v3839 = vadd.f32 %v3650, 3.0
      %v3840 = vadd.f32 %v3737, 3.0
      %v3841 = vadd.f32 %v3824, 3.0
      %v3842 = vmax.f32 %v3826, 0.0
      %v3843 = vmax.f32 %v3827, 0.0
      %v3844 = vmax.f32 %v3828, 0.0
      %v3845 = vmax.f32 %v3829, 0.0
      %v3846 = vmax.f32 %v3830, 0.0
      %v3847 = vmax.f32 %v3831, 0.0
      %v3848 = vmax.f32 %v3832, 0.0
      %v3849 = vmax.f32 %v3833, 0.0
      %v3850 = vmax.f32 %v3834, 0.0
      %v3851 = vmax.f32 %v3835, 0.0
      %v3852 = vmax.f32 %v3836, 0.0
      %v3853 = vmax.f32 %v3837, 0.0
      %v3854 = vmax.f32 %v3838, 0.0
      %v3855 = vmax.f32 %v3839, 0.0
      %v3856 = vmax.f32 %v3840, 0.0
      %v3857 = vmax.f32 %v3841, 0.0
      %v3858 = vmin.f32 %v3842, 6.0
      %v3859 = vmin.f32 %v3843, 6.0
      %v3860 = vmin.f32 %v3844, 6.0
      %v3861 = vmin.f32 %v3845, 6.0
      %v3862 = vmin.f32 %v3846, 6.0
      %v3863 = vmin.f32 %v3847, 6.0
      %v3864 = vmin.f32 %v3848, 6.0
      %v3865 = vmin.f32 %v3849, 6.0
      %v3866 = vmin.f32 %v3850, 6.0
      %v3867 = vmin.f32 %v3851, 6.0
      %v3868 = vmin.f32 %v3852, 6.0
      %v3869 = vmin.f32 %v3853, 6.0
      %v3870 = vmin.f32 %v3854, 6.0
      %v3871 = vmin.f32 %v3855, 6.0
      %v3872 = vmin.f32 %v3856, 6.0
      %v3873 = vmin.f32 %v3857, 6.0
      %v3874 = vmul.f32 %v3554, %v3858
      %v3875 = vmul.f32 %v3641, %v3859
      %v3876 = vmul.f32 %v3728, %v3860
      %v3877 = vmul.f32 %v3815, %v3861
      %v3878 = vmul.f32 %v3557, %v3862
      %v3879 = vmul.f32 %v3644, %v3863
      %v3880 = vmul.f32 %v3731, %v3864
      %v3881 = vmul.f32 %v3818, %v3865
      %v3882 = vmul.f32 %v3560, %v3866
      %v3883 = vmul.f32 %v3647, %v3867
      %v3884 = vmul.f32 %v3734, %v3868
      %v3885 = vmul.f32 %v3821, %v3869
      %v3886 = vmul.f32 %v3563, %v3870
      %v3887 = vmul.f32 %v3650, %v3871
      %v3888 = vmul.f32 %v3737, %v3872
      %v3889 = vmul.f32 %v3824, %v3873
      %v3890 = vmul.f32 %v3874, 0.16666667
      %v3891 = vmul.f32 %v3875, 0.16666667
      %v3892 = vmul.f32 %v3876, 0.16666667
      %v3893 = vmul.f32 %v3877, 0.16666667
      %v3894 = vmul.f32 %v3878, 0.16666667
      %v3895 = vmul.f32 %v3879, 0.16666667
      %v3896 = vmul.f32 %v3880, 0.16666667
      %v3897 = vmul.f32 %v3881, 0.16666667
      %v3898 = vmul.f32 %v3882, 0.16666667
      %v3899 = vmul.f32 %v3883, 0.16666667
      %v3900 = vmul.f32 %v3884, 0.16666667
      %v3901 = vmul.f32 %v3885, 0.16666667
      %v3902 = vmul.f32 %v3886, 0.16666667
      %v3903 = vmul.f32 %v3887, 0.16666667
      %v3904 = vmul.f32 %v3888, 0.16666667
      %v3905 = vmul.f32 %v3889, 0.16666667
      %v3906 = vld [vmem:[%s63] sm:$0xff]
      %v3907 = vld [vmem:[%s63 + $0x8] sm:$0xff]
      %v3908 = vld [vmem:[%s63 + $0x10] sm:$0xff]
      %v3909 = vld [vmem:[%s63 + $0x18] sm:$0xff]
      %v3910 = vld [vmem:[%s63 + $0x20] sm:$0xff]
      %v3911 = vld [vmem:[%s63 + $0x28] sm:$0xff]
      %v3912 = vld [vmem:[%s63 + $0x30] sm:$0xff]
      %v3913 = vld [vmem:[%s63 + $0x38] sm:$0xff]
      %v3914 = vld [vmem:[%s63 + $0x40] sm:$0xff]
      %v3915 = vld [vmem:[%s63 + $0x48] sm:$0xff]
      %v3916 = vld [vmem:[%s63 + $0x50] sm:$0xff]
      %v3917 = vld [vmem:[%s63 + $0x58] sm:$0xff]
      %v3918 = vld [vmem:[%s63 + $0x60] sm:$0xff]
      %v3919 = vld [vmem:[%s63 + $0x68] sm:$0xff]
      %v3920 = vld [vmem:[%s63 + $0x70] sm:$0xff]
      %v3921 = vld [vmem:[%s63 + $0x78] sm:$0xff]
      %v3922 = vld [vmem:[%s63 + $0x80] sm:$0xff]
      %v3923 = vld [vmem:[%s63 + $0x88] sm:$0xff]
      %v3924 = vld [vmem:[%s63 + $0x90] sm:$0xff]
      %v3925 = vld [vmem:[%s63 + $0x98] sm:$0xff]
      %v3926 = vld [vmem:[%s63 + $0xa0] sm:$0xff]
      %v3927 = vld [vmem:[%s63 + $0xa8] sm:$0xff]
      %v3928 = vld [vmem:[%s63 + $0xb0] sm:$0xff]
      %v3929 = vld [vmem:[%s63 + $0xb8] sm:$0xff]
      %v3930 = vld [vmem:[%s63 + $0xc0] sm:$0xff]
      %v3931 = vld [vmem:[%s63 + $0xc8] sm:$0xff]
      %v3932 = vld [vmem:[%s63 + $0xd0] sm:$0xff]
      %v3933 = vld [vmem:[%s63 + $0xd8] sm:$0xff]
      %v3934 = vld [vmem:[%s63 + $0xe0] sm:$0xff]
      %v3935 = vld [vmem:[%s63 + $0xe8] sm:$0xff]
      %v3936 = vld [vmem:[%s63 + $0xf0] sm:$0xff]
      %v3937 = vld [vmem:[%s63 + $0xf8] sm:$0xff]
      %v3938 = vld [vmem:[%s63 + $0x100] sm:$0xff]
      %v3939 = vld [vmem:[%s63 + $0x108] sm:$0xff]
      %v3940 = vld [vmem:[%s63 + $0x110] sm:$0xff]
      %v3941 = vld [vmem:[%s63 + $0x118] sm:$0xff]
      %v3942 = vld [vmem:[%s63 + $0x120] sm:$0xff]
      %v3943 = vld [vmem:[%s63 + $0x128] sm:$0xff]
      %v3944 = vld [vmem:[%s63 + $0x130] sm:$0xff]
      %v3945 = vld [vmem:[%s63 + $0x138] sm:$0xff]
      %v3946 = vld [vmem:[%s63 + $0x140] sm:$0xff]
      %v3947 = vld [vmem:[%s63 + $0x148] sm:$0xff]
      %v3948 = vld [vmem:[%s63 + $0x150] sm:$0xff]
      %v3949 = vld [vmem:[%s63 + $0x158] sm:$0xff]
      %v3950 = vld [vmem:[%s63 + $0x160] sm:$0xff]
      %v3951 = vld [vmem:[%s63 + $0x168] sm:$0xff]
      %v3952 = vld [vmem:[%s63 + $0x170] sm:$0xff]
      %v3953 = vld [vmem:[%s63 + $0x178] sm:$0xff]
      %v3954 = vld [vmem:[%s63 + $0x180] sm:$0xff]
      %v3955 = vld [vmem:[%s63 + $0x188] sm:$0xff]
      %v3956 = vld [vmem:[%s63 + $0x190] sm:$0xff]
      %v3957 = vld [vmem:[%s63 + $0x198] sm:$0xff]
      %v3958 = vld [vmem:[%s63 + $0x1a0] sm:$0xff]
      %v3959 = vld [vmem:[%s63 + $0x1a8] sm:$0xff]
      %v3960 = vld [vmem:[%s63 + $0x1b0] sm:$0xff]
      %v3961 = vld [vmem:[%s63 + $0x1b8] sm:$0xff]
      %v3962 = vld [vmem:[%s63 + $0x1c0] sm:$0xff]
      %v3963 = vld [vmem:[%s63 + $0x1c8] sm:$0xff]
      %v3964 = vld [vmem:[%s63 + $0x1d0] sm:$0xff]
      %v3965 = vld [vmem:[%s63 + $0x1d8] sm:$0xff]
      %v3966 = vld [vmem:[%s63 + $0x1e0] sm:$0x1]
      %v3968 = vsel %vm2600, %v3893, 0
      %v3971 = vsel %vm2600, %v3897, 0
      %v3974 = vsel %vm2600, %v3901, 0
      %v3977 = vsel %vm2600, %v3905, 0
      %vm3979 = vcmask 1040384
      %v3981 = vsel %vm3979, %v3966, 0
      %3983 = vmatpush.msra.mxu0 %v3921
      %3984 = vmatpush.msra.mxu0 %v3920
      %3985 = vmatpush.msra.mxu0 %v3919
      %3986 = vmatpush.msra.mxu0 %v3918
      %3987 = vmatpush.msra.mxu0 %v3917
      %3988 = vmatpush.msra.mxu0 %v3916
      %3989 = vmatpush.msra.mxu0 %v3915
      %3990 = vmatpush.msra.mxu0 %v3914
      %3991 = vmatpush.msra.mxu0 %v3913
      %3992 = vmatpush.msra.mxu0 %v3912
      %3993 = vmatpush.msra.mxu0 %v3911
      %3994 = vmatpush.msra.mxu0 %v3910
      %3995 = vmatpush.msra.mxu0 %v3909
      %3996 = vmatpush.msra.mxu0 %v3908
      %3997 = vmatpush.msra.mxu0 %v3907
      %3998 = vmatpush.msra.mxu0 %v3906
      %3999 = vmatmul.f32.gmra.mxu0 %v3890
      %v4000 = vpop.f32.mrf.mxu0
      %v4001 = vadd.f32 0.0, %v4000
      %4002 = vmatmul.f32.gmra.mxu0 %v3894
      %v4003 = vpop.f32.mrf.mxu0
      %v4004 = vadd.f32 0.0, %v4003
      %4005 = vmatmul.f32.gmra.mxu0 %v3898
      %v4006 = vpop.f32.mrf.mxu0
      %v4007 = vadd.f32 0.0, %v4006
      %4008 = vmatmul.f32.gmra.mxu0 %v3902
      %v4009 = vpop.f32.mrf.mxu0
      %v4010 = vadd.f32 0.0, %v4009
      %4011 = vdwg.mxu0
      %4012 = vmatpush.msra.mxu0 %v3937
      %4013 = vmatpush.msra.mxu0 %v3936
      %4014 = vmatpush.msra.mxu0 %v3935
      %4015 = vmatpush.msra.mxu0 %v3934
      %4016 = vmatpush.msra.mxu0 %v3933
      %4017 = vmatpush.msra.mxu0 %v3932
      %4018 = vmatpush.msra.mxu0 %v3931
      %4019 = vmatpush.msra.mxu0 %v3930
      %4020 = vmatpush.msra.mxu0 %v3929
      %4021 = vmatpush.msra.mxu0 %v3928
      %4022 = vmatpush.msra.mxu0 %v3927
      %4023 = vmatpush.msra.mxu0 %v3926
      %4024 = vmatpush.msra.mxu0 %v3925
      %4025 = vmatpush.msra.mxu0 %v3924
      %4026 = vmatpush.msra.mxu0 %v3923
      %4027 = vmatpush.msra.mxu0 %v3922
      %4028 = vmatmul.f32.gmra.mxu0 %v3891
      %v4029 = vpop.f32.mrf.mxu0
      %v4030 = vadd.f32 %v4001, %v4029
      %4031 = vmatmul.f32.gmra.mxu0 %v3895
      %v4032 = vpop.f32.mrf.mxu0
      %v4033 = vadd.f32 %v4004, %v4032
      %4034 = vmatmul.f32.gmra.mxu0 %v3899
      %v4035 = vpop.f32.mrf.mxu0
      %v4036 = vadd.f32 %v4007, %v4035
      %4037 = vmatmul.f32.gmra.mxu0 %v3903
      %v4038 = vpop.f32.mrf.mxu0
      %v4039 = vadd.f32 %v4010, %v4038
      %4040 = vdwg.mxu0
      %4041 = vmatpush.msra.mxu0 %v3953
      %4042 = vmatpush.msra.mxu0 %v3952
      %4043 = vmatpush.msra.mxu0 %v3951
      %4044 = vmatpush.msra.mxu0 %v3950
      %4045 = vmatpush.msra.mxu0 %v3949
      %4046 = vmatpush.msra.mxu0 %v3948
      %4047 = vmatpush.msra.mxu0 %v3947
      %4048 = vmatpush.msra.mxu0 %v3946
      %4049 = vmatpush.msra.mxu0 %v3945
      %4050 = vmatpush.msra.mxu0 %v3944
      %4051 = vmatpush.msra.mxu0 %v3943
      %4052 = vmatpush.msra.mxu0 %v3942
      %4053 = vmatpush.msra.mxu0 %v3941
      %4054 = vmatpush.msra.mxu0 %v3940
      %4055 = vmatpush.msra.mxu0 %v3939
      %4056 = vmatpush.msra.mxu0 %v3938
      %4057 = vmatmul.f32.gmra.mxu0 %v3892
      %v4058 = vpop.f32.mrf.mxu0
      %v4059 = vadd.f32 %v4030, %v4058
      %4060 = vmatmul.f32.gmra.mxu0 %v3896
      %v4061 = vpop.f32.mrf.mxu0
      %v4062 = vadd.f32 %v4033, %v4061
      %4063 = vmatmul.f32.gmra.mxu0 %v3900
      %v4064 = vpop.f32.mrf.mxu0
      %v4065 = vadd.f32 %v4036, %v4064
      %4066 = vmatmul.f32.gmra.mxu0 %v3904
      %v4067 = vpop.f32.mrf.mxu0
      %v4068 = vadd.f32 %v4039, %v4067
      %4069 = vdwg.mxu0
      %4070 = vmatpush.msra.mxu0 0.0
      %4071 = vmatpush.msra.mxu0 0.0
      %4072 = vmatpush.msra.mxu0 0.0
      %4073 = vmatpush.msra.mxu0 %v3981
      %4074 = vmatpush.msra.mxu0 %v3965
      %4075 = vmatpush.msra.mxu0 %v3964
      %4076 = vmatpush.msra.mxu0 %v3963
      %4077 = vmatpush.msra.mxu0 %v3962
      %4078 = vmatpush.msra.mxu0 %v3961
      %4079 = vmatpush.msra.mxu0 %v3960
      %4080 = vmatpush.msra.mxu0 %v3959
      %4081 = vmatpush.msra.mxu0 %v3958
      %4082 = vmatpush.msra.mxu0 %v3957
      %4083 = vmatpush.msra.mxu0 %v3956
      %4084 = vmatpush.msra.mxu0 %v3955
      %4085 = vmatpush.msra.mxu0 %v3954
      %4086 = vmatmul.f32.gmra.mxu0 %v3968
      %v4087 = vpop.f32.mrf.mxu0
      %v4088 = vadd.f32 %v4059, %v4087
      %4089 = vmatmul.f32.gmra.mxu0 %v3971
      %v4090 = vpop.f32.mrf.mxu0
      %v4091 = vadd.f32 %v4062, %v4090
      %4092 = vmatmul.f32.gmra.mxu0 %v3974
      %v4093 = vpop.f32.mrf.mxu0
      %v4094 = vadd.f32 %v4065, %v4093
      %4095 = vmatmul.f32.gmra.mxu0 %v3977
      %v4096 = vpop.f32.mrf.mxu0
      %v4097 = vadd.f32 %v4068, %v4096
      %4098 = vdwg.mxu0
      %vm4099 = vcmask 818176
      %v4100 = vsel %vm4099, %v4088, 0.0
      %4101 = vadd.xlane.f32.xlu0 %v4100
      %v4102 = vpop.xlane.xlu0 %4101
      %v4103 = vsel %vm4099, %v4091, 0.0
      %4104 = vadd.xlane.f32.xlu0 %v4103
      %v4105 = vpop.xlane.xlu0 %4104
      %v4106 = vsel %vm4099, %v4094, 0.0
      %4107 = vadd.xlane.f32.xlu0 %v4106
      %v4108 = vpop.xlane.xlu0 %4107
      %v4109 = vsel %vm4099, %v4097, 0.0
      %4110 = vadd.xlane.f32.xlu0 %v4109
      %v4111 = vpop.xlane.xlu0 %4110
      %v4112 = vrcp.pop 100.0
      %v4113 = vmul.f32 100.0, %v4112
      %v4114 = vsub.f32 1.0, %v4113
      %v4115 = vmul.f32 %v4112, %v4114
      %v4116 = vadd.f32 %v4112, %v4115
      %vm4117 = vweird.f32 %v4112
      %v4118 = vsel %vm4117, %v4112, %v4116
      %v4119 = vmul.f32 %v4102, %v4118
      %v4120 = vmul.f32 %v4105, %v4118
      %v4121 = vmul.f32 %v4108, %v4118
      %v4122 = vmul.f32 %v4111, %v4118
      %v4123 = vld [vmem:[%s31] sm:$0xff]
      %v4124 = vld [vmem:[%s31 + $0x8] sm:$0xff]
      %v4125 = vld [vmem:[%s33] sm:$0xff]
      %v4126 = vld [vmem:[%s33 + $0x8] sm:$0xff]
      %v4128 = vsel %vm1139, %v4123, 0
      %v4131 = vsel %vm1139, %v4124, 0
      %4133 = vmatpush.msra.mxu0 0.0
      %4134 = vmatpush.msra.mxu0 0.0
      %4135 = vmatpush.msra.mxu0 0.0
      %4136 = vmatpush.msra.mxu0 0.0
      %4137 = vmatpush.msra.mxu0 0.0
      %4138 = vmatpush.msra.mxu0 0.0
      %4139 = vmatpush.msra.mxu0 0.0
      %4140 = vmatpush.msra.mxu0 0.0
      %4141 = vmatpush.msra.mxu0 0.0
      %4142 = vmatpush.msra.mxu0 0.0
      %4143 = vmatpush.msra.mxu0 0.0
      %4144 = vmatpush.msra.mxu0 0.0
      %4145 = vmatpush.msra.mxu0 %v4122
      %4146 = vmatpush.msra.mxu0 %v4121
      %4147 = vmatpush.msra.mxu0 %v4120
      %4148 = vmatpush.msra.mxu0 %v4119
      %4149 = vmatmul.f32.gmra.mxu0 %v4128
      %v4150 = vpop.f32.mrf.mxu0
      %v4151 = vadd.f32 %v4125, %v4150
      %4152 = vmatmul.f32.gmra.mxu0 %v4131
      %v4153 = vpop.f32.mrf.mxu0
      %v4154 = vadd.f32 %v4126, %v4153
      %4155 = vdwg.mxu0
      %v4156 = vadd.f32 %v4151, 3.0
      %v4157 = vadd.f32 %v4154, 3.0
      %v4158 = vmax.f32 %v4156, 0.0
      %v4159 = vmax.f32 %v4157, 0.0
      %v4160 = vmin.f32 %v4158, 6.0
      %v4161 = vmin.f32 %v4159, 6.0
      %v4162 = vmul.f32 %v4151, %v4160
      %v4163 = vmul.f32 %v4154, %v4161
      %v4164 = vmul.f32 %v4162, 0.16666667
      %v4165 = vmul.f32 %v4163, 0.16666667
      %v4166 = vld [vmem:[%s35] sm:$0xff]
      %v4167 = vld [vmem:[%s35 + $0x8] sm:$0xff]
      %v4168 = vld [vmem:[%s35 + $0x10] sm:$0xff]
      %v4169 = vld [vmem:[%s35 + $0x18] sm:$0xff]
      %v4170 = vld [vmem:[%s37] sm:$0xff]
      %v4171 = vld [vmem:[%s37 + $0x8] sm:$0xff]
      %v4172 = vld [vmem:[%s37 + $0x10] sm:$0xff]
      %v4173 = vld [vmem:[%s37 + $0x18] sm:$0xff]
      %v4175 = vsel %vm2439, %v4166, 0
      %v4178 = vsel %vm2439, %v4167, 0
      %v4181 = vsel %vm2439, %v4168, 0
      %v4184 = vsel %vm2439, %v4169, 0
      %4186 = vmatpush.msra.mxu0 0.0
      %4187 = vmatpush.msra.mxu0 0.0
      %4188 = vmatpush.msra.mxu0 0.0
      %4189 = vmatpush.msra.mxu0 0.0
      %4190 = vmatpush.msra.mxu0 0.0
      %4191 = vmatpush.msra.mxu0 0.0
      %4192 = vmatpush.msra.mxu0 0.0
      %4193 = vmatpush.msra.mxu0 0.0
      %4194 = vmatpush.msra.mxu0 0.0
      %4195 = vmatpush.msra.mxu0 0.0
      %4196 = vmatpush.msra.mxu0 0.0
      %4197 = vmatpush.msra.mxu0 0.0
      %4198 = vmatpush.msra.mxu0 0.0
      %4199 = vmatpush.msra.mxu0 0.0
      %4200 = vmatpush.msra.mxu0 %v4165
      %4201 = vmatpush.msra.mxu0 %v4164
      %4202 = vmatmul.f32.gmra.mxu0 %v4175
      %v4203 = vpop.f32.mrf.mxu0
      %v4204 = vadd.f32 %v4170, %v4203
      %4205 = vmatmul.f32.gmra.mxu0 %v4178
      %v4206 = vpop.f32.mrf.mxu0
      %v4207 = vadd.f32 %v4171, %v4206
      %4208 = vmatmul.f32.gmra.mxu0 %v4181
      %v4209 = vpop.f32.mrf.mxu0
      %v4210 = vadd.f32 %v4172, %v4209
      %4211 = vmatmul.f32.gmra.mxu0 %v4184
      %v4212 = vpop.f32.mrf.mxu0
      %v4213 = vadd.f32 %v4173, %v4212
      %4214 = vdwg.mxu0
      %v4215 = vxor.u32 %v4204, 2147483648
      %v4216 = vxor.u32 %v4207, 2147483648
      %v4217 = vxor.u32 %v4210, 2147483648
      %v4218 = vxor.u32 %v4213, 2147483648
      %v4219 = vmul.f32 %v4215, 1.442695
      %v4220 = vpow.pop %v4219
      %v4221 = vmul.f32 %v4216, 1.442695
      %v4222 = vpow.pop %v4221
      %v4223 = vmul.f32 %v4217, 1.442695
      %v4224 = vpow.pop %v4223
      %v4225 = vmul.f32 %v4218, 1.442695
      %v4226 = vpow.pop %v4225
      %v4227 = vadd.f32 %v4220, 1.0
      %v4228 = vadd.f32 %v4222, 1.0
      %v4229 = vadd.f32 %v4224, 1.0
      %v4230 = vadd.f32 %v4226, 1.0
      %v4231 = vrcp.pop %v4227
      %v4232 = vmul.f32 %v4227, %v4231
      %v4233 = vsub.f32 1.0, %v4232
      %v4234 = vmul.f32 %v4231, %v4233
      %v4235 = vadd.f32 %v4231, %v4234
      %vm4236 = vweird.f32 %v4227
      %vm4237 = vweird.f32 %v4231
      %vm4238 = vmor %vm4236, %vm4237
      %v4239 = vsel %vm4238, %v4231, %v4235
      %v4240 = vand.u32 2147483647, %v4227
      %vm4241 = vcmp.eq.f32.partialorder %v4240, 8.507059e+37
      %v4242 = vand.u32 %v4227, 2147483648
      %v4243 = vor.u32 1.1754944e-38, %v4242
      %v4244 = vsel %vm4241, %v4243, %v4239
      %v4245 = vmul.f32 1.0, %v4244
      %v4246 = vrcp.pop %v4228
      %v4247 = vmul.f32 %v4228, %v4246
      %v4248 = vsub.f32 1.0, %v4247
      %v4249 = vmul.f32 %v4246, %v4248
      %v4250 = vadd.f32 %v4246, %v4249
      %vm4251 = vweird.f32 %v4228
      %vm4252 = vweird.f32 %v4246
      %vm4253 = vmor %vm4251, %vm4252
      %v4254 = vsel %vm4253, %v4246, %v4250
      %v4255 = vand.u32 2147483647, %v4228
      %vm4256 = vcmp.eq.f32.partialorder %v4255, 8.507059e+37
      %v4257 = vand.u32 %v4228, 2147483648
      %v4258 = vor.u32 1.1754944e-38, %v4257
      %v4259 = vsel %vm4256, %v4258, %v4254
      %v4260 = vmul.f32 1.0, %v4259
      %v4261 = vrcp.pop %v4229
      %v4262 = vmul.f32 %v4229, %v4261
      %v4263 = vsub.f32 1.0, %v4262
      %v4264 = vmul.f32 %v4261, %v4263
      %v4265 = vadd.f32 %v4261, %v4264
      %vm4266 = vweird.f32 %v4229
      %vm4267 = vweird.f32 %v4261
      %vm4268 = vmor %vm4266, %vm4267
      %v4269 = vsel %vm4268, %v4261, %v4265
      %v4270 = vand.u32 2147483647, %v4229
      %vm4271 = vcmp.eq.f32.partialorder %v4270, 8.507059e+37
      %v4272 = vand.u32 %v4229, 2147483648
      %v4273 = vor.u32 1.1754944e-38, %v4272
      %v4274 = vsel %vm4271, %v4273, %v4269
      %v4275 = vmul.f32 1.0, %v4274
      %v4276 = vrcp.pop %v4230
      %v4277 = vmul.f32 %v4230, %v4276
      %v4278 = vsub.f32 1.0, %v4277
      %v4279 = vmul.f32 %v4276, %v4278
      %v4280 = vadd.f32 %v4276, %v4279
      %vm4281 = vweird.f32 %v4230
      %vm4282 = vweird.f32 %v4276
      %vm4283 = vmor %vm4281, %vm4282
      %v4284 = vsel %vm4283, %v4276, %v4280
      %v4285 = vand.u32 2147483647, %v4230
      %vm4286 = vcmp.eq.f32.partialorder %v4285, 8.507059e+37
      %v4287 = vand.u32 %v4230, 2147483648
      %v4288 = vor.u32 1.1754944e-38, %v4287
      %v4289 = vsel %vm4286, %v4288, %v4284
      %v4290 = vmul.f32 1.0, %v4289
      %4292 = vset.pattern.permute.xlu0 0
      %4293 = vperm.xlu0 %4292, %v4245
      %v4294 = vpop.permute.xlu0 %4293
      %4297 = vset.pattern.permute.xlu0 0
      %4298 = vperm.xlu0 %4297, %v4260
      %v4299 = vpop.permute.xlu0 %4298
      %4302 = vset.pattern.permute.xlu0 0
      %4303 = vperm.xlu0 %4302, %v4275
      %v4304 = vpop.permute.xlu0 %4303
      %4307 = vset.pattern.permute.xlu0 0
      %4308 = vperm.xlu0 %4307, %v4290
      %v4309 = vpop.permute.xlu0 %4308
      %v4311 = vmul.f32 %v4088, %v4294
      %v4312 = vmul.f32 %v4091, %v4299
      %v4313 = vmul.f32 %v4094, %v4304
      %v4314 = vmul.f32 %v4097, %v4309
      %vm4315 = vcmask 637952
      %4316 = vst.msk [vmem:[#allocation3] sm:$0xff] %vm4315, %v4311
      %4317 = vst.msk [vmem:[#allocation3 + $0x8] sm:$0xff] %vm4315, %v4312
      %4318 = vst.msk [vmem:[#allocation3 + $0x10] sm:$0xff] %vm4315, %v4313
      %4319 = vst.msk [vmem:[#allocation3 + $0x18] sm:$0xff] %vm4315, %v4314
      %4324 = vrot.lane.b32.xlu0 %v4311, 127
      %v4325 = vpop.permute.xlu0 %4324
      %4326 = vrot.lane.b32.xlu0 %v4312, 127
      %v4327 = vpop.permute.xlu0 %4326
      %4328 = vrot.lane.b32.xlu0 %v4313, 127
      %v4329 = vpop.permute.xlu0 %4328
      %4330 = vrot.lane.b32.xlu0 %v4314, 127
      %v4331 = vpop.permute.xlu0 %4330
      %4336 = vst.msk [vmem:[#allocation3 + $0x20] sm:$0xff] %vm4315, %v4325
      %4337 = vst.msk [vmem:[#allocation3 + $0x28] sm:$0xff] %vm4315, %v4327
      %4338 = vst.msk [vmem:[#allocation3 + $0x30] sm:$0xff] %vm4315, %v4329
      %4339 = vst.msk [vmem:[#allocation3 + $0x38] sm:$0xff] %vm4315, %v4331
      %4340 = vrot.lane.b32.xlu0 %v4311, 126
      %v4341 = vpop.permute.xlu0 %4340
      %4342 = vrot.lane.b32.xlu0 %v4312, 126
      %v4343 = vpop.permute.xlu0 %4342
      %4344 = vrot.lane.b32.xlu0 %v4313, 126
      %v4345 = vpop.permute.xlu0 %4344
      %4346 = vrot.lane.b32.xlu0 %v4314, 126
      %v4347 = vpop.permute.xlu0 %4346
      %4352 = vst.msk [vmem:[#allocation3 + $0x40] sm:$0xff] %vm4315, %v4341
      %4353 = vst.msk [vmem:[#allocation3 + $0x48] sm:$0xff] %vm4315, %v4343
      %4354 = vst.msk [vmem:[#allocation3 + $0x50] sm:$0xff] %vm4315, %v4345
      %4355 = vst.msk [vmem:[#allocation3 + $0x58] sm:$0xff] %vm4315, %v4347
      %4356 = vrot.lane.b32.xlu0 %v4311, 118
      %v4357 = vpop.permute.xlu0 %4356
      %4358 = vrot.lane.b32.xlu0 %v4312, 118
      %v4359 = vpop.permute.xlu0 %4358
      %4360 = vrot.lane.b32.xlu0 %v4313, 118
      %v4361 = vpop.permute.xlu0 %4360
      %4362 = vrot.lane.b32.xlu0 %v4314, 118
      %v4363 = vpop.permute.xlu0 %4362
      %4368 = vst.msk [vmem:[#allocation3 + $0x60] sm:$0xff] %vm4315, %v4357
      %4369 = vst.msk [vmem:[#allocation3 + $0x68] sm:$0xff] %vm4315, %v4359
      %4370 = vst.msk [vmem:[#allocation3 + $0x70] sm:$0xff] %vm4315, %v4361
      %4371 = vst.msk [vmem:[#allocation3 + $0x78] sm:$0xff] %vm4315, %v4363
      %4372 = vrot.lane.b32.xlu0 %v4311, 117
      %v4373 = vpop.permute.xlu0 %4372
      %4374 = vrot.lane.b32.xlu0 %v4312, 117
      %v4375 = vpop.permute.xlu0 %4374
      %4376 = vrot.lane.b32.xlu0 %v4313, 117
      %v4377 = vpop.permute.xlu0 %4376
      %4378 = vrot.lane.b32.xlu0 %v4314, 117
      %v4379 = vpop.permute.xlu0 %4378
      %4384 = vst.msk [vmem:[#allocation3 + $0x80] sm:$0xff] %vm4315, %v4373
      %4385 = vst.msk [vmem:[#allocation3 + $0x88] sm:$0xff] %vm4315, %v4375
      %4386 = vst.msk [vmem:[#allocation3 + $0x90] sm:$0xff] %vm4315, %v4377
      %4387 = vst.msk [vmem:[#allocation3 + $0x98] sm:$0xff] %vm4315, %v4379
      %4388 = vrot.lane.b32.xlu0 %v4311, 116
      %v4389 = vpop.permute.xlu0 %4388
      %4390 = vrot.lane.b32.xlu0 %v4312, 116
      %v4391 = vpop.permute.xlu0 %4390
      %4392 = vrot.lane.b32.xlu0 %v4313, 116
      %v4393 = vpop.permute.xlu0 %4392
      %4394 = vrot.lane.b32.xlu0 %v4314, 116
      %v4395 = vpop.permute.xlu0 %4394
      %4400 = vst.msk [vmem:[#allocation3 + $0xa0] sm:$0xff] %vm4315, %v4389
      %4401 = vst.msk [vmem:[#allocation3 + $0xa8] sm:$0xff] %vm4315, %v4391
      %4402 = vst.msk [vmem:[#allocation3 + $0xb0] sm:$0xff] %vm4315, %v4393
      %4403 = vst.msk [vmem:[#allocation3 + $0xb8] sm:$0xff] %vm4315, %v4395
      %4404 = vrot.lane.b32.xlu0 %v4311, 108
      %v4405 = vpop.permute.xlu0 %4404
      %4406 = vrot.lane.b32.xlu0 %v4312, 108
      %v4407 = vpop.permute.xlu0 %4406
      %4408 = vrot.lane.b32.xlu0 %v4313, 108
      %v4409 = vpop.permute.xlu0 %4408
      %4410 = vrot.lane.b32.xlu0 %v4314, 108
      %v4411 = vpop.permute.xlu0 %4410
      %4416 = vst.msk [vmem:[#allocation3 + $0xc0] sm:$0xff] %vm4315, %v4405
      %4417 = vst.msk [vmem:[#allocation3 + $0xc8] sm:$0xff] %vm4315, %v4407
      %4418 = vst.msk [vmem:[#allocation3 + $0xd0] sm:$0xff] %vm4315, %v4409
      %4419 = vst.msk [vmem:[#allocation3 + $0xd8] sm:$0xff] %vm4315, %v4411
      %4420 = vrot.lane.b32.xlu0 %v4311, 107
      %v4421 = vpop.permute.xlu0 %4420
      %4422 = vrot.lane.b32.xlu0 %v4312, 107
      %v4423 = vpop.permute.xlu0 %4422
      %4424 = vrot.lane.b32.xlu0 %v4313, 107
      %v4425 = vpop.permute.xlu0 %4424
      %4426 = vrot.lane.b32.xlu0 %v4314, 107
      %v4427 = vpop.permute.xlu0 %4426
      %4432 = vst.msk [vmem:[#allocation3 + $0xe0] sm:$0xff] %vm4315, %v4421
      %4433 = vst.msk [vmem:[#allocation3 + $0xe8] sm:$0xff] %vm4315, %v4423
      %4434 = vst.msk [vmem:[#allocation3 + $0xf0] sm:$0xff] %vm4315, %v4425
      %4435 = vst.msk [vmem:[#allocation3 + $0xf8] sm:$0xff] %vm4315, %v4427
      %4436 = vrot.lane.b32.xlu0 %v4311, 106
      %v4437 = vpop.permute.xlu0 %4436
      %4438 = vrot.lane.b32.xlu0 %v4312, 106
      %v4439 = vpop.permute.xlu0 %4438
      %4440 = vrot.lane.b32.xlu0 %v4313, 106
      %v4441 = vpop.permute.xlu0 %4440
      %4442 = vrot.lane.b32.xlu0 %v4314, 106
      %v4443 = vpop.permute.xlu0 %4442
      %4448 = vst.msk [vmem:[#allocation3 + $0x100] sm:$0xff] %vm4315, %v4437
      %4449 = vst.msk [vmem:[#allocation3 + $0x108] sm:$0xff] %vm4315, %v4439
      %4450 = vst.msk [vmem:[#allocation3 + $0x110] sm:$0xff] %vm4315, %v4441
      %4451 = vst.msk [vmem:[#allocation3 + $0x118] sm:$0xff] %vm4315, %v4443
      %v4452 = vld [vmem:[%s11] sm:$0xff]
      %v4453 = vld [vmem:[%s11 + $0x8] sm:$0xff]
      %v4454 = vld [vmem:[%s11 + $0x10] sm:$0xff]
      %v4455 = vld [vmem:[%s11 + $0x18] sm:$0xff]
      %v4456 = vld [vmem:[%s11 + $0x20] sm:$0xff]
      %v4457 = vld [vmem:[%s11 + $0x28] sm:$0xff]
      %v4458 = vld [vmem:[%s11 + $0x30] sm:$0xff]
      %v4459 = vld [vmem:[%s11 + $0x38] sm:$0xff]
      %v4460 = vld [vmem:[%s11 + $0x40] sm:$0xff]
      %v4461 = vld [vmem:[%s11 + $0x48] sm:$0xff]
      %v4462 = vld [vmem:[%s11 + $0x50] sm:$0xff]
      %v4463 = vld [vmem:[%s11 + $0x58] sm:$0xff]
      %v4464 = vld [vmem:[#allocation3] sm:$0xff]
      %v4465 = vld [vmem:[#allocation3 + $0x8] sm:$0xff]
      %v4466 = vld [vmem:[#allocation3 + $0x10] sm:$0xff]
      %v4467 = vld [vmem:[#allocation3 + $0x18] sm:$0xff]
      %v4468 = vld [vmem:[#allocation3 + $0x20] sm:$0xff]
      %v4469 = vld [vmem:[#allocation3 + $0x28] sm:$0xff]
      %v4470 = vld [vmem:[#allocation3 + $0x30] sm:$0xff]
      %v4471 = vld [vmem:[#allocation3 + $0x38] sm:$0xff]
      %v4472 = vld [vmem:[#allocation3 + $0x40] sm:$0xff]
      %v4473 = vld [vmem:[#allocation3 + $0x48] sm:$0xff]
      %v4474 = vld [vmem:[#allocation3 + $0x50] sm:$0xff]
      %v4475 = vld [vmem:[#allocation3 + $0x58] sm:$0xff]
      %v4476 = vld [vmem:[#allocation3 + $0x60] sm:$0xff]
      %v4477 = vld [vmem:[#allocation3 + $0x68] sm:$0xff]
      %v4478 = vld [vmem:[#allocation3 + $0x70] sm:$0xff]
      %v4479 = vld [vmem:[#allocation3 + $0x78] sm:$0xff]
      %v4480 = vld [vmem:[#allocation3 + $0x80] sm:$0xff]
      %v4481 = vld [vmem:[#allocation3 + $0x88] sm:$0xff]
      %v4482 = vld [vmem:[#allocation3 + $0x90] sm:$0xff]
      %v4483 = vld [vmem:[#allocation3 + $0x98] sm:$0xff]
      %v4484 = vld [vmem:[#allocation3 + $0xa0] sm:$0xff]
      %v4485 = vld [vmem:[#allocation3 + $0xa8] sm:$0xff]
      %v4486 = vld [vmem:[#allocation3 + $0xb0] sm:$0xff]
      %v4487 = vld [vmem:[#allocation3 + $0xb8] sm:$0xff]
      %v4488 = vld [vmem:[#allocation3 + $0xc0] sm:$0xff]
      %v4489 = vld [vmem:[#allocation3 + $0xc8] sm:$0xff]
      %v4490 = vld [vmem:[#allocation3 + $0xd0] sm:$0xff]
      %v4491 = vld [vmem:[#allocation3 + $0xd8] sm:$0xff]
      %v4492 = vld [vmem:[#allocation3 + $0xe0] sm:$0xff]
      %v4493 = vld [vmem:[#allocation3 + $0xe8] sm:$0xff]
      %v4494 = vld [vmem:[#allocation3 + $0xf0] sm:$0xff]
      %v4495 = vld [vmem:[#allocation3 + $0xf8] sm:$0xff]
      %v4496 = vld [vmem:[#allocation3 + $0x100] sm:$0xff]
      %v4497 = vld [vmem:[#allocation3 + $0x108] sm:$0xff]
      %v4498 = vld [vmem:[#allocation3 + $0x110] sm:$0xff]
      %v4499 = vld [vmem:[#allocation3 + $0x118] sm:$0xff]
      %v4500 = vld [vmem:[%s13] sm:$0xff]
      %v4501 = vld [vmem:[%s13 + $0x8] sm:$0xff]
      %v4502 = vld [vmem:[%s13 + $0x10] sm:$0xff]
      %v4503 = vld [vmem:[%s13 + $0x18] sm:$0xff]
      %4505 = vset.pattern.permute.xlu0 0
      %4506 = vperm.xlu0 %4505, %v4500
      %v4507 = vpop.permute.xlu0 %4506
      %4510 = vset.pattern.permute.xlu0 0
      %4511 = vperm.xlu0 %4510, %v4501
      %v4512 = vpop.permute.xlu0 %4511
      %4515 = vset.pattern.permute.xlu0 0
      %4516 = vperm.xlu0 %4515, %v4502
      %v4517 = vpop.permute.xlu0 %4516
      %4520 = vset.pattern.permute.xlu0 0
      %4521 = vperm.xlu0 %4520, %v4503
      %v4522 = vpop.permute.xlu0 %4521
      %v4525 = vsel %vm1139, %v4454, 0
      %v4528 = vsel %vm1139, %v4457, 0
      %v4531 = vsel %vm1139, %v4460, 0
      %v4534 = vsel %vm1139, %v4463, 0
      %4536 = vmatpush.msra.mxu0 %v4479
      %4537 = vmatpush.msra.mxu0 %v4478
      %4538 = vmatpush.msra.mxu0 %v4477
      %4539 = vmatpush.msra.mxu0 %v4476
      %4540 = vmatpush.msra.mxu0 %v4475
      %4541 = vmatpush.msra.mxu0 %v4474
      %4542 = vmatpush.msra.mxu0 %v4473
      %4543 = vmatpush.msra.mxu0 %v4472
      %4544 = vmatpush.msra.mxu0 %v4471
      %4545 = vmatpush.msra.mxu0 %v4470
      %4546 = vmatpush.msra.mxu0 %v4469
      %4547 = vmatpush.msra.mxu0 %v4468
      %4548 = vmatpush.msra.mxu0 %v4467
      %4549 = vmatpush.msra.mxu0 %v4466
      %4550 = vmatpush.msra.mxu0 %v4465
      %4551 = vmatpush.msra.mxu0 %v4464
      %4552 = vmatmul.f32.gmra.mxu0 %v4452
      %v4553 = vpop.f32.mrf.mxu0
      %v4554 = vadd.f32 %v4507, %v4553
      %4555 = vmatmul.f32.gmra.mxu0 %v4455
      %v4556 = vpop.f32.mrf.mxu0
      %v4557 = vadd.f32 %v4512, %v4556
      %4558 = vmatmul.f32.gmra.mxu0 %v4458
      %v4559 = vpop.f32.mrf.mxu0
      %v4560 = vadd.f32 %v4517, %v4559
      %4561 = vmatmul.f32.gmra.mxu0 %v4461
      %v4562 = vpop.f32.mrf.mxu0
      %v4563 = vadd.f32 %v4522, %v4562
      %4564 = vdwg.mxu0
      %4565 = vmatpush.msra.mxu0 %v4495
      %4566 = vmatpush.msra.mxu0 %v4494
      %4567 = vmatpush.msra.mxu0 %v4493
      %4568 = vmatpush.msra.mxu0 %v4492
      %4569 = vmatpush.msra.mxu0 %v4491
      %4570 = vmatpush.msra.mxu0 %v4490
      %4571 = vmatpush.msra.mxu0 %v4489
      %4572 = vmatpush.msra.mxu0 %v4488
      %4573 = vmatpush.msra.mxu0 %v4487
      %4574 = vmatpush.msra.mxu0 %v4486
      %4575 = vmatpush.msra.mxu0 %v4485
      %4576 = vmatpush.msra.mxu0 %v4484
      %4577 = vmatpush.msra.mxu0 %v4483
      %4578 = vmatpush.msra.mxu0 %v4482
      %4579 = vmatpush.msra.mxu0 %v4481
      %4580 = vmatpush.msra.mxu0 %v4480
      %4581 = vmatmul.f32.gmra.mxu0 %v4453
      %v4582 = vpop.f32.mrf.mxu0
      %v4583 = vadd.f32 %v4554, %v4582
      %4584 = vmatmul.f32.gmra.mxu0 %v4456
      %v4585 = vpop.f32.mrf.mxu0
      %v4586 = vadd.f32 %v4557, %v4585
      %4587 = vmatmul.f32.gmra.mxu0 %v4459
      %v4588 = vpop.f32.mrf.mxu0
      %v4589 = vadd.f32 %v4560, %v4588
      %4590 = vmatmul.f32.gmra.mxu0 %v4462
      %v4591 = vpop.f32.mrf.mxu0
      %v4592 = vadd.f32 %v4563, %v4591
      %4593 = vdwg.mxu0
      %4594 = vmatpush.msra.mxu0 0.0
      %4595 = vmatpush.msra.mxu0 0.0
      %4596 = vmatpush.msra.mxu0 0.0
      %4597 = vmatpush.msra.mxu0 0.0
      %4598 = vmatpush.msra.mxu0 0.0
      %4599 = vmatpush.msra.mxu0 0.0
      %4600 = vmatpush.msra.mxu0 0.0
      %4601 = vmatpush.msra.mxu0 0.0
      %4602 = vmatpush.msra.mxu0 0.0
      %4603 = vmatpush.msra.mxu0 0.0
      %4604 = vmatpush.msra.mxu0 0.0
      %4605 = vmatpush.msra.mxu0 0.0
      %4606 = vmatpush.msra.mxu0 %v4499
      %4607 = vmatpush.msra.mxu0 %v4498
      %4608 = vmatpush.msra.mxu0 %v4497
      %4609 = vmatpush.msra.mxu0 %v4496
      %4610 = vmatmul.f32.gmra.mxu0 %v4525
      %v4611 = vpop.f32.mrf.mxu0
      %v4612 = vadd.f32 %v4583, %v4611
      %4613 = vmatmul.f32.gmra.mxu0 %v4528
      %v4614 = vpop.f32.mrf.mxu0
      %v4615 = vadd.f32 %v4586, %v4614
      %4616 = vmatmul.f32.gmra.mxu0 %v4531
      %v4617 = vpop.f32.mrf.mxu0
      %v4618 = vadd.f32 %v4589, %v4617
      %4619 = vmatmul.f32.gmra.mxu0 %v4534
      %v4620 = vpop.f32.mrf.mxu0
      %v4621 = vadd.f32 %v4592, %v4620
      %4622 = vdwg.mxu0
      %v4623 = vadd.f32 %v4612, 3.0
      %v4624 = vadd.f32 %v4615, 3.0
      %v4625 = vadd.f32 %v4618, 3.0
      %v4626 = vadd.f32 %v4621, 3.0
      %v4627 = vmax.f32 %v4623, 0.0
      %v4628 = vmax.f32 %v4624, 0.0
      %v4629 = vmax.f32 %v4625, 0.0
      %v4630 = vmax.f32 %v4626, 0.0
      %v4631 = vmin.f32 %v4627, 6.0
      %v4632 = vmin.f32 %v4628, 6.0
      %v4633 = vmin.f32 %v4629, 6.0
      %v4634 = vmin.f32 %v4630, 6.0
      %v4635 = vmul.f32 %v4612, %v4631
      %v4636 = vmul.f32 %v4615, %v4632
      %v4637 = vmul.f32 %v4618, %v4633
      %v4638 = vmul.f32 %v4621, %v4634
      %v4639 = vmul.f32 %v4635, 0.16666667
      %v4640 = vmul.f32 %v4636, 0.16666667
      %v4641 = vmul.f32 %v4637, 0.16666667
      %v4642 = vmul.f32 %v4638, 0.16666667
      %v4643 = vld [vmem:[%s65] sm:$0xff]
      %v4644 = vld [vmem:[%s65 + $0x8] sm:$0xff]
      %v4645 = vld [vmem:[%s65 + $0x10] sm:$0xff]
      %v4646 = vld [vmem:[%s65 + $0x18] sm:$0xff]
      %v4647 = vld [vmem:[%s65 + $0x20] sm:$0xff]
      %v4648 = vld [vmem:[%s65 + $0x28] sm:$0xff]
      %v4649 = vld [vmem:[%s65 + $0x30] sm:$0xff]
      %v4650 = vld [vmem:[%s65 + $0x38] sm:$0xff]
      %v4651 = vld [vmem:[%s65 + $0x40] sm:$0xff]
      %v4652 = vld [vmem:[%s65 + $0x48] sm:$0x3f]
      %v4654 = vsel %vm4315, %v4639, 0
      %v4657 = vsel %vm4315, %v4640, 0
      %v4660 = vsel %vm4315, %v4641, 0
      %v4663 = vsel %vm4315, %v4642, 0
      %vm4665 = vcmask 1045504
      %v4667 = vsel %vm4665, %v4652, 0
      %4669 = vmatpush.msra.mxu0 0.0
      %4670 = vmatpush.msra.mxu0 0.0
      %4671 = vmatpush.msra.mxu0 0.0
      %4672 = vmatpush.msra.mxu0 0.0
      %4673 = vmatpush.msra.mxu0 0.0
      %4674 = vmatpush.msra.mxu0 0.0
      %4675 = vmatpush.msra.mxu0 %v4667
      %4676 = vmatpush.msra.mxu0 %v4651
      %4677 = vmatpush.msra.mxu0 %v4650
      %4678 = vmatpush.msra.mxu0 %v4649
      %4679 = vmatpush.msra.mxu0 %v4648
      %4680 = vmatpush.msra.mxu0 %v4647
      %4681 = vmatpush.msra.mxu0 %v4646
      %4682 = vmatpush.msra.mxu0 %v4645
      %4683 = vmatpush.msra.mxu0 %v4644
      %4684 = vmatpush.msra.mxu0 %v4643
      %4685 = vmatmul.f32.gmra.mxu0 %v4654
      %v4686 = vpop.f32.mrf.mxu0
      %v4687 = vadd.f32 0.0, %v4686
      %4688 = vmatmul.f32.gmra.mxu0 %v4657
      %v4689 = vpop.f32.mrf.mxu0
      %v4690 = vadd.f32 0.0, %v4689
      %4691 = vmatmul.f32.gmra.mxu0 %v4660
      %v4692 = vpop.f32.mrf.mxu0
      %v4693 = vadd.f32 0.0, %v4692
      %4694 = vmatmul.f32.gmra.mxu0 %v4663
      %v4695 = vpop.f32.mrf.mxu0
      %v4696 = vadd.f32 0.0, %v4695
      %4697 = vdwg.mxu0
      %v4698 = vsel %vm2439, %v4687, 0.0
      %4699 = vadd.xlane.f32.xlu0 %v4698
      %v4700 = vpop.xlane.xlu0 %4699
      %v4701 = vsel %vm2439, %v4690, 0.0
      %4702 = vadd.xlane.f32.xlu0 %v4701
      %v4703 = vpop.xlane.xlu0 %4702
      %v4704 = vsel %vm2439, %v4693, 0.0
      %4705 = vadd.xlane.f32.xlu0 %v4704
      %v4706 = vpop.xlane.xlu0 %4705
      %v4707 = vsel %vm2439, %v4696, 0.0
      %4708 = vadd.xlane.f32.xlu0 %v4707
      %v4709 = vpop.xlane.xlu0 %4708
      %v4710 = vrcp.pop 16.0
      %v4711 = vmul.f32 16.0, %v4710
      %v4712 = vsub.f32 1.0, %v4711
      %v4713 = vmul.f32 %v4710, %v4712
      %v4714 = vadd.f32 %v4710, %v4713
      %vm4715 = vweird.f32 %v4710
      %v4716 = vsel %vm4715, %v4710, %v4714
      %v4717 = vmul.f32 %v4700, %v4716
      %v4718 = vmul.f32 %v4703, %v4716
      %v4719 = vmul.f32 %v4706, %v4716
      %v4720 = vmul.f32 %v4709, %v4716
      %v4721 = vld [vmem:[%s39] sm:$0xff]
      %v4722 = vld [vmem:[%s39 + $0x8] sm:$0xff]
      %v4723 = vld [vmem:[%s41] sm:$0xff]
      %v4724 = vld [vmem:[%s41 + $0x8] sm:$0xff]
      %v4726 = vsel %vm1139, %v4721, 0
      %v4729 = vsel %vm1139, %v4722, 0
      %4731 = vmatpush.msra.mxu0 0.0
      %4732 = vmatpush.msra.mxu0 0.0
      %4733 = vmatpush.msra.mxu0 0.0
      %4734 = vmatpush.msra.mxu0 0.0
      %4735 = vmatpush.msra.mxu0 0.0
      %4736 = vmatpush.msra.mxu0 0.0
      %4737 = vmatpush.msra.mxu0 0.0
      %4738 = vmatpush.msra.mxu0 0.0
      %4739 = vmatpush.msra.mxu0 0.0
      %4740 = vmatpush.msra.mxu0 0.0
      %4741 = vmatpush.msra.mxu0 0.0
      %4742 = vmatpush.msra.mxu0 0.0
      %4743 = vmatpush.msra.mxu0 %v4720
      %4744 = vmatpush.msra.mxu0 %v4719
      %4745 = vmatpush.msra.mxu0 %v4718
      %4746 = vmatpush.msra.mxu0 %v4717
      %4747 = vmatmul.f32.gmra.mxu0 %v4726
      %v4748 = vpop.f32.mrf.mxu0
      %v4749 = vadd.f32 %v4723, %v4748
      %4750 = vmatmul.f32.gmra.mxu0 %v4729
      %v4751 = vpop.f32.mrf.mxu0
      %v4752 = vadd.f32 %v4724, %v4751
      %4753 = vdwg.mxu0
      %v4754 = vadd.f32 %v4749, 3.0
      %v4755 = vadd.f32 %v4752, 3.0
      %v4756 = vmax.f32 %v4754, 0.0
      %v4757 = vmax.f32 %v4755, 0.0
      %v4758 = vmin.f32 %v4756, 6.0
      %v4759 = vmin.f32 %v4757, 6.0
      %v4760 = vmul.f32 %v4749, %v4758
      %v4761 = vmul.f32 %v4752, %v4759
      %v4762 = vmul.f32 %v4760, 0.16666667
      %v4763 = vmul.f32 %v4761, 0.16666667
      %v4764 = vld [vmem:[%s43] sm:$0xff]
      %v4765 = vld [vmem:[%s43 + $0x8] sm:$0xff]
      %v4766 = vld [vmem:[%s43 + $0x10] sm:$0xff]
      %v4767 = vld [vmem:[%s43 + $0x18] sm:$0xff]
      %v4768 = vld [vmem:[%s45] sm:$0xff]
      %v4769 = vld [vmem:[%s45 + $0x8] sm:$0xff]
      %v4770 = vld [vmem:[%s45 + $0x10] sm:$0xff]
      %v4771 = vld [vmem:[%s45 + $0x18] sm:$0xff]
      %v4773 = vsel %vm2439, %v4764, 0
      %v4776 = vsel %vm2439, %v4765, 0
      %v4779 = vsel %vm2439, %v4766, 0
      %v4782 = vsel %vm2439, %v4767, 0
      %4784 = vmatpush.msra.mxu0 0.0
      %4785 = vmatpush.msra.mxu0 0.0
      %4786 = vmatpush.msra.mxu0 0.0
      %4787 = vmatpush.msra.mxu0 0.0
      %4788 = vmatpush.msra.mxu0 0.0
      %4789 = vmatpush.msra.mxu0 0.0
      %4790 = vmatpush.msra.mxu0 0.0
      %4791 = vmatpush.msra.mxu0 0.0
      %4792 = vmatpush.msra.mxu0 0.0
      %4793 = vmatpush.msra.mxu0 0.0
      %4794 = vmatpush.msra.mxu0 0.0
      %4795 = vmatpush.msra.mxu0 0.0
      %4796 = vmatpush.msra.mxu0 0.0
      %4797 = vmatpush.msra.mxu0 0.0
      %4798 = vmatpush.msra.mxu0 %v4763
      %4799 = vmatpush.msra.mxu0 %v4762
      %4800 = vmatmul.f32.gmra.mxu0 %v4773
      %v4801 = vpop.f32.mrf.mxu0
      %v4802 = vadd.f32 %v4768, %v4801
      %4803 = vmatmul.f32.gmra.mxu0 %v4776
      %v4804 = vpop.f32.mrf.mxu0
      %v4805 = vadd.f32 %v4769, %v4804
      %4806 = vmatmul.f32.gmra.mxu0 %v4779
      %v4807 = vpop.f32.mrf.mxu0
      %v4808 = vadd.f32 %v4770, %v4807
      %4809 = vmatmul.f32.gmra.mxu0 %v4782
      %v4810 = vpop.f32.mrf.mxu0
      %v4811 = vadd.f32 %v4771, %v4810
      %4812 = vdwg.mxu0
      %v4813 = vxor.u32 %v4802, 2147483648
      %v4814 = vxor.u32 %v4805, 2147483648
      %v4815 = vxor.u32 %v4808, 2147483648
      %v4816 = vxor.u32 %v4811, 2147483648
      %v4817 = vmul.f32 %v4813, 1.442695
      %v4818 = vpow.pop %v4817
      %v4819 = vmul.f32 %v4814, 1.442695
      %v4820 = vpow.pop %v4819
      %v4821 = vmul.f32 %v4815, 1.442695
      %v4822 = vpow.pop %v4821
      %v4823 = vmul.f32 %v4816, 1.442695
      %v4824 = vpow.pop %v4823
      %v4825 = vadd.f32 %v4818, 1.0
      %v4826 = vadd.f32 %v4820, 1.0
      %v4827 = vadd.f32 %v4822, 1.0
      %v4828 = vadd.f32 %v4824, 1.0
      %v4829 = vrcp.pop %v4825
      %v4830 = vmul.f32 %v4825, %v4829
      %v4831 = vsub.f32 1.0, %v4830
      %v4832 = vmul.f32 %v4829, %v4831
      %v4833 = vadd.f32 %v4829, %v4832
      %vm4834 = vweird.f32 %v4825
      %vm4835 = vweird.f32 %v4829
      %vm4836 = vmor %vm4834, %vm4835
      %v4837 = vsel %vm4836, %v4829, %v4833
      %v4838 = vand.u32 2147483647, %v4825
      %vm4839 = vcmp.eq.f32.partialorder %v4838, 8.507059e+37
      %v4840 = vand.u32 %v4825, 2147483648
      %v4841 = vor.u32 1.1754944e-38, %v4840
      %v4842 = vsel %vm4839, %v4841, %v4837
      %v4843 = vmul.f32 1.0, %v4842
      %v4844 = vrcp.pop %v4826
      %v4845 = vmul.f32 %v4826, %v4844
      %v4846 = vsub.f32 1.0, %v4845
      %v4847 = vmul.f32 %v4844, %v4846
      %v4848 = vadd.f32 %v4844, %v4847
      %vm4849 = vweird.f32 %v4826
      %vm4850 = vweird.f32 %v4844
      %vm4851 = vmor %vm4849, %vm4850
      %v4852 = vsel %vm4851, %v4844, %v4848
      %v4853 = vand.u32 2147483647, %v4826
      %vm4854 = vcmp.eq.f32.partialorder %v4853, 8.507059e+37
      %v4855 = vand.u32 %v4826, 2147483648
      %v4856 = vor.u32 1.1754944e-38, %v4855
      %v4857 = vsel %vm4854, %v4856, %v4852
      %v4858 = vmul.f32 1.0, %v4857
      %v4859 = vrcp.pop %v4827
      %v4860 = vmul.f32 %v4827, %v4859
      %v4861 = vsub.f32 1.0, %v4860
      %v4862 = vmul.f32 %v4859, %v4861
      %v4863 = vadd.f32 %v4859, %v4862
      %vm4864 = vweird.f32 %v4827
      %vm4865 = vweird.f32 %v4859
      %vm4866 = vmor %vm4864, %vm4865
      %v4867 = vsel %vm4866, %v4859, %v4863
      %v4868 = vand.u32 2147483647, %v4827
      %vm4869 = vcmp.eq.f32.partialorder %v4868, 8.507059e+37
      %v4870 = vand.u32 %v4827, 2147483648
      %v4871 = vor.u32 1.1754944e-38, %v4870
      %v4872 = vsel %vm4869, %v4871, %v4867
      %v4873 = vmul.f32 1.0, %v4872
      %v4874 = vrcp.pop %v4828
      %v4875 = vmul.f32 %v4828, %v4874
      %v4876 = vsub.f32 1.0, %v4875
      %v4877 = vmul.f32 %v4874, %v4876
      %v4878 = vadd.f32 %v4874, %v4877
      %vm4879 = vweird.f32 %v4828
      %vm4880 = vweird.f32 %v4874
      %vm4881 = vmor %vm4879, %vm4880
      %v4882 = vsel %vm4881, %v4874, %v4878
      %v4883 = vand.u32 2147483647, %v4828
      %vm4884 = vcmp.eq.f32.partialorder %v4883, 8.507059e+37
      %v4885 = vand.u32 %v4828, 2147483648
      %v4886 = vor.u32 1.1754944e-38, %v4885
      %v4887 = vsel %vm4884, %v4886, %v4882
      %v4888 = vmul.f32 1.0, %v4887
      %4890 = vset.pattern.permute.xlu0 0
      %4891 = vperm.xlu0 %4890, %v4843
      %v4892 = vpop.permute.xlu0 %4891
      %4895 = vset.pattern.permute.xlu0 0
      %4896 = vperm.xlu0 %4895, %v4858
      %v4897 = vpop.permute.xlu0 %4896
      %4900 = vset.pattern.permute.xlu0 0
      %4901 = vperm.xlu0 %4900, %v4873
      %v4902 = vpop.permute.xlu0 %4901
      %4905 = vset.pattern.permute.xlu0 0
      %4906 = vperm.xlu0 %4905, %v4888
      %v4907 = vpop.permute.xlu0 %4906
      %v4909 = vmul.f32 %v4687, %v4892
      %v4910 = vmul.f32 %v4690, %v4897
      %v4911 = vmul.f32 %v4693, %v4902
      %v4912 = vmul.f32 %v4696, %v4907
      %vm4913 = vcmask 48128
      %4914 = vst.msk [vmem:[#allocation4] sm:$0xff] %vm4913, %v4909
      %4915 = vst.msk [vmem:[#allocation4 + $0x8] sm:$0xff] %vm4913, %v4910
      %4916 = vst.msk [vmem:[#allocation4 + $0x10] sm:$0xff] %vm4913, %v4911
      %4917 = vst.msk [vmem:[#allocation4 + $0x18] sm:$0xff] %vm4913, %v4912
      %4922 = vrot.lane.b32.xlu0 %v4909, 127
      %v4923 = vpop.permute.xlu0 %4922
      %4924 = vrot.lane.b32.xlu0 %v4910, 127
      %v4925 = vpop.permute.xlu0 %4924
      %4926 = vrot.lane.b32.xlu0 %v4911, 127
      %v4927 = vpop.permute.xlu0 %4926
      %4928 = vrot.lane.b32.xlu0 %v4912, 127
      %v4929 = vpop.permute.xlu0 %4928
      %4934 = vst.msk [vmem:[#allocation4 + $0x20] sm:$0xff] %vm4913, %v4923
      %4935 = vst.msk [vmem:[#allocation4 + $0x28] sm:$0xff] %vm4913, %v4925
      %4936 = vst.msk [vmem:[#allocation4 + $0x30] sm:$0xff] %vm4913, %v4927
      %4937 = vst.msk [vmem:[#allocation4 + $0x38] sm:$0xff] %vm4913, %v4929
      %4938 = vrot.lane.b32.xlu0 %v4909, 126
      %v4939 = vpop.permute.xlu0 %4938
      %4940 = vrot.lane.b32.xlu0 %v4910, 126
      %v4941 = vpop.permute.xlu0 %4940
      %4942 = vrot.lane.b32.xlu0 %v4911, 126
      %v4943 = vpop.permute.xlu0 %4942
      %4944 = vrot.lane.b32.xlu0 %v4912, 126
      %v4945 = vpop.permute.xlu0 %4944
      %4950 = vst.msk [vmem:[#allocation4 + $0x40] sm:$0xff] %vm4913, %v4939
      %4951 = vst.msk [vmem:[#allocation4 + $0x48] sm:$0xff] %vm4913, %v4941
      %4952 = vst.msk [vmem:[#allocation4 + $0x50] sm:$0xff] %vm4913, %v4943
      %4953 = vst.msk [vmem:[#allocation4 + $0x58] sm:$0xff] %vm4913, %v4945
      %4954 = vrot.lane.b32.xlu0 %v4909, 124
      %v4955 = vpop.permute.xlu0 %4954
      %4956 = vrot.lane.b32.xlu0 %v4910, 124
      %v4957 = vpop.permute.xlu0 %4956
      %4958 = vrot.lane.b32.xlu0 %v4911, 124
      %v4959 = vpop.permute.xlu0 %4958
      %4960 = vrot.lane.b32.xlu0 %v4912, 124
      %v4961 = vpop.permute.xlu0 %4960
      %4966 = vst.msk [vmem:[#allocation4 + $0x60] sm:$0xff] %vm4913, %v4955
      %4967 = vst.msk [vmem:[#allocation4 + $0x68] sm:$0xff] %vm4913, %v4957
      %4968 = vst.msk [vmem:[#allocation4 + $0x70] sm:$0xff] %vm4913, %v4959
      %4969 = vst.msk [vmem:[#allocation4 + $0x78] sm:$0xff] %vm4913, %v4961
      %4970 = vrot.lane.b32.xlu0 %v4909, 123
      %v4971 = vpop.permute.xlu0 %4970
      %4972 = vrot.lane.b32.xlu0 %v4910, 123
      %v4973 = vpop.permute.xlu0 %4972
      %4974 = vrot.lane.b32.xlu0 %v4911, 123
      %v4975 = vpop.permute.xlu0 %4974
      %4976 = vrot.lane.b32.xlu0 %v4912, 123
      %v4977 = vpop.permute.xlu0 %4976
      %4982 = vst.msk [vmem:[#allocation4 + $0x80] sm:$0xff] %vm4913, %v4971
      %4983 = vst.msk [vmem:[#allocation4 + $0x88] sm:$0xff] %vm4913, %v4973
      %4984 = vst.msk [vmem:[#allocation4 + $0x90] sm:$0xff] %vm4913, %v4975
      %4985 = vst.msk [vmem:[#allocation4 + $0x98] sm:$0xff] %vm4913, %v4977
      %4986 = vrot.lane.b32.xlu0 %v4909, 122
      %v4987 = vpop.permute.xlu0 %4986
      %4988 = vrot.lane.b32.xlu0 %v4910, 122
      %v4989 = vpop.permute.xlu0 %4988
      %4990 = vrot.lane.b32.xlu0 %v4911, 122
      %v4991 = vpop.permute.xlu0 %4990
      %4992 = vrot.lane.b32.xlu0 %v4912, 122
      %v4993 = vpop.permute.xlu0 %4992
      %4998 = vst.msk [vmem:[#allocation4 + $0xa0] sm:$0xff] %vm4913, %v4987
      %4999 = vst.msk [vmem:[#allocation4 + $0xa8] sm:$0xff] %vm4913, %v4989
      %5000 = vst.msk [vmem:[#allocation4 + $0xb0] sm:$0xff] %vm4913, %v4991
      %5001 = vst.msk [vmem:[#allocation4 + $0xb8] sm:$0xff] %vm4913, %v4993
      %5002 = vrot.lane.b32.xlu0 %v4909, 120
      %v5003 = vpop.permute.xlu0 %5002
      %5004 = vrot.lane.b32.xlu0 %v4910, 120
      %v5005 = vpop.permute.xlu0 %5004
      %5006 = vrot.lane.b32.xlu0 %v4911, 120
      %v5007 = vpop.permute.xlu0 %5006
      %5008 = vrot.lane.b32.xlu0 %v4912, 120
      %v5009 = vpop.permute.xlu0 %5008
      %5014 = vst.msk [vmem:[#allocation4 + $0xc0] sm:$0xff] %vm4913, %v5003
      %5015 = vst.msk [vmem:[#allocation4 + $0xc8] sm:$0xff] %vm4913, %v5005
      %5016 = vst.msk [vmem:[#allocation4 + $0xd0] sm:$0xff] %vm4913, %v5007
      %5017 = vst.msk [vmem:[#allocation4 + $0xd8] sm:$0xff] %vm4913, %v5009
      %5018 = vrot.lane.b32.xlu0 %v4909, 119
      %v5019 = vpop.permute.xlu0 %5018
      %5020 = vrot.lane.b32.xlu0 %v4910, 119
      %v5021 = vpop.permute.xlu0 %5020
      %5022 = vrot.lane.b32.xlu0 %v4911, 119
      %v5023 = vpop.permute.xlu0 %5022
      %5024 = vrot.lane.b32.xlu0 %v4912, 119
      %v5025 = vpop.permute.xlu0 %5024
      %5030 = vst.msk [vmem:[#allocation4 + $0xe0] sm:$0xff] %vm4913, %v5019
      %5031 = vst.msk [vmem:[#allocation4 + $0xe8] sm:$0xff] %vm4913, %v5021
      %5032 = vst.msk [vmem:[#allocation4 + $0xf0] sm:$0xff] %vm4913, %v5023
      %5033 = vst.msk [vmem:[#allocation4 + $0xf8] sm:$0xff] %vm4913, %v5025
      %5034 = vrot.lane.b32.xlu0 %v4909, 118
      %v5035 = vpop.permute.xlu0 %5034
      %5036 = vrot.lane.b32.xlu0 %v4910, 118
      %v5037 = vpop.permute.xlu0 %5036
      %5038 = vrot.lane.b32.xlu0 %v4911, 118
      %v5039 = vpop.permute.xlu0 %5038
      %5040 = vrot.lane.b32.xlu0 %v4912, 118
      %v5041 = vpop.permute.xlu0 %5040
      %5046 = vst.msk [vmem:[#allocation4 + $0x100] sm:$0xff] %vm4913, %v5035
      %5047 = vst.msk [vmem:[#allocation4 + $0x108] sm:$0xff] %vm4913, %v5037
      %5048 = vst.msk [vmem:[#allocation4 + $0x110] sm:$0xff] %vm4913, %v5039
      %5049 = vst.msk [vmem:[#allocation4 + $0x118] sm:$0xff] %vm4913, %v5041
      %v5050 = vld [vmem:[%s15] sm:$0xff]
      %v5051 = vld [vmem:[%s15 + $0x8] sm:$0xff]
      %v5052 = vld [vmem:[%s15 + $0x10] sm:$0xff]
      %v5053 = vld [vmem:[%s15 + $0x18] sm:$0xff]
      %v5054 = vld [vmem:[%s15 + $0x20] sm:$0xff]
      %v5055 = vld [vmem:[%s15 + $0x28] sm:$0xff]
      %v5056 = vld [vmem:[%s15 + $0x30] sm:$0xff]
      %v5057 = vld [vmem:[%s15 + $0x38] sm:$0xff]
      %v5058 = vld [vmem:[%s15 + $0x40] sm:$0xff]
      %v5059 = vld [vmem:[%s15 + $0x48] sm:$0xff]
      %v5060 = vld [vmem:[%s15 + $0x50] sm:$0xff]
      %v5061 = vld [vmem:[%s15 + $0x58] sm:$0xff]
      %v5062 = vld [vmem:[#allocation4] sm:$0xff]
      %v5063 = vld [vmem:[#allocation4 + $0x8] sm:$0xff]
      %v5064 = vld [vmem:[#allocation4 + $0x10] sm:$0xff]
      %v5065 = vld [vmem:[#allocation4 + $0x18] sm:$0xff]
      %v5066 = vld [vmem:[#allocation4 + $0x20] sm:$0xff]
      %v5067 = vld [vmem:[#allocation4 + $0x28] sm:$0xff]
      %v5068 = vld [vmem:[#allocation4 + $0x30] sm:$0xff]
      %v5069 = vld [vmem:[#allocation4 + $0x38] sm:$0xff]
      %v5070 = vld [vmem:[#allocation4 + $0x40] sm:$0xff]
      %v5071 = vld [vmem:[#allocation4 + $0x48] sm:$0xff]
      %v5072 = vld [vmem:[#allocation4 + $0x50] sm:$0xff]
      %v5073 = vld [vmem:[#allocation4 + $0x58] sm:$0xff]
      %v5074 = vld [vmem:[#allocation4 + $0x60] sm:$0xff]
      %v5075 = vld [vmem:[#allocation4 + $0x68] sm:$0xff]
      %v5076 = vld [vmem:[#allocation4 + $0x70] sm:$0xff]
      %v5077 = vld [vmem:[#allocation4 + $0x78] sm:$0xff]
      %v5078 = vld [vmem:[#allocation4 + $0x80] sm:$0xff]
      %v5079 = vld [vmem:[#allocation4 + $0x88] sm:$0xff]
      %v5080 = vld [vmem:[#allocation4 + $0x90] sm:$0xff]
      %v5081 = vld [vmem:[#allocation4 + $0x98] sm:$0xff]
      %v5082 = vld [vmem:[#allocation4 + $0xa0] sm:$0xff]
      %v5083 = vld [vmem:[#allocation4 + $0xa8] sm:$0xff]
      %v5084 = vld [vmem:[#allocation4 + $0xb0] sm:$0xff]
      %v5085 = vld [vmem:[#allocation4 + $0xb8] sm:$0xff]
      %v5086 = vld [vmem:[#allocation4 + $0xc0] sm:$0xff]
      %v5087 = vld [vmem:[#allocation4 + $0xc8] sm:$0xff]
      %v5088 = vld [vmem:[#allocation4 + $0xd0] sm:$0xff]
      %v5089 = vld [vmem:[#allocation4 + $0xd8] sm:$0xff]
      %v5090 = vld [vmem:[#allocation4 + $0xe0] sm:$0xff]
      %v5091 = vld [vmem:[#allocation4 + $0xe8] sm:$0xff]
      %v5092 = vld [vmem:[#allocation4 + $0xf0] sm:$0xff]
      %v5093 = vld [vmem:[#allocation4 + $0xf8] sm:$0xff]
      %v5094 = vld [vmem:[#allocation4 + $0x100] sm:$0xff]
      %v5095 = vld [vmem:[#allocation4 + $0x108] sm:$0xff]
      %v5096 = vld [vmem:[#allocation4 + $0x110] sm:$0xff]
      %v5097 = vld [vmem:[#allocation4 + $0x118] sm:$0xff]
      %v5098 = vld [vmem:[%s17] sm:$0xff]
      %v5099 = vld [vmem:[%s17 + $0x8] sm:$0xff]
      %v5100 = vld [vmem:[%s17 + $0x10] sm:$0xff]
      %v5101 = vld [vmem:[%s17 + $0x18] sm:$0xff]
      %5103 = vset.pattern.permute.xlu0 0
      %5104 = vperm.xlu0 %5103, %v5098
      %v5105 = vpop.permute.xlu0 %5104
      %5108 = vset.pattern.permute.xlu0 0
      %5109 = vperm.xlu0 %5108, %v5099
      %v5110 = vpop.permute.xlu0 %5109
      %5113 = vset.pattern.permute.xlu0 0
      %5114 = vperm.xlu0 %5113, %v5100
      %v5115 = vpop.permute.xlu0 %5114
      %5118 = vset.pattern.permute.xlu0 0
      %5119 = vperm.xlu0 %5118, %v5101
      %v5120 = vpop.permute.xlu0 %5119
      %v5123 = vsel %vm1139, %v5052, 0
      %v5126 = vsel %vm1139, %v5055, 0
      %v5129 = vsel %vm1139, %v5058, 0
      %v5132 = vsel %vm1139, %v5061, 0
      %5134 = vmatpush.msra.mxu0 %v5077
      %5135 = vmatpush.msra.mxu0 %v5076
      %5136 = vmatpush.msra.mxu0 %v5075
      %5137 = vmatpush.msra.mxu0 %v5074
      %5138 = vmatpush.msra.mxu0 %v5073
      %5139 = vmatpush.msra.mxu0 %v5072
      %5140 = vmatpush.msra.mxu0 %v5071
      %5141 = vmatpush.msra.mxu0 %v5070
      %5142 = vmatpush.msra.mxu0 %v5069
      %5143 = vmatpush.msra.mxu0 %v5068
      %5144 = vmatpush.msra.mxu0 %v5067
      %5145 = vmatpush.msra.mxu0 %v5066
      %5146 = vmatpush.msra.mxu0 %v5065
      %5147 = vmatpush.msra.mxu0 %v5064
      %5148 = vmatpush.msra.mxu0 %v5063
      %5149 = vmatpush.msra.mxu0 %v5062
      %5150 = vmatmul.f32.gmra.mxu0 %v5050
      %v5151 = vpop.f32.mrf.mxu0
      %v5152 = vadd.f32 %v5105, %v5151
      %5153 = vmatmul.f32.gmra.mxu0 %v5053
      %v5154 = vpop.f32.mrf.mxu0
      %v5155 = vadd.f32 %v5110, %v5154
      %5156 = vmatmul.f32.gmra.mxu0 %v5056
      %v5157 = vpop.f32.mrf.mxu0
      %v5158 = vadd.f32 %v5115, %v5157
      %5159 = vmatmul.f32.gmra.mxu0 %v5059
      %v5160 = vpop.f32.mrf.mxu0
      %v5161 = vadd.f32 %v5120, %v5160
      %5162 = vdwg.mxu0
      %5163 = vmatpush.msra.mxu0 %v5093
      %5164 = vmatpush.msra.mxu0 %v5092
      %5165 = vmatpush.msra.mxu0 %v5091
      %5166 = vmatpush.msra.mxu0 %v5090
      %5167 = vmatpush.msra.mxu0 %v5089
      %5168 = vmatpush.msra.mxu0 %v5088
      %5169 = vmatpush.msra.mxu0 %v5087
      %5170 = vmatpush.msra.mxu0 %v5086
      %5171 = vmatpush.msra.mxu0 %v5085
      %5172 = vmatpush.msra.mxu0 %v5084
      %5173 = vmatpush.msra.mxu0 %v5083
      %5174 = vmatpush.msra.mxu0 %v5082
      %5175 = vmatpush.msra.mxu0 %v5081
      %5176 = vmatpush.msra.mxu0 %v5080
      %5177 = vmatpush.msra.mxu0 %v5079
      %5178 = vmatpush.msra.mxu0 %v5078
      %5179 = vmatmul.f32.gmra.mxu0 %v5051
      %v5180 = vpop.f32.mrf.mxu0
      %v5181 = vadd.f32 %v5152, %v5180
      %5182 = vmatmul.f32.gmra.mxu0 %v5054
      %v5183 = vpop.f32.mrf.mxu0
      %v5184 = vadd.f32 %v5155, %v5183
      %5185 = vmatmul.f32.gmra.mxu0 %v5057
      %v5186 = vpop.f32.mrf.mxu0
      %v5187 = vadd.f32 %v5158, %v5186
      %5188 = vmatmul.f32.gmra.mxu0 %v5060
      %v5189 = vpop.f32.mrf.mxu0
      %v5190 = vadd.f32 %v5161, %v5189
      %5191 = vdwg.mxu0
      %5192 = vmatpush.msra.mxu0 0.0
      %5193 = vmatpush.msra.mxu0 0.0
      %5194 = vmatpush.msra.mxu0 0.0
      %5195 = vmatpush.msra.mxu0 0.0
      %5196 = vmatpush.msra.mxu0 0.0
      %5197 = vmatpush.msra.mxu0 0.0
      %5198 = vmatpush.msra.mxu0 0.0
      %5199 = vmatpush.msra.mxu0 0.0
      %5200 = vmatpush.msra.mxu0 0.0
      %5201 = vmatpush.msra.mxu0 0.0
      %5202 = vmatpush.msra.mxu0 0.0
      %5203 = vmatpush.msra.mxu0 0.0
      %5204 = vmatpush.msra.mxu0 %v5097
      %5205 = vmatpush.msra.mxu0 %v5096
      %5206 = vmatpush.msra.mxu0 %v5095
      %5207 = vmatpush.msra.mxu0 %v5094
      %5208 = vmatmul.f32.gmra.mxu0 %v5123
      %v5209 = vpop.f32.mrf.mxu0
      %v5210 = vadd.f32 %v5181, %v5209
      %5211 = vmatmul.f32.gmra.mxu0 %v5126
      %v5212 = vpop.f32.mrf.mxu0
      %v5213 = vadd.f32 %v5184, %v5212
      %5214 = vmatmul.f32.gmra.mxu0 %v5129
      %v5215 = vpop.f32.mrf.mxu0
      %v5216 = vadd.f32 %v5187, %v5215
      %5217 = vmatmul.f32.gmra.mxu0 %v5132
      %v5218 = vpop.f32.mrf.mxu0
      %v5219 = vadd.f32 %v5190, %v5218
      %5220 = vdwg.mxu0
      %v5221 = vld [vmem:[%s67] sm:$0x3f]
      %v5223 = vsel %vm4913, %v5210, 0
      %v5226 = vsel %vm4913, %v5213, 0
      %v5229 = vsel %vm4913, %v5216, 0
      %v5232 = vsel %vm4913, %v5219, 0
      %v5235 = vsel %vm4665, %v5221, 0
      %5237 = vmatpush.msra.mxu0 0.0
      %5238 = vmatpush.msra.mxu0 0.0
      %5239 = vmatpush.msra.mxu0 0.0
      %5240 = vmatpush.msra.mxu0 0.0
      %5241 = vmatpush.msra.mxu0 0.0
      %5242 = vmatpush.msra.mxu0 0.0
      %5243 = vmatpush.msra.mxu0 0.0
      %5244 = vmatpush.msra.mxu0 0.0
      %5245 = vmatpush.msra.mxu0 0.0
      %5246 = vmatpush.msra.mxu0 0.0
      %5247 = vmatpush.msra.mxu0 0.0
      %5248 = vmatpush.msra.mxu0 0.0
      %5249 = vmatpush.msra.mxu0 0.0
      %5250 = vmatpush.msra.mxu0 0.0
      %5251 = vmatpush.msra.mxu0 0.0
      %5252 = vmatpush.msra.mxu0 %v5235
      %5253 = vmatmul.f32.gmra.mxu0 %v5223
      %v5254 = vpop.f32.mrf.mxu0
      %v5255 = vadd.f32 0.0, %v5254
      %5256 = vmatmul.f32.gmra.mxu0 %v5226
      %v5257 = vpop.f32.mrf.mxu0
      %v5258 = vadd.f32 0.0, %v5257
      %5259 = vmatmul.f32.gmra.mxu0 %v5229
      %v5260 = vpop.f32.mrf.mxu0
      %v5261 = vadd.f32 0.0, %v5260
      %5262 = vmatmul.f32.gmra.mxu0 %v5232
      %v5263 = vpop.f32.mrf.mxu0
      %v5264 = vadd.f32 0.0, %v5263
      %5265 = vdwg.mxu0
      %v5266 = vadd.f32 %v5255, 3.0
      %v5267 = vadd.f32 %v5258, 3.0
      %v5268 = vadd.f32 %v5261, 3.0
      %v5269 = vadd.f32 %v5264, 3.0
      %v5270 = vmax.f32 %v5266, 0.0
      %v5271 = vmax.f32 %v5267, 0.0
      %v5272 = vmax.f32 %v5268, 0.0
      %v5273 = vmax.f32 %v5269, 0.0
      %v5274 = vmin.f32 %v5270, 6.0
      %v5275 = vmin.f32 %v5271, 6.0
      %v5276 = vmin.f32 %v5272, 6.0
      %v5277 = vmin.f32 %v5273, 6.0
      %v5278 = vmul.f32 %v5255, %v5274
      %v5279 = vmul.f32 %v5258, %v5275
      %v5280 = vmul.f32 %v5261, %v5276
      %v5281 = vmul.f32 %v5264, %v5277
      %v5282 = vmul.f32 %v5278, 0.16666667
      %v5283 = vmul.f32 %v5279, 0.16666667
      %v5284 = vmul.f32 %v5280, 0.16666667
      %v5285 = vmul.f32 %v5281, 0.16666667
      %vm5286 = vcmask 31744
      %v5287 = vsel %vm5286, %v5282, 0.0
      %5288 = vadd.xlane.f32.xlu0 %v5287
      %v5289 = vpop.xlane.xlu0 %5288
      %v5290 = vsel %vm5286, %v5283, 0.0
      %5291 = vadd.xlane.f32.xlu0 %v5290
      %v5292 = vpop.xlane.xlu0 %5291
      %v5293 = vsel %vm5286, %v5284, 0.0
      %5294 = vadd.xlane.f32.xlu0 %v5293
      %v5295 = vpop.xlane.xlu0 %5294
      %v5296 = vsel %vm5286, %v5285, 0.0
      %5297 = vadd.xlane.f32.xlu0 %v5296
      %v5298 = vpop.xlane.xlu0 %5297
      %v5299 = vrcp.pop 4.0
      %v5300 = vmul.f32 4.0, %v5299
      %v5301 = vsub.f32 1.0, %v5300
      %v5302 = vmul.f32 %v5299, %v5301
      %v5303 = vadd.f32 %v5299, %v5302
      %vm5304 = vweird.f32 %v5299
      %v5305 = vsel %vm5304, %v5299, %v5303
      %v5306 = vmul.f32 %v5289, %v5305
      %v5307 = vmul.f32 %v5292, %v5305
      %v5308 = vmul.f32 %v5295, %v5305
      %v5309 = vmul.f32 %v5298, %v5305
      %v5310 = vld [vmem:[%s47] sm:$0xff]
      %v5311 = vld [vmem:[%s47 + $0x8] sm:$0xff]
      %v5312 = vld [vmem:[%s49] sm:$0xff]
      %v5313 = vld [vmem:[%s49 + $0x8] sm:$0xff]
      %v5315 = vsel %vm1139, %v5310, 0
      %v5318 = vsel %vm1139, %v5311, 0
      %5320 = vmatpush.msra.mxu0 0.0
      %5321 = vmatpush.msra.mxu0 0.0
      %5322 = vmatpush.msra.mxu0 0.0
      %5323 = vmatpush.msra.mxu0 0.0
      %5324 = vmatpush.msra.mxu0 0.0
      %5325 = vmatpush.msra.mxu0 0.0
      %5326 = vmatpush.msra.mxu0 0.0
      %5327 = vmatpush.msra.mxu0 0.0
      %5328 = vmatpush.msra.mxu0 0.0
      %5329 = vmatpush.msra.mxu0 0.0
      %5330 = vmatpush.msra.mxu0 0.0
      %5331 = vmatpush.msra.mxu0 0.0
      %5332 = vmatpush.msra.mxu0 %v5309
      %5333 = vmatpush.msra.mxu0 %v5308
      %5334 = vmatpush.msra.mxu0 %v5307
      %5335 = vmatpush.msra.mxu0 %v5306
      %5336 = vmatmul.f32.gmra.mxu0 %v5315
      %v5337 = vpop.f32.mrf.mxu0
      %v5338 = vadd.f32 %v5312, %v5337
      %5339 = vmatmul.f32.gmra.mxu0 %v5318
      %v5340 = vpop.f32.mrf.mxu0
      %v5341 = vadd.f32 %v5313, %v5340
      %5342 = vdwg.mxu0
      %v5343 = vadd.f32 %v5338, 3.0
      %v5344 = vadd.f32 %v5341, 3.0
      %v5345 = vmax.f32 %v5343, 0.0
      %v5346 = vmax.f32 %v5344, 0.0
      %v5347 = vmin.f32 %v5345, 6.0
      %v5348 = vmin.f32 %v5346, 6.0
      %v5349 = vmul.f32 %v5338, %v5347
      %v5350 = vmul.f32 %v5341, %v5348
      %v5351 = vmul.f32 %v5349, 0.16666667
      %v5352 = vmul.f32 %v5350, 0.16666667
      %v5353 = vld [vmem:[%s51] sm:$0xff]
      %v5354 = vld [vmem:[%s51 + $0x8] sm:$0xff]
      %v5355 = vld [vmem:[%s51 + $0x10] sm:$0xff]
      %v5356 = vld [vmem:[%s51 + $0x18] sm:$0xff]
      %v5357 = vld [vmem:[%s53] sm:$0xff]
      %v5358 = vld [vmem:[%s53 + $0x8] sm:$0xff]
      %v5359 = vld [vmem:[%s53 + $0x10] sm:$0xff]
      %v5360 = vld [vmem:[%s53 + $0x18] sm:$0xff]
      %v5362 = vsel %vm2439, %v5353, 0
      %v5365 = vsel %vm2439, %v5354, 0
      %v5368 = vsel %vm2439, %v5355, 0
      %v5371 = vsel %vm2439, %v5356, 0
      %5373 = vmatpush.msra.mxu0 0.0
      %5374 = vmatpush.msra.mxu0 0.0
      %5375 = vmatpush.msra.mxu0 0.0
      %5376 = vmatpush.msra.mxu0 0.0
      %5377 = vmatpush.msra.mxu0 0.0
      %5378 = vmatpush.msra.mxu0 0.0
      %5379 = vmatpush.msra.mxu0 0.0
      %5380 = vmatpush.msra.mxu0 0.0
      %5381 = vmatpush.msra.mxu0 0.0
      %5382 = vmatpush.msra.mxu0 0.0
      %5383 = vmatpush.msra.mxu0 0.0
      %5384 = vmatpush.msra.mxu0 0.0
      %5385 = vmatpush.msra.mxu0 0.0
      %5386 = vmatpush.msra.mxu0 0.0
      %5387 = vmatpush.msra.mxu0 %v5352
      %5388 = vmatpush.msra.mxu0 %v5351
      %5389 = vmatmul.f32.gmra.mxu0 %v5362
      %v5390 = vpop.f32.mrf.mxu0
      %v5391 = vadd.f32 %v5357, %v5390
      %5392 = vmatmul.f32.gmra.mxu0 %v5365
      %v5393 = vpop.f32.mrf.mxu0
      %v5394 = vadd.f32 %v5358, %v5393
      %5395 = vmatmul.f32.gmra.mxu0 %v5368
      %v5396 = vpop.f32.mrf.mxu0
      %v5397 = vadd.f32 %v5359, %v5396
      %5398 = vmatmul.f32.gmra.mxu0 %v5371
      %v5399 = vpop.f32.mrf.mxu0
      %v5400 = vadd.f32 %v5360, %v5399
      %5401 = vdwg.mxu0
      %v5402 = vxor.u32 %v5391, 2147483648
      %v5403 = vxor.u32 %v5394, 2147483648
      %v5404 = vxor.u32 %v5397, 2147483648
      %v5405 = vxor.u32 %v5400, 2147483648
      %v5406 = vmul.f32 %v5402, 1.442695
      %v5407 = vpow.pop %v5406
      %v5408 = vmul.f32 %v5403, 1.442695
      %v5409 = vpow.pop %v5408
      %v5410 = vmul.f32 %v5404, 1.442695
      %v5411 = vpow.pop %v5410
      %v5412 = vmul.f32 %v5405, 1.442695
      %v5413 = vpow.pop %v5412
      %v5414 = vadd.f32 %v5407, 1.0
      %v5415 = vadd.f32 %v5409, 1.0
      %v5416 = vadd.f32 %v5411, 1.0
      %v5417 = vadd.f32 %v5413, 1.0
      %v5418 = vrcp.pop %v5414
      %v5419 = vmul.f32 %v5414, %v5418
      %v5420 = vsub.f32 1.0, %v5419
      %v5421 = vmul.f32 %v5418, %v5420
      %v5422 = vadd.f32 %v5418, %v5421
      %vm5423 = vweird.f32 %v5414
      %vm5424 = vweird.f32 %v5418
      %vm5425 = vmor %vm5423, %vm5424
      %v5426 = vsel %vm5425, %v5418, %v5422
      %v5427 = vand.u32 2147483647, %v5414
      %vm5428 = vcmp.eq.f32.partialorder %v5427, 8.507059e+37
      %v5429 = vand.u32 %v5414, 2147483648
      %v5430 = vor.u32 1.1754944e-38, %v5429
      %v5431 = vsel %vm5428, %v5430, %v5426
      %v5432 = vmul.f32 1.0, %v5431
      %v5433 = vrcp.pop %v5415
      %v5434 = vmul.f32 %v5415, %v5433
      %v5435 = vsub.f32 1.0, %v5434
      %v5436 = vmul.f32 %v5433, %v5435
      %v5437 = vadd.f32 %v5433, %v5436
      %vm5438 = vweird.f32 %v5415
      %vm5439 = vweird.f32 %v5433
      %vm5440 = vmor %vm5438, %vm5439
      %v5441 = vsel %vm5440, %v5433, %v5437
      %v5442 = vand.u32 2147483647, %v5415
      %vm5443 = vcmp.eq.f32.partialorder %v5442, 8.507059e+37
      %v5444 = vand.u32 %v5415, 2147483648
      %v5445 = vor.u32 1.1754944e-38, %v5444
      %v5446 = vsel %vm5443, %v5445, %v5441
      %v5447 = vmul.f32 1.0, %v5446
      %v5448 = vrcp.pop %v5416
      %v5449 = vmul.f32 %v5416, %v5448
      %v5450 = vsub.f32 1.0, %v5449
      %v5451 = vmul.f32 %v5448, %v5450
      %v5452 = vadd.f32 %v5448, %v5451
      %vm5453 = vweird.f32 %v5416
      %vm5454 = vweird.f32 %v5448
      %vm5455 = vmor %vm5453, %vm5454
      %v5456 = vsel %vm5455, %v5448, %v5452
      %v5457 = vand.u32 2147483647, %v5416
      %vm5458 = vcmp.eq.f32.partialorder %v5457, 8.507059e+37
      %v5459 = vand.u32 %v5416, 2147483648
      %v5460 = vor.u32 1.1754944e-38, %v5459
      %v5461 = vsel %vm5458, %v5460, %v5456
      %v5462 = vmul.f32 1.0, %v5461
      %v5463 = vrcp.pop %v5417
      %v5464 = vmul.f32 %v5417, %v5463
      %v5465 = vsub.f32 1.0, %v5464
      %v5466 = vmul.f32 %v5463, %v5465
      %v5467 = vadd.f32 %v5463, %v5466
      %vm5468 = vweird.f32 %v5417
      %vm5469 = vweird.f32 %v5463
      %vm5470 = vmor %vm5468, %vm5469
      %v5471 = vsel %vm5470, %v5463, %v5467
      %v5472 = vand.u32 2147483647, %v5417
      %vm5473 = vcmp.eq.f32.partialorder %v5472, 8.507059e+37
      %v5474 = vand.u32 %v5417, 2147483648
      %v5475 = vor.u32 1.1754944e-38, %v5474
      %v5476 = vsel %vm5473, %v5475, %v5471
      %v5477 = vmul.f32 1.0, %v5476
      %5479 = vset.pattern.permute.xlu0 0
      %5480 = vperm.xlu0 %5479, %v5432
      %v5481 = vpop.permute.xlu0 %5480
      %5484 = vset.pattern.permute.xlu0 0
      %5485 = vperm.xlu0 %5484, %v5447
      %v5486 = vpop.permute.xlu0 %5485
      %5489 = vset.pattern.permute.xlu0 0
      %5490 = vperm.xlu0 %5489, %v5462
      %v5491 = vpop.permute.xlu0 %5490
      %5494 = vset.pattern.permute.xlu0 0
      %5495 = vperm.xlu0 %5494, %v5477
      %v5496 = vpop.permute.xlu0 %5495
      %v5498 = vmul.f32 %v5282, %v5481
      %v5499 = vmul.f32 %v5283, %v5486
      %v5500 = vmul.f32 %v5284, %v5491
      %v5501 = vmul.f32 %v5285, %v5496
      %v5502 = vld [vmem:[%s19] sm:$0xff]
      %v5503 = vld [vmem:[%s19 + $0x8] sm:$0xff]
      %v5504 = vld [vmem:[%s19 + $0x10] sm:$0xff]
      %v5505 = vld [vmem:[%s19 + $0x18] sm:$0xff]
      %v5506 = vld [vmem:[%s21] sm:$0xff]
      %v5507 = vld [vmem:[%s21 + $0x8] sm:$0xff]
      %v5508 = vld [vmem:[%s21 + $0x10] sm:$0xff]
      %v5509 = vld [vmem:[%s21 + $0x18] sm:$0xff]
      %5511 = vset.pattern.permute.xlu0 0
      %5512 = vperm.xlu0 %5511, %v5506
      %v5513 = vpop.permute.xlu0 %5512
      %5516 = vset.pattern.permute.xlu0 0
      %5517 = vperm.xlu0 %5516, %v5507
      %v5518 = vpop.permute.xlu0 %5517
      %5521 = vset.pattern.permute.xlu0 0
      %5522 = vperm.xlu0 %5521, %v5508
      %v5523 = vpop.permute.xlu0 %5522
      %5526 = vset.pattern.permute.xlu0 0
      %5527 = vperm.xlu0 %5526, %v5509
      %v5528 = vpop.permute.xlu0 %5527
      %v5531 = vsel %vm1139, %v5502, 0
      %v5534 = vsel %vm1139, %v5503, 0
      %v5537 = vsel %vm1139, %v5504, 0
      %v5540 = vsel %vm1139, %v5505, 0
      %5542 = vmatpush.msra.mxu0 0.0
      %5543 = vmatpush.msra.mxu0 0.0
      %5544 = vmatpush.msra.mxu0 0.0
      %5545 = vmatpush.msra.mxu0 0.0
      %5546 = vmatpush.msra.mxu0 0.0
      %5547 = vmatpush.msra.mxu0 0.0
      %5548 = vmatpush.msra.mxu0 0.0
      %5549 = vmatpush.msra.mxu0 0.0
      %5550 = vmatpush.msra.mxu0 0.0
      %5551 = vmatpush.msra.mxu0 0.0
      %5552 = vmatpush.msra.mxu0 0.0
      %5553 = vmatpush.msra.mxu0 0.0
      %5554 = vmatpush.msra.mxu0 %v5501
      %5555 = vmatpush.msra.mxu0 %v5500
      %5556 = vmatpush.msra.mxu0 %v5499
      %5557 = vmatpush.msra.mxu0 %v5498
      %5558 = vmatmul.f32.gmra.mxu0 %v5531
      %v5559 = vpop.f32.mrf.mxu0
      %v5560 = vadd.f32 %v5513, %v5559
      %5561 = vmatmul.f32.gmra.mxu0 %v5534
      %v5562 = vpop.f32.mrf.mxu0
      %v5563 = vadd.f32 %v5518, %v5562
      %5564 = vmatmul.f32.gmra.mxu0 %v5537
      %v5565 = vpop.f32.mrf.mxu0
      %v5566 = vadd.f32 %v5523, %v5565
      %5567 = vmatmul.f32.gmra.mxu0 %v5540
      %v5568 = vpop.f32.mrf.mxu0
      %v5569 = vadd.f32 %v5528, %v5568
      %5570 = vdwg.mxu0
      %v5571 = vsel %vm5286, %v5560, 0.0
      %5572 = vadd.xlane.f32.xlu0 %v5571
      %v5573 = vpop.xlane.xlu0 %5572
      %v5574 = vsel %vm5286, %v5563, 0.0
      %5575 = vadd.xlane.f32.xlu0 %v5574
      %v5576 = vpop.xlane.xlu0 %5575
      %v5577 = vsel %vm5286, %v5566, 0.0
      %5578 = vadd.xlane.f32.xlu0 %v5577
      %v5579 = vpop.xlane.xlu0 %5578
      %v5580 = vsel %vm5286, %v5569, 0.0
      %5581 = vadd.xlane.f32.xlu0 %v5580
      %v5582 = vpop.xlane.xlu0 %5581
      %v5583 = vmul.f32 %v5573, %v5305
      %v5584 = vmul.f32 %v5576, %v5305
      %v5585 = vmul.f32 %v5579, %v5305
      %v5586 = vmul.f32 %v5582, %v5305
      %v5587 = vld [vmem:[%s55] sm:$0xff]
      %v5588 = vld [vmem:[%s55 + $0x8] sm:$0xff]
      %v5589 = vld [vmem:[%s57] sm:$0xff]
      %v5590 = vld [vmem:[%s57 + $0x8] sm:$0xff]
      %v5592 = vsel %vm1139, %v5587, 0
      %v5595 = vsel %vm1139, %v5588, 0
      %5597 = vmatpush.msra.mxu0 0.0
      %5598 = vmatpush.msra.mxu0 0.0
      %5599 = vmatpush.msra.mxu0 0.0
      %5600 = vmatpush.msra.mxu0 0.0
      %5601 = vmatpush.msra.mxu0 0.0
      %5602 = vmatpush.msra.mxu0 0.0
      %5603 = vmatpush.msra.mxu0 0.0
      %5604 = vmatpush.msra.mxu0 0.0
      %5605 = vmatpush.msra.mxu0 0.0
      %5606 = vmatpush.msra.mxu0 0.0
      %5607 = vmatpush.msra.mxu0 0.0
      %5608 = vmatpush.msra.mxu0 0.0
      %5609 = vmatpush.msra.mxu0 %v5586
      %5610 = vmatpush.msra.mxu0 %v5585
      %5611 = vmatpush.msra.mxu0 %v5584
      %5612 = vmatpush.msra.mxu0 %v5583
      %5613 = vmatmul.f32.gmra.mxu0 %v5592
      %v5614 = vpop.f32.mrf.mxu0
      %v5615 = vadd.f32 %v5589, %v5614
      %5616 = vmatmul.f32.gmra.mxu0 %v5595
      %v5617 = vpop.f32.mrf.mxu0
      %v5618 = vadd.f32 %v5590, %v5617
      %5619 = vdwg.mxu0
      %v5620 = vadd.f32 %v5615, 3.0
      %v5621 = vadd.f32 %v5618, 3.0
      %v5622 = vmax.f32 %v5620, 0.0
      %v5623 = vmax.f32 %v5621, 0.0
      %v5624 = vmin.f32 %v5622, 6.0
      %v5625 = vmin.f32 %v5623, 6.0
      %v5626 = vmul.f32 %v5615, %v5624
      %v5627 = vmul.f32 %v5618, %v5625
      %v5628 = vmul.f32 %v5626, 0.16666667
      %v5629 = vmul.f32 %v5627, 0.16666667
      %v5630 = vld [vmem:[%s59] sm:$0xff]
      %v5631 = vld [vmem:[%s59 + $0x8] sm:$0xff]
      %v5632 = vld [vmem:[%s59 + $0x10] sm:$0xff]
      %v5633 = vld [vmem:[%s59 + $0x18] sm:$0xff]
      %v5634 = vld [vmem:[%s61] sm:$0xff]
      %v5635 = vld [vmem:[%s61 + $0x8] sm:$0xff]
      %v5636 = vld [vmem:[%s61 + $0x10] sm:$0xff]
      %v5637 = vld [vmem:[%s61 + $0x18] sm:$0xff]
      %v5639 = vsel %vm2439, %v5630, 0
      %v5642 = vsel %vm2439, %v5631, 0
      %v5645 = vsel %vm2439, %v5632, 0
      %v5648 = vsel %vm2439, %v5633, 0
      %5650 = vmatpush.msra.mxu0 0.0
      %5651 = vmatpush.msra.mxu0 0.0
      %5652 = vmatpush.msra.mxu0 0.0
      %5653 = vmatpush.msra.mxu0 0.0
      %5654 = vmatpush.msra.mxu0 0.0
      %5655 = vmatpush.msra.mxu0 0.0
      %5656 = vmatpush.msra.mxu0 0.0
      %5657 = vmatpush.msra.mxu0 0.0
      %5658 = vmatpush.msra.mxu0 0.0
      %5659 = vmatpush.msra.mxu0 0.0
      %5660 = vmatpush.msra.mxu0 0.0
      %5661 = vmatpush.msra.mxu0 0.0
      %5662 = vmatpush.msra.mxu0 0.0
      %5663 = vmatpush.msra.mxu0 0.0
      %5664 = vmatpush.msra.mxu0 %v5629
      %5665 = vmatpush.msra.mxu0 %v5628
      %5666 = vmatmul.f32.gmra.mxu0 %v5639
      %v5667 = vpop.f32.mrf.mxu0
      %v5668 = vadd.f32 %v5634, %v5667
      %5669 = vmatmul.f32.gmra.mxu0 %v5642
      %v5670 = vpop.f32.mrf.mxu0
      %v5671 = vadd.f32 %v5635, %v5670
      %5672 = vmatmul.f32.gmra.mxu0 %v5645
      %v5673 = vpop.f32.mrf.mxu0
      %v5674 = vadd.f32 %v5636, %v5673
      %5675 = vmatmul.f32.gmra.mxu0 %v5648
      %v5676 = vpop.f32.mrf.mxu0
      %v5677 = vadd.f32 %v5637, %v5676
      %5678 = vdwg.mxu0
      %v5679 = vxor.u32 %v5668, 2147483648
      %v5680 = vxor.u32 %v5671, 2147483648
      %v5681 = vxor.u32 %v5674, 2147483648
      %v5682 = vxor.u32 %v5677, 2147483648
      %v5683 = vmul.f32 %v5679, 1.442695
      %v5684 = vpow.pop %v5683
      %v5685 = vmul.f32 %v5680, 1.442695
      %v5686 = vpow.pop %v5685
      %v5687 = vmul.f32 %v5681, 1.442695
      %v5688 = vpow.pop %v5687
      %v5689 = vmul.f32 %v5682, 1.442695
      %v5690 = vpow.pop %v5689
      %v5691 = vadd.f32 %v5684, 1.0
      %v5692 = vadd.f32 %v5686, 1.0
      %v5693 = vadd.f32 %v5688, 1.0
      %v5694 = vadd.f32 %v5690, 1.0
      %v5695 = vrcp.pop %v5691
      %v5696 = vmul.f32 %v5691, %v5695
      %v5697 = vsub.f32 1.0, %v5696
      %v5698 = vmul.f32 %v5695, %v5697
      %v5699 = vadd.f32 %v5695, %v5698
      %vm5700 = vweird.f32 %v5691
      %vm5701 = vweird.f32 %v5695
      %vm5702 = vmor %vm5700, %vm5701
      %v5703 = vsel %vm5702, %v5695, %v5699
      %v5704 = vand.u32 2147483647, %v5691
      %vm5705 = vcmp.eq.f32.partialorder %v5704, 8.507059e+37
      %v5706 = vand.u32 %v5691, 2147483648
      %v5707 = vor.u32 1.1754944e-38, %v5706
      %v5708 = vsel %vm5705, %v5707, %v5703
      %v5709 = vmul.f32 1.0, %v5708
      %v5710 = vrcp.pop %v5692
      %v5711 = vmul.f32 %v5692, %v5710
      %v5712 = vsub.f32 1.0, %v5711
      %v5713 = vmul.f32 %v5710, %v5712
      %v5714 = vadd.f32 %v5710, %v5713
      %vm5715 = vweird.f32 %v5692
      %vm5716 = vweird.f32 %v5710
      %vm5717 = vmor %vm5715, %vm5716
      %v5718 = vsel %vm5717, %v5710, %v5714
      %v5719 = vand.u32 2147483647, %v5692
      %vm5720 = vcmp.eq.f32.partialorder %v5719, 8.507059e+37
      %v5721 = vand.u32 %v5692, 2147483648
      %v5722 = vor.u32 1.1754944e-38, %v5721
      %v5723 = vsel %vm5720, %v5722, %v5718
      %v5724 = vmul.f32 1.0, %v5723
      %v5725 = vrcp.pop %v5693
      %v5726 = vmul.f32 %v5693, %v5725
      %v5727 = vsub.f32 1.0, %v5726
      %v5728 = vmul.f32 %v5725, %v5727
      %v5729 = vadd.f32 %v5725, %v5728
      %vm5730 = vweird.f32 %v5693
      %vm5731 = vweird.f32 %v5725
      %vm5732 = vmor %vm5730, %vm5731
      %v5733 = vsel %vm5732, %v5725, %v5729
      %v5734 = vand.u32 2147483647, %v5693
      %vm5735 = vcmp.eq.f32.partialorder %v5734, 8.507059e+37
      %v5736 = vand.u32 %v5693, 2147483648
      %v5737 = vor.u32 1.1754944e-38, %v5736
      %v5738 = vsel %vm5735, %v5737, %v5733
      %v5739 = vmul.f32 1.0, %v5738
      %v5740 = vrcp.pop %v5694
      %v5741 = vmul.f32 %v5694, %v5740
      %v5742 = vsub.f32 1.0, %v5741
      %v5743 = vmul.f32 %v5740, %v5742
      %v5744 = vadd.f32 %v5740, %v5743
      %vm5745 = vweird.f32 %v5694
      %vm5746 = vweird.f32 %v5740
      %vm5747 = vmor %vm5745, %vm5746
      %v5748 = vsel %vm5747, %v5740, %v5744
      %v5749 = vand.u32 2147483647, %v5694
      %vm5750 = vcmp.eq.f32.partialorder %v5749, 8.507059e+37
      %v5751 = vand.u32 %v5694, 2147483648
      %v5752 = vor.u32 1.1754944e-38, %v5751
      %v5753 = vsel %vm5750, %v5752, %v5748
      %v5754 = vmul.f32 1.0, %v5753
      %5756 = vset.pattern.permute.xlu0 0
      %5757 = vperm.xlu0 %5756, %v5709
      %v5758 = vpop.permute.xlu0 %5757
      %5761 = vset.pattern.permute.xlu0 0
      %5762 = vperm.xlu0 %5761, %v5724
      %v5763 = vpop.permute.xlu0 %5762
      %5766 = vset.pattern.permute.xlu0 0
      %5767 = vperm.xlu0 %5766, %v5739
      %v5768 = vpop.permute.xlu0 %5767
      %5771 = vset.pattern.permute.xlu0 0
      %5772 = vperm.xlu0 %5771, %v5754
      %v5773 = vpop.permute.xlu0 %5772
      %v5775 = vmul.f32 %v5560, %v5758
      %v5776 = vmul.f32 %v5563, %v5763
      %v5777 = vmul.f32 %v5566, %v5768
      %v5778 = vmul.f32 %v5569, %v5773
      %5779 = vst.msk [vmem:[%s1042] sm:$0xff] %vm5286, %v5775
      %5780 = vst.msk [vmem:[%s1042 + $0x8] sm:$0xff] %vm5286, %v5776
      %5781 = vst.msk [vmem:[%s1042 + $0x10] sm:$0xff] %vm5286, %v5777
      %5782 = vst.msk [vmem:[%s1042 + $0x18] sm:$0xff] %vm5286, %v5778
      %p5783 = scmp.lt.s32.totalorder %s80, 1
      %s5784 = scalar_select %p5783, %s80, 1
      %s5785 = smul.addr %s5784, 4
      %s5786 = smul.addr %s5785, 8
      %s5787 = scalar_lea.vmem %s69, %s5786
      // Predicated region
      $region157: #{c3ae_forward.1} parent=155 // pred_check
        %p5788 = pneg %p817
      $region158: #{c3ae_forward.1} parent=155 // pred_check_branch
        %5790 = sbr.rel (%p5788) target = $region160
      $region159: #{c3ae_forward.1} parent=155 // pred_region
        _
      $region160: #{c3ae_forward.1} parent=155 // pred_fallthru
        _
    $region156: #{c3ae_forward.1} parent=5 // pred_fallthru
      _
    %p5791 = scmp.le.s32.totalorder 2, %s75
    // Predicated region
    $region161: #{c3ae_forward.1} parent=5 // pred_check
      %p5792 = pneg %p5791
    $region162: #{c3ae_forward.1} parent=5 // pred_check_branch
      %5794 = sbr.rel (%p5792) target = $region164
    $region163: #{c3ae_forward.1} parent=5 // pred_region
      %s5795 = ssub.s32 %s75, 2
      // Predicated region
      $region165: #{c3ae_forward.1} parent=163 // pred_check
        %p5796 = pneg %p823
      $region166: #{c3ae_forward.1} parent=163 // pred_check_branch
        %5798 = sbr.rel (%p5796) target = $region168
      $region167: #{c3ae_forward.1} parent=163 // pred_region
        %p5799 = scmp.lt.s32.totalorder %s81, 1
        %s5800 = scalar_select %p5799, %s81, 1
        %s5801 = smul.addr %s5800, 4
        %s5802 = smul.addr %s5801, 8
        %s5803 = scalar_lea.vmem %s69, %s5802
      $region168: #{c3ae_forward.1} parent=163 // pred_fallthru
        _
    $region164: #{c3ae_forward.1} parent=5 // pred_fallthru
      _
  $region6: #{c3ae_forward.1} parent=0 // loop_footer
    %s79 = sadd.s32 1, %s75
  $region7: #{c3ae_forward.1} parent=0 // loop_footer_branch
    %74 = sbr.rel target = $region3
  $region8: #{c3ae_forward.1} parent=0 // loop_exit
    _

</llo_original>
